<compile_context>
chip_gen: v7x
topology: tpu7x:2x2x1
jax: 0.10.0
libtpu: 0.0.40
codegen_flags: <defaults>
</compile_context>

<pallas_src>
import math
from functools import partial

import jax
import jax.numpy as jnp
from jax import lax
from jax.experimental import pallas as pl
from jax.experimental.pallas import tpu as pltpu

INV_SQRT2 = 1.0 / math.sqrt(2.0)


def _softplus_beta(x, beta=100.0, threshold=20.0):
    # torch.nn.Softplus(beta=100): (1/beta)*log(1+exp(beta*x)), linear where
    # beta*x > threshold; min() guards exp overflow (both where-branches run).
    z = beta * x
    return jnp.where(z > threshold, x,
                     jnp.log(1.0 + jnp.exp(jnp.minimum(z, threshold))) / beta)


def _mm(a, b):
    # full-f32 matmul for the tiny wrapper-side folds and the reference
    return jnp.dot(a, b, precision=lax.Precision.HIGHEST)


# ---------------------------------------------------------------------------
# Kernel (feature-major: activations are (features, tile_n), rows on lanes)
# ---------------------------------------------------------------------------
def _deformation_kernel(nlayers, skip_layer,
                        xyz_ref,    # (1, spat_pad, tile_n)   xyz^T, zero-padded
                        lat_ref,    # (1, 2, hidden, 1)       per-batch folded biases
                        wxyz_ref,   # (2, hidden, spat_pad)   [layer0 | skip] xyz weights
                        w_mid_ref,  # (nlayers-1, hidden, hidden)
                        b_mid_ref,  # (nlayers-1, hidden, 1)  (zeros at skip slot)
                        w_last_ref, # (out_pad, hidden)
                        b_last_ref, # (out_pad, 1)
                        out_ref):   # (1, out_pad, tile_n)
    xyz = xyz_ref[0]                                        # (spat_pad, tile_n)
    lat = lat_ref[0]                                        # (2, hidden, 1)

    # layer 0: latent contribution + bias precomputed per batch in the wrapper.
    x = jnp.dot(wxyz_ref[0], xyz, preferred_element_type=jnp.float32)
    x = _softplus_beta(x + lat[0])

    # hidden layers 1 .. nlayers-1 (the skip layer uses split matmuls).
    for layer in range(1, nlayers):
        pre = jnp.dot(w_mid_ref[layer - 1], x,
                      preferred_element_type=jnp.float32)
        if layer == skip_layer:
            pre = (pre
                   + jnp.dot(wxyz_ref[1], xyz,
                             preferred_element_type=jnp.float32)
                   + lat[1])
        else:
            pre = pre + b_mid_ref[layer - 1]
        x = _softplus_beta(pre)

    # output layer (no activation)
    out_ref[0] = (jnp.dot(w_last_ref[...], x,
                          preferred_element_type=jnp.float32)
                  + b_last_ref[...])


# ---------------------------------------------------------------------------
# Parameter init (nn.Linear layout (out,in); geometric_init=False in the module)
# ---------------------------------------------------------------------------
def init_deformation_params(key, lat_dim, hidden_dim, nlayers=8, out_dim=3,
                            input_dim=3):
    d_in = lat_dim + input_dim
    dims = [d_in] + [hidden_dim] * nlayers + [out_dim]
    skip_layer = nlayers // 2
    params = []
    for layer in range(len(dims) - 1):
        in_dim = dims[layer] + (d_in if layer == skip_layer else 0)
        o_dim = dims[layer + 1]
        key, kw, kb = jax.random.split(key, 3)
        bound = 1.0 / math.sqrt(in_dim)
        w = jax.random.uniform(kw, (o_dim, in_dim), jnp.float32, -bound, bound)
        b = jax.random.uniform(kb, (o_dim,), jnp.float32, -bound, bound)
        params.append((w, b))
    return params


# ---------------------------------------------------------------------------
# Wrapper (DeformationNetwork.forward)
# ---------------------------------------------------------------------------
def deformation_network_forward(in_dict, params, cfg, *, tile_n=1024):
    """Supported: mode in ('glob_only', 'expr_only'), local_arch=False, latents
    given per batch (shape (B, 1, .)); neutral_only returns zeros like torch."""
    # TODO(synk): modes 'compress'/'GNN'/'interpolate', local_arch=True and
    # per-row latents (lat_rep.shape[1] == N) are not implemented here.
    if cfg.get("neutral_only", False):
        return {"offsets": jnp.zeros_like(in_dict["queries"])}

    xyz = in_dict["queries"]
    if xyz.ndim < 3:
        xyz = xyz[None]
    B, N, input_dim = xyz.shape
    assert input_dim == 3

    geo = in_dict["cond"]["geo"]
    exp = in_dict["cond"]["exp"]
    assert geo.shape[1] == 1 and exp.shape[1] == 1, "per-batch latents expected"

    mode = cfg.get("mode", "glob_only")
    glob = cfg["lat_dim_glob_shape"]
    if mode == "glob_only":
        lat = jnp.concatenate([geo[:, 0, :glob], exp[:, 0, :]], axis=-1)
    elif mode == "expr_only":
        lat = exp[:, 0, :]
    else:
        raise NotImplementedError(f"mode {mode!r} not supported")
    lat = lat.astype(jnp.float32)                          # (B, lat_dim)
    lat_dim = lat.shape[-1]

    hidden = cfg["hidden_dim"]
    nlayers = cfg["nlayers"]
    skip_layer = nlayers // 2
    n_hyper = cfg.get("n_hyper", 0)
    sdf_corrective = cfg.get("sdf_corrective", False)
    out_dim = 3 + n_hyper + (1 if sdf_corrective else 0)
    d_in = lat_dim + input_dim

    assert len(params) == nlayers + 1
    assert params[0][0].shape == (hidden, d_in)
    assert params[skip_layer][0].shape == (hidden, hidden + d_in)
    assert params[-1][0].shape == (out_dim, hidden)
    assert tile_n % 128 == 0
    assert 1 <= skip_layer < nlayers

    f32 = jnp.float32
    spat_pad = 8                                  # xyz features 3 -> 8 sublanes
    out_pad = max(8, pl.cdiv(out_dim, 8) * 8)     # sublane-friendly output rows
    n_pad = pl.cdiv(N, tile_n) * tile_n

    # --- fold latent + bias terms (constant over N) into per-batch vectors ---
    w0, b0 = params[0]
    w0 = w0.astype(f32)
    ws, bsk = params[skip_layer]
    ws = ws.astype(f32) * INV_SQRT2               # 1/sqrt(2) of the skip concat

    # xyz weights for layer 0 and the skip layer, stacked + padded to 8 cols.
    wxyz = jnp.stack([
        jnp.pad(w0[:, :input_dim], ((0, 0), (0, spat_pad - input_dim))),
        jnp.pad(ws[:, hidden:hidden + input_dim],
                ((0, 0), (0, spat_pad - input_dim))),
    ])                                                     # (2, hidden, spat_pad)

    # per-batch folded biases: [layer0 ; skip], shape (B, 2, hidden, 1)
    lat_bias = jnp.stack([
        _mm(lat, w0[:, input_dim:].T) + b0.astype(f32),
        _mm(lat, ws[:, hidden + input_dim:].T) + bsk.astype(f32),
    ], axis=1)[..., None]

    # hidden layers 1..nlayers-1 stacked into single resident tensors
    w_mid, b_mid = [], []
    for layer in range(1, nlayers):
        if layer == skip_layer:
            w_mid.append(ws[:, :hidden])                   # x-part, pre-scaled
            b_mid.append(jnp.zeros((hidden,), f32))        # bias folded in lat_bias
        else:
            w, b = params[layer]
            w_mid.append(w.astype(f32))
            b_mid.append(b.astype(f32))
    w_mid = jnp.stack(w_mid)                               # (nlayers-1, hidden, hidden)
    b_mid = jnp.stack(b_mid)[..., None]                    # (nlayers-1, hidden, 1)

    w_last, b_last = params[nlayers]
    w_last = jnp.pad(w_last.astype(f32), ((0, out_pad - out_dim), (0, 0)))
    b_last = jnp.pad(b_last.astype(f32), (0, out_pad - out_dim))[..., None]

    # --- xyz in feature-major layout: (B, spat_pad, n_pad), rows on lanes ----
    xyz_t = jnp.swapaxes(xyz.astype(f32), 1, 2)
    xyz_t = jnp.pad(xyz_t, ((0, 0), (0, spat_pad - input_dim), (0, n_pad - N)))

    in_specs = [
        pl.BlockSpec((1, spat_pad, tile_n), lambda b, j: (b, 0, j)),
        pl.BlockSpec((1, 2, hidden, 1), lambda b, j: (b, 0, 0, 0)),
        pl.BlockSpec(wxyz.shape, lambda b, j: (0, 0, 0)),
        pl.BlockSpec(w_mid.shape, lambda b, j: (0, 0, 0)),
        pl.BlockSpec(b_mid.shape, lambda b, j: (0, 0, 0)),
        pl.BlockSpec(w_last.shape, lambda b, j: (0, 0)),
        pl.BlockSpec(b_last.shape, lambda b, j: (0, 0)),
    ]
    out_spec = pl.BlockSpec((1, out_pad, tile_n), lambda b, j: (b, 0, j))
    out_shape = jax.ShapeDtypeStruct((B, out_pad, n_pad), f32)

    # --- advisory cost estimate ----------------------------------------------
    rows = B * n_pad
    flops = 2 * rows * (hidden * spat_pad                      # layer 0
                        + (nlayers - 1) * hidden * hidden      # hidden layers
                        + hidden * spat_pad                    # skip xyz part
                        + out_pad * hidden)                    # output layer
    transcendentals = 2 * rows * hidden * nlayers              # exp+log / softplus
    param_bytes = 4 * (int(wxyz.size) + int(w_mid.size) + int(b_mid.size)
                       + int(w_last.size) + int(b_last.size))
    bytes_accessed = (4 * (int(xyz_t.size) + B * out_pad * n_pad
                           + int(lat_bias.size)) + param_bytes)

    kernel = partial(_deformation_kernel, nlayers, skip_layer)
    out = pl.pallas_call(
        kernel,
        out_shape=out_shape,
        grid=(B, n_pad // tile_n),
        in_specs=in_specs,
        out_specs=out_spec,
        compiler_params=pltpu.CompilerParams(
            dimension_semantics=("parallel", "parallel"),
            vmem_limit_bytes=32 * 1024 * 1024),
        cost_estimate=pl.CostEstimate(flops=flops,
                                      transcendentals=transcendentals,
                                      bytes_accessed=bytes_accessed),
    )(xyz_t, lat_bias, wxyz, w_mid, b_mid, w_last, b_last)

    pred = jnp.swapaxes(out[:, :out_dim, :N], 1, 2)            # (B, N, out_dim)
    output = {"offsets": pred[..., :3]}
    if sdf_corrective:
        output["sdf_corrective"] = pred[..., 3 + n_hyper:3 + n_hyper + 1]
    if n_hyper > 0:
        output["hyper_coords"] = pred[..., 3:3 + n_hyper]
    return output


# ---------------------------------------------------------------------------
# Pure-JAX reference (mirrors the PyTorch forward exactly)
# ---------------------------------------------------------------------------
def deformation_network_reference(in_dict, params, cfg):
    if cfg.get("neutral_only", False):
        return {"offsets": jnp.zeros_like(in_dict["queries"])}
    xyz = in_dict["queries"]
    if xyz.ndim < 3:
        xyz = xyz[None]
    B, N, _ = xyz.shape
    geo = in_dict["cond"]["geo"]
    exp = in_dict["cond"]["exp"]
    if geo.shape[1] == 1:
        geo = jnp.broadcast_to(geo, (B, N, geo.shape[-1]))
    if exp.shape[1] == 1:
        exp = jnp.broadcast_to(exp, (B, N, exp.shape[-1]))
    mode = cfg.get("mode", "glob_only")
    glob = cfg["lat_dim_glob_shape"]
    if mode == "glob_only":
        cond = jnp.concatenate([geo[:, :, :glob], exp], axis=-1)
    elif mode == "expr_only":
        cond = exp
    else:
        raise NotImplementedError(mode)

    nlayers = cfg["nlayers"]
    skip_layer = nlayers // 2
    n_hyper = cfg.get("n_hyper", 0)
    sdf_corrective = cfg.get("sdf_corrective", False)

    inp = jnp.concatenate([xyz, cond], axis=-1)
    x = inp
    n_lin = len(params)
    for layer, (w, b) in enumerate(params):
        if layer == skip_layer:
            x = jnp.concatenate([x, inp], axis=-1) / math.sqrt(2.0)
        x = _mm(x, w.T) + b
        if layer < n_lin - 1:
            x = _softplus_beta(x)
    output = {"offsets": x[..., :3]}
    if sdf_corrective:
        output["sdf_corrective"] = x[..., 3 + n_hyper:3 + n_hyper + 1]
    if n_hyper > 0:
        output["hyper_coords"] = x[..., 3:3 + n_hyper]
    return output


# ---------------------------------------------------------------------------
if __name__ == "__main__":
    # Small DeformationNetwork config (mode='glob_only'):
    #   lat_dim = 16 + 16 = 32, d_in = 35, hidden = 32, nlayers = 8, out_dim = 3.
    cfg = dict(mode="glob_only", lat_dim_glob_shape=16, lat_dim_expr=16,
               hidden_dim=32, nlayers=8, n_hyper=0, sdf_corrective=False,
               neutral_only=False)
    B, N, TILE_N = 2, 2048, 1024          # grid = (2, 2): >= 2 parallel steps

    key = jax.random.PRNGKey(0)
    kp, kx, kg, ke = jax.random.split(key, 4)
    lat_dim = cfg["lat_dim_glob_shape"] + cfg["lat_dim_expr"]
    params = init_deformation_params(kp, lat_dim, cfg["hidden_dim"],
                                     nlayers=cfg["nlayers"], out_dim=3)

    in_dict = {
        "queries": jax.random.normal(kx, (B, N, 3), jnp.float32),
        "cond": {
            # geo carries extra (local) dims beyond lat_dim_glob_shape; the
            # module only uses the first lat_dim_glob_shape of them.
            "geo": jax.random.normal(kg, (B, 1, cfg["lat_dim_glob_shape"] + 8),
                                     jnp.float32),
            "exp": jax.random.normal(ke, (B, 1, cfg["lat_dim_expr"]),
                                     jnp.float32),
        },
    }

    out = deformation_network_forward(in_dict, params, cfg, tile_n=TILE_N)
    offsets = jax.block_until_ready(out["offsets"])

    ref = deformation_network_reference(in_dict, params, cfg)["offsets"]
    assert offsets.shape == (B, N, 3), offsets.shape
    err = float(jnp.max(jnp.abs(offsets - ref)))
    assert err < 2e-3, f"max abs error vs reference: {err}"
    print("KERNEL_OK")
</pallas_src>

<mosaic_0001>
module attributes {stable_mosaic.version = 11 : i64} {
  func.func @_deformation_kernel(%arg0: i32, %arg1: i32, %arg2: memref<1x8x1024xf32, #tpu.memory_space<vmem>>, %arg3: memref<1x2x32x1xf32, #tpu.memory_space<vmem>>, %arg4: memref<2x32x8xf32, #tpu.memory_space<vmem>>, %arg5: memref<7x32x32xf32, #tpu.memory_space<vmem>>, %arg6: memref<7x32x1xf32, #tpu.memory_space<vmem>>, %arg7: memref<8x32xf32, #tpu.memory_space<vmem>>, %arg8: memref<8x1xf32, #tpu.memory_space<vmem>>, %arg9: memref<1x8x1024xf32, #tpu.memory_space<vmem>>) attributes {dimension_semantics = [#tpu.dimension_semantics<parallel>, #tpu.dimension_semantics<parallel>], iteration_bounds = array<i64: 2, 2>, scalar_prefetch = 0 : i64, scratch_operands = 0 : i64, tpu.core_type = #tpu.core_type<tc>, window_params = [{transform_indices = @transform_0, window_bounds = array<i64: 1, 8, 1024>}, {transform_indices = @transform_1, window_bounds = array<i64: 1, 2, 32, 1>}, {pipeline_mode = #tpu.pipeline_mode<synchronous>, transform_indices = @transform_2, window_bounds = array<i64: 2, 32, 8>}, {pipeline_mode = #tpu.pipeline_mode<synchronous>, transform_indices = @transform_3, window_bounds = array<i64: 7, 32, 32>}, {pipeline_mode = #tpu.pipeline_mode<synchronous>, transform_indices = @transform_4, window_bounds = array<i64: 7, 32, 1>}, {pipeline_mode = #tpu.pipeline_mode<synchronous>, transform_indices = @transform_5, window_bounds = array<i64: 8, 32>}, {pipeline_mode = #tpu.pipeline_mode<synchronous>, transform_indices = @transform_6, window_bounds = array<i64: 8, 1>}, {transform_indices = @transform_7, window_bounds = array<i64: 1, 8, 1024>}]} {
    %c0 = arith.constant 0 : index
    %c0_0 = arith.constant 0 : index
    %c0_1 = arith.constant 0 : index
    %0 = vector.load %arg2[%c0, %c0_0, %c0_1] : memref<1x8x1024xf32, #tpu.memory_space<vmem>>, vector<1x8x1024xf32>
    %1 = vector.shape_cast %0 : vector<1x8x1024xf32> to vector<8x1024xf32>
    %c0_2 = arith.constant 0 : index
    %c0_3 = arith.constant 0 : index
    %c0_4 = arith.constant 0 : index
    %c0_5 = arith.constant 0 : index
    %2 = vector.load %arg3[%c0_2, %c0_3, %c0_4, %c0_5] : memref<1x2x32x1xf32, #tpu.memory_space<vmem>>, vector<1x2x32x1xf32>
    %3 = vector.shape_cast %2 : vector<1x2x32x1xf32> to vector<2x32x1xf32>
    %c0_6 = arith.constant 0 : index
    %c0_7 = arith.constant 0 : index
    %c0_8 = arith.constant 0 : index
    %4 = vector.load %arg4[%c0_6, %c0_7, %c0_8] : memref<2x32x8xf32, #tpu.memory_space<vmem>>, vector<1x32x8xf32>
    %5 = vector.shape_cast %4 : vector<1x32x8xf32> to vector<32x8xf32>
    %cst = arith.constant dense<0.000000e+00> : vector<32x1024xf32>
    %6 = tpu.matmul %5, %1, %cst {dimension_numbers = #tpu.dot_dimension_numbers<[1], [0], [0], [1], [0, 0, 1, 1], [], []>} : vector<32x8xf32>, vector<8x1024xf32>, vector<32x1024xf32> -> vector<32x1024xf32>
    %7 = vector.extract_strided_slice %3 {offsets = [0, 0, 0], sizes = [1, 32, 1], strides = [1, 1, 1]} : vector<2x32x1xf32> to vector<1x32x1xf32>
    %8 = vector.shape_cast %7 : vector<1x32x1xf32> to vector<32x1xf32>
    %9 = vector.broadcast %8 : vector<32x1xf32> to vector<32x1024xf32>
    %10 = arith.addf %6, %9 : vector<32x1024xf32>
    %cst_9 = arith.constant 1.000000e+02 : f32
    %11 = vector.broadcast %cst_9 : f32 to vector<32x1024xf32>
    %12 = arith.mulf %11, %10 : vector<32x1024xf32>
    %cst_10 = arith.constant 2.000000e+01 : f32
    %13 = vector.broadcast %cst_10 : f32 to vector<32x1024xf32>
    %14 = arith.cmpf ogt, %12, %13 : vector<32x1024xf32>
    %cst_11 = arith.constant 2.000000e+01 : f32
    %15 = vector.broadcast %cst_11 : f32 to vector<32x1024xf32>
    %16 = arith.minimumf %12, %15 : vector<32x1024xf32>
    %17 = math.exp %16 : vector<32x1024xf32>
    %cst_12 = arith.constant 1.000000e+00 : f32
    %18 = vector.broadcast %cst_12 : f32 to vector<32x1024xf32>
    %19 = arith.addf %18, %17 : vector<32x1024xf32>
    %20 = math.log %19 : vector<32x1024xf32>
    %cst_13 = arith.constant 1.000000e+02 : f32
    %21 = vector.broadcast %cst_13 : f32 to vector<32x1024xf32>
    %22 = arith.divf %20, %21 : vector<32x1024xf32>
    %23 = arith.select %14, %10, %22 : vector<32x1024xi1>, vector<32x1024xf32>
    %c0_14 = arith.constant 0 : index
    %c0_15 = arith.constant 0 : index
    %c0_16 = arith.constant 0 : index
    %24 = vector.load %arg5[%c0_14, %c0_15, %c0_16] : memref<7x32x32xf32, #tpu.memory_space<vmem>>, vector<1x32x32xf32>
    %25 = vector.shape_cast %24 : vector<1x32x32xf32> to vector<32x32xf32>
    %cst_17 = arith.constant dense<0.000000e+00> : vector<32x1024xf32>
    %26 = tpu.matmul %25, %23, %cst_17 {dimension_numbers = #tpu.dot_dimension_numbers<[1], [0], [0], [1], [0, 0, 1, 1], [], []>} : vector<32x32xf32>, vector<32x1024xf32>, vector<32x1024xf32> -> vector<32x1024xf32>
    %c0_18 = arith.constant 0 : index
    %c0_19 = arith.constant 0 : index
    %c0_20 = arith.constant 0 : index
    %27 = vector.load %arg6[%c0_18, %c0_19, %c0_20] : memref<7x32x1xf32, #tpu.memory_space<vmem>>, vector<1x32x1xf32>
    %28 = vector.shape_cast %27 : vector<1x32x1xf32> to vector<32x1xf32>
    %29 = vector.broadcast %28 : vector<32x1xf32> to vector<32x1024xf32>
    %30 = arith.addf %26, %29 : vector<32x1024xf32>
    %cst_21 = arith.constant 1.000000e+02 : f32
    %31 = vector.broadcast %cst_21 : f32 to vector<32x1024xf32>
    %32 = arith.mulf %31, %30 : vector<32x1024xf32>
    %cst_22 = arith.constant 2.000000e+01 : f32
    %33 = vector.broadcast %cst_22 : f32 to vector<32x1024xf32>
    %34 = arith.cmpf ogt, %32, %33 : vector<32x1024xf32>
    %cst_23 = arith.constant 2.000000e+01 : f32
    %35 = vector.broadcast %cst_23 : f32 to vector<32x1024xf32>
    %36 = arith.minimumf %32, %35 : vector<32x1024xf32>
    %37 = math.exp %36 : vector<32x1024xf32>
    %cst_24 = arith.constant 1.000000e+00 : f32
    %38 = vector.broadcast %cst_24 : f32 to vector<32x1024xf32>
    %39 = arith.addf %38, %37 : vector<32x1024xf32>
    %40 = math.log %39 : vector<32x1024xf32>
    %cst_25 = arith.constant 1.000000e+02 : f32
    %41 = vector.broadcast %cst_25 : f32 to vector<32x1024xf32>
    %42 = arith.divf %40, %41 : vector<32x1024xf32>
    %43 = arith.select %34, %30, %42 : vector<32x1024xi1>, vector<32x1024xf32>
    %c1 = arith.constant 1 : index
    %c0_26 = arith.constant 0 : index
    %c0_27 = arith.constant 0 : index
    %44 = vector.load %arg5[%c1, %c0_26, %c0_27] : memref<7x32x32xf32, #tpu.memory_space<vmem>>, vector<1x32x32xf32>
    %45 = vector.shape_cast %44 : vector<1x32x32xf32> to vector<32x32xf32>
    %cst_28 = arith.constant dense<0.000000e+00> : vector<32x1024xf32>
    %46 = tpu.matmul %45, %43, %cst_28 {dimension_numbers = #tpu.dot_dimension_numbers<[1], [0], [0], [1], [0, 0, 1, 1], [], []>} : vector<32x32xf32>, vector<32x1024xf32>, vector<32x1024xf32> -> vector<32x1024xf32>
    %c1_29 = arith.constant 1 : index
    %c0_30 = arith.constant 0 : index
    %c0_31 = arith.constant 0 : index
    %47 = vector.load %arg6[%c1_29, %c0_30, %c0_31] : memref<7x32x1xf32, #tpu.memory_space<vmem>>, vector<1x32x1xf32>
    %48 = vector.shape_cast %47 : vector<1x32x1xf32> to vector<32x1xf32>
    %49 = vector.broadcast %48 : vector<32x1xf32> to vector<32x1024xf32>
    %50 = arith.addf %46, %49 : vector<32x1024xf32>
    %cst_32 = arith.constant 1.000000e+02 : f32
    %51 = vector.broadcast %cst_32 : f32 to vector<32x1024xf32>
    %52 = arith.mulf %51, %50 : vector<32x1024xf32>
    %cst_33 = arith.constant 2.000000e+01 : f32
    %53 = vector.broadcast %cst_33 : f32 to vector<32x1024xf32>
    %54 = arith.cmpf ogt, %52, %53 : vector<32x1024xf32>
    %cst_34 = arith.constant 2.000000e+01 : f32
    %55 = vector.broadcast %cst_34 : f32 to vector<32x1024xf32>
    %56 = arith.minimumf %52, %55 : vector<32x1024xf32>
    %57 = math.exp %56 : vector<32x1024xf32>
    %cst_35 = arith.constant 1.000000e+00 : f32
    %58 = vector.broadcast %cst_35 : f32 to vector<32x1024xf32>
    %59 = arith.addf %58, %57 : vector<32x1024xf32>
    %60 = math.log %59 : vector<32x1024xf32>
    %cst_36 = arith.constant 1.000000e+02 : f32
    %61 = vector.broadcast %cst_36 : f32 to vector<32x1024xf32>
    %62 = arith.divf %60, %61 : vector<32x1024xf32>
    %63 = arith.select %54, %50, %62 : vector<32x1024xi1>, vector<32x1024xf32>
    %c2 = arith.constant 2 : index
    %c0_37 = arith.constant 0 : index
    %c0_38 = arith.constant 0 : index
    %64 = vector.load %arg5[%c2, %c0_37, %c0_38] : memref<7x32x32xf32, #tpu.memory_space<vmem>>, vector<1x32x32xf32>
    %65 = vector.shape_cast %64 : vector<1x32x32xf32> to vector<32x32xf32>
    %cst_39 = arith.constant dense<0.000000e+00> : vector<32x1024xf32>
    %66 = tpu.matmul %65, %63, %cst_39 {dimension_numbers = #tpu.dot_dimension_numbers<[1], [0], [0], [1], [0, 0, 1, 1], [], []>} : vector<32x32xf32>, vector<32x1024xf32>, vector<32x1024xf32> -> vector<32x1024xf32>
    %c2_40 = arith.constant 2 : index
    %c0_41 = arith.constant 0 : index
    %c0_42 = arith.constant 0 : index
    %67 = vector.load %arg6[%c2_40, %c0_41, %c0_42] : memref<7x32x1xf32, #tpu.memory_space<vmem>>, vector<1x32x1xf32>
    %68 = vector.shape_cast %67 : vector<1x32x1xf32> to vector<32x1xf32>
    %69 = vector.broadcast %68 : vector<32x1xf32> to vector<32x1024xf32>
    %70 = arith.addf %66, %69 : vector<32x1024xf32>
    %cst_43 = arith.constant 1.000000e+02 : f32
    %71 = vector.broadcast %cst_43 : f32 to vector<32x1024xf32>
    %72 = arith.mulf %71, %70 : vector<32x1024xf32>
    %cst_44 = arith.constant 2.000000e+01 : f32
    %73 = vector.broadcast %cst_44 : f32 to vector<32x1024xf32>
    %74 = arith.cmpf ogt, %72, %73 : vector<32x1024xf32>
    %cst_45 = arith.constant 2.000000e+01 : f32
    %75 = vector.broadcast %cst_45 : f32 to vector<32x1024xf32>
    %76 = arith.minimumf %72, %75 : vector<32x1024xf32>
    %77 = math.exp %76 : vector<32x1024xf32>
    %cst_46 = arith.constant 1.000000e+00 : f32
    %78 = vector.broadcast %cst_46 : f32 to vector<32x1024xf32>
    %79 = arith.addf %78, %77 : vector<32x1024xf32>
    %80 = math.log %79 : vector<32x1024xf32>
    %cst_47 = arith.constant 1.000000e+02 : f32
    %81 = vector.broadcast %cst_47 : f32 to vector<32x1024xf32>
    %82 = arith.divf %80, %81 : vector<32x1024xf32>
    %83 = arith.select %74, %70, %82 : vector<32x1024xi1>, vector<32x1024xf32>
    %c3 = arith.constant 3 : index
    %c0_48 = arith.constant 0 : index
    %c0_49 = arith.constant 0 : index
    %84 = vector.load %arg5[%c3, %c0_48, %c0_49] : memref<7x32x32xf32, #tpu.memory_space<vmem>>, vector<1x32x32xf32>
    %85 = vector.shape_cast %84 : vector<1x32x32xf32> to vector<32x32xf32>
    %cst_50 = arith.constant dense<0.000000e+00> : vector<32x1024xf32>
    %86 = tpu.matmul %85, %83, %cst_50 {dimension_numbers = #tpu.dot_dimension_numbers<[1], [0], [0], [1], [0, 0, 1, 1], [], []>} : vector<32x32xf32>, vector<32x1024xf32>, vector<32x1024xf32> -> vector<32x1024xf32>
    %c1_51 = arith.constant 1 : index
    %c0_52 = arith.constant 0 : index
    %c0_53 = arith.constant 0 : index
    %87 = vector.load %arg4[%c1_51, %c0_52, %c0_53] : memref<2x32x8xf32, #tpu.memory_space<vmem>>, vector<1x32x8xf32>
    %88 = vector.shape_cast %87 : vector<1x32x8xf32> to vector<32x8xf32>
    %cst_54 = arith.constant dense<0.000000e+00> : vector<32x1024xf32>
    %89 = tpu.matmul %88, %1, %cst_54 {dimension_numbers = #tpu.dot_dimension_numbers<[1], [0], [0], [1], [0, 0, 1, 1], [], []>} : vector<32x8xf32>, vector<8x1024xf32>, vector<32x1024xf32> -> vector<32x1024xf32>
    %90 = arith.addf %86, %89 : vector<32x1024xf32>
    %91 = vector.extract_strided_slice %3 {offsets = [1, 0, 0], sizes = [1, 32, 1], strides = [1, 1, 1]} : vector<2x32x1xf32> to vector<1x32x1xf32>
    %92 = vector.shape_cast %91 : vector<1x32x1xf32> to vector<32x1xf32>
    %93 = vector.broadcast %92 : vector<32x1xf32> to vector<32x1024xf32>
    %94 = arith.addf %90, %93 : vector<32x1024xf32>
    %cst_55 = arith.constant 1.000000e+02 : f32
    %95 = vector.broadcast %cst_55 : f32 to vector<32x1024xf32>
    %96 = arith.mulf %95, %94 : vector<32x1024xf32>
    %cst_56 = arith.constant 2.000000e+01 : f32
    %97 = vector.broadcast %cst_56 : f32 to vector<32x1024xf32>
    %98 = arith.cmpf ogt, %96, %97 : vector<32x1024xf32>
    %cst_57 = arith.constant 2.000000e+01 : f32
    %99 = vector.broadcast %cst_57 : f32 to vector<32x1024xf32>
    %100 = arith.minimumf %96, %99 : vector<32x1024xf32>
    %101 = math.exp %100 : vector<32x1024xf32>
    %cst_58 = arith.constant 1.000000e+00 : f32
    %102 = vector.broadcast %cst_58 : f32 to vector<32x1024xf32>
    %103 = arith.addf %102, %101 : vector<32x1024xf32>
    %104 = math.log %103 : vector<32x1024xf32>
    %cst_59 = arith.constant 1.000000e+02 : f32
    %105 = vector.broadcast %cst_59 : f32 to vector<32x1024xf32>
    %106 = arith.divf %104, %105 : vector<32x1024xf32>
    %107 = arith.select %98, %94, %106 : vector<32x1024xi1>, vector<32x1024xf32>
    %c4 = arith.constant 4 : index
    %c0_60 = arith.constant 0 : index
    %c0_61 = arith.constant 0 : index
    %108 = vector.load %arg5[%c4, %c0_60, %c0_61] : memref<7x32x32xf32, #tpu.memory_space<vmem>>, vector<1x32x32xf32>
    %109 = vector.shape_cast %108 : vector<1x32x32xf32> to vector<32x32xf32>
    %cst_62 = arith.constant dense<0.000000e+00> : vector<32x1024xf32>
    %110 = tpu.matmul %109, %107, %cst_62 {dimension_numbers = #tpu.dot_dimension_numbers<[1], [0], [0], [1], [0, 0, 1, 1], [], []>} : vector<32x32xf32>, vector<32x1024xf32>, vector<32x1024xf32> -> vector<32x1024xf32>
    %c4_63 = arith.constant 4 : index
    %c0_64 = arith.constant 0 : index
    %c0_65 = arith.constant 0 : index
    %111 = vector.load %arg6[%c4_63, %c0_64, %c0_65] : memref<7x32x1xf32, #tpu.memory_space<vmem>>, vector<1x32x1xf32>
    %112 = vector.shape_cast %111 : vector<1x32x1xf32> to vector<32x1xf32>
    %113 = vector.broadcast %112 : vector<32x1xf32> to vector<32x1024xf32>
    %114 = arith.addf %110, %113 : vector<32x1024xf32>
    %cst_66 = arith.constant 1.000000e+02 : f32
    %115 = vector.broadcast %cst_66 : f32 to vector<32x1024xf32>
    %116 = arith.mulf %115, %114 : vector<32x1024xf32>
    %cst_67 = arith.constant 2.000000e+01 : f32
    %117 = vector.broadcast %cst_67 : f32 to vector<32x1024xf32>
    %118 = arith.cmpf ogt, %116, %117 : vector<32x1024xf32>
    %cst_68 = arith.constant 2.000000e+01 : f32
    %119 = vector.broadcast %cst_68 : f32 to vector<32x1024xf32>
    %120 = arith.minimumf %116, %119 : vector<32x1024xf32>
    %121 = math.exp %120 : vector<32x1024xf32>
    %cst_69 = arith.constant 1.000000e+00 : f32
    %122 = vector.broadcast %cst_69 : f32 to vector<32x1024xf32>
    %123 = arith.addf %122, %121 : vector<32x1024xf32>
    %124 = math.log %123 : vector<32x1024xf32>
    %cst_70 = arith.constant 1.000000e+02 : f32
    %125 = vector.broadcast %cst_70 : f32 to vector<32x1024xf32>
    %126 = arith.divf %124, %125 : vector<32x1024xf32>
    %127 = arith.select %118, %114, %126 : vector<32x1024xi1>, vector<32x1024xf32>
    %c5 = arith.constant 5 : index
    %c0_71 = arith.constant 0 : index
    %c0_72 = arith.constant 0 : index
    %128 = vector.load %arg5[%c5, %c0_71, %c0_72] : memref<7x32x32xf32, #tpu.memory_space<vmem>>, vector<1x32x32xf32>
    %129 = vector.shape_cast %128 : vector<1x32x32xf32> to vector<32x32xf32>
    %cst_73 = arith.constant dense<0.000000e+00> : vector<32x1024xf32>
    %130 = tpu.matmul %129, %127, %cst_73 {dimension_numbers = #tpu.dot_dimension_numbers<[1], [0], [0], [1], [0, 0, 1, 1], [], []>} : vector<32x32xf32>, vector<32x1024xf32>, vector<32x1024xf32> -> vector<32x1024xf32>
    %c5_74 = arith.constant 5 : index
    %c0_75 = arith.constant 0 : index
    %c0_76 = arith.constant 0 : index
    %131 = vector.load %arg6[%c5_74, %c0_75, %c0_76] : memref<7x32x1xf32, #tpu.memory_space<vmem>>, vector<1x32x1xf32>
    %132 = vector.shape_cast %131 : vector<1x32x1xf32> to vector<32x1xf32>
    %133 = vector.broadcast %132 : vector<32x1xf32> to vector<32x1024xf32>
    %134 = arith.addf %130, %133 : vector<32x1024xf32>
    %cst_77 = arith.constant 1.000000e+02 : f32
    %135 = vector.broadcast %cst_77 : f32 to vector<32x1024xf32>
    %136 = arith.mulf %135, %134 : vector<32x1024xf32>
    %cst_78 = arith.constant 2.000000e+01 : f32
    %137 = vector.broadcast %cst_78 : f32 to vector<32x1024xf32>
    %138 = arith.cmpf ogt, %136, %137 : vector<32x1024xf32>
    %cst_79 = arith.constant 2.000000e+01 : f32
    %139 = vector.broadcast %cst_79 : f32 to vector<32x1024xf32>
    %140 = arith.minimumf %136, %139 : vector<32x1024xf32>
    %141 = math.exp %140 : vector<32x1024xf32>
    %cst_80 = arith.constant 1.000000e+00 : f32
    %142 = vector.broadcast %cst_80 : f32 to vector<32x1024xf32>
    %143 = arith.addf %142, %141 : vector<32x1024xf32>
    %144 = math.log %143 : vector<32x1024xf32>
    %cst_81 = arith.constant 1.000000e+02 : f32
    %145 = vector.broadcast %cst_81 : f32 to vector<32x1024xf32>
    %146 = arith.divf %144, %145 : vector<32x1024xf32>
    %147 = arith.select %138, %134, %146 : vector<32x1024xi1>, vector<32x1024xf32>
    %c6 = arith.constant 6 : index
    %c0_82 = arith.constant 0 : index
    %c0_83 = arith.constant 0 : index
    %148 = vector.load %arg5[%c6, %c0_82, %c0_83] : memref<7x32x32xf32, #tpu.memory_space<vmem>>, vector<1x32x32xf32>
    %149 = vector.shape_cast %148 : vector<1x32x32xf32> to vector<32x32xf32>
    %cst_84 = arith.constant dense<0.000000e+00> : vector<32x1024xf32>
    %150 = tpu.matmul %149, %147, %cst_84 {dimension_numbers = #tpu.dot_dimension_numbers<[1], [0], [0], [1], [0, 0, 1, 1], [], []>} : vector<32x32xf32>, vector<32x1024xf32>, vector<32x1024xf32> -> vector<32x1024xf32>
    %c6_85 = arith.constant 6 : index
    %c0_86 = arith.constant 0 : index
    %c0_87 = arith.constant 0 : index
    %151 = vector.load %arg6[%c6_85, %c0_86, %c0_87] : memref<7x32x1xf32, #tpu.memory_space<vmem>>, vector<1x32x1xf32>
    %152 = vector.shape_cast %151 : vector<1x32x1xf32> to vector<32x1xf32>
    %153 = vector.broadcast %152 : vector<32x1xf32> to vector<32x1024xf32>
    %154 = arith.addf %150, %153 : vector<32x1024xf32>
    %cst_88 = arith.constant 1.000000e+02 : f32
    %155 = vector.broadcast %cst_88 : f32 to vector<32x1024xf32>
    %156 = arith.mulf %155, %154 : vector<32x1024xf32>
    %cst_89 = arith.constant 2.000000e+01 : f32
    %157 = vector.broadcast %cst_89 : f32 to vector<32x1024xf32>
    %158 = arith.cmpf ogt, %156, %157 : vector<32x1024xf32>
    %cst_90 = arith.constant 2.000000e+01 : f32
    %159 = vector.broadcast %cst_90 : f32 to vector<32x1024xf32>
    %160 = arith.minimumf %156, %159 : vector<32x1024xf32>
    %161 = math.exp %160 : vector<32x1024xf32>
    %cst_91 = arith.constant 1.000000e+00 : f32
    %162 = vector.broadcast %cst_91 : f32 to vector<32x1024xf32>
    %163 = arith.addf %162, %161 : vector<32x1024xf32>
    %164 = math.log %163 : vector<32x1024xf32>
    %cst_92 = arith.constant 1.000000e+02 : f32
    %165 = vector.broadcast %cst_92 : f32 to vector<32x1024xf32>
    %166 = arith.divf %164, %165 : vector<32x1024xf32>
    %167 = arith.select %158, %154, %166 : vector<32x1024xi1>, vector<32x1024xf32>
    %c0_93 = arith.constant 0 : index
    %c0_94 = arith.constant 0 : index
    %168 = vector.load %arg7[%c0_93, %c0_94] : memref<8x32xf32, #tpu.memory_space<vmem>>, vector<8x32xf32>
    %cst_95 = arith.constant dense<0.000000e+00> : vector<8x1024xf32>
    %169 = tpu.matmul %168, %167, %cst_95 {dimension_numbers = #tpu.dot_dimension_numbers<[1], [0], [0], [1], [0, 0, 1, 1], [], []>} : vector<8x32xf32>, vector<32x1024xf32>, vector<8x1024xf32> -> vector<8x1024xf32>
    %c0_96 = arith.constant 0 : index
    %c0_97 = arith.constant 0 : index
    %170 = vector.load %arg8[%c0_96, %c0_97] : memref<8x1xf32, #tpu.memory_space<vmem>>, vector<8x1xf32>
    %171 = vector.broadcast %170 : vector<8x1xf32> to vector<8x1024xf32>
    %172 = arith.addf %169, %171 : vector<8x1024xf32>
    %c0_98 = arith.constant 0 : index
    %c0_99 = arith.constant 0 : index
    %c0_100 = arith.constant 0 : index
    %173 = vector.load %arg9[%c0_98, %c0_99, %c0_100] : memref<1x8x1024xf32, #tpu.memory_space<vmem>>, vector<1x8x1024xf32>
    %174 = vector.shape_cast %173 : vector<1x8x1024xf32> to vector<8x1024xf32>
    %175 = vector.shape_cast %172 : vector<8x1024xf32> to vector<1x8x1024xf32>
    tpu.vector_store %arg9[%c0_98, %c0_99, %c0_100], %175 {strides = array<i32>} : memref<1x8x1024xf32, #tpu.memory_space<vmem>>, vector<1x8x1024xf32>,
    return
  }
  func.func @transform_0(%arg0: i32, %arg1: i32) -> (i32, i32, i32) {
    %c0_i32 = arith.constant 0 : i32
    %c0_i32_0 = arith.constant 0 : i32
    return %arg0, %c0_i32, %arg1 : i32, i32, i32
  }
  func.func @transform_1(%arg0: i32, %arg1: i32) -> (i32, i32, i32, i32) {
    %c0_i32 = arith.constant 0 : i32
    %c0_i32_0 = arith.constant 0 : i32
    %c0_i32_1 = arith.constant 0 : i32
    %c0_i32_2 = arith.constant 0 : i32
    return %arg0, %c0_i32, %c0_i32_0, %c0_i32_1 : i32, i32, i32, i32
  }
  func.func @transform_2(%arg0: i32, %arg1: i32) -> (i32, i32, i32) {
    %c0_i32 = arith.constant 0 : i32
    %c0_i32_0 = arith.constant 0 : i32
    %c0_i32_1 = arith.constant 0 : i32
    %c0_i32_2 = arith.constant 0 : i32
    return %c0_i32, %c0_i32_0, %c0_i32_1 : i32, i32, i32
  }
  func.func @transform_3(%arg0: i32, %arg1: i32) -> (i32, i32, i32) {
    %c0_i32 = arith.constant 0 : i32
    %c0_i32_0 = arith.constant 0 : i32
    %c0_i32_1 = arith.constant 0 : i32
    %c0_i32_2 = arith.constant 0 : i32
    return %c0_i32, %c0_i32_0, %c0_i32_1 : i32, i32, i32
  }
  func.func @transform_4(%arg0: i32, %arg1: i32) -> (i32, i32, i32) {
    %c0_i32 = arith.constant 0 : i32
    %c0_i32_0 = arith.constant 0 : i32
    %c0_i32_1 = arith.constant 0 : i32
    %c0_i32_2 = arith.constant 0 : i32
    return %c0_i32, %c0_i32_0, %c0_i32_1 : i32, i32, i32
  }
  func.func @transform_5(%arg0: i32, %arg1: i32) -> (i32, i32) {
    %c0_i32 = arith.constant 0 : i32
    %c0_i32_0 = arith.constant 0 : i32
    %c0_i32_1 = arith.constant 0 : i32
    return %c0_i32, %c0_i32_0 : i32, i32
  }
  func.func @transform_6(%arg0: i32, %arg1: i32) -> (i32, i32) {
    %c0_i32 = arith.constant 0 : i32
    %c0_i32_0 = arith.constant 0 : i32
    %c0_i32_1 = arith.constant 0 : i32
    return %c0_i32, %c0_i32_0 : i32, i32
  }
  func.func @transform_7(%arg0: i32, %arg1: i32) -> (i32, i32, i32) {
    %c0_i32 = arith.constant 0 : i32
    %c0_i32_0 = arith.constant 0 : i32
    return %arg0, %c0_i32, %arg1 : i32, i32, i32
  }
}

</mosaic_0001>

<llo_original>
// kernel: tpu_custom_call.1
$region0: #{tpu_custom_call.1}
  #allocation0 [shape = 'u32[]', space=smem, size = 0x4, offset = 0x4, fixed_abs, tag = 'smem constant byte address 0x4 - core index']
  #allocation1 [shape = 'u32[144,128]{1,0:T(1,128)}', space=vmem, size = 0x12000, scoped, tag = 'internal scratch']
  %s0 = inlined_call_operand.vmem [shape: f32[2,8,2048], index: 0, kind: input, shape index: {}]
  %s1 = inlined_call_operand.vmem [shape: f32[2,2,32,1], index: 1, kind: input, shape index: {}]
  %s2 = inlined_call_operand.vmem [shape: f32[2,32,8], index: 2, kind: input, shape index: {}]
  %s3 = inlined_call_operand.hbm [shape: f32[7,32,32], index: 3, kind: input, shape index: {}]
  %s4 = inlined_call_operand.vmem [shape: f32[7,32,1], index: 4, kind: input, shape index: {}]
  %s5 = inlined_call_operand.vmem [shape: f32[8,32], index: 5, kind: input, shape index: {}]
  %s6 = inlined_call_operand.vmem [shape: f32[8,1], index: 6, kind: input, shape index: {}]
  %s7 = inlined_call_operand.hbm [shape: f32[2,8,2048], index: 7, kind: output, shape index: {}]
  %s8 = sld [smem:[#allocation0]]
  $region65: #{tpu_custom_call.1} parent=0
    _
  %s10 = ssub.s32 1, %s8
  %s11 = scalar_select 0, %s10, %s8
  $region1: #{tpu_custom_call.1} parent=0
    #allocation2 [shape = 'u8[114688]{0}', space=vmem, size = 0x1c000, scoped, tag = 'input window, operand 3, single buffered']
    #allocation3 [shape = 's32[2]{0}', space=sflag, size = 0x8, scoped, tag = 'scoped memory for tpu_custom_call.1']
    #allocation4 [shape = 's32[2]{0}', space=sflag, size = 0x8, scoped, tag = 'scoped memory for tpu_custom_call.1']
    #allocation5 [shape = 'u8[65536]{0}', space=vmem, size = 0x10000, scoped, tag = 'output window, operand 0']
    %12 = vsyncpa [#allocation3], 0
    %13 = vsyncpa [#allocation4], 0
    %s14 = scalar_lea.sflag [#allocation4], 1
    %15 = vsyncpa %s14, 0
    loop: start=0, step=1, limit=6
    $region2: #{tpu_custom_call.1} parent=1 // loop_pre_header
      _
    $region3: #{tpu_custom_call.1} parent=1 // loop_header
      %s17 = sphi 0, %s21
      %p18 = scmp.ge.s32.totalorder %s17, 6
      %s24 = sphi 0, %s36
      %s25 = sphi 0, %s32
      %s26 = sphi 0, %s24
      %s27 = sphi 0, %s25
      %s28 = sphi 0, %s26
      %s29 = sphi 0, %s27
      %s41 = sphi 0, %s43
      %s44 = sphi 0, %s41
      %s45 = sphi 0, %s44
      %s61 = sphi 0, %s45
      %s67 = sphi 0, %s69
      %s70 = sphi 0, %s67
      %s71 = sphi 0, %s70
      %s87 = sphi 0, %s71
      %s91 = sphi 0, %s91
      %s93 = sphi 0, %s91
      %s94 = sphi 0, %s93
      %s108 = sphi 0, %s94
      %s112 = sphi 0, %s112
      %s114 = sphi 0, %s112
      %s115 = sphi 0, %s114
      %s129 = sphi 0, %s115
      %s133 = sphi 0, %s133
      %s135 = sphi 0, %s133
      %s136 = sphi 0, %s135
      %s150 = sphi 0, %s136
      %s154 = sphi 0, %s154
      %s156 = sphi 0, %s154
      %s157 = sphi 0, %s156
      %s171 = sphi 0, %s157
      %s175 = sphi 0, %s175
      %s177 = sphi 0, %s175
      %s178 = sphi 0, %s177
      %s192 = sphi 0, %s178
      %s200 = sphi 0, %s202
      %s203 = sphi 0, %s200
      %s204 = sphi 0, %s203
      %s220 = sphi 0, %s204
    $region4: #{tpu_custom_call.1} parent=1 // loop_header_branch
      %20 = sbr.rel (%p18) target = $region8
    $region5: #{tpu_custom_call.1} parent=1 // loop_body
      %s22 = ssub.s32 %s17, 1
      %s23 = ssub.s32 %s17, 2
      %s30 = sadd.s32 1, %s25
      %p31 = scmp.ge.s32.totalorder %s30, 2
      %s32 = scalar_select %p31, 0, %s30
      %s33 = sadd.s32 1, %s24
      %s34 = scalar_select %p31, %s33, %s24
      %p35 = scmp.ge.s32.totalorder %s34, 2
      %s36 = scalar_select %p35, 0, %s34
      %s37 = ssub.s32 %s24, %s36
      %s38 = ssub.s32 %s25, %s32
      %s39 = sor.u32 %s37, %s38
      %p40 = scmp.eq.s32.totalorder %s39, 0
      %s42 = sadd.s32 %s41, 1
      %s43 = scalar_select %p40, %s41, %s42
      %p46 = pneg %p40
      %p47 = scmp.eq.s32.totalorder %s17, 3
      %p48 = por %p46, %p47
      %p49 = scmp.ne.s32.totalorder %s41, %s44
      %p50 = scmp.eq.s32.totalorder %s17, 0
      %p51 = por %p49, %p50
      %p52 = scmp.ne.s32.totalorder %s41, %s44
      %p53 = scmp.eq.s32.totalorder %s22, 3
      %p54 = por %p52, %p53
      %p55 = scmp.ne.s32.totalorder %s44, %s45
      %p56 = scmp.eq.s32.totalorder %s22, 0
      %p57 = por %p55, %p56
      %p58 = scmp.ne.s32.totalorder %s44, %s45
      %p59 = scmp.eq.s32.totalorder %s23, 3
      %p60 = por %p58, %p59
      %p62 = scmp.ne.s32.totalorder %s45, %s61
      %p63 = scmp.eq.s32.totalorder %s23, 0
      %p64 = por %p62, %p63
      %s65 = ssub.s32 %s24, %s36
      %p66 = scmp.eq.s32.totalorder %s65, 0
      %s68 = sadd.s32 %s67, 1
      %s69 = scalar_select %p66, %s67, %s68
      %p72 = pneg %p66
      %p73 = scmp.eq.s32.totalorder %s17, 3
      %p74 = por %p72, %p73
      %p75 = scmp.ne.s32.totalorder %s67, %s70
      %p76 = scmp.eq.s32.totalorder %s17, 0
      %p77 = por %p75, %p76
      %p78 = scmp.ne.s32.totalorder %s67, %s70
      %p79 = scmp.eq.s32.totalorder %s22, 3
      %p80 = por %p78, %p79
      %p81 = scmp.ne.s32.totalorder %s70, %s71
      %p82 = scmp.eq.s32.totalorder %s22, 0
      %p83 = por %p81, %p82
      %p84 = scmp.ne.s32.totalorder %s70, %s71
      %p85 = scmp.eq.s32.totalorder %s23, 3
      %p86 = por %p84, %p85
      %p88 = scmp.ne.s32.totalorder %s71, %s87
      %p89 = scmp.eq.s32.totalorder %s23, 0
      %p90 = por %p88, %p89
      %s92 = sadd.s32 %s91, 1
      %p95 = scmp.eq.s32.totalorder %s17, 3
      %p96 = scmp.ne.s32.totalorder %s91, %s93
      %p97 = scmp.eq.s32.totalorder %s17, 0
      %p98 = por %p96, %p97
      %p99 = scmp.ne.s32.totalorder %s91, %s93
      %p100 = scmp.eq.s32.totalorder %s22, 3
      %p101 = por %p99, %p100
      %p102 = scmp.ne.s32.totalorder %s93, %s94
      %p103 = scmp.eq.s32.totalorder %s22, 0
      %p104 = por %p102, %p103
      %p105 = scmp.ne.s32.totalorder %s93, %s94
      %p106 = scmp.eq.s32.totalorder %s23, 3
      %p107 = por %p105, %p106
      %p109 = scmp.ne.s32.totalorder %s94, %s108
      %p110 = scmp.eq.s32.totalorder %s23, 0
      %p111 = por %p109, %p110
      %s113 = sadd.s32 %s112, 1
      %p116 = scmp.eq.s32.totalorder %s17, 3
      %p117 = scmp.ne.s32.totalorder %s112, %s114
      %p118 = scmp.eq.s32.totalorder %s17, 0
      %p119 = por %p117, %p118
      %p120 = scmp.ne.s32.totalorder %s112, %s114
      %p121 = scmp.eq.s32.totalorder %s22, 3
      %p122 = por %p120, %p121
      %p123 = scmp.ne.s32.totalorder %s114, %s115
      %p124 = scmp.eq.s32.totalorder %s22, 0
      %p125 = por %p123, %p124
      %p126 = scmp.ne.s32.totalorder %s114, %s115
      %p127 = scmp.eq.s32.totalorder %s23, 3
      %p128 = por %p126, %p127
      %p130 = scmp.ne.s32.totalorder %s115, %s129
      %p131 = scmp.eq.s32.totalorder %s23, 0
      %p132 = por %p130, %p131
      %s134 = sadd.s32 %s133, 1
      %p137 = scmp.eq.s32.totalorder %s17, 3
      %p138 = scmp.ne.s32.totalorder %s133, %s135
      %p139 = scmp.eq.s32.totalorder %s17, 0
      %p140 = por %p138, %p139
      %p141 = scmp.ne.s32.totalorder %s133, %s135
      %p142 = scmp.eq.s32.totalorder %s22, 3
      %p143 = por %p141, %p142
      %p144 = scmp.ne.s32.totalorder %s135, %s136
      %p145 = scmp.eq.s32.totalorder %s22, 0
      %p146 = por %p144, %p145
      %p147 = scmp.ne.s32.totalorder %s135, %s136
      %p148 = scmp.eq.s32.totalorder %s23, 3
      %p149 = por %p147, %p148
      %p151 = scmp.ne.s32.totalorder %s136, %s150
      %p152 = scmp.eq.s32.totalorder %s23, 0
      %p153 = por %p151, %p152
      %s155 = sadd.s32 %s154, 1
      %p158 = scmp.eq.s32.totalorder %s17, 3
      %p159 = scmp.ne.s32.totalorder %s154, %s156
      %p160 = scmp.eq.s32.totalorder %s17, 0
      %p161 = por %p159, %p160
      %p162 = scmp.ne.s32.totalorder %s154, %s156
      %p163 = scmp.eq.s32.totalorder %s22, 3
      %p164 = por %p162, %p163
      %p165 = scmp.ne.s32.totalorder %s156, %s157
      %p166 = scmp.eq.s32.totalorder %s22, 0
      %p167 = por %p165, %p166
      %p168 = scmp.ne.s32.totalorder %s156, %s157
      %p169 = scmp.eq.s32.totalorder %s23, 3
      %p170 = por %p168, %p169
      %p172 = scmp.ne.s32.totalorder %s157, %s171
      %p173 = scmp.eq.s32.totalorder %s23, 0
      %p174 = por %p172, %p173
      %s176 = sadd.s32 %s175, 1
      %p179 = scmp.eq.s32.totalorder %s17, 3
      %p180 = scmp.ne.s32.totalorder %s175, %s177
      %p181 = scmp.eq.s32.totalorder %s17, 0
      %p182 = por %p180, %p181
      %p183 = scmp.ne.s32.totalorder %s175, %s177
      %p184 = scmp.eq.s32.totalorder %s22, 3
      %p185 = por %p183, %p184
      %p186 = scmp.ne.s32.totalorder %s177, %s178
      %p187 = scmp.eq.s32.totalorder %s22, 0
      %p188 = por %p186, %p187
      %p189 = scmp.ne.s32.totalorder %s177, %s178
      %p190 = scmp.eq.s32.totalorder %s23, 3
      %p191 = por %p189, %p190
      %p193 = scmp.ne.s32.totalorder %s178, %s192
      %p194 = scmp.eq.s32.totalorder %s23, 0
      %p195 = por %p193, %p194
      %s196 = ssub.s32 %s24, %s36
      %s197 = ssub.s32 %s25, %s32
      %s198 = sor.u32 %s196, %s197
      %p199 = scmp.eq.s32.totalorder %s198, 0
      %s201 = sadd.s32 %s200, 1
      %s202 = scalar_select %p199, %s200, %s201
      %p205 = pneg %p199
      %p206 = scmp.eq.s32.totalorder %s17, 3
      %p207 = por %p205, %p206
      %p208 = scmp.ne.s32.totalorder %s200, %s203
      %p209 = scmp.eq.s32.totalorder %s17, 0
      %p210 = por %p208, %p209
      %p211 = scmp.ne.s32.totalorder %s200, %s203
      %p212 = scmp.eq.s32.totalorder %s22, 3
      %p213 = por %p211, %p212
      %p214 = scmp.ne.s32.totalorder %s203, %s204
      %p215 = scmp.eq.s32.totalorder %s22, 0
      %p216 = por %p214, %p215
      %p217 = scmp.ne.s32.totalorder %s203, %s204
      %p218 = scmp.eq.s32.totalorder %s23, 3
      %p219 = por %p217, %p218
      %p221 = scmp.ne.s32.totalorder %s204, %s220
      %p222 = scmp.eq.s32.totalorder %s23, 0
      %p223 = por %p221, %p222
      %p224 = scmp.le.s32.totalorder 1, %s17
      %p225 = scmp.lt.s32.totalorder %s17, 5
      %p226 = pnand %p224, %p225
      %p227 = pneg %p226
      // Predicated region
      $region9: #{tpu_custom_call.1} parent=5 // pred_check
        _
      $region10: #{tpu_custom_call.1} parent=5 // pred_check_branch
        %229 = sbr.rel (%p226) target = $region12
      $region11: #{tpu_custom_call.1} parent=5 // pred_region
        %s230 = ssub.s32 %s17, 1
        // Predicated region
        $region13: #{tpu_custom_call.1} parent=11 // pred_check
          %p231 = pneg %p104
        $region14: #{tpu_custom_call.1} parent=11 // pred_check_branch
          %233 = sbr.rel (%p231) target = $region16
        $region15: #{tpu_custom_call.1} parent=11 // pred_region
          _
        $region16: #{tpu_custom_call.1} parent=11 // pred_fallthru
          _
        // Predicated region
        $region17: #{tpu_custom_call.1} parent=11 // pred_check
          %p234 = pneg %p125
        $region18: #{tpu_custom_call.1} parent=11 // pred_check_branch
          %236 = sbr.rel (%p234) target = $region20
        $region19: #{tpu_custom_call.1} parent=11 // pred_region
          %s238 = ssub.s32 3584, 3584
          %239 = vsyncadd [#allocation3], %s238
          %s240 = sshll.u32 [#allocation2], 4
          %s241 = int_to_ptr.vmem [resolvable:$true] %s240
          %246 = dma.hbm_to_vmem [thread:$0]  %s3, 3584, %s241, [#allocation3], 128, 128, 8
        $region20: #{tpu_custom_call.1} parent=11 // pred_fallthru
          _
        // Predicated region
        $region21: #{tpu_custom_call.1} parent=11 // pred_check
          %p247 = pneg %p146
        $region22: #{tpu_custom_call.1} parent=11 // pred_check_branch
          %249 = sbr.rel (%p247) target = $region24
        $region23: #{tpu_custom_call.1} parent=11 // pred_region
          _
        $region24: #{tpu_custom_call.1} parent=11 // pred_fallthru
          _
        // Predicated region
        $region25: #{tpu_custom_call.1} parent=11 // pred_check
          %p250 = pneg %p167
        $region26: #{tpu_custom_call.1} parent=11 // pred_check_branch
          %252 = sbr.rel (%p250) target = $region28
        $region27: #{tpu_custom_call.1} parent=11 // pred_region
          _
        $region28: #{tpu_custom_call.1} parent=11 // pred_fallthru
          _
        // Predicated region
        $region29: #{tpu_custom_call.1} parent=11 // pred_check
          %p253 = pneg %p188
        $region30: #{tpu_custom_call.1} parent=11 // pred_check_branch
          %255 = sbr.rel (%p253) target = $region32
        $region31: #{tpu_custom_call.1} parent=11 // pred_region
          _
        $region32: #{tpu_custom_call.1} parent=11 // pred_fallthru
          _
      $region12: #{tpu_custom_call.1} parent=5 // pred_fallthru
        _
      %p256 = scmp.lt.s32.totalorder %s17, 4
      // Predicated region
      $region33: #{tpu_custom_call.1} parent=5 // pred_check
        %p257 = pneg %p256
      $region34: #{tpu_custom_call.1} parent=5 // pred_check_branch
        %259 = sbr.rel (%p257) target = $region36
      $region35: #{tpu_custom_call.1} parent=5 // pred_region
        // Predicated region
        $region37: #{tpu_custom_call.1} parent=35 // pred_check
          %p260 = pneg %p51
        $region38: #{tpu_custom_call.1} parent=35 // pred_check_branch
          %262 = sbr.rel (%p260) target = $region40
        $region39: #{tpu_custom_call.1} parent=35 // pred_region
          %s263 = smul.u32 8, %s25
          %p264 = scmp.lt.s32.totalorder %s24, 1
          %s265 = scalar_select %p264, %s24, 1
          %p266 = scmp.lt.s32.totalorder %s263, 15
          %s267 = scalar_select %p266, %s263, 15
          %s268 = smul.addr %s265, 16
          %s269 = sadd.s32 %s267, %s268
          %s270 = smul.addr %s269, 8
          %s271 = scalar_lea.vmem %s0, %s270
          %s272 = smul.u32 8, %s25
        $region40: #{tpu_custom_call.1} parent=35 // pred_fallthru
          _
        // Predicated region
        $region41: #{tpu_custom_call.1} parent=35 // pred_check
          %p273 = pneg %p77
        $region42: #{tpu_custom_call.1} parent=35 // pred_check_branch
          %275 = sbr.rel (%p273) target = $region44
        $region43: #{tpu_custom_call.1} parent=35 // pred_region
          %p276 = scmp.lt.s32.totalorder %s24, 1
          %s277 = scalar_select %p276, %s24, 1
          %s278 = smul.addr %s277, 8
          %s279 = smul.addr %s278, 8
          %s280 = scalar_lea.vmem %s1, %s279
        $region44: #{tpu_custom_call.1} parent=35 // pred_fallthru
          _
      $region36: #{tpu_custom_call.1} parent=5 // pred_fallthru
        _
      %p281 = scmp.le.s32.totalorder 1, %s17
      %p282 = scmp.lt.s32.totalorder %s17, 5
      %p283 = pnand %p281, %p282
      %p284 = pneg %p283
      // Predicated region
      $region45: #{tpu_custom_call.1} parent=5 // pred_check
        _
      $region46: #{tpu_custom_call.1} parent=5 // pred_check_branch
        %286 = sbr.rel (%p283) target = $region48
      $region47: #{tpu_custom_call.1} parent=5 // pred_region
        %s287 = ssub.s32 %s17, 1
        // Predicated region
        $region49: #{tpu_custom_call.1} parent=47 // pred_check
          %p288 = pneg %p125
        $region50: #{tpu_custom_call.1} parent=47 // pred_check_branch
          %290 = sbr.rel (%p288) target = $region52
        $region51: #{tpu_custom_call.1} parent=47 // pred_region
          %291 = dma.done [#allocation3], 3584
        $region52: #{tpu_custom_call.1} parent=47 // pred_fallthru
          _
        %s292 = smul.u32 8, %s27
        %p293 = scmp.lt.s32.totalorder %s26, 1
        %s294 = scalar_select %p293, %s26, 1
        %p295 = scmp.lt.s32.totalorder %s292, 15
        %s296 = scalar_select %p295, %s292, 15
        %s297 = smul.addr %s294, 16
        %s298 = sadd.s32 %s296, %s297
        %s299 = smul.addr %s298, 8
        %s300 = scalar_lea.vmem %s0, %s299
        %p301 = pneg %p57
        %p302 = pneg %p54
        %p303 = scmp.lt.s32.totalorder %s26, 1
        %s304 = scalar_select %p303, %s26, 1
        %s305 = smul.addr %s304, 8
        %s306 = smul.addr %s305, 8
        %s307 = scalar_lea.vmem %s1, %s306
        %p308 = pneg %p83
        %p309 = pneg %p80
        %p310 = pneg %p104
        %p311 = pneg %p101
        %p312 = pneg %p125
        %p313 = pneg %p122
        %p314 = pneg %p146
        %p315 = pneg %p143
        %p316 = pneg %p167
        %p317 = pneg %p164
        %p318 = pneg %p188
        %p319 = pneg %p185
        %p320 = pneg %p216
        %p321 = pneg %p213
        %s322 = sand.u32 %s203, 1
        %s323 = scalar_lea.sflag [#allocation4], %s322
        %s324 = sand.u32 %s203, 1
        %s325 = smul.addr %s324, 64
        %s326 = scalar_lea.vmem [#allocation5], %s325
        %s327 = smul.u32 8, %s27
        %p328 = scmp.lt.s32.totalorder %s26, 1
        %s329 = scalar_select %p328, %s26, 1
        %p330 = scmp.lt.s32.totalorder %s327, 15
        %s331 = scalar_select %p330, %s327, 15
        %s332 = smul.addr %s329, 16
        %s333 = sadd.s32 %s331, %s332
        %s334 = smul.addr %s333, 8
        %s335 = scalar_lea.vmem %s0, %s334
        %s336 = smul.u32 8, %s27
        %p337 = scmp.lt.s32.totalorder %s26, 1
        %s338 = scalar_select %p337, %s26, 1
        %s339 = smul.addr %s338, 8
        %s340 = smul.addr %s339, 8
        %s341 = scalar_lea.vmem %s1, %s340
        %s342 = smul.u32 8, %s27
        %v343 = vld [vmem:[%s335] sm:$0xff]
        %v344 = vld [vmem:[%s335 + $0x8] sm:$0xff]
        %v345 = vld [vmem:[%s335 + $0x10] sm:$0xff]
        %v346 = vld [vmem:[%s335 + $0x18] sm:$0xff]
        %v347 = vld [vmem:[%s335 + $0x20] sm:$0xff]
        %v348 = vld [vmem:[%s335 + $0x28] sm:$0xff]
        %v349 = vld [vmem:[%s335 + $0x30] sm:$0xff]
        %v350 = vld [vmem:[%s335 + $0x38] sm:$0xff]
        %v351 = vld [vmem:[%s341] sm:$0xff]
        %v352 = vld [vmem:[%s341 + $0x8] sm:$0xff]
        %v353 = vld [vmem:[%s341 + $0x10] sm:$0xff]
        %v354 = vld [vmem:[%s341 + $0x18] sm:$0xff]
        %v355 = vld [vmem:[%s341 + $0x20] sm:$0xff]
        %v356 = vld [vmem:[%s341 + $0x28] sm:$0xff]
        %v357 = vld [vmem:[%s341 + $0x30] sm:$0xff]
        %v358 = vld [vmem:[%s341 + $0x38] sm:$0xff]
        %v359 = vld [vmem:[%s2] sm:$0xff]
        %v360 = vld [vmem:[%s2 + $0x8] sm:$0xff]
        %v361 = vld [vmem:[%s2 + $0x10] sm:$0xff]
        %v362 = vld [vmem:[%s2 + $0x18] sm:$0xff]
        %364 = vset.pattern.permute.xlu0 0
        %365 = vperm.xlu0 %364, %v351
        %v366 = vpop.permute.xlu0 %365
        %369 = vset.pattern.permute.xlu0 0
        %370 = vperm.xlu0 %369, %v352
        %v371 = vpop.permute.xlu0 %370
        %374 = vset.pattern.permute.xlu0 0
        %375 = vperm.xlu0 %374, %v353
        %v376 = vpop.permute.xlu0 %375
        %379 = vset.pattern.permute.xlu0 0
        %380 = vperm.xlu0 %379, %v354
        %v381 = vpop.permute.xlu0 %380
        %vm383 = vcmask 64512
        %v385 = vsel %vm383, %v359, 0
        %v388 = vsel %vm383, %v360, 0
        %v391 = vsel %vm383, %v361, 0
        %v394 = vsel %vm383, %v362, 0
        %396 = vmatprep.subr.mxu0 %v344
        %397 = vmatpush1.msra.mxu0 %v343
        %398 = vmatprep.subr.mxu0 0.0
        %399 = vmatpush1.msra.mxu0 0.0
        %400 = vmatprep.subr.mxu0 0.0
        %401 = vmatpush1.msra.mxu0 0.0
        %402 = vmatprep.subr.mxu0 0.0
        %403 = vmatpush1.msra.mxu0 0.0
        %404 = vmatprep.subr.mxu0 0.0
        %405 = vmatpush1.msra.mxu0 0.0
        %406 = vmatprep.subr.mxu0 0.0
        %407 = vmatpush1.msra.mxu0 0.0
        %408 = vmatprep.subr.mxu0 0.0
        %409 = vmatpush1.msra.mxu0 0.0
        %410 = vmatprep.subr.mxu0 0.0
        %411 = vmatpush1.msra.mxu0 0.0
        %412 = vmatprep.subr.mxu0 0.0
        %413 = vmatpush1.msra.mxu0 0.0
        %414 = vmatprep.subr.mxu0 0.0
        %415 = vmatpush1.msra.mxu0 0.0
        %416 = vmatprep.subr.mxu0 0.0
        %417 = vmatpush1.msra.mxu0 0.0
        %418 = vmatprep.subr.mxu0 0.0
        %419 = vmatpush1.msra.mxu0 0.0
        %420 = vmatprep.subr.mxu0 0.0
        %421 = vmatpush1.msra.mxu0 0.0
        %422 = vmatprep.subr.mxu0 0.0
        %423 = vmatpush1.msra.mxu0 0.0
        %424 = vmatprep.subr.mxu0 0.0
        %425 = vmatpush1.msra.mxu0 0.0
        %426 = vmatprep.subr.mxu0 0.0
        %427 = vmatpush1.msra.mxu0 0.0
        %428 = vmatprep.subr.mxu0 0.0
        %429 = vmatpush1.msra.mxu0 0.0
        %430 = vmatprep.subr.mxu0 0.0
        %431 = vmatpush1.msra.mxu0 0.0
        %432 = vmatprep.subr.mxu0 0.0
        %433 = vmatpush1.msra.mxu0 0.0
        %434 = vmatprep.subr.mxu0 0.0
        %435 = vmatpush1.msra.mxu0 0.0
        %436 = vmatprep.subr.mxu0 0.0
        %437 = vmatpush1.msra.mxu0 0.0
        %438 = vmatprep.subr.mxu0 0.0
        %439 = vmatpush1.msra.mxu0 0.0
        %440 = vmatprep.subr.mxu0 0.0
        %441 = vmatpush1.msra.mxu0 0.0
        %442 = vmatprep.subr.mxu0 0.0
        %443 = vmatpush1.msra.mxu0 0.0
        %444 = vmatprep.subr.mxu0 0.0
        %445 = vmatpush1.msra.mxu0 0.0
        %446 = vmatprep.subr.mxu0 0.0
        %447 = vmatpush1.msra.mxu0 0.0
        %448 = vmatprep.subr.mxu0 0.0
        %449 = vmatpush1.msra.mxu0 0.0
        %450 = vmatprep.subr.mxu0 0.0
        %451 = vmatpush1.msra.mxu0 0.0
        %452 = vmatprep.subr.mxu0 0.0
        %453 = vmatpush1.msra.mxu0 0.0
        %454 = vmatprep.subr.mxu0 0.0
        %455 = vmatpush1.msra.mxu0 0.0
        %456 = vmatprep.subr.mxu0 0.0
        %457 = vmatpush1.msra.mxu0 0.0
        %458 = vmatprep.subr.mxu0 0.0
        %459 = vmatpush1.msra.mxu0 0.0
        %460 = vmatprep.mubr.f32.mxu0 0.0
        %461 = vmatmul.mubr.f32.gmra.mrb[0].mxu0 %v385
        %v462 = vpop.f32.mrb[0].mxu0
        %v463 = vadd.f32 %v366, %v462
        %v464 = vpop.f32.mrb[0].mxu0
        %v465 = vadd.f32 %v366, %v464
        %466 = vmatprep.mubr.f32.mxu0 0.0
        %467 = vmatmul.mubr.f32.gmra.mrb[0].mxu0 %v388
        %v468 = vpop.f32.mrb[0].mxu0
        %v469 = vadd.f32 %v371, %v468
        %v470 = vpop.f32.mrb[0].mxu0
        %v471 = vadd.f32 %v371, %v470
        %472 = vmatprep.mubr.f32.mxu0 0.0
        %473 = vmatmul.mubr.f32.gmra.mrb[0].mxu0 %v391
        %v474 = vpop.f32.mrb[0].mxu0
        %v475 = vadd.f32 %v376, %v474
        %v476 = vpop.f32.mrb[0].mxu0
        %v477 = vadd.f32 %v376, %v476
        %478 = vmatprep.mubr.f32.mxu0 0.0
        %479 = vmatmul.mubr.f32.gmra.mrb[0].mxu0 %v394
        %v480 = vpop.f32.mrb[0].mxu0
        %v481 = vadd.f32 %v381, %v480
        %v482 = vpop.f32.mrb[0].mxu0
        %v483 = vadd.f32 %v381, %v482
        %484 = vdwg.mxu0
        %485 = vmatprep.subr.mxu0 %v346
        %486 = vmatpush1.msra.mxu0 %v345
        %487 = vmatprep.subr.mxu0 0.0
        %488 = vmatpush1.msra.mxu0 0.0
        %489 = vmatprep.subr.mxu0 0.0
        %490 = vmatpush1.msra.mxu0 0.0
        %491 = vmatprep.subr.mxu0 0.0
        %492 = vmatpush1.msra.mxu0 0.0
        %493 = vmatprep.subr.mxu0 0.0
        %494 = vmatpush1.msra.mxu0 0.0
        %495 = vmatprep.subr.mxu0 0.0
        %496 = vmatpush1.msra.mxu0 0.0
        %497 = vmatprep.subr.mxu0 0.0
        %498 = vmatpush1.msra.mxu0 0.0
        %499 = vmatprep.subr.mxu0 0.0
        %500 = vmatpush1.msra.mxu0 0.0
        %501 = vmatprep.subr.mxu0 0.0
        %502 = vmatpush1.msra.mxu0 0.0
        %503 = vmatprep.subr.mxu0 0.0
        %504 = vmatpush1.msra.mxu0 0.0
        %505 = vmatprep.subr.mxu0 0.0
        %506 = vmatpush1.msra.mxu0 0.0
        %507 = vmatprep.subr.mxu0 0.0
        %508 = vmatpush1.msra.mxu0 0.0
        %509 = vmatprep.subr.mxu0 0.0
        %510 = vmatpush1.msra.mxu0 0.0
        %511 = vmatprep.subr.mxu0 0.0
        %512 = vmatpush1.msra.mxu0 0.0
        %513 = vmatprep.subr.mxu0 0.0
        %514 = vmatpush1.msra.mxu0 0.0
        %515 = vmatprep.subr.mxu0 0.0
        %516 = vmatpush1.msra.mxu0 0.0
        %517 = vmatprep.subr.mxu0 0.0
        %518 = vmatpush1.msra.mxu0 0.0
        %519 = vmatprep.subr.mxu0 0.0
        %520 = vmatpush1.msra.mxu0 0.0
        %521 = vmatprep.subr.mxu0 0.0
        %522 = vmatpush1.msra.mxu0 0.0
        %523 = vmatprep.subr.mxu0 0.0
        %524 = vmatpush1.msra.mxu0 0.0
        %525 = vmatprep.subr.mxu0 0.0
        %526 = vmatpush1.msra.mxu0 0.0
        %527 = vmatprep.subr.mxu0 0.0
        %528 = vmatpush1.msra.mxu0 0.0
        %529 = vmatprep.subr.mxu0 0.0
        %530 = vmatpush1.msra.mxu0 0.0
        %531 = vmatprep.subr.mxu0 0.0
        %532 = vmatpush1.msra.mxu0 0.0
        %533 = vmatprep.subr.mxu0 0.0
        %534 = vmatpush1.msra.mxu0 0.0
        %535 = vmatprep.subr.mxu0 0.0
        %536 = vmatpush1.msra.mxu0 0.0
        %537 = vmatprep.subr.mxu0 0.0
        %538 = vmatpush1.msra.mxu0 0.0
        %539 = vmatprep.subr.mxu0 0.0
        %540 = vmatpush1.msra.mxu0 0.0
        %541 = vmatprep.subr.mxu0 0.0
        %542 = vmatpush1.msra.mxu0 0.0
        %543 = vmatprep.subr.mxu0 0.0
        %544 = vmatpush1.msra.mxu0 0.0
        %545 = vmatprep.subr.mxu0 0.0
        %546 = vmatpush1.msra.mxu0 0.0
        %547 = vmatprep.subr.mxu0 0.0
        %548 = vmatpush1.msra.mxu0 0.0
        %549 = vmatprep.mubr.f32.mxu0 0.0
        %550 = vmatmul.mubr.f32.gmra.mrb[0].mxu0 %v385
        %v551 = vpop.f32.mrb[0].mxu0
        %v552 = vadd.f32 %v366, %v551
        %v553 = vpop.f32.mrb[0].mxu0
        %v554 = vadd.f32 %v366, %v553
        %555 = vmatprep.mubr.f32.mxu0 0.0
        %556 = vmatmul.mubr.f32.gmra.mrb[0].mxu0 %v388
        %v557 = vpop.f32.mrb[0].mxu0
        %v558 = vadd.f32 %v371, %v557
        %v559 = vpop.f32.mrb[0].mxu0
        %v560 = vadd.f32 %v371, %v559
        %561 = vmatprep.mubr.f32.mxu0 0.0
        %562 = vmatmul.mubr.f32.gmra.mrb[0].mxu0 %v391
        %v563 = vpop.f32.mrb[0].mxu0
        %v564 = vadd.f32 %v376, %v563
        %v565 = vpop.f32.mrb[0].mxu0
        %v566 = vadd.f32 %v376, %v565
        %567 = vmatprep.mubr.f32.mxu0 0.0
        %568 = vmatmul.mubr.f32.gmra.mrb[0].mxu0 %v394
        %v569 = vpop.f32.mrb[0].mxu0
        %v570 = vadd.f32 %v381, %v569
        %v571 = vpop.f32.mrb[0].mxu0
        %v572 = vadd.f32 %v381, %v571
        %573 = vdwg.mxu0
        %574 = vmatprep.subr.mxu0 %v348
        %575 = vmatpush1.msra.mxu0 %v347
        %576 = vmatprep.subr.mxu0 0.0
        %577 = vmatpush1.msra.mxu0 0.0
        %578 = vmatprep.subr.mxu0 0.0
        %579 = vmatpush1.msra.mxu0 0.0
        %580 = vmatprep.subr.mxu0 0.0
        %581 = vmatpush1.msra.mxu0 0.0
        %582 = vmatprep.subr.mxu0 0.0
        %583 = vmatpush1.msra.mxu0 0.0
        %584 = vmatprep.subr.mxu0 0.0
        %585 = vmatpush1.msra.mxu0 0.0
        %586 = vmatprep.subr.mxu0 0.0
        %587 = vmatpush1.msra.mxu0 0.0
        %588 = vmatprep.subr.mxu0 0.0
        %589 = vmatpush1.msra.mxu0 0.0
        %590 = vmatprep.subr.mxu0 0.0
        %591 = vmatpush1.msra.mxu0 0.0
        %592 = vmatprep.subr.mxu0 0.0
        %593 = vmatpush1.msra.mxu0 0.0
        %594 = vmatprep.subr.mxu0 0.0
        %595 = vmatpush1.msra.mxu0 0.0
        %596 = vmatprep.subr.mxu0 0.0
        %597 = vmatpush1.msra.mxu0 0.0
        %598 = vmatprep.subr.mxu0 0.0
        %599 = vmatpush1.msra.mxu0 0.0
        %600 = vmatprep.subr.mxu0 0.0
        %601 = vmatpush1.msra.mxu0 0.0
        %602 = vmatprep.subr.mxu0 0.0
        %603 = vmatpush1.msra.mxu0 0.0
        %604 = vmatprep.subr.mxu0 0.0
        %605 = vmatpush1.msra.mxu0 0.0
        %606 = vmatprep.subr.mxu0 0.0
        %607 = vmatpush1.msra.mxu0 0.0
        %608 = vmatprep.subr.mxu0 0.0
        %609 = vmatpush1.msra.mxu0 0.0
        %610 = vmatprep.subr.mxu0 0.0
        %611 = vmatpush1.msra.mxu0 0.0
        %612 = vmatprep.subr.mxu0 0.0
        %613 = vmatpush1.msra.mxu0 0.0
        %614 = vmatprep.subr.mxu0 0.0
        %615 = vmatpush1.msra.mxu0 0.0
        %616 = vmatprep.subr.mxu0 0.0
        %617 = vmatpush1.msra.mxu0 0.0
        %618 = vmatprep.subr.mxu0 0.0
        %619 = vmatpush1.msra.mxu0 0.0
        %620 = vmatprep.subr.mxu0 0.0
        %621 = vmatpush1.msra.mxu0 0.0
        %622 = vmatprep.subr.mxu0 0.0
        %623 = vmatpush1.msra.mxu0 0.0
        %624 = vmatprep.subr.mxu0 0.0
        %625 = vmatpush1.msra.mxu0 0.0
        %626 = vmatprep.subr.mxu0 0.0
        %627 = vmatpush1.msra.mxu0 0.0
        %628 = vmatprep.subr.mxu0 0.0
        %629 = vmatpush1.msra.mxu0 0.0
        %630 = vmatprep.subr.mxu0 0.0
        %631 = vmatpush1.msra.mxu0 0.0
        %632 = vmatprep.subr.mxu0 0.0
        %633 = vmatpush1.msra.mxu0 0.0
        %634 = vmatprep.subr.mxu0 0.0
        %635 = vmatpush1.msra.mxu0 0.0
        %636 = vmatprep.subr.mxu0 0.0
        %637 = vmatpush1.msra.mxu0 0.0
        %638 = vmatprep.mubr.f32.mxu0 0.0
        %639 = vmatmul.mubr.f32.gmra.mrb[0].mxu0 %v385
        %v640 = vpop.f32.mrb[0].mxu0
        %v641 = vadd.f32 %v366, %v640
        %v642 = vpop.f32.mrb[0].mxu0
        %v643 = vadd.f32 %v366, %v642
        %644 = vmatprep.mubr.f32.mxu0 0.0
        %645 = vmatmul.mubr.f32.gmra.mrb[0].mxu0 %v388
        %v646 = vpop.f32.mrb[0].mxu0
        %v647 = vadd.f32 %v371, %v646
        %v648 = vpop.f32.mrb[0].mxu0
        %v649 = vadd.f32 %v371, %v648
        %650 = vmatprep.mubr.f32.mxu0 0.0
        %651 = vmatmul.mubr.f32.gmra.mrb[0].mxu0 %v391
        %v652 = vpop.f32.mrb[0].mxu0
        %v653 = vadd.f32 %v376, %v652
        %v654 = vpop.f32.mrb[0].mxu0
        %v655 = vadd.f32 %v376, %v654
        %656 = vmatprep.mubr.f32.mxu0 0.0
        %657 = vmatmul.mubr.f32.gmra.mrb[0].mxu0 %v394
        %v658 = vpop.f32.mrb[0].mxu0
        %v659 = vadd.f32 %v381, %v658
        %v660 = vpop.f32.mrb[0].mxu0
        %v661 = vadd.f32 %v381, %v660
        %662 = vdwg.mxu0
        %663 = vmatprep.subr.mxu0 %v350
        %664 = vmatpush1.msra.mxu0 %v349
        %665 = vmatprep.subr.mxu0 0.0
        %666 = vmatpush1.msra.mxu0 0.0
        %667 = vmatprep.subr.mxu0 0.0
        %668 = vmatpush1.msra.mxu0 0.0
        %669 = vmatprep.subr.mxu0 0.0
        %670 = vmatpush1.msra.mxu0 0.0
        %671 = vmatprep.subr.mxu0 0.0
        %672 = vmatpush1.msra.mxu0 0.0
        %673 = vmatprep.subr.mxu0 0.0
        %674 = vmatpush1.msra.mxu0 0.0
        %675 = vmatprep.subr.mxu0 0.0
        %676 = vmatpush1.msra.mxu0 0.0
        %677 = vmatprep.subr.mxu0 0.0
        %678 = vmatpush1.msra.mxu0 0.0
        %679 = vmatprep.subr.mxu0 0.0
        %680 = vmatpush1.msra.mxu0 0.0
        %681 = vmatprep.subr.mxu0 0.0
        %682 = vmatpush1.msra.mxu0 0.0
        %683 = vmatprep.subr.mxu0 0.0
        %684 = vmatpush1.msra.mxu0 0.0
        %685 = vmatprep.subr.mxu0 0.0
        %686 = vmatpush1.msra.mxu0 0.0
        %687 = vmatprep.subr.mxu0 0.0
        %688 = vmatpush1.msra.mxu0 0.0
        %689 = vmatprep.subr.mxu0 0.0
        %690 = vmatpush1.msra.mxu0 0.0
        %691 = vmatprep.subr.mxu0 0.0
        %692 = vmatpush1.msra.mxu0 0.0
        %693 = vmatprep.subr.mxu0 0.0
        %694 = vmatpush1.msra.mxu0 0.0
        %695 = vmatprep.subr.mxu0 0.0
        %696 = vmatpush1.msra.mxu0 0.0
        %697 = vmatprep.subr.mxu0 0.0
        %698 = vmatpush1.msra.mxu0 0.0
        %699 = vmatprep.subr.mxu0 0.0
        %700 = vmatpush1.msra.mxu0 0.0
        %701 = vmatprep.subr.mxu0 0.0
        %702 = vmatpush1.msra.mxu0 0.0
        %703 = vmatprep.subr.mxu0 0.0
        %704 = vmatpush1.msra.mxu0 0.0
        %705 = vmatprep.subr.mxu0 0.0
        %706 = vmatpush1.msra.mxu0 0.0
        %707 = vmatprep.subr.mxu0 0.0
        %708 = vmatpush1.msra.mxu0 0.0
        %709 = vmatprep.subr.mxu0 0.0
        %710 = vmatpush1.msra.mxu0 0.0
        %711 = vmatprep.subr.mxu0 0.0
        %712 = vmatpush1.msra.mxu0 0.0
        %713 = vmatprep.subr.mxu0 0.0
        %714 = vmatpush1.msra.mxu0 0.0
        %715 = vmatprep.subr.mxu0 0.0
        %716 = vmatpush1.msra.mxu0 0.0
        %717 = vmatprep.subr.mxu0 0.0
        %718 = vmatpush1.msra.mxu0 0.0
        %719 = vmatprep.subr.mxu0 0.0
        %720 = vmatpush1.msra.mxu0 0.0
        %721 = vmatprep.subr.mxu0 0.0
        %722 = vmatpush1.msra.mxu0 0.0
        %723 = vmatprep.subr.mxu0 0.0
        %724 = vmatpush1.msra.mxu0 0.0
        %725 = vmatprep.subr.mxu0 0.0
        %726 = vmatpush1.msra.mxu0 0.0
        %727 = vmatprep.mubr.f32.mxu0 0.0
        %728 = vmatmul.mubr.f32.gmra.mrb[0].mxu0 %v385
        %v729 = vpop.f32.mrb[0].mxu0
        %v730 = vadd.f32 %v366, %v729
        %v731 = vpop.f32.mrb[0].mxu0
        %v732 = vadd.f32 %v366, %v731
        %733 = vmatprep.mubr.f32.mxu0 0.0
        %734 = vmatmul.mubr.f32.gmra.mrb[0].mxu0 %v388
        %v735 = vpop.f32.mrb[0].mxu0
        %v736 = vadd.f32 %v371, %v735
        %v737 = vpop.f32.mrb[0].mxu0
        %v738 = vadd.f32 %v371, %v737
        %739 = vmatprep.mubr.f32.mxu0 0.0
        %740 = vmatmul.mubr.f32.gmra.mrb[0].mxu0 %v391
        %v741 = vpop.f32.mrb[0].mxu0
        %v742 = vadd.f32 %v376, %v741
        %v743 = vpop.f32.mrb[0].mxu0
        %v744 = vadd.f32 %v376, %v743
        %745 = vmatprep.mubr.f32.mxu0 0.0
        %746 = vmatmul.mubr.f32.gmra.mrb[0].mxu0 %v394
        %v747 = vpop.f32.mrb[0].mxu0
        %v748 = vadd.f32 %v381, %v747
        %v749 = vpop.f32.mrb[0].mxu0
        %v750 = vadd.f32 %v381, %v749
        %751 = vdwg.mxu0
        %v752 = vmul.f32 %v463, 100.0
        %v753 = vmul.f32 %v465, 100.0
        %v754 = vmul.f32 %v552, 100.0
        %v755 = vmul.f32 %v554, 100.0
        %v756 = vmul.f32 %v641, 100.0
        %v757 = vmul.f32 %v643, 100.0
        %v758 = vmul.f32 %v730, 100.0
        %v759 = vmul.f32 %v732, 100.0
        %v760 = vmul.f32 %v469, 100.0
        %v761 = vmul.f32 %v471, 100.0
        %v762 = vmul.f32 %v558, 100.0
        %v763 = vmul.f32 %v560, 100.0
        %v764 = vmul.f32 %v647, 100.0
        %v765 = vmul.f32 %v649, 100.0
        %v766 = vmul.f32 %v736, 100.0
        %v767 = vmul.f32 %v738, 100.0
        %v768 = vmul.f32 %v475, 100.0
        %v769 = vmul.f32 %v477, 100.0
        %v770 = vmul.f32 %v564, 100.0
        %v771 = vmul.f32 %v566, 100.0
        %v772 = vmul.f32 %v653, 100.0
        %v773 = vmul.f32 %v655, 100.0
        %v774 = vmul.f32 %v742, 100.0
        %v775 = vmul.f32 %v744, 100.0
        %v776 = vmul.f32 %v481, 100.0
        %v777 = vmul.f32 %v483, 100.0
        %v778 = vmul.f32 %v570, 100.0
        %v779 = vmul.f32 %v572, 100.0
        %v780 = vmul.f32 %v659, 100.0
        %v781 = vmul.f32 %v661, 100.0
        %v782 = vmul.f32 %v748, 100.0
        %v783 = vmul.f32 %v750, 100.0
        %vm784 = vcmp.gt.f32.partialorder %v752, 20.0
        %vm785 = vcmp.gt.f32.partialorder %v753, 20.0
        %vm786 = vcmp.gt.f32.partialorder %v754, 20.0
        %vm787 = vcmp.gt.f32.partialorder %v755, 20.0
        %vm788 = vcmp.gt.f32.partialorder %v756, 20.0
        %vm789 = vcmp.gt.f32.partialorder %v757, 20.0
        %vm790 = vcmp.gt.f32.partialorder %v758, 20.0
        %vm791 = vcmp.gt.f32.partialorder %v759, 20.0
        %vm792 = vcmp.gt.f32.partialorder %v760, 20.0
        %vm793 = vcmp.gt.f32.partialorder %v761, 20.0
        %vm794 = vcmp.gt.f32.partialorder %v762, 20.0
        %vm795 = vcmp.gt.f32.partialorder %v763, 20.0
        %vm796 = vcmp.gt.f32.partialorder %v764, 20.0
        %vm797 = vcmp.gt.f32.partialorder %v765, 20.0
        %vm798 = vcmp.gt.f32.partialorder %v766, 20.0
        %vm799 = vcmp.gt.f32.partialorder %v767, 20.0
        %vm800 = vcmp.gt.f32.partialorder %v768, 20.0
        %vm801 = vcmp.gt.f32.partialorder %v769, 20.0
        %vm802 = vcmp.gt.f32.partialorder %v770, 20.0
        %vm803 = vcmp.gt.f32.partialorder %v771, 20.0
        %vm804 = vcmp.gt.f32.partialorder %v772, 20.0
        %vm805 = vcmp.gt.f32.partialorder %v773, 20.0
        %vm806 = vcmp.gt.f32.partialorder %v774, 20.0
        %vm807 = vcmp.gt.f32.partialorder %v775, 20.0
        %vm808 = vcmp.gt.f32.partialorder %v776, 20.0
        %vm809 = vcmp.gt.f32.partialorder %v777, 20.0
        %vm810 = vcmp.gt.f32.partialorder %v778, 20.0
        %vm811 = vcmp.gt.f32.partialorder %v779, 20.0
        %vm812 = vcmp.gt.f32.partialorder %v780, 20.0
        %vm813 = vcmp.gt.f32.partialorder %v781, 20.0
        %vm814 = vcmp.gt.f32.partialorder %v782, 20.0
        %vm815 = vcmp.gt.f32.partialorder %v783, 20.0
        %v816 = vmin.f32 %v752, 20.0
        %v817 = vmin.f32 %v753, 20.0
        %v818 = vmin.f32 %v754, 20.0
        %v819 = vmin.f32 %v755, 20.0
        %v820 = vmin.f32 %v756, 20.0
        %v821 = vmin.f32 %v757, 20.0
        %v822 = vmin.f32 %v758, 20.0
        %v823 = vmin.f32 %v759, 20.0
        %v824 = vmin.f32 %v760, 20.0
        %v825 = vmin.f32 %v761, 20.0
        %v826 = vmin.f32 %v762, 20.0
        %v827 = vmin.f32 %v763, 20.0
        %v828 = vmin.f32 %v764, 20.0
        %v829 = vmin.f32 %v765, 20.0
        %v830 = vmin.f32 %v766, 20.0
        %v831 = vmin.f32 %v767, 20.0
        %v832 = vmin.f32 %v768, 20.0
        %v833 = vmin.f32 %v769, 20.0
        %v834 = vmin.f32 %v770, 20.0
        %v835 = vmin.f32 %v771, 20.0
        %v836 = vmin.f32 %v772, 20.0
        %v837 = vmin.f32 %v773, 20.0
        %v838 = vmin.f32 %v774, 20.0
        %v839 = vmin.f32 %v775, 20.0
        %v840 = vmin.f32 %v776, 20.0
        %v841 = vmin.f32 %v777, 20.0
        %v842 = vmin.f32 %v778, 20.0
        %v843 = vmin.f32 %v779, 20.0
        %v844 = vmin.f32 %v780, 20.0
        %v845 = vmin.f32 %v781, 20.0
        %v846 = vmin.f32 %v782, 20.0
        %v847 = vmin.f32 %v783, 20.0
        %v848 = vmul.f32 %v816, 1.442695
        %v849 = vpow.pop %v848
        %v850 = vmul.f32 %v817, 1.442695
        %v851 = vpow.pop %v850
        %v852 = vmul.f32 %v818, 1.442695
        %v853 = vpow.pop %v852
        %v854 = vmul.f32 %v819, 1.442695
        %v855 = vpow.pop %v854
        %v856 = vmul.f32 %v820, 1.442695
        %v857 = vpow.pop %v856
        %v858 = vmul.f32 %v821, 1.442695
        %v859 = vpow.pop %v858
        %v860 = vmul.f32 %v822, 1.442695
        %v861 = vpow.pop %v860
        %v862 = vmul.f32 %v823, 1.442695
        %v863 = vpow.pop %v862
        %v864 = vmul.f32 %v824, 1.442695
        %v865 = vpow.pop %v864
        %v866 = vmul.f32 %v825, 1.442695
        %v867 = vpow.pop %v866
        %v868 = vmul.f32 %v826, 1.442695
        %v869 = vpow.pop %v868
        %v870 = vmul.f32 %v827, 1.442695
        %v871 = vpow.pop %v870
        %v872 = vmul.f32 %v828, 1.442695
        %v873 = vpow.pop %v872
        %v874 = vmul.f32 %v829, 1.442695
        %v875 = vpow.pop %v874
        %v876 = vmul.f32 %v830, 1.442695
        %v877 = vpow.pop %v876
        %v878 = vmul.f32 %v831, 1.442695
        %v879 = vpow.pop %v878
        %v880 = vmul.f32 %v832, 1.442695
        %v881 = vpow.pop %v880
        %v882 = vmul.f32 %v833, 1.442695
        %v883 = vpow.pop %v882
        %v884 = vmul.f32 %v834, 1.442695
        %v885 = vpow.pop %v884
        %v886 = vmul.f32 %v835, 1.442695
        %v887 = vpow.pop %v886
        %v888 = vmul.f32 %v836, 1.442695
        %v889 = vpow.pop %v888
        %v890 = vmul.f32 %v837, 1.442695
        %v891 = vpow.pop %v890
        %v892 = vmul.f32 %v838, 1.442695
        %v893 = vpow.pop %v892
        %v894 = vmul.f32 %v839, 1.442695
        %v895 = vpow.pop %v894
        %v896 = vmul.f32 %v840, 1.442695
        %v897 = vpow.pop %v896
        %v898 = vmul.f32 %v841, 1.442695
        %v899 = vpow.pop %v898
        %v900 = vmul.f32 %v842, 1.442695
        %v901 = vpow.pop %v900
        %v902 = vmul.f32 %v843, 1.442695
        %v903 = vpow.pop %v902
        %v904 = vmul.f32 %v844, 1.442695
        %v905 = vpow.pop %v904
        %v906 = vmul.f32 %v845, 1.442695
        %v907 = vpow.pop %v906
        %v908 = vmul.f32 %v846, 1.442695
        %v909 = vpow.pop %v908
        %v910 = vmul.f32 %v847, 1.442695
        %v911 = vpow.pop %v910
        %v912 = vadd.f32 %v849, 1.0
        %v913 = vadd.f32 %v851, 1.0
        %v914 = vadd.f32 %v853, 1.0
        %v915 = vadd.f32 %v855, 1.0
        %v916 = vadd.f32 %v857, 1.0
        %v917 = vadd.f32 %v859, 1.0
        %v918 = vadd.f32 %v861, 1.0
        %v919 = vadd.f32 %v863, 1.0
        %v920 = vadd.f32 %v865, 1.0
        %v921 = vadd.f32 %v867, 1.0
        %v922 = vadd.f32 %v869, 1.0
        %v923 = vadd.f32 %v871, 1.0
        %v924 = vadd.f32 %v873, 1.0
        %v925 = vadd.f32 %v875, 1.0
        %v926 = vadd.f32 %v877, 1.0
        %v927 = vadd.f32 %v879, 1.0
        %v928 = vadd.f32 %v881, 1.0
        %v929 = vadd.f32 %v883, 1.0
        %v930 = vadd.f32 %v885, 1.0
        %v931 = vadd.f32 %v887, 1.0
        %v932 = vadd.f32 %v889, 1.0
        %v933 = vadd.f32 %v891, 1.0
        %v934 = vadd.f32 %v893, 1.0
        %v935 = vadd.f32 %v895, 1.0
        %v936 = vadd.f32 %v897, 1.0
        %v937 = vadd.f32 %v899, 1.0
        %v938 = vadd.f32 %v901, 1.0
        %v939 = vadd.f32 %v903, 1.0
        %v940 = vadd.f32 %v905, 1.0
        %v941 = vadd.f32 %v907, 1.0
        %v942 = vadd.f32 %v909, 1.0
        %v943 = vadd.f32 %v911, 1.0
        %v944 = vlog2.pop %v912
        %v945 = vmul.f32 %v944, 0.6931472
        %v946 = vlog2.pop %v913
        %v947 = vmul.f32 %v946, 0.6931472
        %v948 = vlog2.pop %v914
        %v949 = vmul.f32 %v948, 0.6931472
        %v950 = vlog2.pop %v915
        %v951 = vmul.f32 %v950, 0.6931472
        %v952 = vlog2.pop %v916
        %v953 = vmul.f32 %v952, 0.6931472
        %v954 = vlog2.pop %v917
        %v955 = vmul.f32 %v954, 0.6931472
        %v956 = vlog2.pop %v918
        %v957 = vmul.f32 %v956, 0.6931472
        %v958 = vlog2.pop %v919
        %v959 = vmul.f32 %v958, 0.6931472
        %v960 = vlog2.pop %v920
        %v961 = vmul.f32 %v960, 0.6931472
        %v962 = vlog2.pop %v921
        %v963 = vmul.f32 %v962, 0.6931472
        %v964 = vlog2.pop %v922
        %v965 = vmul.f32 %v964, 0.6931472
        %v966 = vlog2.pop %v923
        %v967 = vmul.f32 %v966, 0.6931472
        %v968 = vlog2.pop %v924
        %v969 = vmul.f32 %v968, 0.6931472
        %v970 = vlog2.pop %v925
        %v971 = vmul.f32 %v970, 0.6931472
        %v972 = vlog2.pop %v926
        %v973 = vmul.f32 %v972, 0.6931472
        %v974 = vlog2.pop %v927
        %v975 = vmul.f32 %v974, 0.6931472
        %v976 = vlog2.pop %v928
        %v977 = vmul.f32 %v976, 0.6931472
        %v978 = vlog2.pop %v929
        %v979 = vmul.f32 %v978, 0.6931472
        %v980 = vlog2.pop %v930
        %v981 = vmul.f32 %v980, 0.6931472
        %v982 = vlog2.pop %v931
        %v983 = vmul.f32 %v982, 0.6931472
        %v984 = vlog2.pop %v932
        %v985 = vmul.f32 %v984, 0.6931472
        %v986 = vlog2.pop %v933
        %v987 = vmul.f32 %v986, 0.6931472
        %v988 = vlog2.pop %v934
        %v989 = vmul.f32 %v988, 0.6931472
        %v990 = vlog2.pop %v935
        %v991 = vmul.f32 %v990, 0.6931472
        %v992 = vlog2.pop %v936
        %v993 = vmul.f32 %v992, 0.6931472
        %v994 = vlog2.pop %v937
        %v995 = vmul.f32 %v994, 0.6931472
        %v996 = vlog2.pop %v938
        %v997 = vmul.f32 %v996, 0.6931472
        %v998 = vlog2.pop %v939
        %v999 = vmul.f32 %v998, 0.6931472
        %v1000 = vlog2.pop %v940
        %v1001 = vmul.f32 %v1000, 0.6931472
        %v1002 = vlog2.pop %v941
        %v1003 = vmul.f32 %v1002, 0.6931472
        %v1004 = vlog2.pop %v942
        %v1005 = vmul.f32 %v1004, 0.6931472
        %v1006 = vlog2.pop %v943
        %v1007 = vmul.f32 %v1006, 0.6931472
        %v1008 = vrcp.pop 100.0
        %v1009 = vmul.f32 %v945, %v1008
        %v1010 = vmul.f32 %v947, %v1008
        %v1011 = vmul.f32 %v949, %v1008
        %v1012 = vmul.f32 %v951, %v1008
        %v1013 = vmul.f32 %v953, %v1008
        %v1014 = vmul.f32 %v955, %v1008
        %v1015 = vmul.f32 %v957, %v1008
        %v1016 = vmul.f32 %v959, %v1008
        %v1017 = vmul.f32 %v961, %v1008
        %v1018 = vmul.f32 %v963, %v1008
        %v1019 = vmul.f32 %v965, %v1008
        %v1020 = vmul.f32 %v967, %v1008
        %v1021 = vmul.f32 %v969, %v1008
        %v1022 = vmul.f32 %v971, %v1008
        %v1023 = vmul.f32 %v973, %v1008
        %v1024 = vmul.f32 %v975, %v1008
        %v1025 = vmul.f32 %v977, %v1008
        %v1026 = vmul.f32 %v979, %v1008
        %v1027 = vmul.f32 %v981, %v1008
        %v1028 = vmul.f32 %v983, %v1008
        %v1029 = vmul.f32 %v985, %v1008
        %v1030 = vmul.f32 %v987, %v1008
        %v1031 = vmul.f32 %v989, %v1008
        %v1032 = vmul.f32 %v991, %v1008
        %v1033 = vmul.f32 %v993, %v1008
        %v1034 = vmul.f32 %v995, %v1008
        %v1035 = vmul.f32 %v997, %v1008
        %v1036 = vmul.f32 %v999, %v1008
        %v1037 = vmul.f32 %v1001, %v1008
        %v1038 = vmul.f32 %v1003, %v1008
        %v1039 = vmul.f32 %v1005, %v1008
        %v1040 = vmul.f32 %v1007, %v1008
        %v1041 = vsel %vm784, %v463, %v1009
        %v1042 = vsel %vm785, %v465, %v1010
        %v1043 = vsel %vm786, %v552, %v1011
        %v1044 = vsel %vm787, %v554, %v1012
        %v1045 = vsel %vm788, %v641, %v1013
        %v1046 = vsel %vm789, %v643, %v1014
        %v1047 = vsel %vm790, %v730, %v1015
        %v1048 = vsel %vm791, %v732, %v1016
        %v1049 = vsel %vm792, %v469, %v1017
        %v1050 = vsel %vm793, %v471, %v1018
        %v1051 = vsel %vm794, %v558, %v1019
        %v1052 = vsel %vm795, %v560, %v1020
        %v1053 = vsel %vm796, %v647, %v1021
        %v1054 = vsel %vm797, %v649, %v1022
        %v1055 = vsel %vm798, %v736, %v1023
        %v1056 = vsel %vm799, %v738, %v1024
        %v1057 = vsel %vm800, %v475, %v1025
        %v1058 = vsel %vm801, %v477, %v1026
        %v1059 = vsel %vm802, %v564, %v1027
        %v1060 = vsel %vm803, %v566, %v1028
        %v1061 = vsel %vm804, %v653, %v1029
        %v1062 = vsel %vm805, %v655, %v1030
        %v1063 = vsel %vm806, %v742, %v1031
        %v1064 = vsel %vm807, %v744, %v1032
        %v1065 = vsel %vm808, %v481, %v1033
        %v1066 = vsel %vm809, %v483, %v1034
        %v1067 = vsel %vm810, %v570, %v1035
        %v1068 = vsel %vm811, %v572, %v1036
        %v1069 = vsel %vm812, %v659, %v1037
        %v1070 = vsel %vm813, %v661, %v1038
        %v1071 = vsel %vm814, %v748, %v1039
        %v1072 = vsel %vm815, %v750, %v1040
        %v1073 = vld [vmem:[#allocation2] sm:$0xff]
        %v1074 = vld [vmem:[#allocation2 + $0x8] sm:$0xff]
        %v1075 = vld [vmem:[#allocation2 + $0x10] sm:$0xff]
        %v1076 = vld [vmem:[#allocation2 + $0x18] sm:$0xff]
        %v1077 = vld [vmem:[%s4] sm:$0xff]
        %v1078 = vld [vmem:[%s4 + $0x8] sm:$0xff]
        %v1079 = vld [vmem:[%s4 + $0x10] sm:$0xff]
        %v1080 = vld [vmem:[%s4 + $0x18] sm:$0xff]
        %1082 = vset.pattern.permute.xlu0 0
        %1083 = vperm.xlu0 %1082, %v1077
        %v1084 = vpop.permute.xlu0 %1083
        %1087 = vset.pattern.permute.xlu0 0
        %1088 = vperm.xlu0 %1087, %v1078
        %v1089 = vpop.permute.xlu0 %1088
        %1092 = vset.pattern.permute.xlu0 0
        %1093 = vperm.xlu0 %1092, %v1079
        %v1094 = vpop.permute.xlu0 %1093
        %1097 = vset.pattern.permute.xlu0 0
        %1098 = vperm.xlu0 %1097, %v1080
        %v1099 = vpop.permute.xlu0 %1098
        %vm1101 = vcmask 261120
        %v1103 = vsel %vm1101, %v1073, 0
        %v1106 = vsel %vm1101, %v1074, 0
        %v1109 = vsel %vm1101, %v1075, 0
        %v1112 = vsel %vm1101, %v1076, 0
        %1114 = vmatprep.subr.mxu0 %v1042
        %1115 = vmatpush1.msra.mxu0 %v1041
        %1116 = vmatprep.subr.mxu0 %v1050
        %1117 = vmatpush1.msra.mxu0 %v1049
        %1118 = vmatprep.subr.mxu0 %v1058
        %1119 = vmatpush1.msra.mxu0 %v1057
        %1120 = vmatprep.subr.mxu0 %v1066
        %1121 = vmatpush1.msra.mxu0 %v1065
        %1122 = vmatprep.subr.mxu0 0.0
        %1123 = vmatpush1.msra.mxu0 0.0
        %1124 = vmatprep.subr.mxu0 0.0
        %1125 = vmatpush1.msra.mxu0 0.0
        %1126 = vmatprep.subr.mxu0 0.0
        %1127 = vmatpush1.msra.mxu0 0.0
        %1128 = vmatprep.subr.mxu0 0.0
        %1129 = vmatpush1.msra.mxu0 0.0
        %1130 = vmatprep.subr.mxu0 0.0
        %1131 = vmatpush1.msra.mxu0 0.0
        %1132 = vmatprep.subr.mxu0 0.0
        %1133 = vmatpush1.msra.mxu0 0.0
        %1134 = vmatprep.subr.mxu0 0.0
        %1135 = vmatpush1.msra.mxu0 0.0
        %1136 = vmatprep.subr.mxu0 0.0
        %1137 = vmatpush1.msra.mxu0 0.0
        %1138 = vmatprep.subr.mxu0 0.0
        %1139 = vmatpush1.msra.mxu0 0.0
        %1140 = vmatprep.subr.mxu0 0.0
        %1141 = vmatpush1.msra.mxu0 0.0
        %1142 = vmatprep.subr.mxu0 0.0
        %1143 = vmatpush1.msra.mxu0 0.0
        %1144 = vmatprep.subr.mxu0 0.0
        %1145 = vmatpush1.msra.mxu0 0.0
        %1146 = vmatprep.subr.mxu0 0.0
        %1147 = vmatpush1.msra.mxu0 0.0
        %1148 = vmatprep.subr.mxu0 0.0
        %1149 = vmatpush1.msra.mxu0 0.0
        %1150 = vmatprep.subr.mxu0 0.0
        %1151 = vmatpush1.msra.mxu0 0.0
        %1152 = vmatprep.subr.mxu0 0.0
        %1153 = vmatpush1.msra.mxu0 0.0
        %1154 = vmatprep.subr.mxu0 0.0
        %1155 = vmatpush1.msra.mxu0 0.0
        %1156 = vmatprep.subr.mxu0 0.0
        %1157 = vmatpush1.msra.mxu0 0.0
        %1158 = vmatprep.subr.mxu0 0.0
        %1159 = vmatpush1.msra.mxu0 0.0
        %1160 = vmatprep.subr.mxu0 0.0
        %1161 = vmatpush1.msra.mxu0 0.0
        %1162 = vmatprep.subr.mxu0 0.0
        %1163 = vmatpush1.msra.mxu0 0.0
        %1164 = vmatprep.subr.mxu0 0.0
        %1165 = vmatpush1.msra.mxu0 0.0
        %1166 = vmatprep.subr.mxu0 0.0
        %1167 = vmatpush1.msra.mxu0 0.0
        %1168 = vmatprep.subr.mxu0 0.0
        %1169 = vmatpush1.msra.mxu0 0.0
        %1170 = vmatprep.subr.mxu0 0.0
        %1171 = vmatpush1.msra.mxu0 0.0
        %1172 = vmatprep.subr.mxu0 0.0
        %1173 = vmatpush1.msra.mxu0 0.0
        %1174 = vmatprep.subr.mxu0 0.0
        %1175 = vmatpush1.msra.mxu0 0.0
        %1176 = vmatprep.subr.mxu0 0.0
        %1177 = vmatpush1.msra.mxu0 0.0
        %1178 = vmatprep.mubr.f32.mxu0 0.0
        %1179 = vmatmul.mubr.f32.gmra.mrb[0].mxu0 %v1103
        %v1180 = vpop.f32.mrb[0].mxu0
        %v1181 = vadd.f32 %v1084, %v1180
        %v1182 = vpop.f32.mrb[0].mxu0
        %v1183 = vadd.f32 %v1084, %v1182
        %1184 = vmatprep.mubr.f32.mxu0 0.0
        %1185 = vmatmul.mubr.f32.gmra.mrb[0].mxu0 %v1106
        %v1186 = vpop.f32.mrb[0].mxu0
        %v1187 = vadd.f32 %v1089, %v1186
        %v1188 = vpop.f32.mrb[0].mxu0
        %v1189 = vadd.f32 %v1089, %v1188
        %1190 = vmatprep.mubr.f32.mxu0 0.0
        %1191 = vmatmul.mubr.f32.gmra.mrb[0].mxu0 %v1109
        %v1192 = vpop.f32.mrb[0].mxu0
        %v1193 = vadd.f32 %v1094, %v1192
        %v1194 = vpop.f32.mrb[0].mxu0
        %v1195 = vadd.f32 %v1094, %v1194
        %1196 = vmatprep.mubr.f32.mxu0 0.0
        %1197 = vmatmul.mubr.f32.gmra.mrb[0].mxu0 %v1112
        %v1198 = vpop.f32.mrb[0].mxu0
        %v1199 = vadd.f32 %v1099, %v1198
        %v1200 = vpop.f32.mrb[0].mxu0
        %v1201 = vadd.f32 %v1099, %v1200
        %1202 = vdwg.mxu0
        %1203 = vmatprep.subr.mxu0 %v1044
        %1204 = vmatpush1.msra.mxu0 %v1043
        %1205 = vmatprep.subr.mxu0 %v1052
        %1206 = vmatpush1.msra.mxu0 %v1051
        %1207 = vmatprep.subr.mxu0 %v1060
        %1208 = vmatpush1.msra.mxu0 %v1059
        %1209 = vmatprep.subr.mxu0 %v1068
        %1210 = vmatpush1.msra.mxu0 %v1067
        %1211 = vmatprep.subr.mxu0 0.0
        %1212 = vmatpush1.msra.mxu0 0.0
        %1213 = vmatprep.subr.mxu0 0.0
        %1214 = vmatpush1.msra.mxu0 0.0
        %1215 = vmatprep.subr.mxu0 0.0
        %1216 = vmatpush1.msra.mxu0 0.0
        %1217 = vmatprep.subr.mxu0 0.0
        %1218 = vmatpush1.msra.mxu0 0.0
        %1219 = vmatprep.subr.mxu0 0.0
        %1220 = vmatpush1.msra.mxu0 0.0
        %1221 = vmatprep.subr.mxu0 0.0
        %1222 = vmatpush1.msra.mxu0 0.0
        %1223 = vmatprep.subr.mxu0 0.0
        %1224 = vmatpush1.msra.mxu0 0.0
        %1225 = vmatprep.subr.mxu0 0.0
        %1226 = vmatpush1.msra.mxu0 0.0
        %1227 = vmatprep.subr.mxu0 0.0
        %1228 = vmatpush1.msra.mxu0 0.0
        %1229 = vmatprep.subr.mxu0 0.0
        %1230 = vmatpush1.msra.mxu0 0.0
        %1231 = vmatprep.subr.mxu0 0.0
        %1232 = vmatpush1.msra.mxu0 0.0
        %1233 = vmatprep.subr.mxu0 0.0
        %1234 = vmatpush1.msra.mxu0 0.0
        %1235 = vmatprep.subr.mxu0 0.0
        %1236 = vmatpush1.msra.mxu0 0.0
        %1237 = vmatprep.subr.mxu0 0.0
        %1238 = vmatpush1.msra.mxu0 0.0
        %1239 = vmatprep.subr.mxu0 0.0
        %1240 = vmatpush1.msra.mxu0 0.0
        %1241 = vmatprep.subr.mxu0 0.0
        %1242 = vmatpush1.msra.mxu0 0.0
        %1243 = vmatprep.subr.mxu0 0.0
        %1244 = vmatpush1.msra.mxu0 0.0
        %1245 = vmatprep.subr.mxu0 0.0
        %1246 = vmatpush1.msra.mxu0 0.0
        %1247 = vmatprep.subr.mxu0 0.0
        %1248 = vmatpush1.msra.mxu0 0.0
        %1249 = vmatprep.subr.mxu0 0.0
        %1250 = vmatpush1.msra.mxu0 0.0
        %1251 = vmatprep.subr.mxu0 0.0
        %1252 = vmatpush1.msra.mxu0 0.0
        %1253 = vmatprep.subr.mxu0 0.0
        %1254 = vmatpush1.msra.mxu0 0.0
        %1255 = vmatprep.subr.mxu0 0.0
        %1256 = vmatpush1.msra.mxu0 0.0
        %1257 = vmatprep.subr.mxu0 0.0
        %1258 = vmatpush1.msra.mxu0 0.0
        %1259 = vmatprep.subr.mxu0 0.0
        %1260 = vmatpush1.msra.mxu0 0.0
        %1261 = vmatprep.subr.mxu0 0.0
        %1262 = vmatpush1.msra.mxu0 0.0
        %1263 = vmatprep.subr.mxu0 0.0
        %1264 = vmatpush1.msra.mxu0 0.0
        %1265 = vmatprep.subr.mxu0 0.0
        %1266 = vmatpush1.msra.mxu0 0.0
        %1267 = vmatprep.mubr.f32.mxu0 0.0
        %1268 = vmatmul.mubr.f32.gmra.mrb[0].mxu0 %v1103
        %v1269 = vpop.f32.mrb[0].mxu0
        %v1270 = vadd.f32 %v1084, %v1269
        %v1271 = vpop.f32.mrb[0].mxu0
        %v1272 = vadd.f32 %v1084, %v1271
        %1273 = vmatprep.mubr.f32.mxu0 0.0
        %1274 = vmatmul.mubr.f32.gmra.mrb[0].mxu0 %v1106
        %v1275 = vpop.f32.mrb[0].mxu0
        %v1276 = vadd.f32 %v1089, %v1275
        %v1277 = vpop.f32.mrb[0].mxu0
        %v1278 = vadd.f32 %v1089, %v1277
        %1279 = vmatprep.mubr.f32.mxu0 0.0
        %1280 = vmatmul.mubr.f32.gmra.mrb[0].mxu0 %v1109
        %v1281 = vpop.f32.mrb[0].mxu0
        %v1282 = vadd.f32 %v1094, %v1281
        %v1283 = vpop.f32.mrb[0].mxu0
        %v1284 = vadd.f32 %v1094, %v1283
        %1285 = vmatprep.mubr.f32.mxu0 0.0
        %1286 = vmatmul.mubr.f32.gmra.mrb[0].mxu0 %v1112
        %v1287 = vpop.f32.mrb[0].mxu0
        %v1288 = vadd.f32 %v1099, %v1287
        %v1289 = vpop.f32.mrb[0].mxu0
        %v1290 = vadd.f32 %v1099, %v1289
        %1291 = vdwg.mxu0
        %1292 = vmatprep.subr.mxu0 %v1046
        %1293 = vmatpush1.msra.mxu0 %v1045
        %1294 = vmatprep.subr.mxu0 %v1054
        %1295 = vmatpush1.msra.mxu0 %v1053
        %1296 = vmatprep.subr.mxu0 %v1062
        %1297 = vmatpush1.msra.mxu0 %v1061
        %1298 = vmatprep.subr.mxu0 %v1070
        %1299 = vmatpush1.msra.mxu0 %v1069
        %1300 = vmatprep.subr.mxu0 0.0
        %1301 = vmatpush1.msra.mxu0 0.0
        %1302 = vmatprep.subr.mxu0 0.0
        %1303 = vmatpush1.msra.mxu0 0.0
        %1304 = vmatprep.subr.mxu0 0.0
        %1305 = vmatpush1.msra.mxu0 0.0
        %1306 = vmatprep.subr.mxu0 0.0
        %1307 = vmatpush1.msra.mxu0 0.0
        %1308 = vmatprep.subr.mxu0 0.0
        %1309 = vmatpush1.msra.mxu0 0.0
        %1310 = vmatprep.subr.mxu0 0.0
        %1311 = vmatpush1.msra.mxu0 0.0
        %1312 = vmatprep.subr.mxu0 0.0
        %1313 = vmatpush1.msra.mxu0 0.0
        %1314 = vmatprep.subr.mxu0 0.0
        %1315 = vmatpush1.msra.mxu0 0.0
        %1316 = vmatprep.subr.mxu0 0.0
        %1317 = vmatpush1.msra.mxu0 0.0
        %1318 = vmatprep.subr.mxu0 0.0
        %1319 = vmatpush1.msra.mxu0 0.0
        %1320 = vmatprep.subr.mxu0 0.0
        %1321 = vmatpush1.msra.mxu0 0.0
        %1322 = vmatprep.subr.mxu0 0.0
        %1323 = vmatpush1.msra.mxu0 0.0
        %1324 = vmatprep.subr.mxu0 0.0
        %1325 = vmatpush1.msra.mxu0 0.0
        %1326 = vmatprep.subr.mxu0 0.0
        %1327 = vmatpush1.msra.mxu0 0.0
        %1328 = vmatprep.subr.mxu0 0.0
        %1329 = vmatpush1.msra.mxu0 0.0
        %1330 = vmatprep.subr.mxu0 0.0
        %1331 = vmatpush1.msra.mxu0 0.0
        %1332 = vmatprep.subr.mxu0 0.0
        %1333 = vmatpush1.msra.mxu0 0.0
        %1334 = vmatprep.subr.mxu0 0.0
        %1335 = vmatpush1.msra.mxu0 0.0
        %1336 = vmatprep.subr.mxu0 0.0
        %1337 = vmatpush1.msra.mxu0 0.0
        %1338 = vmatprep.subr.mxu0 0.0
        %1339 = vmatpush1.msra.mxu0 0.0
        %1340 = vmatprep.subr.mxu0 0.0
        %1341 = vmatpush1.msra.mxu0 0.0
        %1342 = vmatprep.subr.mxu0 0.0
        %1343 = vmatpush1.msra.mxu0 0.0
        %1344 = vmatprep.subr.mxu0 0.0
        %1345 = vmatpush1.msra.mxu0 0.0
        %1346 = vmatprep.subr.mxu0 0.0
        %1347 = vmatpush1.msra.mxu0 0.0
        %1348 = vmatprep.subr.mxu0 0.0
        %1349 = vmatpush1.msra.mxu0 0.0
        %1350 = vmatprep.subr.mxu0 0.0
        %1351 = vmatpush1.msra.mxu0 0.0
        %1352 = vmatprep.subr.mxu0 0.0
        %1353 = vmatpush1.msra.mxu0 0.0
        %1354 = vmatprep.subr.mxu0 0.0
        %1355 = vmatpush1.msra.mxu0 0.0
        %1356 = vmatprep.mubr.f32.mxu0 0.0
        %1357 = vmatmul.mubr.f32.gmra.mrb[0].mxu0 %v1103
        %v1358 = vpop.f32.mrb[0].mxu0
        %v1359 = vadd.f32 %v1084, %v1358
        %v1360 = vpop.f32.mrb[0].mxu0
        %v1361 = vadd.f32 %v1084, %v1360
        %1362 = vmatprep.mubr.f32.mxu0 0.0
        %1363 = vmatmul.mubr.f32.gmra.mrb[0].mxu0 %v1106
        %v1364 = vpop.f32.mrb[0].mxu0
        %v1365 = vadd.f32 %v1089, %v1364
        %v1366 = vpop.f32.mrb[0].mxu0
        %v1367 = vadd.f32 %v1089, %v1366
        %1368 = vmatprep.mubr.f32.mxu0 0.0
        %1369 = vmatmul.mubr.f32.gmra.mrb[0].mxu0 %v1109
        %v1370 = vpop.f32.mrb[0].mxu0
        %v1371 = vadd.f32 %v1094, %v1370
        %v1372 = vpop.f32.mrb[0].mxu0
        %v1373 = vadd.f32 %v1094, %v1372
        %1374 = vmatprep.mubr.f32.mxu0 0.0
        %1375 = vmatmul.mubr.f32.gmra.mrb[0].mxu0 %v1112
        %v1376 = vpop.f32.mrb[0].mxu0
        %v1377 = vadd.f32 %v1099, %v1376
        %v1378 = vpop.f32.mrb[0].mxu0
        %v1379 = vadd.f32 %v1099, %v1378
        %1380 = vdwg.mxu0
        %1381 = vmatprep.subr.mxu0 %v1048
        %1382 = vmatpush1.msra.mxu0 %v1047
        %1383 = vmatprep.subr.mxu0 %v1056
        %1384 = vmatpush1.msra.mxu0 %v1055
        %1385 = vmatprep.subr.mxu0 %v1064
        %1386 = vmatpush1.msra.mxu0 %v1063
        %1387 = vmatprep.subr.mxu0 %v1072
        %1388 = vmatpush1.msra.mxu0 %v1071
        %1389 = vmatprep.subr.mxu0 0.0
        %1390 = vmatpush1.msra.mxu0 0.0
        %1391 = vmatprep.subr.mxu0 0.0
        %1392 = vmatpush1.msra.mxu0 0.0
        %1393 = vmatprep.subr.mxu0 0.0
        %1394 = vmatpush1.msra.mxu0 0.0
        %1395 = vmatprep.subr.mxu0 0.0
        %1396 = vmatpush1.msra.mxu0 0.0
        %1397 = vmatprep.subr.mxu0 0.0
        %1398 = vmatpush1.msra.mxu0 0.0
        %1399 = vmatprep.subr.mxu0 0.0
        %1400 = vmatpush1.msra.mxu0 0.0
        %1401 = vmatprep.subr.mxu0 0.0
        %1402 = vmatpush1.msra.mxu0 0.0
        %1403 = vmatprep.subr.mxu0 0.0
        %1404 = vmatpush1.msra.mxu0 0.0
        %1405 = vmatprep.subr.mxu0 0.0
        %1406 = vmatpush1.msra.mxu0 0.0
        %1407 = vmatprep.subr.mxu0 0.0
        %1408 = vmatpush1.msra.mxu0 0.0
        %1409 = vmatprep.subr.mxu0 0.0
        %1410 = vmatpush1.msra.mxu0 0.0
        %1411 = vmatprep.subr.mxu0 0.0
        %1412 = vmatpush1.msra.mxu0 0.0
        %1413 = vmatprep.subr.mxu0 0.0
        %1414 = vmatpush1.msra.mxu0 0.0
        %1415 = vmatprep.subr.mxu0 0.0
        %1416 = vmatpush1.msra.mxu0 0.0
        %1417 = vmatprep.subr.mxu0 0.0
        %1418 = vmatpush1.msra.mxu0 0.0
        %1419 = vmatprep.subr.mxu0 0.0
        %1420 = vmatpush1.msra.mxu0 0.0
        %1421 = vmatprep.subr.mxu0 0.0
        %1422 = vmatpush1.msra.mxu0 0.0
        %1423 = vmatprep.subr.mxu0 0.0
        %1424 = vmatpush1.msra.mxu0 0.0
        %1425 = vmatprep.subr.mxu0 0.0
        %1426 = vmatpush1.msra.mxu0 0.0
        %1427 = vmatprep.subr.mxu0 0.0
        %1428 = vmatpush1.msra.mxu0 0.0
        %1429 = vmatprep.subr.mxu0 0.0
        %1430 = vmatpush1.msra.mxu0 0.0
        %1431 = vmatprep.subr.mxu0 0.0
        %1432 = vmatpush1.msra.mxu0 0.0
        %1433 = vmatprep.subr.mxu0 0.0
        %1434 = vmatpush1.msra.mxu0 0.0
        %1435 = vmatprep.subr.mxu0 0.0
        %1436 = vmatpush1.msra.mxu0 0.0
        %1437 = vmatprep.subr.mxu0 0.0
        %1438 = vmatpush1.msra.mxu0 0.0
        %1439 = vmatprep.subr.mxu0 0.0
        %1440 = vmatpush1.msra.mxu0 0.0
        %1441 = vmatprep.subr.mxu0 0.0
        %1442 = vmatpush1.msra.mxu0 0.0
        %1443 = vmatprep.subr.mxu0 0.0
        %1444 = vmatpush1.msra.mxu0 0.0
        %1445 = vmatprep.mubr.f32.mxu0 0.0
        %1446 = vmatmul.mubr.f32.gmra.mrb[0].mxu0 %v1103
        %v1447 = vpop.f32.mrb[0].mxu0
        %v1448 = vadd.f32 %v1084, %v1447
        %v1449 = vpop.f32.mrb[0].mxu0
        %v1450 = vadd.f32 %v1084, %v1449
        %1451 = vmatprep.mubr.f32.mxu0 0.0
        %1452 = vmatmul.mubr.f32.gmra.mrb[0].mxu0 %v1106
        %v1453 = vpop.f32.mrb[0].mxu0
        %v1454 = vadd.f32 %v1089, %v1453
        %v1455 = vpop.f32.mrb[0].mxu0
        %v1456 = vadd.f32 %v1089, %v1455
        %1457 = vmatprep.mubr.f32.mxu0 0.0
        %1458 = vmatmul.mubr.f32.gmra.mrb[0].mxu0 %v1109
        %v1459 = vpop.f32.mrb[0].mxu0
        %v1460 = vadd.f32 %v1094, %v1459
        %v1461 = vpop.f32.mrb[0].mxu0
        %v1462 = vadd.f32 %v1094, %v1461
        %1463 = vmatprep.mubr.f32.mxu0 0.0
        %1464 = vmatmul.mubr.f32.gmra.mrb[0].mxu0 %v1112
        %v1465 = vpop.f32.mrb[0].mxu0
        %v1466 = vadd.f32 %v1099, %v1465
        %v1467 = vpop.f32.mrb[0].mxu0
        %v1468 = vadd.f32 %v1099, %v1467
        %1469 = vdwg.mxu0
        %v1470 = vmul.f32 %v1181, 100.0
        %v1471 = vmul.f32 %v1183, 100.0
        %v1472 = vmul.f32 %v1270, 100.0
        %v1473 = vmul.f32 %v1272, 100.0
        %v1474 = vmul.f32 %v1359, 100.0
        %v1475 = vmul.f32 %v1361, 100.0
        %v1476 = vmul.f32 %v1448, 100.0
        %v1477 = vmul.f32 %v1450, 100.0
        %v1478 = vmul.f32 %v1187, 100.0
        %v1479 = vmul.f32 %v1189, 100.0
        %v1480 = vmul.f32 %v1276, 100.0
        %v1481 = vmul.f32 %v1278, 100.0
        %v1482 = vmul.f32 %v1365, 100.0
        %v1483 = vmul.f32 %v1367, 100.0
        %v1484 = vmul.f32 %v1454, 100.0
        %v1485 = vmul.f32 %v1456, 100.0
        %v1486 = vmul.f32 %v1193, 100.0
        %v1487 = vmul.f32 %v1195, 100.0
        %v1488 = vmul.f32 %v1282, 100.0
        %v1489 = vmul.f32 %v1284, 100.0
        %v1490 = vmul.f32 %v1371, 100.0
        %v1491 = vmul.f32 %v1373, 100.0
        %v1492 = vmul.f32 %v1460, 100.0
        %v1493 = vmul.f32 %v1462, 100.0
        %v1494 = vmul.f32 %v1199, 100.0
        %v1495 = vmul.f32 %v1201, 100.0
        %v1496 = vmul.f32 %v1288, 100.0
        %v1497 = vmul.f32 %v1290, 100.0
        %v1498 = vmul.f32 %v1377, 100.0
        %v1499 = vmul.f32 %v1379, 100.0
        %v1500 = vmul.f32 %v1466, 100.0
        %v1501 = vmul.f32 %v1468, 100.0
        %vm1502 = vcmp.gt.f32.partialorder %v1470, 20.0
        %vm1503 = vcmp.gt.f32.partialorder %v1471, 20.0
        %vm1504 = vcmp.gt.f32.partialorder %v1472, 20.0
        %vm1505 = vcmp.gt.f32.partialorder %v1473, 20.0
        %vm1506 = vcmp.gt.f32.partialorder %v1474, 20.0
        %vm1507 = vcmp.gt.f32.partialorder %v1475, 20.0
        %vm1508 = vcmp.gt.f32.partialorder %v1476, 20.0
        %vm1509 = vcmp.gt.f32.partialorder %v1477, 20.0
        %vm1510 = vcmp.gt.f32.partialorder %v1478, 20.0
        %vm1511 = vcmp.gt.f32.partialorder %v1479, 20.0
        %vm1512 = vcmp.gt.f32.partialorder %v1480, 20.0
        %vm1513 = vcmp.gt.f32.partialorder %v1481, 20.0
        %vm1514 = vcmp.gt.f32.partialorder %v1482, 20.0
        %vm1515 = vcmp.gt.f32.partialorder %v1483, 20.0
        %vm1516 = vcmp.gt.f32.partialorder %v1484, 20.0
        %vm1517 = vcmp.gt.f32.partialorder %v1485, 20.0
        %vm1518 = vcmp.gt.f32.partialorder %v1486, 20.0
        %vm1519 = vcmp.gt.f32.partialorder %v1487, 20.0
        %vm1520 = vcmp.gt.f32.partialorder %v1488, 20.0
        %vm1521 = vcmp.gt.f32.partialorder %v1489, 20.0
        %vm1522 = vcmp.gt.f32.partialorder %v1490, 20.0
        %vm1523 = vcmp.gt.f32.partialorder %v1491, 20.0
        %vm1524 = vcmp.gt.f32.partialorder %v1492, 20.0
        %vm1525 = vcmp.gt.f32.partialorder %v1493, 20.0
        %vm1526 = vcmp.gt.f32.partialorder %v1494, 20.0
        %vm1527 = vcmp.gt.f32.partialorder %v1495, 20.0
        %vm1528 = vcmp.gt.f32.partialorder %v1496, 20.0
        %vm1529 = vcmp.gt.f32.partialorder %v1497, 20.0
        %vm1530 = vcmp.gt.f32.partialorder %v1498, 20.0
        %vm1531 = vcmp.gt.f32.partialorder %v1499, 20.0
        %vm1532 = vcmp.gt.f32.partialorder %v1500, 20.0
        %vm1533 = vcmp.gt.f32.partialorder %v1501, 20.0
        %v1534 = vmin.f32 %v1470, 20.0
        %v1535 = vmin.f32 %v1471, 20.0
        %v1536 = vmin.f32 %v1472, 20.0
        %v1537 = vmin.f32 %v1473, 20.0
        %v1538 = vmin.f32 %v1474, 20.0
        %v1539 = vmin.f32 %v1475, 20.0
        %v1540 = vmin.f32 %v1476, 20.0
        %v1541 = vmin.f32 %v1477, 20.0
        %v1542 = vmin.f32 %v1478, 20.0
        %v1543 = vmin.f32 %v1479, 20.0
        %v1544 = vmin.f32 %v1480, 20.0
        %v1545 = vmin.f32 %v1481, 20.0
        %v1546 = vmin.f32 %v1482, 20.0
        %v1547 = vmin.f32 %v1483, 20.0
        %v1548 = vmin.f32 %v1484, 20.0
        %v1549 = vmin.f32 %v1485, 20.0
        %v1550 = vmin.f32 %v1486, 20.0
        %v1551 = vmin.f32 %v1487, 20.0
        %v1552 = vmin.f32 %v1488, 20.0
        %v1553 = vmin.f32 %v1489, 20.0
        %v1554 = vmin.f32 %v1490, 20.0
        %v1555 = vmin.f32 %v1491, 20.0
        %v1556 = vmin.f32 %v1492, 20.0
        %v1557 = vmin.f32 %v1493, 20.0
        %v1558 = vmin.f32 %v1494, 20.0
        %v1559 = vmin.f32 %v1495, 20.0
        %v1560 = vmin.f32 %v1496, 20.0
        %v1561 = vmin.f32 %v1497, 20.0
        %v1562 = vmin.f32 %v1498, 20.0
        %v1563 = vmin.f32 %v1499, 20.0
        %v1564 = vmin.f32 %v1500, 20.0
        %v1565 = vmin.f32 %v1501, 20.0
        %v1566 = vmul.f32 %v1534, 1.442695
        %v1567 = vpow.pop %v1566
        %v1568 = vmul.f32 %v1535, 1.442695
        %v1569 = vpow.pop %v1568
        %v1570 = vmul.f32 %v1536, 1.442695
        %v1571 = vpow.pop %v1570
        %v1572 = vmul.f32 %v1537, 1.442695
        %v1573 = vpow.pop %v1572
        %v1574 = vmul.f32 %v1538, 1.442695
        %v1575 = vpow.pop %v1574
        %v1576 = vmul.f32 %v1539, 1.442695
        %v1577 = vpow.pop %v1576
        %v1578 = vmul.f32 %v1540, 1.442695
        %v1579 = vpow.pop %v1578
        %v1580 = vmul.f32 %v1541, 1.442695
        %v1581 = vpow.pop %v1580
        %v1582 = vmul.f32 %v1542, 1.442695
        %v1583 = vpow.pop %v1582
        %v1584 = vmul.f32 %v1543, 1.442695
        %v1585 = vpow.pop %v1584
        %v1586 = vmul.f32 %v1544, 1.442695
        %v1587 = vpow.pop %v1586
        %v1588 = vmul.f32 %v1545, 1.442695
        %v1589 = vpow.pop %v1588
        %v1590 = vmul.f32 %v1546, 1.442695
        %v1591 = vpow.pop %v1590
        %v1592 = vmul.f32 %v1547, 1.442695
        %v1593 = vpow.pop %v1592
        %v1594 = vmul.f32 %v1548, 1.442695
        %v1595 = vpow.pop %v1594
        %v1596 = vmul.f32 %v1549, 1.442695
        %v1597 = vpow.pop %v1596
        %v1598 = vmul.f32 %v1550, 1.442695
        %v1599 = vpow.pop %v1598
        %v1600 = vmul.f32 %v1551, 1.442695
        %v1601 = vpow.pop %v1600
        %v1602 = vmul.f32 %v1552, 1.442695
        %v1603 = vpow.pop %v1602
        %v1604 = vmul.f32 %v1553, 1.442695
        %v1605 = vpow.pop %v1604
        %v1606 = vmul.f32 %v1554, 1.442695
        %v1607 = vpow.pop %v1606
        %v1608 = vmul.f32 %v1555, 1.442695
        %v1609 = vpow.pop %v1608
        %v1610 = vmul.f32 %v1556, 1.442695
        %v1611 = vpow.pop %v1610
        %v1612 = vmul.f32 %v1557, 1.442695
        %v1613 = vpow.pop %v1612
        %v1614 = vmul.f32 %v1558, 1.442695
        %v1615 = vpow.pop %v1614
        %v1616 = vmul.f32 %v1559, 1.442695
        %v1617 = vpow.pop %v1616
        %v1618 = vmul.f32 %v1560, 1.442695
        %v1619 = vpow.pop %v1618
        %v1620 = vmul.f32 %v1561, 1.442695
        %v1621 = vpow.pop %v1620
        %v1622 = vmul.f32 %v1562, 1.442695
        %v1623 = vpow.pop %v1622
        %v1624 = vmul.f32 %v1563, 1.442695
        %v1625 = vpow.pop %v1624
        %v1626 = vmul.f32 %v1564, 1.442695
        %v1627 = vpow.pop %v1626
        %v1628 = vmul.f32 %v1565, 1.442695
        %v1629 = vpow.pop %v1628
        %v1630 = vadd.f32 %v1567, 1.0
        %v1631 = vadd.f32 %v1569, 1.0
        %v1632 = vadd.f32 %v1571, 1.0
        %v1633 = vadd.f32 %v1573, 1.0
        %v1634 = vadd.f32 %v1575, 1.0
        %v1635 = vadd.f32 %v1577, 1.0
        %v1636 = vadd.f32 %v1579, 1.0
        %v1637 = vadd.f32 %v1581, 1.0
        %v1638 = vadd.f32 %v1583, 1.0
        %v1639 = vadd.f32 %v1585, 1.0
        %v1640 = vadd.f32 %v1587, 1.0
        %v1641 = vadd.f32 %v1589, 1.0
        %v1642 = vadd.f32 %v1591, 1.0
        %v1643 = vadd.f32 %v1593, 1.0
        %v1644 = vadd.f32 %v1595, 1.0
        %v1645 = vadd.f32 %v1597, 1.0
        %v1646 = vadd.f32 %v1599, 1.0
        %v1647 = vadd.f32 %v1601, 1.0
        %v1648 = vadd.f32 %v1603, 1.0
        %v1649 = vadd.f32 %v1605, 1.0
        %v1650 = vadd.f32 %v1607, 1.0
        %v1651 = vadd.f32 %v1609, 1.0
        %v1652 = vadd.f32 %v1611, 1.0
        %v1653 = vadd.f32 %v1613, 1.0
        %v1654 = vadd.f32 %v1615, 1.0
        %v1655 = vadd.f32 %v1617, 1.0
        %v1656 = vadd.f32 %v1619, 1.0
        %v1657 = vadd.f32 %v1621, 1.0
        %v1658 = vadd.f32 %v1623, 1.0
        %v1659 = vadd.f32 %v1625, 1.0
        %v1660 = vadd.f32 %v1627, 1.0
        %v1661 = vadd.f32 %v1629, 1.0
        %v1662 = vlog2.pop %v1630
        %v1663 = vmul.f32 %v1662, 0.6931472
        %v1664 = vlog2.pop %v1631
        %v1665 = vmul.f32 %v1664, 0.6931472
        %v1666 = vlog2.pop %v1632
        %v1667 = vmul.f32 %v1666, 0.6931472
        %v1668 = vlog2.pop %v1633
        %v1669 = vmul.f32 %v1668, 0.6931472
        %v1670 = vlog2.pop %v1634
        %v1671 = vmul.f32 %v1670, 0.6931472
        %v1672 = vlog2.pop %v1635
        %v1673 = vmul.f32 %v1672, 0.6931472
        %v1674 = vlog2.pop %v1636
        %v1675 = vmul.f32 %v1674, 0.6931472
        %v1676 = vlog2.pop %v1637
        %v1677 = vmul.f32 %v1676, 0.6931472
        %v1678 = vlog2.pop %v1638
        %v1679 = vmul.f32 %v1678, 0.6931472
        %v1680 = vlog2.pop %v1639
        %v1681 = vmul.f32 %v1680, 0.6931472
        %v1682 = vlog2.pop %v1640
        %v1683 = vmul.f32 %v1682, 0.6931472
        %v1684 = vlog2.pop %v1641
        %v1685 = vmul.f32 %v1684, 0.6931472
        %v1686 = vlog2.pop %v1642
        %v1687 = vmul.f32 %v1686, 0.6931472
        %v1688 = vlog2.pop %v1643
        %v1689 = vmul.f32 %v1688, 0.6931472
        %v1690 = vlog2.pop %v1644
        %v1691 = vmul.f32 %v1690, 0.6931472
        %v1692 = vlog2.pop %v1645
        %v1693 = vmul.f32 %v1692, 0.6931472
        %v1694 = vlog2.pop %v1646
        %v1695 = vmul.f32 %v1694, 0.6931472
        %v1696 = vlog2.pop %v1647
        %v1697 = vmul.f32 %v1696, 0.6931472
        %v1698 = vlog2.pop %v1648
        %v1699 = vmul.f32 %v1698, 0.6931472
        %v1700 = vlog2.pop %v1649
        %v1701 = vmul.f32 %v1700, 0.6931472
        %v1702 = vlog2.pop %v1650
        %v1703 = vmul.f32 %v1702, 0.6931472
        %v1704 = vlog2.pop %v1651
        %v1705 = vmul.f32 %v1704, 0.6931472
        %v1706 = vlog2.pop %v1652
        %v1707 = vmul.f32 %v1706, 0.6931472
        %v1708 = vlog2.pop %v1653
        %v1709 = vmul.f32 %v1708, 0.6931472
        %v1710 = vlog2.pop %v1654
        %v1711 = vmul.f32 %v1710, 0.6931472
        %v1712 = vlog2.pop %v1655
        %v1713 = vmul.f32 %v1712, 0.6931472
        %v1714 = vlog2.pop %v1656
        %v1715 = vmul.f32 %v1714, 0.6931472
        %v1716 = vlog2.pop %v1657
        %v1717 = vmul.f32 %v1716, 0.6931472
        %v1718 = vlog2.pop %v1658
        %v1719 = vmul.f32 %v1718, 0.6931472
        %v1720 = vlog2.pop %v1659
        %v1721 = vmul.f32 %v1720, 0.6931472
        %v1722 = vlog2.pop %v1660
        %v1723 = vmul.f32 %v1722, 0.6931472
        %v1724 = vlog2.pop %v1661
        %v1725 = vmul.f32 %v1724, 0.6931472
        %v1726 = vmul.f32 %v1663, %v1008
        %v1727 = vmul.f32 %v1665, %v1008
        %v1728 = vmul.f32 %v1667, %v1008
        %v1729 = vmul.f32 %v1669, %v1008
        %v1730 = vmul.f32 %v1671, %v1008
        %v1731 = vmul.f32 %v1673, %v1008
        %v1732 = vmul.f32 %v1675, %v1008
        %v1733 = vmul.f32 %v1677, %v1008
        %v1734 = vmul.f32 %v1679, %v1008
        %v1735 = vmul.f32 %v1681, %v1008
        %v1736 = vmul.f32 %v1683, %v1008
        %v1737 = vmul.f32 %v1685, %v1008
        %v1738 = vmul.f32 %v1687, %v1008
        %v1739 = vmul.f32 %v1689, %v1008
        %v1740 = vmul.f32 %v1691, %v1008
        %v1741 = vmul.f32 %v1693, %v1008
        %v1742 = vmul.f32 %v1695, %v1008
        %v1743 = vmul.f32 %v1697, %v1008
        %v1744 = vmul.f32 %v1699, %v1008
        %v1745 = vmul.f32 %v1701, %v1008
        %v1746 = vmul.f32 %v1703, %v1008
        %v1747 = vmul.f32 %v1705, %v1008
        %v1748 = vmul.f32 %v1707, %v1008
        %v1749 = vmul.f32 %v1709, %v1008
        %v1750 = vmul.f32 %v1711, %v1008
        %v1751 = vmul.f32 %v1713, %v1008
        %v1752 = vmul.f32 %v1715, %v1008
        %v1753 = vmul.f32 %v1717, %v1008
        %v1754 = vmul.f32 %v1719, %v1008
        %v1755 = vmul.f32 %v1721, %v1008
        %v1756 = vmul.f32 %v1723, %v1008
        %v1757 = vmul.f32 %v1725, %v1008
        %v1758 = vsel %vm1502, %v1181, %v1726
        %v1759 = vsel %vm1503, %v1183, %v1727
        %v1760 = vsel %vm1504, %v1270, %v1728
        %v1761 = vsel %vm1505, %v1272, %v1729
        %v1762 = vsel %vm1506, %v1359, %v1730
        %v1763 = vsel %vm1507, %v1361, %v1731
        %v1764 = vsel %vm1508, %v1448, %v1732
        %v1765 = vsel %vm1509, %v1450, %v1733
        %v1766 = vsel %vm1510, %v1187, %v1734
        %v1767 = vsel %vm1511, %v1189, %v1735
        %v1768 = vsel %vm1512, %v1276, %v1736
        %v1769 = vsel %vm1513, %v1278, %v1737
        %v1770 = vsel %vm1514, %v1365, %v1738
        %v1771 = vsel %vm1515, %v1367, %v1739
        %v1772 = vsel %vm1516, %v1454, %v1740
        %v1773 = vsel %vm1517, %v1456, %v1741
        %v1774 = vsel %vm1518, %v1193, %v1742
        %v1775 = vsel %vm1519, %v1195, %v1743
        %v1776 = vsel %vm1520, %v1282, %v1744
        %v1777 = vsel %vm1521, %v1284, %v1745
        %v1778 = vsel %vm1522, %v1371, %v1746
        %v1779 = vsel %vm1523, %v1373, %v1747
        %v1780 = vsel %vm1524, %v1460, %v1748
        %v1781 = vsel %vm1525, %v1462, %v1749
        %v1782 = vsel %vm1526, %v1199, %v1750
        %v1783 = vsel %vm1527, %v1201, %v1751
        %v1784 = vsel %vm1528, %v1288, %v1752
        %v1785 = vsel %vm1529, %v1290, %v1753
        %v1786 = vsel %vm1530, %v1377, %v1754
        %v1787 = vsel %vm1531, %v1379, %v1755
        %v1788 = vsel %vm1532, %v1466, %v1756
        %v1789 = vsel %vm1533, %v1468, %v1757
        %s1790 = scalar_lea.vmem [#allocation2], 32
        %v1791 = vld [vmem:[%s1790] sm:$0xff]
        %v1792 = vld [vmem:[%s1790 + $0x8] sm:$0xff]
        %v1793 = vld [vmem:[%s1790 + $0x10] sm:$0xff]
        %v1794 = vld [vmem:[%s1790 + $0x18] sm:$0xff]
        %s1795 = scalar_lea.vmem %s4, 32
        %v1796 = vld [vmem:[%s1795] sm:$0xff]
        %v1797 = vld [vmem:[%s1795 + $0x8] sm:$0xff]
        %v1798 = vld [vmem:[%s1795 + $0x10] sm:$0xff]
        %v1799 = vld [vmem:[%s1795 + $0x18] sm:$0xff]
        %1801 = vset.pattern.permute.xlu0 0
        %1802 = vperm.xlu0 %1801, %v1796
        %v1803 = vpop.permute.xlu0 %1802
        %1806 = vset.pattern.permute.xlu0 0
        %1807 = vperm.xlu0 %1806, %v1797
        %v1808 = vpop.permute.xlu0 %1807
        %1811 = vset.pattern.permute.xlu0 0
        %1812 = vperm.xlu0 %1811, %v1798
        %v1813 = vpop.permute.xlu0 %1812
        %1816 = vset.pattern.permute.xlu0 0
        %1817 = vperm.xlu0 %1816, %v1799
        %v1818 = vpop.permute.xlu0 %1817
        %v1821 = vsel %vm1101, %v1791, 0
        %v1824 = vsel %vm1101, %v1792, 0
        %v1827 = vsel %vm1101, %v1793, 0
        %v1830 = vsel %vm1101, %v1794, 0
        %1832 = vmatprep.subr.mxu0 %v1759
        %1833 = vmatpush1.msra.mxu0 %v1758
        %1834 = vmatprep.subr.mxu0 %v1767
        %1835 = vmatpush1.msra.mxu0 %v1766
        %1836 = vmatprep.subr.mxu0 %v1775
        %1837 = vmatpush1.msra.mxu0 %v1774
        %1838 = vmatprep.subr.mxu0 %v1783
        %1839 = vmatpush1.msra.mxu0 %v1782
        %1840 = vmatprep.subr.mxu0 0.0
        %1841 = vmatpush1.msra.mxu0 0.0
        %1842 = vmatprep.subr.mxu0 0.0
        %1843 = vmatpush1.msra.mxu0 0.0
        %1844 = vmatprep.subr.mxu0 0.0
        %1845 = vmatpush1.msra.mxu0 0.0
        %1846 = vmatprep.subr.mxu0 0.0
        %1847 = vmatpush1.msra.mxu0 0.0
        %1848 = vmatprep.subr.mxu0 0.0
        %1849 = vmatpush1.msra.mxu0 0.0
        %1850 = vmatprep.subr.mxu0 0.0
        %1851 = vmatpush1.msra.mxu0 0.0
        %1852 = vmatprep.subr.mxu0 0.0
        %1853 = vmatpush1.msra.mxu0 0.0
        %1854 = vmatprep.subr.mxu0 0.0
        %1855 = vmatpush1.msra.mxu0 0.0
        %1856 = vmatprep.subr.mxu0 0.0
        %1857 = vmatpush1.msra.mxu0 0.0
        %1858 = vmatprep.subr.mxu0 0.0
        %1859 = vmatpush1.msra.mxu0 0.0
        %1860 = vmatprep.subr.mxu0 0.0
        %1861 = vmatpush1.msra.mxu0 0.0
        %1862 = vmatprep.subr.mxu0 0.0
        %1863 = vmatpush1.msra.mxu0 0.0
        %1864 = vmatprep.subr.mxu0 0.0
        %1865 = vmatpush1.msra.mxu0 0.0
        %1866 = vmatprep.subr.mxu0 0.0
        %1867 = vmatpush1.msra.mxu0 0.0
        %1868 = vmatprep.subr.mxu0 0.0
        %1869 = vmatpush1.msra.mxu0 0.0
        %1870 = vmatprep.subr.mxu0 0.0
        %1871 = vmatpush1.msra.mxu0 0.0
        %1872 = vmatprep.subr.mxu0 0.0
        %1873 = vmatpush1.msra.mxu0 0.0
        %1874 = vmatprep.subr.mxu0 0.0
        %1875 = vmatpush1.msra.mxu0 0.0
        %1876 = vmatprep.subr.mxu0 0.0
        %1877 = vmatpush1.msra.mxu0 0.0
        %1878 = vmatprep.subr.mxu0 0.0
        %1879 = vmatpush1.msra.mxu0 0.0
        %1880 = vmatprep.subr.mxu0 0.0
        %1881 = vmatpush1.msra.mxu0 0.0
        %1882 = vmatprep.subr.mxu0 0.0
        %1883 = vmatpush1.msra.mxu0 0.0
        %1884 = vmatprep.subr.mxu0 0.0
        %1885 = vmatpush1.msra.mxu0 0.0
        %1886 = vmatprep.subr.mxu0 0.0
        %1887 = vmatpush1.msra.mxu0 0.0
        %1888 = vmatprep.subr.mxu0 0.0
        %1889 = vmatpush1.msra.mxu0 0.0
        %1890 = vmatprep.subr.mxu0 0.0
        %1891 = vmatpush1.msra.mxu0 0.0
        %1892 = vmatprep.subr.mxu0 0.0
        %1893 = vmatpush1.msra.mxu0 0.0
        %1894 = vmatprep.subr.mxu0 0.0
        %1895 = vmatpush1.msra.mxu0 0.0
        %1896 = vmatprep.mubr.f32.mxu0 0.0
        %1897 = vmatmul.mubr.f32.gmra.mrb[0].mxu0 %v1821
        %v1898 = vpop.f32.mrb[0].mxu0
        %v1899 = vadd.f32 %v1803, %v1898
        %v1900 = vpop.f32.mrb[0].mxu0
        %v1901 = vadd.f32 %v1803, %v1900
        %1902 = vmatprep.mubr.f32.mxu0 0.0
        %1903 = vmatmul.mubr.f32.gmra.mrb[0].mxu0 %v1824
        %v1904 = vpop.f32.mrb[0].mxu0
        %v1905 = vadd.f32 %v1808, %v1904
        %v1906 = vpop.f32.mrb[0].mxu0
        %v1907 = vadd.f32 %v1808, %v1906
        %1908 = vmatprep.mubr.f32.mxu0 0.0
        %1909 = vmatmul.mubr.f32.gmra.mrb[0].mxu0 %v1827
        %v1910 = vpop.f32.mrb[0].mxu0
        %v1911 = vadd.f32 %v1813, %v1910
        %v1912 = vpop.f32.mrb[0].mxu0
        %v1913 = vadd.f32 %v1813, %v1912
        %1914 = vmatprep.mubr.f32.mxu0 0.0
        %1915 = vmatmul.mubr.f32.gmra.mrb[0].mxu0 %v1830
        %v1916 = vpop.f32.mrb[0].mxu0
        %v1917 = vadd.f32 %v1818, %v1916
        %v1918 = vpop.f32.mrb[0].mxu0
        %v1919 = vadd.f32 %v1818, %v1918
        %1920 = vdwg.mxu0
        %1921 = vmatprep.subr.mxu0 %v1761
        %1922 = vmatpush1.msra.mxu0 %v1760
        %1923 = vmatprep.subr.mxu0 %v1769
        %1924 = vmatpush1.msra.mxu0 %v1768
        %1925 = vmatprep.subr.mxu0 %v1777
        %1926 = vmatpush1.msra.mxu0 %v1776
        %1927 = vmatprep.subr.mxu0 %v1785
        %1928 = vmatpush1.msra.mxu0 %v1784
        %1929 = vmatprep.subr.mxu0 0.0
        %1930 = vmatpush1.msra.mxu0 0.0
        %1931 = vmatprep.subr.mxu0 0.0
        %1932 = vmatpush1.msra.mxu0 0.0
        %1933 = vmatprep.subr.mxu0 0.0
        %1934 = vmatpush1.msra.mxu0 0.0
        %1935 = vmatprep.subr.mxu0 0.0
        %1936 = vmatpush1.msra.mxu0 0.0
        %1937 = vmatprep.subr.mxu0 0.0
        %1938 = vmatpush1.msra.mxu0 0.0
        %1939 = vmatprep.subr.mxu0 0.0
        %1940 = vmatpush1.msra.mxu0 0.0
        %1941 = vmatprep.subr.mxu0 0.0
        %1942 = vmatpush1.msra.mxu0 0.0
        %1943 = vmatprep.subr.mxu0 0.0
        %1944 = vmatpush1.msra.mxu0 0.0
        %1945 = vmatprep.subr.mxu0 0.0
        %1946 = vmatpush1.msra.mxu0 0.0
        %1947 = vmatprep.subr.mxu0 0.0
        %1948 = vmatpush1.msra.mxu0 0.0
        %1949 = vmatprep.subr.mxu0 0.0
        %1950 = vmatpush1.msra.mxu0 0.0
        %1951 = vmatprep.subr.mxu0 0.0
        %1952 = vmatpush1.msra.mxu0 0.0
        %1953 = vmatprep.subr.mxu0 0.0
        %1954 = vmatpush1.msra.mxu0 0.0
        %1955 = vmatprep.subr.mxu0 0.0
        %1956 = vmatpush1.msra.mxu0 0.0
        %1957 = vmatprep.subr.mxu0 0.0
        %1958 = vmatpush1.msra.mxu0 0.0
        %1959 = vmatprep.subr.mxu0 0.0
        %1960 = vmatpush1.msra.mxu0 0.0
        %1961 = vmatprep.subr.mxu0 0.0
        %1962 = vmatpush1.msra.mxu0 0.0
        %1963 = vmatprep.subr.mxu0 0.0
        %1964 = vmatpush1.msra.mxu0 0.0
        %1965 = vmatprep.subr.mxu0 0.0
        %1966 = vmatpush1.msra.mxu0 0.0
        %1967 = vmatprep.subr.mxu0 0.0
        %1968 = vmatpush1.msra.mxu0 0.0
        %1969 = vmatprep.subr.mxu0 0.0
        %1970 = vmatpush1.msra.mxu0 0.0
        %1971 = vmatprep.subr.mxu0 0.0
        %1972 = vmatpush1.msra.mxu0 0.0
        %1973 = vmatprep.subr.mxu0 0.0
        %1974 = vmatpush1.msra.mxu0 0.0
        %1975 = vmatprep.subr.mxu0 0.0
        %1976 = vmatpush1.msra.mxu0 0.0
        %1977 = vmatprep.subr.mxu0 0.0
        %1978 = vmatpush1.msra.mxu0 0.0
        %1979 = vmatprep.subr.mxu0 0.0
        %1980 = vmatpush1.msra.mxu0 0.0
        %1981 = vmatprep.subr.mxu0 0.0
        %1982 = vmatpush1.msra.mxu0 0.0
        %1983 = vmatprep.subr.mxu0 0.0
        %1984 = vmatpush1.msra.mxu0 0.0
        %1985 = vmatprep.mubr.f32.mxu0 0.0
        %1986 = vmatmul.mubr.f32.gmra.mrb[0].mxu0 %v1821
        %v1987 = vpop.f32.mrb[0].mxu0
        %v1988 = vadd.f32 %v1803, %v1987
        %v1989 = vpop.f32.mrb[0].mxu0
        %v1990 = vadd.f32 %v1803, %v1989
        %1991 = vmatprep.mubr.f32.mxu0 0.0
        %1992 = vmatmul.mubr.f32.gmra.mrb[0].mxu0 %v1824
        %v1993 = vpop.f32.mrb[0].mxu0
        %v1994 = vadd.f32 %v1808, %v1993
        %v1995 = vpop.f32.mrb[0].mxu0
        %v1996 = vadd.f32 %v1808, %v1995
        %1997 = vmatprep.mubr.f32.mxu0 0.0
        %1998 = vmatmul.mubr.f32.gmra.mrb[0].mxu0 %v1827
        %v1999 = vpop.f32.mrb[0].mxu0
        %v2000 = vadd.f32 %v1813, %v1999
        %v2001 = vpop.f32.mrb[0].mxu0
        %v2002 = vadd.f32 %v1813, %v2001
        %2003 = vmatprep.mubr.f32.mxu0 0.0
        %2004 = vmatmul.mubr.f32.gmra.mrb[0].mxu0 %v1830
        %v2005 = vpop.f32.mrb[0].mxu0
        %v2006 = vadd.f32 %v1818, %v2005
        %v2007 = vpop.f32.mrb[0].mxu0
        %v2008 = vadd.f32 %v1818, %v2007
        %2009 = vdwg.mxu0
        %2010 = vmatprep.subr.mxu0 %v1763
        %2011 = vmatpush1.msra.mxu0 %v1762
        %2012 = vmatprep.subr.mxu0 %v1771
        %2013 = vmatpush1.msra.mxu0 %v1770
        %2014 = vmatprep.subr.mxu0 %v1779
        %2015 = vmatpush1.msra.mxu0 %v1778
        %2016 = vmatprep.subr.mxu0 %v1787
        %2017 = vmatpush1.msra.mxu0 %v1786
        %2018 = vmatprep.subr.mxu0 0.0
        %2019 = vmatpush1.msra.mxu0 0.0
        %2020 = vmatprep.subr.mxu0 0.0
        %2021 = vmatpush1.msra.mxu0 0.0
        %2022 = vmatprep.subr.mxu0 0.0
        %2023 = vmatpush1.msra.mxu0 0.0
        %2024 = vmatprep.subr.mxu0 0.0
        %2025 = vmatpush1.msra.mxu0 0.0
        %2026 = vmatprep.subr.mxu0 0.0
        %2027 = vmatpush1.msra.mxu0 0.0
        %2028 = vmatprep.subr.mxu0 0.0
        %2029 = vmatpush1.msra.mxu0 0.0
        %2030 = vmatprep.subr.mxu0 0.0
        %2031 = vmatpush1.msra.mxu0 0.0
        %2032 = vmatprep.subr.mxu0 0.0
        %2033 = vmatpush1.msra.mxu0 0.0
        %2034 = vmatprep.subr.mxu0 0.0
        %2035 = vmatpush1.msra.mxu0 0.0
        %2036 = vmatprep.subr.mxu0 0.0
        %2037 = vmatpush1.msra.mxu0 0.0
        %2038 = vmatprep.subr.mxu0 0.0
        %2039 = vmatpush1.msra.mxu0 0.0
        %2040 = vmatprep.subr.mxu0 0.0
        %2041 = vmatpush1.msra.mxu0 0.0
        %2042 = vmatprep.subr.mxu0 0.0
        %2043 = vmatpush1.msra.mxu0 0.0
        %2044 = vmatprep.subr.mxu0 0.0
        %2045 = vmatpush1.msra.mxu0 0.0
        %2046 = vmatprep.subr.mxu0 0.0
        %2047 = vmatpush1.msra.mxu0 0.0
        %2048 = vmatprep.subr.mxu0 0.0
        %2049 = vmatpush1.msra.mxu0 0.0
        %2050 = vmatprep.subr.mxu0 0.0
        %2051 = vmatpush1.msra.mxu0 0.0
        %2052 = vmatprep.subr.mxu0 0.0
        %2053 = vmatpush1.msra.mxu0 0.0
        %2054 = vmatprep.subr.mxu0 0.0
        %2055 = vmatpush1.msra.mxu0 0.0
        %2056 = vmatprep.subr.mxu0 0.0
        %2057 = vmatpush1.msra.mxu0 0.0
        %2058 = vmatprep.subr.mxu0 0.0
        %2059 = vmatpush1.msra.mxu0 0.0
        %2060 = vmatprep.subr.mxu0 0.0
        %2061 = vmatpush1.msra.mxu0 0.0
        %2062 = vmatprep.subr.mxu0 0.0
        %2063 = vmatpush1.msra.mxu0 0.0
        %2064 = vmatprep.subr.mxu0 0.0
        %2065 = vmatpush1.msra.mxu0 0.0
        %2066 = vmatprep.subr.mxu0 0.0
        %2067 = vmatpush1.msra.mxu0 0.0
        %2068 = vmatprep.subr.mxu0 0.0
        %2069 = vmatpush1.msra.mxu0 0.0
        %2070 = vmatprep.subr.mxu0 0.0
        %2071 = vmatpush1.msra.mxu0 0.0
        %2072 = vmatprep.subr.mxu0 0.0
        %2073 = vmatpush1.msra.mxu0 0.0
        %2074 = vmatprep.mubr.f32.mxu0 0.0
        %2075 = vmatmul.mubr.f32.gmra.mrb[0].mxu0 %v1821
        %v2076 = vpop.f32.mrb[0].mxu0
        %v2077 = vadd.f32 %v1803, %v2076
        %v2078 = vpop.f32.mrb[0].mxu0
        %v2079 = vadd.f32 %v1803, %v2078
        %2080 = vmatprep.mubr.f32.mxu0 0.0
        %2081 = vmatmul.mubr.f32.gmra.mrb[0].mxu0 %v1824
        %v2082 = vpop.f32.mrb[0].mxu0
        %v2083 = vadd.f32 %v1808, %v2082
        %v2084 = vpop.f32.mrb[0].mxu0
        %v2085 = vadd.f32 %v1808, %v2084
        %2086 = vmatprep.mubr.f32.mxu0 0.0
        %2087 = vmatmul.mubr.f32.gmra.mrb[0].mxu0 %v1827
        %v2088 = vpop.f32.mrb[0].mxu0
        %v2089 = vadd.f32 %v1813, %v2088
        %v2090 = vpop.f32.mrb[0].mxu0
        %v2091 = vadd.f32 %v1813, %v2090
        %2092 = vmatprep.mubr.f32.mxu0 0.0
        %2093 = vmatmul.mubr.f32.gmra.mrb[0].mxu0 %v1830
        %v2094 = vpop.f32.mrb[0].mxu0
        %v2095 = vadd.f32 %v1818, %v2094
        %v2096 = vpop.f32.mrb[0].mxu0
        %v2097 = vadd.f32 %v1818, %v2096
        %2098 = vdwg.mxu0
        %2099 = vmatprep.subr.mxu0 %v1765
        %2100 = vmatpush1.msra.mxu0 %v1764
        %2101 = vmatprep.subr.mxu0 %v1773
        %2102 = vmatpush1.msra.mxu0 %v1772
        %2103 = vmatprep.subr.mxu0 %v1781
        %2104 = vmatpush1.msra.mxu0 %v1780
        %2105 = vmatprep.subr.mxu0 %v1789
        %2106 = vmatpush1.msra.mxu0 %v1788
        %2107 = vmatprep.subr.mxu0 0.0
        %2108 = vmatpush1.msra.mxu0 0.0
        %2109 = vmatprep.subr.mxu0 0.0
        %2110 = vmatpush1.msra.mxu0 0.0
        %2111 = vmatprep.subr.mxu0 0.0
        %2112 = vmatpush1.msra.mxu0 0.0
        %2113 = vmatprep.subr.mxu0 0.0
        %2114 = vmatpush1.msra.mxu0 0.0
        %2115 = vmatprep.subr.mxu0 0.0
        %2116 = vmatpush1.msra.mxu0 0.0
        %2117 = vmatprep.subr.mxu0 0.0
        %2118 = vmatpush1.msra.mxu0 0.0
        %2119 = vmatprep.subr.mxu0 0.0
        %2120 = vmatpush1.msra.mxu0 0.0
        %2121 = vmatprep.subr.mxu0 0.0
        %2122 = vmatpush1.msra.mxu0 0.0
        %2123 = vmatprep.subr.mxu0 0.0
        %2124 = vmatpush1.msra.mxu0 0.0
        %2125 = vmatprep.subr.mxu0 0.0
        %2126 = vmatpush1.msra.mxu0 0.0
        %2127 = vmatprep.subr.mxu0 0.0
        %2128 = vmatpush1.msra.mxu0 0.0
        %2129 = vmatprep.subr.mxu0 0.0
        %2130 = vmatpush1.msra.mxu0 0.0
        %2131 = vmatprep.subr.mxu0 0.0
        %2132 = vmatpush1.msra.mxu0 0.0
        %2133 = vmatprep.subr.mxu0 0.0
        %2134 = vmatpush1.msra.mxu0 0.0
        %2135 = vmatprep.subr.mxu0 0.0
        %2136 = vmatpush1.msra.mxu0 0.0
        %2137 = vmatprep.subr.mxu0 0.0
        %2138 = vmatpush1.msra.mxu0 0.0
        %2139 = vmatprep.subr.mxu0 0.0
        %2140 = vmatpush1.msra.mxu0 0.0
        %2141 = vmatprep.subr.mxu0 0.0
        %2142 = vmatpush1.msra.mxu0 0.0
        %2143 = vmatprep.subr.mxu0 0.0
        %2144 = vmatpush1.msra.mxu0 0.0
        %2145 = vmatprep.subr.mxu0 0.0
        %2146 = vmatpush1.msra.mxu0 0.0
        %2147 = vmatprep.subr.mxu0 0.0
        %2148 = vmatpush1.msra.mxu0 0.0
        %2149 = vmatprep.subr.mxu0 0.0
        %2150 = vmatpush1.msra.mxu0 0.0
        %2151 = vmatprep.subr.mxu0 0.0
        %2152 = vmatpush1.msra.mxu0 0.0
        %2153 = vmatprep.subr.mxu0 0.0
        %2154 = vmatpush1.msra.mxu0 0.0
        %2155 = vmatprep.subr.mxu0 0.0
        %2156 = vmatpush1.msra.mxu0 0.0
        %2157 = vmatprep.subr.mxu0 0.0
        %2158 = vmatpush1.msra.mxu0 0.0
        %2159 = vmatprep.subr.mxu0 0.0
        %2160 = vmatpush1.msra.mxu0 0.0
        %2161 = vmatprep.subr.mxu0 0.0
        %2162 = vmatpush1.msra.mxu0 0.0
        %2163 = vmatprep.mubr.f32.mxu0 0.0
        %2164 = vmatmul.mubr.f32.gmra.mrb[0].mxu0 %v1821
        %v2165 = vpop.f32.mrb[0].mxu0
        %v2166 = vadd.f32 %v1803, %v2165
        %v2167 = vpop.f32.mrb[0].mxu0
        %v2168 = vadd.f32 %v1803, %v2167
        %2169 = vmatprep.mubr.f32.mxu0 0.0
        %2170 = vmatmul.mubr.f32.gmra.mrb[0].mxu0 %v1824
        %v2171 = vpop.f32.mrb[0].mxu0
        %v2172 = vadd.f32 %v1808, %v2171
        %v2173 = vpop.f32.mrb[0].mxu0
        %v2174 = vadd.f32 %v1808, %v2173
        %2175 = vmatprep.mubr.f32.mxu0 0.0
        %2176 = vmatmul.mubr.f32.gmra.mrb[0].mxu0 %v1827
        %v2177 = vpop.f32.mrb[0].mxu0
        %v2178 = vadd.f32 %v1813, %v2177
        %v2179 = vpop.f32.mrb[0].mxu0
        %v2180 = vadd.f32 %v1813, %v2179
        %2181 = vmatprep.mubr.f32.mxu0 0.0
        %2182 = vmatmul.mubr.f32.gmra.mrb[0].mxu0 %v1830
        %v2183 = vpop.f32.mrb[0].mxu0
        %v2184 = vadd.f32 %v1818, %v2183
        %v2185 = vpop.f32.mrb[0].mxu0
        %v2186 = vadd.f32 %v1818, %v2185
        %2187 = vdwg.mxu0
        %v2188 = vmul.f32 %v1899, 100.0
        %v2189 = vmul.f32 %v1901, 100.0
        %v2190 = vmul.f32 %v1988, 100.0
        %v2191 = vmul.f32 %v1990, 100.0
        %v2192 = vmul.f32 %v2077, 100.0
        %v2193 = vmul.f32 %v2079, 100.0
        %v2194 = vmul.f32 %v2166, 100.0
        %v2195 = vmul.f32 %v2168, 100.0
        %v2196 = vmul.f32 %v1905, 100.0
        %v2197 = vmul.f32 %v1907, 100.0
        %v2198 = vmul.f32 %v1994, 100.0
        %v2199 = vmul.f32 %v1996, 100.0
        %v2200 = vmul.f32 %v2083, 100.0
        %v2201 = vmul.f32 %v2085, 100.0
        %v2202 = vmul.f32 %v2172, 100.0
        %v2203 = vmul.f32 %v2174, 100.0
        %v2204 = vmul.f32 %v1911, 100.0
        %v2205 = vmul.f32 %v1913, 100.0
        %v2206 = vmul.f32 %v2000, 100.0
        %v2207 = vmul.f32 %v2002, 100.0
        %v2208 = vmul.f32 %v2089, 100.0
        %v2209 = vmul.f32 %v2091, 100.0
        %v2210 = vmul.f32 %v2178, 100.0
        %v2211 = vmul.f32 %v2180, 100.0
        %v2212 = vmul.f32 %v1917, 100.0
        %v2213 = vmul.f32 %v1919, 100.0
        %v2214 = vmul.f32 %v2006, 100.0
        %v2215 = vmul.f32 %v2008, 100.0
        %v2216 = vmul.f32 %v2095, 100.0
        %v2217 = vmul.f32 %v2097, 100.0
        %v2218 = vmul.f32 %v2184, 100.0
        %v2219 = vmul.f32 %v2186, 100.0
        %vm2220 = vcmp.gt.f32.partialorder %v2188, 20.0
        %vm2221 = vcmp.gt.f32.partialorder %v2189, 20.0
        %vm2222 = vcmp.gt.f32.partialorder %v2190, 20.0
        %vm2223 = vcmp.gt.f32.partialorder %v2191, 20.0
        %vm2224 = vcmp.gt.f32.partialorder %v2192, 20.0
        %vm2225 = vcmp.gt.f32.partialorder %v2193, 20.0
        %vm2226 = vcmp.gt.f32.partialorder %v2194, 20.0
        %vm2227 = vcmp.gt.f32.partialorder %v2195, 20.0
        %vm2228 = vcmp.gt.f32.partialorder %v2196, 20.0
        %vm2229 = vcmp.gt.f32.partialorder %v2197, 20.0
        %vm2230 = vcmp.gt.f32.partialorder %v2198, 20.0
        %vm2231 = vcmp.gt.f32.partialorder %v2199, 20.0
        %vm2232 = vcmp.gt.f32.partialorder %v2200, 20.0
        %vm2233 = vcmp.gt.f32.partialorder %v2201, 20.0
        %vm2234 = vcmp.gt.f32.partialorder %v2202, 20.0
        %vm2235 = vcmp.gt.f32.partialorder %v2203, 20.0
        %vm2236 = vcmp.gt.f32.partialorder %v2204, 20.0
        %vm2237 = vcmp.gt.f32.partialorder %v2205, 20.0
        %vm2238 = vcmp.gt.f32.partialorder %v2206, 20.0
        %vm2239 = vcmp.gt.f32.partialorder %v2207, 20.0
        %vm2240 = vcmp.gt.f32.partialorder %v2208, 20.0
        %vm2241 = vcmp.gt.f32.partialorder %v2209, 20.0
        %vm2242 = vcmp.gt.f32.partialorder %v2210, 20.0
        %vm2243 = vcmp.gt.f32.partialorder %v2211, 20.0
        %vm2244 = vcmp.gt.f32.partialorder %v2212, 20.0
        %vm2245 = vcmp.gt.f32.partialorder %v2213, 20.0
        %vm2246 = vcmp.gt.f32.partialorder %v2214, 20.0
        %vm2247 = vcmp.gt.f32.partialorder %v2215, 20.0
        %vm2248 = vcmp.gt.f32.partialorder %v2216, 20.0
        %vm2249 = vcmp.gt.f32.partialorder %v2217, 20.0
        %vm2250 = vcmp.gt.f32.partialorder %v2218, 20.0
        %vm2251 = vcmp.gt.f32.partialorder %v2219, 20.0
        %v2252 = vmin.f32 %v2188, 20.0
        %v2253 = vmin.f32 %v2189, 20.0
        %v2254 = vmin.f32 %v2190, 20.0
        %v2255 = vmin.f32 %v2191, 20.0
        %v2256 = vmin.f32 %v2192, 20.0
        %v2257 = vmin.f32 %v2193, 20.0
        %v2258 = vmin.f32 %v2194, 20.0
        %v2259 = vmin.f32 %v2195, 20.0
        %v2260 = vmin.f32 %v2196, 20.0
        %v2261 = vmin.f32 %v2197, 20.0
        %v2262 = vmin.f32 %v2198, 20.0
        %v2263 = vmin.f32 %v2199, 20.0
        %v2264 = vmin.f32 %v2200, 20.0
        %v2265 = vmin.f32 %v2201, 20.0
        %v2266 = vmin.f32 %v2202, 20.0
        %v2267 = vmin.f32 %v2203, 20.0
        %v2268 = vmin.f32 %v2204, 20.0
        %v2269 = vmin.f32 %v2205, 20.0
        %v2270 = vmin.f32 %v2206, 20.0
        %v2271 = vmin.f32 %v2207, 20.0
        %v2272 = vmin.f32 %v2208, 20.0
        %v2273 = vmin.f32 %v2209, 20.0
        %v2274 = vmin.f32 %v2210, 20.0
        %v2275 = vmin.f32 %v2211, 20.0
        %v2276 = vmin.f32 %v2212, 20.0
        %v2277 = vmin.f32 %v2213, 20.0
        %v2278 = vmin.f32 %v2214, 20.0
        %v2279 = vmin.f32 %v2215, 20.0
        %v2280 = vmin.f32 %v2216, 20.0
        %v2281 = vmin.f32 %v2217, 20.0
        %v2282 = vmin.f32 %v2218, 20.0
        %v2283 = vmin.f32 %v2219, 20.0
        %v2284 = vmul.f32 %v2252, 1.442695
        %v2285 = vpow.pop %v2284
        %v2286 = vmul.f32 %v2253, 1.442695
        %v2287 = vpow.pop %v2286
        %v2288 = vmul.f32 %v2254, 1.442695
        %v2289 = vpow.pop %v2288
        %v2290 = vmul.f32 %v2255, 1.442695
        %v2291 = vpow.pop %v2290
        %v2292 = vmul.f32 %v2256, 1.442695
        %v2293 = vpow.pop %v2292
        %v2294 = vmul.f32 %v2257, 1.442695
        %v2295 = vpow.pop %v2294
        %v2296 = vmul.f32 %v2258, 1.442695
        %v2297 = vpow.pop %v2296
        %v2298 = vmul.f32 %v2259, 1.442695
        %v2299 = vpow.pop %v2298
        %v2300 = vmul.f32 %v2260, 1.442695
        %v2301 = vpow.pop %v2300
        %v2302 = vmul.f32 %v2261, 1.442695
        %v2303 = vpow.pop %v2302
        %v2304 = vmul.f32 %v2262, 1.442695
        %v2305 = vpow.pop %v2304
        %v2306 = vmul.f32 %v2263, 1.442695
        %v2307 = vpow.pop %v2306
        %v2308 = vmul.f32 %v2264, 1.442695
        %v2309 = vpow.pop %v2308
        %v2310 = vmul.f32 %v2265, 1.442695
        %v2311 = vpow.pop %v2310
        %v2312 = vmul.f32 %v2266, 1.442695
        %v2313 = vpow.pop %v2312
        %v2314 = vmul.f32 %v2267, 1.442695
        %v2315 = vpow.pop %v2314
        %v2316 = vmul.f32 %v2268, 1.442695
        %v2317 = vpow.pop %v2316
        %v2318 = vmul.f32 %v2269, 1.442695
        %v2319 = vpow.pop %v2318
        %v2320 = vmul.f32 %v2270, 1.442695
        %v2321 = vpow.pop %v2320
        %v2322 = vmul.f32 %v2271, 1.442695
        %v2323 = vpow.pop %v2322
        %v2324 = vmul.f32 %v2272, 1.442695
        %v2325 = vpow.pop %v2324
        %v2326 = vmul.f32 %v2273, 1.442695
        %v2327 = vpow.pop %v2326
        %v2328 = vmul.f32 %v2274, 1.442695
        %v2329 = vpow.pop %v2328
        %v2330 = vmul.f32 %v2275, 1.442695
        %v2331 = vpow.pop %v2330
        %v2332 = vmul.f32 %v2276, 1.442695
        %v2333 = vpow.pop %v2332
        %v2334 = vmul.f32 %v2277, 1.442695
        %v2335 = vpow.pop %v2334
        %v2336 = vmul.f32 %v2278, 1.442695
        %v2337 = vpow.pop %v2336
        %v2338 = vmul.f32 %v2279, 1.442695
        %v2339 = vpow.pop %v2338
        %v2340 = vmul.f32 %v2280, 1.442695
        %v2341 = vpow.pop %v2340
        %v2342 = vmul.f32 %v2281, 1.442695
        %v2343 = vpow.pop %v2342
        %v2344 = vmul.f32 %v2282, 1.442695
        %v2345 = vpow.pop %v2344
        %v2346 = vmul.f32 %v2283, 1.442695
        %v2347 = vpow.pop %v2346
        %v2348 = vadd.f32 %v2285, 1.0
        %v2349 = vadd.f32 %v2287, 1.0
        %v2350 = vadd.f32 %v2289, 1.0
        %v2351 = vadd.f32 %v2291, 1.0
        %v2352 = vadd.f32 %v2293, 1.0
        %v2353 = vadd.f32 %v2295, 1.0
        %v2354 = vadd.f32 %v2297, 1.0
        %v2355 = vadd.f32 %v2299, 1.0
        %v2356 = vadd.f32 %v2301, 1.0
        %v2357 = vadd.f32 %v2303, 1.0
        %v2358 = vadd.f32 %v2305, 1.0
        %v2359 = vadd.f32 %v2307, 1.0
        %v2360 = vadd.f32 %v2309, 1.0
        %v2361 = vadd.f32 %v2311, 1.0
        %v2362 = vadd.f32 %v2313, 1.0
        %v2363 = vadd.f32 %v2315, 1.0
        %v2364 = vadd.f32 %v2317, 1.0
        %v2365 = vadd.f32 %v2319, 1.0
        %v2366 = vadd.f32 %v2321, 1.0
        %v2367 = vadd.f32 %v2323, 1.0
        %v2368 = vadd.f32 %v2325, 1.0
        %v2369 = vadd.f32 %v2327, 1.0
        %v2370 = vadd.f32 %v2329, 1.0
        %v2371 = vadd.f32 %v2331, 1.0
        %v2372 = vadd.f32 %v2333, 1.0
        %v2373 = vadd.f32 %v2335, 1.0
        %v2374 = vadd.f32 %v2337, 1.0
        %v2375 = vadd.f32 %v2339, 1.0
        %v2376 = vadd.f32 %v2341, 1.0
        %v2377 = vadd.f32 %v2343, 1.0
        %v2378 = vadd.f32 %v2345, 1.0
        %v2379 = vadd.f32 %v2347, 1.0
        %v2380 = vlog2.pop %v2348
        %v2381 = vmul.f32 %v2380, 0.6931472
        %v2382 = vlog2.pop %v2349
        %v2383 = vmul.f32 %v2382, 0.6931472
        %v2384 = vlog2.pop %v2350
        %v2385 = vmul.f32 %v2384, 0.6931472
        %v2386 = vlog2.pop %v2351
        %v2387 = vmul.f32 %v2386, 0.6931472
        %v2388 = vlog2.pop %v2352
        %v2389 = vmul.f32 %v2388, 0.6931472
        %v2390 = vlog2.pop %v2353
        %v2391 = vmul.f32 %v2390, 0.6931472
        %v2392 = vlog2.pop %v2354
        %v2393 = vmul.f32 %v2392, 0.6931472
        %v2394 = vlog2.pop %v2355
        %v2395 = vmul.f32 %v2394, 0.6931472
        %v2396 = vlog2.pop %v2356
        %v2397 = vmul.f32 %v2396, 0.6931472
        %v2398 = vlog2.pop %v2357
        %v2399 = vmul.f32 %v2398, 0.6931472
        %v2400 = vlog2.pop %v2358
        %v2401 = vmul.f32 %v2400, 0.6931472
        %v2402 = vlog2.pop %v2359
        %v2403 = vmul.f32 %v2402, 0.6931472
        %v2404 = vlog2.pop %v2360
        %v2405 = vmul.f32 %v2404, 0.6931472
        %v2406 = vlog2.pop %v2361
        %v2407 = vmul.f32 %v2406, 0.6931472
        %v2408 = vlog2.pop %v2362
        %v2409 = vmul.f32 %v2408, 0.6931472
        %v2410 = vlog2.pop %v2363
        %v2411 = vmul.f32 %v2410, 0.6931472
        %v2412 = vlog2.pop %v2364
        %v2413 = vmul.f32 %v2412, 0.6931472
        %v2414 = vlog2.pop %v2365
        %v2415 = vmul.f32 %v2414, 0.6931472
        %v2416 = vlog2.pop %v2366
        %v2417 = vmul.f32 %v2416, 0.6931472
        %v2418 = vlog2.pop %v2367
        %v2419 = vmul.f32 %v2418, 0.6931472
        %v2420 = vlog2.pop %v2368
        %v2421 = vmul.f32 %v2420, 0.6931472
        %v2422 = vlog2.pop %v2369
        %v2423 = vmul.f32 %v2422, 0.6931472
        %v2424 = vlog2.pop %v2370
        %v2425 = vmul.f32 %v2424, 0.6931472
        %v2426 = vlog2.pop %v2371
        %v2427 = vmul.f32 %v2426, 0.6931472
        %v2428 = vlog2.pop %v2372
        %v2429 = vmul.f32 %v2428, 0.6931472
        %v2430 = vlog2.pop %v2373
        %v2431 = vmul.f32 %v2430, 0.6931472
        %v2432 = vlog2.pop %v2374
        %v2433 = vmul.f32 %v2432, 0.6931472
        %v2434 = vlog2.pop %v2375
        %v2435 = vmul.f32 %v2434, 0.6931472
        %v2436 = vlog2.pop %v2376
        %v2437 = vmul.f32 %v2436, 0.6931472
        %v2438 = vlog2.pop %v2377
        %v2439 = vmul.f32 %v2438, 0.6931472
        %v2440 = vlog2.pop %v2378
        %v2441 = vmul.f32 %v2440, 0.6931472
        %v2442 = vlog2.pop %v2379
        %v2443 = vmul.f32 %v2442, 0.6931472
        %v2444 = vmul.f32 %v2381, %v1008
        %v2445 = vmul.f32 %v2383, %v1008
        %v2446 = vmul.f32 %v2385, %v1008
        %v2447 = vmul.f32 %v2387, %v1008
        %v2448 = vmul.f32 %v2389, %v1008
        %v2449 = vmul.f32 %v2391, %v1008
        %v2450 = vmul.f32 %v2393, %v1008
        %v2451 = vmul.f32 %v2395, %v1008
        %v2452 = vmul.f32 %v2397, %v1008
        %v2453 = vmul.f32 %v2399, %v1008
        %v2454 = vmul.f32 %v2401, %v1008
        %v2455 = vmul.f32 %v2403, %v1008
        %v2456 = vmul.f32 %v2405, %v1008
        %v2457 = vmul.f32 %v2407, %v1008
        %v2458 = vmul.f32 %v2409, %v1008
        %v2459 = vmul.f32 %v2411, %v1008
        %v2460 = vmul.f32 %v2413, %v1008
        %v2461 = vmul.f32 %v2415, %v1008
        %v2462 = vmul.f32 %v2417, %v1008
        %v2463 = vmul.f32 %v2419, %v1008
        %v2464 = vmul.f32 %v2421, %v1008
        %v2465 = vmul.f32 %v2423, %v1008
        %v2466 = vmul.f32 %v2425, %v1008
        %v2467 = vmul.f32 %v2427, %v1008
        %v2468 = vmul.f32 %v2429, %v1008
        %v2469 = vmul.f32 %v2431, %v1008
        %v2470 = vmul.f32 %v2433, %v1008
        %v2471 = vmul.f32 %v2435, %v1008
        %v2472 = vmul.f32 %v2437, %v1008
        %v2473 = vmul.f32 %v2439, %v1008
        %v2474 = vmul.f32 %v2441, %v1008
        %v2475 = vmul.f32 %v2443, %v1008
        %v2476 = vsel %vm2220, %v1899, %v2444
        %v2477 = vsel %vm2221, %v1901, %v2445
        %v2478 = vsel %vm2222, %v1988, %v2446
        %v2479 = vsel %vm2223, %v1990, %v2447
        %v2480 = vsel %vm2224, %v2077, %v2448
        %v2481 = vsel %vm2225, %v2079, %v2449
        %v2482 = vsel %vm2226, %v2166, %v2450
        %v2483 = vsel %vm2227, %v2168, %v2451
        %v2484 = vsel %vm2228, %v1905, %v2452
        %v2485 = vsel %vm2229, %v1907, %v2453
        %v2486 = vsel %vm2230, %v1994, %v2454
        %v2487 = vsel %vm2231, %v1996, %v2455
        %v2488 = vsel %vm2232, %v2083, %v2456
        %v2489 = vsel %vm2233, %v2085, %v2457
        %v2490 = vsel %vm2234, %v2172, %v2458
        %v2491 = vsel %vm2235, %v2174, %v2459
        %v2492 = vsel %vm2236, %v1911, %v2460
        %v2493 = vsel %vm2237, %v1913, %v2461
        %v2494 = vsel %vm2238, %v2000, %v2462
        %v2495 = vsel %vm2239, %v2002, %v2463
        %v2496 = vsel %vm2240, %v2089, %v2464
        %v2497 = vsel %vm2241, %v2091, %v2465
        %v2498 = vsel %vm2242, %v2178, %v2466
        %v2499 = vsel %vm2243, %v2180, %v2467
        %v2500 = vsel %vm2244, %v1917, %v2468
        %v2501 = vsel %vm2245, %v1919, %v2469
        %v2502 = vsel %vm2246, %v2006, %v2470
        %v2503 = vsel %vm2247, %v2008, %v2471
        %v2504 = vsel %vm2248, %v2095, %v2472
        %v2505 = vsel %vm2249, %v2097, %v2473
        %v2506 = vsel %vm2250, %v2184, %v2474
        %v2507 = vsel %vm2251, %v2186, %v2475
        %s2508 = scalar_lea.vmem [#allocation2], 64
        %v2509 = vld [vmem:[%s2508] sm:$0xff]
        %v2510 = vld [vmem:[%s2508 + $0x8] sm:$0xff]
        %v2511 = vld [vmem:[%s2508 + $0x10] sm:$0xff]
        %v2512 = vld [vmem:[%s2508 + $0x18] sm:$0xff]
        %s2513 = scalar_lea.vmem %s4, 64
        %v2514 = vld [vmem:[%s2513] sm:$0xff]
        %v2515 = vld [vmem:[%s2513 + $0x8] sm:$0xff]
        %v2516 = vld [vmem:[%s2513 + $0x10] sm:$0xff]
        %v2517 = vld [vmem:[%s2513 + $0x18] sm:$0xff]
        %2519 = vset.pattern.permute.xlu0 0
        %2520 = vperm.xlu0 %2519, %v2514
        %v2521 = vpop.permute.xlu0 %2520
        %2524 = vset.pattern.permute.xlu0 0
        %2525 = vperm.xlu0 %2524, %v2515
        %v2526 = vpop.permute.xlu0 %2525
        %2529 = vset.pattern.permute.xlu0 0
        %2530 = vperm.xlu0 %2529, %v2516
        %v2531 = vpop.permute.xlu0 %2530
        %2534 = vset.pattern.permute.xlu0 0
        %2535 = vperm.xlu0 %2534, %v2517
        %v2536 = vpop.permute.xlu0 %2535
        %v2539 = vsel %vm1101, %v2509, 0
        %v2542 = vsel %vm1101, %v2510, 0
        %v2545 = vsel %vm1101, %v2511, 0
        %v2548 = vsel %vm1101, %v2512, 0
        %2550 = vmatprep.subr.mxu0 %v2477
        %2551 = vmatpush1.msra.mxu0 %v2476
        %2552 = vmatprep.subr.mxu0 %v2485
        %2553 = vmatpush1.msra.mxu0 %v2484
        %2554 = vmatprep.subr.mxu0 %v2493
        %2555 = vmatpush1.msra.mxu0 %v2492
        %2556 = vmatprep.subr.mxu0 %v2501
        %2557 = vmatpush1.msra.mxu0 %v2500
        %2558 = vmatprep.subr.mxu0 0.0
        %2559 = vmatpush1.msra.mxu0 0.0
        %2560 = vmatprep.subr.mxu0 0.0
        %2561 = vmatpush1.msra.mxu0 0.0
        %2562 = vmatprep.subr.mxu0 0.0
        %2563 = vmatpush1.msra.mxu0 0.0
        %2564 = vmatprep.subr.mxu0 0.0
        %2565 = vmatpush1.msra.mxu0 0.0
        %2566 = vmatprep.subr.mxu0 0.0
        %2567 = vmatpush1.msra.mxu0 0.0
        %2568 = vmatprep.subr.mxu0 0.0
        %2569 = vmatpush1.msra.mxu0 0.0
        %2570 = vmatprep.subr.mxu0 0.0
        %2571 = vmatpush1.msra.mxu0 0.0
        %2572 = vmatprep.subr.mxu0 0.0
        %2573 = vmatpush1.msra.mxu0 0.0
        %2574 = vmatprep.subr.mxu0 0.0
        %2575 = vmatpush1.msra.mxu0 0.0
        %2576 = vmatprep.subr.mxu0 0.0
        %2577 = vmatpush1.msra.mxu0 0.0
        %2578 = vmatprep.subr.mxu0 0.0
        %2579 = vmatpush1.msra.mxu0 0.0
        %2580 = vmatprep.subr.mxu0 0.0
        %2581 = vmatpush1.msra.mxu0 0.0
        %2582 = vmatprep.subr.mxu0 0.0
        %2583 = vmatpush1.msra.mxu0 0.0
        %2584 = vmatprep.subr.mxu0 0.0
        %2585 = vmatpush1.msra.mxu0 0.0
        %2586 = vmatprep.subr.mxu0 0.0
        %2587 = vmatpush1.msra.mxu0 0.0
        %2588 = vmatprep.subr.mxu0 0.0
        %2589 = vmatpush1.msra.mxu0 0.0
        %2590 = vmatprep.subr.mxu0 0.0
        %2591 = vmatpush1.msra.mxu0 0.0
        %2592 = vmatprep.subr.mxu0 0.0
        %2593 = vmatpush1.msra.mxu0 0.0
        %2594 = vmatprep.subr.mxu0 0.0
        %2595 = vmatpush1.msra.mxu0 0.0
        %2596 = vmatprep.subr.mxu0 0.0
        %2597 = vmatpush1.msra.mxu0 0.0
        %2598 = vmatprep.subr.mxu0 0.0
        %2599 = vmatpush1.msra.mxu0 0.0
        %2600 = vmatprep.subr.mxu0 0.0
        %2601 = vmatpush1.msra.mxu0 0.0
        %2602 = vmatprep.subr.mxu0 0.0
        %2603 = vmatpush1.msra.mxu0 0.0
        %2604 = vmatprep.subr.mxu0 0.0
        %2605 = vmatpush1.msra.mxu0 0.0
        %2606 = vmatprep.subr.mxu0 0.0
        %2607 = vmatpush1.msra.mxu0 0.0
        %2608 = vmatprep.subr.mxu0 0.0
        %2609 = vmatpush1.msra.mxu0 0.0
        %2610 = vmatprep.subr.mxu0 0.0
        %2611 = vmatpush1.msra.mxu0 0.0
        %2612 = vmatprep.subr.mxu0 0.0
        %2613 = vmatpush1.msra.mxu0 0.0
        %2614 = vmatprep.mubr.f32.mxu0 0.0
        %2615 = vmatmul.mubr.f32.gmra.mrb[0].mxu0 %v2539
        %v2616 = vpop.f32.mrb[0].mxu0
        %v2617 = vadd.f32 %v2521, %v2616
        %v2618 = vpop.f32.mrb[0].mxu0
        %v2619 = vadd.f32 %v2521, %v2618
        %2620 = vmatprep.mubr.f32.mxu0 0.0
        %2621 = vmatmul.mubr.f32.gmra.mrb[0].mxu0 %v2542
        %v2622 = vpop.f32.mrb[0].mxu0
        %v2623 = vadd.f32 %v2526, %v2622
        %v2624 = vpop.f32.mrb[0].mxu0
        %v2625 = vadd.f32 %v2526, %v2624
        %2626 = vmatprep.mubr.f32.mxu0 0.0
        %2627 = vmatmul.mubr.f32.gmra.mrb[0].mxu0 %v2545
        %v2628 = vpop.f32.mrb[0].mxu0
        %v2629 = vadd.f32 %v2531, %v2628
        %v2630 = vpop.f32.mrb[0].mxu0
        %v2631 = vadd.f32 %v2531, %v2630
        %2632 = vmatprep.mubr.f32.mxu0 0.0
        %2633 = vmatmul.mubr.f32.gmra.mrb[0].mxu0 %v2548
        %v2634 = vpop.f32.mrb[0].mxu0
        %v2635 = vadd.f32 %v2536, %v2634
        %v2636 = vpop.f32.mrb[0].mxu0
        %v2637 = vadd.f32 %v2536, %v2636
        %2638 = vdwg.mxu0
        %2639 = vmatprep.subr.mxu0 %v2479
        %2640 = vmatpush1.msra.mxu0 %v2478
        %2641 = vmatprep.subr.mxu0 %v2487
        %2642 = vmatpush1.msra.mxu0 %v2486
        %2643 = vmatprep.subr.mxu0 %v2495
        %2644 = vmatpush1.msra.mxu0 %v2494
        %2645 = vmatprep.subr.mxu0 %v2503
        %2646 = vmatpush1.msra.mxu0 %v2502
        %2647 = vmatprep.subr.mxu0 0.0
        %2648 = vmatpush1.msra.mxu0 0.0
        %2649 = vmatprep.subr.mxu0 0.0
        %2650 = vmatpush1.msra.mxu0 0.0
        %2651 = vmatprep.subr.mxu0 0.0
        %2652 = vmatpush1.msra.mxu0 0.0
        %2653 = vmatprep.subr.mxu0 0.0
        %2654 = vmatpush1.msra.mxu0 0.0
        %2655 = vmatprep.subr.mxu0 0.0
        %2656 = vmatpush1.msra.mxu0 0.0
        %2657 = vmatprep.subr.mxu0 0.0
        %2658 = vmatpush1.msra.mxu0 0.0
        %2659 = vmatprep.subr.mxu0 0.0
        %2660 = vmatpush1.msra.mxu0 0.0
        %2661 = vmatprep.subr.mxu0 0.0
        %2662 = vmatpush1.msra.mxu0 0.0
        %2663 = vmatprep.subr.mxu0 0.0
        %2664 = vmatpush1.msra.mxu0 0.0
        %2665 = vmatprep.subr.mxu0 0.0
        %2666 = vmatpush1.msra.mxu0 0.0
        %2667 = vmatprep.subr.mxu0 0.0
        %2668 = vmatpush1.msra.mxu0 0.0
        %2669 = vmatprep.subr.mxu0 0.0
        %2670 = vmatpush1.msra.mxu0 0.0
        %2671 = vmatprep.subr.mxu0 0.0
        %2672 = vmatpush1.msra.mxu0 0.0
        %2673 = vmatprep.subr.mxu0 0.0
        %2674 = vmatpush1.msra.mxu0 0.0
        %2675 = vmatprep.subr.mxu0 0.0
        %2676 = vmatpush1.msra.mxu0 0.0
        %2677 = vmatprep.subr.mxu0 0.0
        %2678 = vmatpush1.msra.mxu0 0.0
        %2679 = vmatprep.subr.mxu0 0.0
        %2680 = vmatpush1.msra.mxu0 0.0
        %2681 = vmatprep.subr.mxu0 0.0
        %2682 = vmatpush1.msra.mxu0 0.0
        %2683 = vmatprep.subr.mxu0 0.0
        %2684 = vmatpush1.msra.mxu0 0.0
        %2685 = vmatprep.subr.mxu0 0.0
        %2686 = vmatpush1.msra.mxu0 0.0
        %2687 = vmatprep.subr.mxu0 0.0
        %2688 = vmatpush1.msra.mxu0 0.0
        %2689 = vmatprep.subr.mxu0 0.0
        %2690 = vmatpush1.msra.mxu0 0.0
        %2691 = vmatprep.subr.mxu0 0.0
        %2692 = vmatpush1.msra.mxu0 0.0
        %2693 = vmatprep.subr.mxu0 0.0
        %2694 = vmatpush1.msra.mxu0 0.0
        %2695 = vmatprep.subr.mxu0 0.0
        %2696 = vmatpush1.msra.mxu0 0.0
        %2697 = vmatprep.subr.mxu0 0.0
        %2698 = vmatpush1.msra.mxu0 0.0
        %2699 = vmatprep.subr.mxu0 0.0
        %2700 = vmatpush1.msra.mxu0 0.0
        %2701 = vmatprep.subr.mxu0 0.0
        %2702 = vmatpush1.msra.mxu0 0.0
        %2703 = vmatprep.mubr.f32.mxu0 0.0
        %2704 = vmatmul.mubr.f32.gmra.mrb[0].mxu0 %v2539
        %v2705 = vpop.f32.mrb[0].mxu0
        %v2706 = vadd.f32 %v2521, %v2705
        %v2707 = vpop.f32.mrb[0].mxu0
        %v2708 = vadd.f32 %v2521, %v2707
        %2709 = vmatprep.mubr.f32.mxu0 0.0
        %2710 = vmatmul.mubr.f32.gmra.mrb[0].mxu0 %v2542
        %v2711 = vpop.f32.mrb[0].mxu0
        %v2712 = vadd.f32 %v2526, %v2711
        %v2713 = vpop.f32.mrb[0].mxu0
        %v2714 = vadd.f32 %v2526, %v2713
        %2715 = vmatprep.mubr.f32.mxu0 0.0
        %2716 = vmatmul.mubr.f32.gmra.mrb[0].mxu0 %v2545
        %v2717 = vpop.f32.mrb[0].mxu0
        %v2718 = vadd.f32 %v2531, %v2717
        %v2719 = vpop.f32.mrb[0].mxu0
        %v2720 = vadd.f32 %v2531, %v2719
        %2721 = vmatprep.mubr.f32.mxu0 0.0
        %2722 = vmatmul.mubr.f32.gmra.mrb[0].mxu0 %v2548
        %v2723 = vpop.f32.mrb[0].mxu0
        %v2724 = vadd.f32 %v2536, %v2723
        %v2725 = vpop.f32.mrb[0].mxu0
        %v2726 = vadd.f32 %v2536, %v2725
        %2727 = vdwg.mxu0
        %2728 = vmatprep.subr.mxu0 %v2481
        %2729 = vmatpush1.msra.mxu0 %v2480
        %2730 = vmatprep.subr.mxu0 %v2489
        %2731 = vmatpush1.msra.mxu0 %v2488
        %2732 = vmatprep.subr.mxu0 %v2497
        %2733 = vmatpush1.msra.mxu0 %v2496
        %2734 = vmatprep.subr.mxu0 %v2505
        %2735 = vmatpush1.msra.mxu0 %v2504
        %2736 = vmatprep.subr.mxu0 0.0
        %2737 = vmatpush1.msra.mxu0 0.0
        %2738 = vmatprep.subr.mxu0 0.0
        %2739 = vmatpush1.msra.mxu0 0.0
        %2740 = vmatprep.subr.mxu0 0.0
        %2741 = vmatpush1.msra.mxu0 0.0
        %2742 = vmatprep.subr.mxu0 0.0
        %2743 = vmatpush1.msra.mxu0 0.0
        %2744 = vmatprep.subr.mxu0 0.0
        %2745 = vmatpush1.msra.mxu0 0.0
        %2746 = vmatprep.subr.mxu0 0.0
        %2747 = vmatpush1.msra.mxu0 0.0
        %2748 = vmatprep.subr.mxu0 0.0
        %2749 = vmatpush1.msra.mxu0 0.0
        %2750 = vmatprep.subr.mxu0 0.0
        %2751 = vmatpush1.msra.mxu0 0.0
        %2752 = vmatprep.subr.mxu0 0.0
        %2753 = vmatpush1.msra.mxu0 0.0
        %2754 = vmatprep.subr.mxu0 0.0
        %2755 = vmatpush1.msra.mxu0 0.0
        %2756 = vmatprep.subr.mxu0 0.0
        %2757 = vmatpush1.msra.mxu0 0.0
        %2758 = vmatprep.subr.mxu0 0.0
        %2759 = vmatpush1.msra.mxu0 0.0
        %2760 = vmatprep.subr.mxu0 0.0
        %2761 = vmatpush1.msra.mxu0 0.0
        %2762 = vmatprep.subr.mxu0 0.0
        %2763 = vmatpush1.msra.mxu0 0.0
        %2764 = vmatprep.subr.mxu0 0.0
        %2765 = vmatpush1.msra.mxu0 0.0
        %2766 = vmatprep.subr.mxu0 0.0
        %2767 = vmatpush1.msra.mxu0 0.0
        %2768 = vmatprep.subr.mxu0 0.0
        %2769 = vmatpush1.msra.mxu0 0.0
        %2770 = vmatprep.subr.mxu0 0.0
        %2771 = vmatpush1.msra.mxu0 0.0
        %2772 = vmatprep.subr.mxu0 0.0
        %2773 = vmatpush1.msra.mxu0 0.0
        %2774 = vmatprep.subr.mxu0 0.0
        %2775 = vmatpush1.msra.mxu0 0.0
        %2776 = vmatprep.subr.mxu0 0.0
        %2777 = vmatpush1.msra.mxu0 0.0
        %2778 = vmatprep.subr.mxu0 0.0
        %2779 = vmatpush1.msra.mxu0 0.0
        %2780 = vmatprep.subr.mxu0 0.0
        %2781 = vmatpush1.msra.mxu0 0.0
        %2782 = vmatprep.subr.mxu0 0.0
        %2783 = vmatpush1.msra.mxu0 0.0
        %2784 = vmatprep.subr.mxu0 0.0
        %2785 = vmatpush1.msra.mxu0 0.0
        %2786 = vmatprep.subr.mxu0 0.0
        %2787 = vmatpush1.msra.mxu0 0.0
        %2788 = vmatprep.subr.mxu0 0.0
        %2789 = vmatpush1.msra.mxu0 0.0
        %2790 = vmatprep.subr.mxu0 0.0
        %2791 = vmatpush1.msra.mxu0 0.0
        %2792 = vmatprep.mubr.f32.mxu0 0.0
        %2793 = vmatmul.mubr.f32.gmra.mrb[0].mxu0 %v2539
        %v2794 = vpop.f32.mrb[0].mxu0
        %v2795 = vadd.f32 %v2521, %v2794
        %v2796 = vpop.f32.mrb[0].mxu0
        %v2797 = vadd.f32 %v2521, %v2796
        %2798 = vmatprep.mubr.f32.mxu0 0.0
        %2799 = vmatmul.mubr.f32.gmra.mrb[0].mxu0 %v2542
        %v2800 = vpop.f32.mrb[0].mxu0
        %v2801 = vadd.f32 %v2526, %v2800
        %v2802 = vpop.f32.mrb[0].mxu0
        %v2803 = vadd.f32 %v2526, %v2802
        %2804 = vmatprep.mubr.f32.mxu0 0.0
        %2805 = vmatmul.mubr.f32.gmra.mrb[0].mxu0 %v2545
        %v2806 = vpop.f32.mrb[0].mxu0
        %v2807 = vadd.f32 %v2531, %v2806
        %v2808 = vpop.f32.mrb[0].mxu0
        %v2809 = vadd.f32 %v2531, %v2808
        %2810 = vmatprep.mubr.f32.mxu0 0.0
        %2811 = vmatmul.mubr.f32.gmra.mrb[0].mxu0 %v2548
        %v2812 = vpop.f32.mrb[0].mxu0
        %v2813 = vadd.f32 %v2536, %v2812
        %v2814 = vpop.f32.mrb[0].mxu0
        %v2815 = vadd.f32 %v2536, %v2814
        %2816 = vdwg.mxu0
        %2817 = vmatprep.subr.mxu0 %v2483
        %2818 = vmatpush1.msra.mxu0 %v2482
        %2819 = vmatprep.subr.mxu0 %v2491
        %2820 = vmatpush1.msra.mxu0 %v2490
        %2821 = vmatprep.subr.mxu0 %v2499
        %2822 = vmatpush1.msra.mxu0 %v2498
        %2823 = vmatprep.subr.mxu0 %v2507
        %2824 = vmatpush1.msra.mxu0 %v2506
        %2825 = vmatprep.subr.mxu0 0.0
        %2826 = vmatpush1.msra.mxu0 0.0
        %2827 = vmatprep.subr.mxu0 0.0
        %2828 = vmatpush1.msra.mxu0 0.0
        %2829 = vmatprep.subr.mxu0 0.0
        %2830 = vmatpush1.msra.mxu0 0.0
        %2831 = vmatprep.subr.mxu0 0.0
        %2832 = vmatpush1.msra.mxu0 0.0
        %2833 = vmatprep.subr.mxu0 0.0
        %2834 = vmatpush1.msra.mxu0 0.0
        %2835 = vmatprep.subr.mxu0 0.0
        %2836 = vmatpush1.msra.mxu0 0.0
        %2837 = vmatprep.subr.mxu0 0.0
        %2838 = vmatpush1.msra.mxu0 0.0
        %2839 = vmatprep.subr.mxu0 0.0
        %2840 = vmatpush1.msra.mxu0 0.0
        %2841 = vmatprep.subr.mxu0 0.0
        %2842 = vmatpush1.msra.mxu0 0.0
        %2843 = vmatprep.subr.mxu0 0.0
        %2844 = vmatpush1.msra.mxu0 0.0
        %2845 = vmatprep.subr.mxu0 0.0
        %2846 = vmatpush1.msra.mxu0 0.0
        %2847 = vmatprep.subr.mxu0 0.0
        %2848 = vmatpush1.msra.mxu0 0.0
        %2849 = vmatprep.subr.mxu0 0.0
        %2850 = vmatpush1.msra.mxu0 0.0
        %2851 = vmatprep.subr.mxu0 0.0
        %2852 = vmatpush1.msra.mxu0 0.0
        %2853 = vmatprep.subr.mxu0 0.0
        %2854 = vmatpush1.msra.mxu0 0.0
        %2855 = vmatprep.subr.mxu0 0.0
        %2856 = vmatpush1.msra.mxu0 0.0
        %2857 = vmatprep.subr.mxu0 0.0
        %2858 = vmatpush1.msra.mxu0 0.0
        %2859 = vmatprep.subr.mxu0 0.0
        %2860 = vmatpush1.msra.mxu0 0.0
        %2861 = vmatprep.subr.mxu0 0.0
        %2862 = vmatpush1.msra.mxu0 0.0
        %2863 = vmatprep.subr.mxu0 0.0
        %2864 = vmatpush1.msra.mxu0 0.0
        %2865 = vmatprep.subr.mxu0 0.0
        %2866 = vmatpush1.msra.mxu0 0.0
        %2867 = vmatprep.subr.mxu0 0.0
        %2868 = vmatpush1.msra.mxu0 0.0
        %2869 = vmatprep.subr.mxu0 0.0
        %2870 = vmatpush1.msra.mxu0 0.0
        %2871 = vmatprep.subr.mxu0 0.0
        %2872 = vmatpush1.msra.mxu0 0.0
        %2873 = vmatprep.subr.mxu0 0.0
        %2874 = vmatpush1.msra.mxu0 0.0
        %2875 = vmatprep.subr.mxu0 0.0
        %2876 = vmatpush1.msra.mxu0 0.0
        %2877 = vmatprep.subr.mxu0 0.0
        %2878 = vmatpush1.msra.mxu0 0.0
        %2879 = vmatprep.subr.mxu0 0.0
        %2880 = vmatpush1.msra.mxu0 0.0
        %2881 = vmatprep.mubr.f32.mxu0 0.0
        %2882 = vmatmul.mubr.f32.gmra.mrb[0].mxu0 %v2539
        %v2883 = vpop.f32.mrb[0].mxu0
        %v2884 = vadd.f32 %v2521, %v2883
        %v2885 = vpop.f32.mrb[0].mxu0
        %v2886 = vadd.f32 %v2521, %v2885
        %2887 = vmatprep.mubr.f32.mxu0 0.0
        %2888 = vmatmul.mubr.f32.gmra.mrb[0].mxu0 %v2542
        %v2889 = vpop.f32.mrb[0].mxu0
        %v2890 = vadd.f32 %v2526, %v2889
        %v2891 = vpop.f32.mrb[0].mxu0
        %v2892 = vadd.f32 %v2526, %v2891
        %2893 = vmatprep.mubr.f32.mxu0 0.0
        %2894 = vmatmul.mubr.f32.gmra.mrb[0].mxu0 %v2545
        %v2895 = vpop.f32.mrb[0].mxu0
        %v2896 = vadd.f32 %v2531, %v2895
        %v2897 = vpop.f32.mrb[0].mxu0
        %v2898 = vadd.f32 %v2531, %v2897
        %2899 = vmatprep.mubr.f32.mxu0 0.0
        %2900 = vmatmul.mubr.f32.gmra.mrb[0].mxu0 %v2548
        %v2901 = vpop.f32.mrb[0].mxu0
        %v2902 = vadd.f32 %v2536, %v2901
        %v2903 = vpop.f32.mrb[0].mxu0
        %v2904 = vadd.f32 %v2536, %v2903
        %2905 = vdwg.mxu0
        %v2906 = vmul.f32 %v2617, 100.0
        %v2907 = vmul.f32 %v2619, 100.0
        %v2908 = vmul.f32 %v2706, 100.0
        %v2909 = vmul.f32 %v2708, 100.0
        %v2910 = vmul.f32 %v2795, 100.0
        %v2911 = vmul.f32 %v2797, 100.0
        %v2912 = vmul.f32 %v2884, 100.0
        %v2913 = vmul.f32 %v2886, 100.0
        %v2914 = vmul.f32 %v2623, 100.0
        %v2915 = vmul.f32 %v2625, 100.0
        %v2916 = vmul.f32 %v2712, 100.0
        %v2917 = vmul.f32 %v2714, 100.0
        %v2918 = vmul.f32 %v2801, 100.0
        %v2919 = vmul.f32 %v2803, 100.0
        %v2920 = vmul.f32 %v2890, 100.0
        %v2921 = vmul.f32 %v2892, 100.0
        %v2922 = vmul.f32 %v2629, 100.0
        %v2923 = vmul.f32 %v2631, 100.0
        %v2924 = vmul.f32 %v2718, 100.0
        %v2925 = vmul.f32 %v2720, 100.0
        %v2926 = vmul.f32 %v2807, 100.0
        %v2927 = vmul.f32 %v2809, 100.0
        %v2928 = vmul.f32 %v2896, 100.0
        %v2929 = vmul.f32 %v2898, 100.0
        %v2930 = vmul.f32 %v2635, 100.0
        %v2931 = vmul.f32 %v2637, 100.0
        %v2932 = vmul.f32 %v2724, 100.0
        %v2933 = vmul.f32 %v2726, 100.0
        %v2934 = vmul.f32 %v2813, 100.0
        %v2935 = vmul.f32 %v2815, 100.0
        %v2936 = vmul.f32 %v2902, 100.0
        %v2937 = vmul.f32 %v2904, 100.0
        %vm2938 = vcmp.gt.f32.partialorder %v2906, 20.0
        %vm2939 = vcmp.gt.f32.partialorder %v2907, 20.0
        %vm2940 = vcmp.gt.f32.partialorder %v2908, 20.0
        %vm2941 = vcmp.gt.f32.partialorder %v2909, 20.0
        %vm2942 = vcmp.gt.f32.partialorder %v2910, 20.0
        %vm2943 = vcmp.gt.f32.partialorder %v2911, 20.0
        %vm2944 = vcmp.gt.f32.partialorder %v2912, 20.0
        %vm2945 = vcmp.gt.f32.partialorder %v2913, 20.0
        %vm2946 = vcmp.gt.f32.partialorder %v2914, 20.0
        %vm2947 = vcmp.gt.f32.partialorder %v2915, 20.0
        %vm2948 = vcmp.gt.f32.partialorder %v2916, 20.0
        %vm2949 = vcmp.gt.f32.partialorder %v2917, 20.0
        %vm2950 = vcmp.gt.f32.partialorder %v2918, 20.0
        %vm2951 = vcmp.gt.f32.partialorder %v2919, 20.0
        %vm2952 = vcmp.gt.f32.partialorder %v2920, 20.0
        %vm2953 = vcmp.gt.f32.partialorder %v2921, 20.0
        %vm2954 = vcmp.gt.f32.partialorder %v2922, 20.0
        %vm2955 = vcmp.gt.f32.partialorder %v2923, 20.0
        %vm2956 = vcmp.gt.f32.partialorder %v2924, 20.0
        %vm2957 = vcmp.gt.f32.partialorder %v2925, 20.0
        %vm2958 = vcmp.gt.f32.partialorder %v2926, 20.0
        %vm2959 = vcmp.gt.f32.partialorder %v2927, 20.0
        %vm2960 = vcmp.gt.f32.partialorder %v2928, 20.0
        %vm2961 = vcmp.gt.f32.partialorder %v2929, 20.0
        %vm2962 = vcmp.gt.f32.partialorder %v2930, 20.0
        %vm2963 = vcmp.gt.f32.partialorder %v2931, 20.0
        %vm2964 = vcmp.gt.f32.partialorder %v2932, 20.0
        %vm2965 = vcmp.gt.f32.partialorder %v2933, 20.0
        %vm2966 = vcmp.gt.f32.partialorder %v2934, 20.0
        %vm2967 = vcmp.gt.f32.partialorder %v2935, 20.0
        %vm2968 = vcmp.gt.f32.partialorder %v2936, 20.0
        %vm2969 = vcmp.gt.f32.partialorder %v2937, 20.0
        %v2970 = vmin.f32 %v2906, 20.0
        %v2971 = vmin.f32 %v2907, 20.0
        %v2972 = vmin.f32 %v2908, 20.0
        %v2973 = vmin.f32 %v2909, 20.0
        %v2974 = vmin.f32 %v2910, 20.0
        %v2975 = vmin.f32 %v2911, 20.0
        %v2976 = vmin.f32 %v2912, 20.0
        %v2977 = vmin.f32 %v2913, 20.0
        %v2978 = vmin.f32 %v2914, 20.0
        %v2979 = vmin.f32 %v2915, 20.0
        %v2980 = vmin.f32 %v2916, 20.0
        %v2981 = vmin.f32 %v2917, 20.0
        %v2982 = vmin.f32 %v2918, 20.0
        %v2983 = vmin.f32 %v2919, 20.0
        %v2984 = vmin.f32 %v2920, 20.0
        %v2985 = vmin.f32 %v2921, 20.0
        %v2986 = vmin.f32 %v2922, 20.0
        %v2987 = vmin.f32 %v2923, 20.0
        %v2988 = vmin.f32 %v2924, 20.0
        %v2989 = vmin.f32 %v2925, 20.0
        %v2990 = vmin.f32 %v2926, 20.0
        %v2991 = vmin.f32 %v2927, 20.0
        %v2992 = vmin.f32 %v2928, 20.0
        %v2993 = vmin.f32 %v2929, 20.0
        %v2994 = vmin.f32 %v2930, 20.0
        %v2995 = vmin.f32 %v2931, 20.0
        %v2996 = vmin.f32 %v2932, 20.0
        %v2997 = vmin.f32 %v2933, 20.0
        %v2998 = vmin.f32 %v2934, 20.0
        %v2999 = vmin.f32 %v2935, 20.0
        %v3000 = vmin.f32 %v2936, 20.0
        %v3001 = vmin.f32 %v2937, 20.0
        %v3002 = vmul.f32 %v2970, 1.442695
        %v3003 = vpow.pop %v3002
        %v3004 = vmul.f32 %v2971, 1.442695
        %v3005 = vpow.pop %v3004
        %v3006 = vmul.f32 %v2972, 1.442695
        %v3007 = vpow.pop %v3006
        %v3008 = vmul.f32 %v2973, 1.442695
        %v3009 = vpow.pop %v3008
        %v3010 = vmul.f32 %v2974, 1.442695
        %v3011 = vpow.pop %v3010
        %v3012 = vmul.f32 %v2975, 1.442695
        %v3013 = vpow.pop %v3012
        %v3014 = vmul.f32 %v2976, 1.442695
        %v3015 = vpow.pop %v3014
        %v3016 = vmul.f32 %v2977, 1.442695
        %v3017 = vpow.pop %v3016
        %v3018 = vmul.f32 %v2978, 1.442695
        %v3019 = vpow.pop %v3018
        %v3020 = vmul.f32 %v2979, 1.442695
        %v3021 = vpow.pop %v3020
        %v3022 = vmul.f32 %v2980, 1.442695
        %v3023 = vpow.pop %v3022
        %v3024 = vmul.f32 %v2981, 1.442695
        %v3025 = vpow.pop %v3024
        %v3026 = vmul.f32 %v2982, 1.442695
        %v3027 = vpow.pop %v3026
        %v3028 = vmul.f32 %v2983, 1.442695
        %v3029 = vpow.pop %v3028
        %v3030 = vmul.f32 %v2984, 1.442695
        %v3031 = vpow.pop %v3030
        %v3032 = vmul.f32 %v2985, 1.442695
        %v3033 = vpow.pop %v3032
        %v3034 = vmul.f32 %v2986, 1.442695
        %v3035 = vpow.pop %v3034
        %v3036 = vmul.f32 %v2987, 1.442695
        %v3037 = vpow.pop %v3036
        %v3038 = vmul.f32 %v2988, 1.442695
        %v3039 = vpow.pop %v3038
        %v3040 = vmul.f32 %v2989, 1.442695
        %v3041 = vpow.pop %v3040
        %v3042 = vmul.f32 %v2990, 1.442695
        %v3043 = vpow.pop %v3042
        %v3044 = vmul.f32 %v2991, 1.442695
        %v3045 = vpow.pop %v3044
        %v3046 = vmul.f32 %v2992, 1.442695
        %v3047 = vpow.pop %v3046
        %v3048 = vmul.f32 %v2993, 1.442695
        %v3049 = vpow.pop %v3048
        %v3050 = vmul.f32 %v2994, 1.442695
        %v3051 = vpow.pop %v3050
        %v3052 = vmul.f32 %v2995, 1.442695
        %v3053 = vpow.pop %v3052
        %v3054 = vmul.f32 %v2996, 1.442695
        %v3055 = vpow.pop %v3054
        %v3056 = vmul.f32 %v2997, 1.442695
        %v3057 = vpow.pop %v3056
        %v3058 = vmul.f32 %v2998, 1.442695
        %v3059 = vpow.pop %v3058
        %v3060 = vmul.f32 %v2999, 1.442695
        %v3061 = vpow.pop %v3060
        %v3062 = vmul.f32 %v3000, 1.442695
        %v3063 = vpow.pop %v3062
        %v3064 = vmul.f32 %v3001, 1.442695
        %v3065 = vpow.pop %v3064
        %v3066 = vadd.f32 %v3003, 1.0
        %v3067 = vadd.f32 %v3005, 1.0
        %v3068 = vadd.f32 %v3007, 1.0
        %v3069 = vadd.f32 %v3009, 1.0
        %v3070 = vadd.f32 %v3011, 1.0
        %v3071 = vadd.f32 %v3013, 1.0
        %v3072 = vadd.f32 %v3015, 1.0
        %v3073 = vadd.f32 %v3017, 1.0
        %v3074 = vadd.f32 %v3019, 1.0
        %v3075 = vadd.f32 %v3021, 1.0
        %v3076 = vadd.f32 %v3023, 1.0
        %v3077 = vadd.f32 %v3025, 1.0
        %v3078 = vadd.f32 %v3027, 1.0
        %v3079 = vadd.f32 %v3029, 1.0
        %v3080 = vadd.f32 %v3031, 1.0
        %v3081 = vadd.f32 %v3033, 1.0
        %v3082 = vadd.f32 %v3035, 1.0
        %v3083 = vadd.f32 %v3037, 1.0
        %v3084 = vadd.f32 %v3039, 1.0
        %v3085 = vadd.f32 %v3041, 1.0
        %v3086 = vadd.f32 %v3043, 1.0
        %v3087 = vadd.f32 %v3045, 1.0
        %v3088 = vadd.f32 %v3047, 1.0
        %v3089 = vadd.f32 %v3049, 1.0
        %v3090 = vadd.f32 %v3051, 1.0
        %v3091 = vadd.f32 %v3053, 1.0
        %v3092 = vadd.f32 %v3055, 1.0
        %v3093 = vadd.f32 %v3057, 1.0
        %v3094 = vadd.f32 %v3059, 1.0
        %v3095 = vadd.f32 %v3061, 1.0
        %v3096 = vadd.f32 %v3063, 1.0
        %v3097 = vadd.f32 %v3065, 1.0
        %v3098 = vlog2.pop %v3066
        %v3099 = vmul.f32 %v3098, 0.6931472
        %v3100 = vlog2.pop %v3067
        %v3101 = vmul.f32 %v3100, 0.6931472
        %v3102 = vlog2.pop %v3068
        %v3103 = vmul.f32 %v3102, 0.6931472
        %v3104 = vlog2.pop %v3069
        %v3105 = vmul.f32 %v3104, 0.6931472
        %v3106 = vlog2.pop %v3070
        %v3107 = vmul.f32 %v3106, 0.6931472
        %v3108 = vlog2.pop %v3071
        %v3109 = vmul.f32 %v3108, 0.6931472
        %v3110 = vlog2.pop %v3072
        %v3111 = vmul.f32 %v3110, 0.6931472
        %v3112 = vlog2.pop %v3073
        %v3113 = vmul.f32 %v3112, 0.6931472
        %v3114 = vlog2.pop %v3074
        %v3115 = vmul.f32 %v3114, 0.6931472
        %v3116 = vlog2.pop %v3075
        %v3117 = vmul.f32 %v3116, 0.6931472
        %v3118 = vlog2.pop %v3076
        %v3119 = vmul.f32 %v3118, 0.6931472
        %v3120 = vlog2.pop %v3077
        %v3121 = vmul.f32 %v3120, 0.6931472
        %v3122 = vlog2.pop %v3078
        %v3123 = vmul.f32 %v3122, 0.6931472
        %v3124 = vlog2.pop %v3079
        %v3125 = vmul.f32 %v3124, 0.6931472
        %v3126 = vlog2.pop %v3080
        %v3127 = vmul.f32 %v3126, 0.6931472
        %v3128 = vlog2.pop %v3081
        %v3129 = vmul.f32 %v3128, 0.6931472
        %v3130 = vlog2.pop %v3082
        %v3131 = vmul.f32 %v3130, 0.6931472
        %v3132 = vlog2.pop %v3083
        %v3133 = vmul.f32 %v3132, 0.6931472
        %v3134 = vlog2.pop %v3084
        %v3135 = vmul.f32 %v3134, 0.6931472
        %v3136 = vlog2.pop %v3085
        %v3137 = vmul.f32 %v3136, 0.6931472
        %v3138 = vlog2.pop %v3086
        %v3139 = vmul.f32 %v3138, 0.6931472
        %v3140 = vlog2.pop %v3087
        %v3141 = vmul.f32 %v3140, 0.6931472
        %v3142 = vlog2.pop %v3088
        %v3143 = vmul.f32 %v3142, 0.6931472
        %v3144 = vlog2.pop %v3089
        %v3145 = vmul.f32 %v3144, 0.6931472
        %v3146 = vlog2.pop %v3090
        %v3147 = vmul.f32 %v3146, 0.6931472
        %v3148 = vlog2.pop %v3091
        %v3149 = vmul.f32 %v3148, 0.6931472
        %v3150 = vlog2.pop %v3092
        %v3151 = vmul.f32 %v3150, 0.6931472
        %v3152 = vlog2.pop %v3093
        %v3153 = vmul.f32 %v3152, 0.6931472
        %v3154 = vlog2.pop %v3094
        %v3155 = vmul.f32 %v3154, 0.6931472
        %v3156 = vlog2.pop %v3095
        %v3157 = vmul.f32 %v3156, 0.6931472
        %v3158 = vlog2.pop %v3096
        %v3159 = vmul.f32 %v3158, 0.6931472
        %v3160 = vlog2.pop %v3097
        %v3161 = vmul.f32 %v3160, 0.6931472
        %v3162 = vmul.f32 %v3099, %v1008
        %v3163 = vmul.f32 %v3101, %v1008
        %v3164 = vmul.f32 %v3103, %v1008
        %v3165 = vmul.f32 %v3105, %v1008
        %v3166 = vmul.f32 %v3107, %v1008
        %v3167 = vmul.f32 %v3109, %v1008
        %v3168 = vmul.f32 %v3111, %v1008
        %v3169 = vmul.f32 %v3113, %v1008
        %v3170 = vmul.f32 %v3115, %v1008
        %v3171 = vmul.f32 %v3117, %v1008
        %v3172 = vmul.f32 %v3119, %v1008
        %v3173 = vmul.f32 %v3121, %v1008
        %v3174 = vmul.f32 %v3123, %v1008
        %v3175 = vmul.f32 %v3125, %v1008
        %v3176 = vmul.f32 %v3127, %v1008
        %v3177 = vmul.f32 %v3129, %v1008
        %v3178 = vmul.f32 %v3131, %v1008
        %v3179 = vmul.f32 %v3133, %v1008
        %v3180 = vmul.f32 %v3135, %v1008
        %v3181 = vmul.f32 %v3137, %v1008
        %v3182 = vmul.f32 %v3139, %v1008
        %v3183 = vmul.f32 %v3141, %v1008
        %v3184 = vmul.f32 %v3143, %v1008
        %v3185 = vmul.f32 %v3145, %v1008
        %v3186 = vmul.f32 %v3147, %v1008
        %v3187 = vmul.f32 %v3149, %v1008
        %v3188 = vmul.f32 %v3151, %v1008
        %v3189 = vmul.f32 %v3153, %v1008
        %v3190 = vmul.f32 %v3155, %v1008
        %v3191 = vmul.f32 %v3157, %v1008
        %v3192 = vmul.f32 %v3159, %v1008
        %v3193 = vmul.f32 %v3161, %v1008
        %v3194 = vsel %vm2938, %v2617, %v3162
        %v3195 = vsel %vm2939, %v2619, %v3163
        %v3196 = vsel %vm2940, %v2706, %v3164
        %v3197 = vsel %vm2941, %v2708, %v3165
        %v3198 = vsel %vm2942, %v2795, %v3166
        %v3199 = vsel %vm2943, %v2797, %v3167
        %v3200 = vsel %vm2944, %v2884, %v3168
        %v3201 = vsel %vm2945, %v2886, %v3169
        %v3202 = vsel %vm2946, %v2623, %v3170
        %v3203 = vsel %vm2947, %v2625, %v3171
        %v3204 = vsel %vm2948, %v2712, %v3172
        %v3205 = vsel %vm2949, %v2714, %v3173
        %v3206 = vsel %vm2950, %v2801, %v3174
        %v3207 = vsel %vm2951, %v2803, %v3175
        %v3208 = vsel %vm2952, %v2890, %v3176
        %v3209 = vsel %vm2953, %v2892, %v3177
        %v3210 = vsel %vm2954, %v2629, %v3178
        %v3211 = vsel %vm2955, %v2631, %v3179
        %v3212 = vsel %vm2956, %v2718, %v3180
        %v3213 = vsel %vm2957, %v2720, %v3181
        %v3214 = vsel %vm2958, %v2807, %v3182
        %v3215 = vsel %vm2959, %v2809, %v3183
        %v3216 = vsel %vm2960, %v2896, %v3184
        %v3217 = vsel %vm2961, %v2898, %v3185
        %v3218 = vsel %vm2962, %v2635, %v3186
        %v3219 = vsel %vm2963, %v2637, %v3187
        %v3220 = vsel %vm2964, %v2724, %v3188
        %v3221 = vsel %vm2965, %v2726, %v3189
        %v3222 = vsel %vm2966, %v2813, %v3190
        %v3223 = vsel %vm2967, %v2815, %v3191
        %v3224 = vsel %vm2968, %v2902, %v3192
        %v3225 = vsel %vm2969, %v2904, %v3193
        %s3226 = scalar_lea.vmem [#allocation2], 96
        %v3227 = vld [vmem:[%s3226] sm:$0xff]
        %v3228 = vld [vmem:[%s3226 + $0x8] sm:$0xff]
        %v3229 = vld [vmem:[%s3226 + $0x10] sm:$0xff]
        %v3230 = vld [vmem:[%s3226 + $0x18] sm:$0xff]
        %s3231 = scalar_lea.vmem %s2, 32
        %v3232 = vld [vmem:[%s3231] sm:$0xff]
        %v3233 = vld [vmem:[%s3231 + $0x8] sm:$0xff]
        %v3234 = vld [vmem:[%s3231 + $0x10] sm:$0xff]
        %v3235 = vld [vmem:[%s3231 + $0x18] sm:$0xff]
        %v3237 = vsel %vm383, %v3232, 0
        %v3240 = vsel %vm383, %v3233, 0
        %v3243 = vsel %vm383, %v3234, 0
        %v3246 = vsel %vm383, %v3235, 0
        %3248 = vmatprep.subr.mxu0 %v344
        %3249 = vmatpush1.msra.mxu0 %v343
        %3250 = vmatprep.subr.mxu0 0.0
        %3251 = vmatpush1.msra.mxu0 0.0
        %3252 = vmatprep.subr.mxu0 0.0
        %3253 = vmatpush1.msra.mxu0 0.0
        %3254 = vmatprep.subr.mxu0 0.0
        %3255 = vmatpush1.msra.mxu0 0.0
        %3256 = vmatprep.subr.mxu0 0.0
        %3257 = vmatpush1.msra.mxu0 0.0
        %3258 = vmatprep.subr.mxu0 0.0
        %3259 = vmatpush1.msra.mxu0 0.0
        %3260 = vmatprep.subr.mxu0 0.0
        %3261 = vmatpush1.msra.mxu0 0.0
        %3262 = vmatprep.subr.mxu0 0.0
        %3263 = vmatpush1.msra.mxu0 0.0
        %3264 = vmatprep.subr.mxu0 0.0
        %3265 = vmatpush1.msra.mxu0 0.0
        %3266 = vmatprep.subr.mxu0 0.0
        %3267 = vmatpush1.msra.mxu0 0.0
        %3268 = vmatprep.subr.mxu0 0.0
        %3269 = vmatpush1.msra.mxu0 0.0
        %3270 = vmatprep.subr.mxu0 0.0
        %3271 = vmatpush1.msra.mxu0 0.0
        %3272 = vmatprep.subr.mxu0 0.0
        %3273 = vmatpush1.msra.mxu0 0.0
        %3274 = vmatprep.subr.mxu0 0.0
        %3275 = vmatpush1.msra.mxu0 0.0
        %3276 = vmatprep.subr.mxu0 0.0
        %3277 = vmatpush1.msra.mxu0 0.0
        %3278 = vmatprep.subr.mxu0 0.0
        %3279 = vmatpush1.msra.mxu0 0.0
        %3280 = vmatprep.subr.mxu0 0.0
        %3281 = vmatpush1.msra.mxu0 0.0
        %3282 = vmatprep.subr.mxu0 0.0
        %3283 = vmatpush1.msra.mxu0 0.0
        %3284 = vmatprep.subr.mxu0 0.0
        %3285 = vmatpush1.msra.mxu0 0.0
        %3286 = vmatprep.subr.mxu0 0.0
        %3287 = vmatpush1.msra.mxu0 0.0
        %3288 = vmatprep.subr.mxu0 0.0
        %3289 = vmatpush1.msra.mxu0 0.0
        %3290 = vmatprep.subr.mxu0 0.0
        %3291 = vmatpush1.msra.mxu0 0.0
        %3292 = vmatprep.subr.mxu0 0.0
        %3293 = vmatpush1.msra.mxu0 0.0
        %3294 = vmatprep.subr.mxu0 0.0
        %3295 = vmatpush1.msra.mxu0 0.0
        %3296 = vmatprep.subr.mxu0 0.0
        %3297 = vmatpush1.msra.mxu0 0.0
        %3298 = vmatprep.subr.mxu0 0.0
        %3299 = vmatpush1.msra.mxu0 0.0
        %3300 = vmatprep.subr.mxu0 0.0
        %3301 = vmatpush1.msra.mxu0 0.0
        %3302 = vmatprep.subr.mxu0 0.0
        %3303 = vmatpush1.msra.mxu0 0.0
        %3304 = vmatprep.subr.mxu0 0.0
        %3305 = vmatpush1.msra.mxu0 0.0
        %3306 = vmatprep.subr.mxu0 0.0
        %3307 = vmatpush1.msra.mxu0 0.0
        %3308 = vmatprep.subr.mxu0 0.0
        %3309 = vmatpush1.msra.mxu0 0.0
        %3310 = vmatprep.subr.mxu0 0.0
        %3311 = vmatpush1.msra.mxu0 0.0
        %3312 = vmatprep.mubr.f32.mxu0 0.0
        %3313 = vmatmul.mubr.f32.gmra.mrb[0].mxu0 %v3237
        %v3314 = vpop.f32.mrb[0].mxu0
        %v3315 = vadd.f32 0.0, %v3314
        %v3316 = vpop.f32.mrb[0].mxu0
        %v3317 = vadd.f32 0.0, %v3316
        %3318 = vmatprep.mubr.f32.mxu0 0.0
        %3319 = vmatmul.mubr.f32.gmra.mrb[0].mxu0 %v3240
        %v3320 = vpop.f32.mrb[0].mxu0
        %v3321 = vadd.f32 0.0, %v3320
        %v3322 = vpop.f32.mrb[0].mxu0
        %v3323 = vadd.f32 0.0, %v3322
        %3324 = vmatprep.mubr.f32.mxu0 0.0
        %3325 = vmatmul.mubr.f32.gmra.mrb[0].mxu0 %v3243
        %v3326 = vpop.f32.mrb[0].mxu0
        %v3327 = vadd.f32 0.0, %v3326
        %v3328 = vpop.f32.mrb[0].mxu0
        %v3329 = vadd.f32 0.0, %v3328
        %3330 = vmatprep.mubr.f32.mxu0 0.0
        %3331 = vmatmul.mubr.f32.gmra.mrb[0].mxu0 %v3246
        %v3332 = vpop.f32.mrb[0].mxu0
        %v3333 = vadd.f32 0.0, %v3332
        %v3334 = vpop.f32.mrb[0].mxu0
        %v3335 = vadd.f32 0.0, %v3334
        %3336 = vdwg.mxu0
        %3337 = vmatprep.subr.mxu0 %v346
        %3338 = vmatpush1.msra.mxu0 %v345
        %3339 = vmatprep.subr.mxu0 0.0
        %3340 = vmatpush1.msra.mxu0 0.0
        %3341 = vmatprep.subr.mxu0 0.0
        %3342 = vmatpush1.msra.mxu0 0.0
        %3343 = vmatprep.subr.mxu0 0.0
        %3344 = vmatpush1.msra.mxu0 0.0
        %3345 = vmatprep.subr.mxu0 0.0
        %3346 = vmatpush1.msra.mxu0 0.0
        %3347 = vmatprep.subr.mxu0 0.0
        %3348 = vmatpush1.msra.mxu0 0.0
        %3349 = vmatprep.subr.mxu0 0.0
        %3350 = vmatpush1.msra.mxu0 0.0
        %3351 = vmatprep.subr.mxu0 0.0
        %3352 = vmatpush1.msra.mxu0 0.0
        %3353 = vmatprep.subr.mxu0 0.0
        %3354 = vmatpush1.msra.mxu0 0.0
        %3355 = vmatprep.subr.mxu0 0.0
        %3356 = vmatpush1.msra.mxu0 0.0
        %3357 = vmatprep.subr.mxu0 0.0
        %3358 = vmatpush1.msra.mxu0 0.0
        %3359 = vmatprep.subr.mxu0 0.0
        %3360 = vmatpush1.msra.mxu0 0.0
        %3361 = vmatprep.subr.mxu0 0.0
        %3362 = vmatpush1.msra.mxu0 0.0
        %3363 = vmatprep.subr.mxu0 0.0
        %3364 = vmatpush1.msra.mxu0 0.0
        %3365 = vmatprep.subr.mxu0 0.0
        %3366 = vmatpush1.msra.mxu0 0.0
        %3367 = vmatprep.subr.mxu0 0.0
        %3368 = vmatpush1.msra.mxu0 0.0
        %3369 = vmatprep.subr.mxu0 0.0
        %3370 = vmatpush1.msra.mxu0 0.0
        %3371 = vmatprep.subr.mxu0 0.0
        %3372 = vmatpush1.msra.mxu0 0.0
        %3373 = vmatprep.subr.mxu0 0.0
        %3374 = vmatpush1.msra.mxu0 0.0
        %3375 = vmatprep.subr.mxu0 0.0
        %3376 = vmatpush1.msra.mxu0 0.0
        %3377 = vmatprep.subr.mxu0 0.0
        %3378 = vmatpush1.msra.mxu0 0.0
        %3379 = vmatprep.subr.mxu0 0.0
        %3380 = vmatpush1.msra.mxu0 0.0
        %3381 = vmatprep.subr.mxu0 0.0
        %3382 = vmatpush1.msra.mxu0 0.0
        %3383 = vmatprep.subr.mxu0 0.0
        %3384 = vmatpush1.msra.mxu0 0.0
        %3385 = vmatprep.subr.mxu0 0.0
        %3386 = vmatpush1.msra.mxu0 0.0
        %3387 = vmatprep.subr.mxu0 0.0
        %3388 = vmatpush1.msra.mxu0 0.0
        %3389 = vmatprep.subr.mxu0 0.0
        %3390 = vmatpush1.msra.mxu0 0.0
        %3391 = vmatprep.subr.mxu0 0.0
        %3392 = vmatpush1.msra.mxu0 0.0
        %3393 = vmatprep.subr.mxu0 0.0
        %3394 = vmatpush1.msra.mxu0 0.0
        %3395 = vmatprep.subr.mxu0 0.0
        %3396 = vmatpush1.msra.mxu0 0.0
        %3397 = vmatprep.subr.mxu0 0.0
        %3398 = vmatpush1.msra.mxu0 0.0
        %3399 = vmatprep.subr.mxu0 0.0
        %3400 = vmatpush1.msra.mxu0 0.0
        %3401 = vmatprep.mubr.f32.mxu0 0.0
        %3402 = vmatmul.mubr.f32.gmra.mrb[0].mxu0 %v3237
        %v3403 = vpop.f32.mrb[0].mxu0
        %v3404 = vadd.f32 0.0, %v3403
        %v3405 = vpop.f32.mrb[0].mxu0
        %v3406 = vadd.f32 0.0, %v3405
        %3407 = vmatprep.mubr.f32.mxu0 0.0
        %3408 = vmatmul.mubr.f32.gmra.mrb[0].mxu0 %v3240
        %v3409 = vpop.f32.mrb[0].mxu0
        %v3410 = vadd.f32 0.0, %v3409
        %v3411 = vpop.f32.mrb[0].mxu0
        %v3412 = vadd.f32 0.0, %v3411
        %3413 = vmatprep.mubr.f32.mxu0 0.0
        %3414 = vmatmul.mubr.f32.gmra.mrb[0].mxu0 %v3243
        %v3415 = vpop.f32.mrb[0].mxu0
        %v3416 = vadd.f32 0.0, %v3415
        %v3417 = vpop.f32.mrb[0].mxu0
        %v3418 = vadd.f32 0.0, %v3417
        %3419 = vmatprep.mubr.f32.mxu0 0.0
        %3420 = vmatmul.mubr.f32.gmra.mrb[0].mxu0 %v3246
        %v3421 = vpop.f32.mrb[0].mxu0
        %v3422 = vadd.f32 0.0, %v3421
        %v3423 = vpop.f32.mrb[0].mxu0
        %v3424 = vadd.f32 0.0, %v3423
        %3425 = vdwg.mxu0
        %3426 = vmatprep.subr.mxu0 %v348
        %3427 = vmatpush1.msra.mxu0 %v347
        %3428 = vmatprep.subr.mxu0 0.0
        %3429 = vmatpush1.msra.mxu0 0.0
        %3430 = vmatprep.subr.mxu0 0.0
        %3431 = vmatpush1.msra.mxu0 0.0
        %3432 = vmatprep.subr.mxu0 0.0
        %3433 = vmatpush1.msra.mxu0 0.0
        %3434 = vmatprep.subr.mxu0 0.0
        %3435 = vmatpush1.msra.mxu0 0.0
        %3436 = vmatprep.subr.mxu0 0.0
        %3437 = vmatpush1.msra.mxu0 0.0
        %3438 = vmatprep.subr.mxu0 0.0
        %3439 = vmatpush1.msra.mxu0 0.0
        %3440 = vmatprep.subr.mxu0 0.0
        %3441 = vmatpush1.msra.mxu0 0.0
        %3442 = vmatprep.subr.mxu0 0.0
        %3443 = vmatpush1.msra.mxu0 0.0
        %3444 = vmatprep.subr.mxu0 0.0
        %3445 = vmatpush1.msra.mxu0 0.0
        %3446 = vmatprep.subr.mxu0 0.0
        %3447 = vmatpush1.msra.mxu0 0.0
        %3448 = vmatprep.subr.mxu0 0.0
        %3449 = vmatpush1.msra.mxu0 0.0
        %3450 = vmatprep.subr.mxu0 0.0
        %3451 = vmatpush1.msra.mxu0 0.0
        %3452 = vmatprep.subr.mxu0 0.0
        %3453 = vmatpush1.msra.mxu0 0.0
        %3454 = vmatprep.subr.mxu0 0.0
        %3455 = vmatpush1.msra.mxu0 0.0
        %3456 = vmatprep.subr.mxu0 0.0
        %3457 = vmatpush1.msra.mxu0 0.0
        %3458 = vmatprep.subr.mxu0 0.0
        %3459 = vmatpush1.msra.mxu0 0.0
        %3460 = vmatprep.subr.mxu0 0.0
        %3461 = vmatpush1.msra.mxu0 0.0
        %3462 = vmatprep.subr.mxu0 0.0
        %3463 = vmatpush1.msra.mxu0 0.0
        %3464 = vmatprep.subr.mxu0 0.0
        %3465 = vmatpush1.msra.mxu0 0.0
        %3466 = vmatprep.subr.mxu0 0.0
        %3467 = vmatpush1.msra.mxu0 0.0
        %3468 = vmatprep.subr.mxu0 0.0
        %3469 = vmatpush1.msra.mxu0 0.0
        %3470 = vmatprep.subr.mxu0 0.0
        %3471 = vmatpush1.msra.mxu0 0.0
        %3472 = vmatprep.subr.mxu0 0.0
        %3473 = vmatpush1.msra.mxu0 0.0
        %3474 = vmatprep.subr.mxu0 0.0
        %3475 = vmatpush1.msra.mxu0 0.0
        %3476 = vmatprep.subr.mxu0 0.0
        %3477 = vmatpush1.msra.mxu0 0.0
        %3478 = vmatprep.subr.mxu0 0.0
        %3479 = vmatpush1.msra.mxu0 0.0
        %3480 = vmatprep.subr.mxu0 0.0
        %3481 = vmatpush1.msra.mxu0 0.0
        %3482 = vmatprep.subr.mxu0 0.0
        %3483 = vmatpush1.msra.mxu0 0.0
        %3484 = vmatprep.subr.mxu0 0.0
        %3485 = vmatpush1.msra.mxu0 0.0
        %3486 = vmatprep.subr.mxu0 0.0
        %3487 = vmatpush1.msra.mxu0 0.0
        %3488 = vmatprep.subr.mxu0 0.0
        %3489 = vmatpush1.msra.mxu0 0.0
        %3490 = vmatprep.mubr.f32.mxu0 0.0
        %3491 = vmatmul.mubr.f32.gmra.mrb[0].mxu0 %v3237
        %v3492 = vpop.f32.mrb[0].mxu0
        %v3493 = vadd.f32 0.0, %v3492
        %v3494 = vpop.f32.mrb[0].mxu0
        %v3495 = vadd.f32 0.0, %v3494
        %3496 = vmatprep.mubr.f32.mxu0 0.0
        %3497 = vmatmul.mubr.f32.gmra.mrb[0].mxu0 %v3240
        %v3498 = vpop.f32.mrb[0].mxu0
        %v3499 = vadd.f32 0.0, %v3498
        %v3500 = vpop.f32.mrb[0].mxu0
        %v3501 = vadd.f32 0.0, %v3500
        %3502 = vmatprep.mubr.f32.mxu0 0.0
        %3503 = vmatmul.mubr.f32.gmra.mrb[0].mxu0 %v3243
        %v3504 = vpop.f32.mrb[0].mxu0
        %v3505 = vadd.f32 0.0, %v3504
        %v3506 = vpop.f32.mrb[0].mxu0
        %v3507 = vadd.f32 0.0, %v3506
        %3508 = vmatprep.mubr.f32.mxu0 0.0
        %3509 = vmatmul.mubr.f32.gmra.mrb[0].mxu0 %v3246
        %v3510 = vpop.f32.mrb[0].mxu0
        %v3511 = vadd.f32 0.0, %v3510
        %v3512 = vpop.f32.mrb[0].mxu0
        %v3513 = vadd.f32 0.0, %v3512
        %3514 = vdwg.mxu0
        %3515 = vmatprep.subr.mxu0 %v350
        %3516 = vmatpush1.msra.mxu0 %v349
        %3517 = vmatprep.subr.mxu0 0.0
        %3518 = vmatpush1.msra.mxu0 0.0
        %3519 = vmatprep.subr.mxu0 0.0
        %3520 = vmatpush1.msra.mxu0 0.0
        %3521 = vmatprep.subr.mxu0 0.0
        %3522 = vmatpush1.msra.mxu0 0.0
        %3523 = vmatprep.subr.mxu0 0.0
        %3524 = vmatpush1.msra.mxu0 0.0
        %3525 = vmatprep.subr.mxu0 0.0
        %3526 = vmatpush1.msra.mxu0 0.0
        %3527 = vmatprep.subr.mxu0 0.0
        %3528 = vmatpush1.msra.mxu0 0.0
        %3529 = vmatprep.subr.mxu0 0.0
        %3530 = vmatpush1.msra.mxu0 0.0
        %3531 = vmatprep.subr.mxu0 0.0
        %3532 = vmatpush1.msra.mxu0 0.0
        %3533 = vmatprep.subr.mxu0 0.0
        %3534 = vmatpush1.msra.mxu0 0.0
        %3535 = vmatprep.subr.mxu0 0.0
        %3536 = vmatpush1.msra.mxu0 0.0
        %3537 = vmatprep.subr.mxu0 0.0
        %3538 = vmatpush1.msra.mxu0 0.0
        %3539 = vmatprep.subr.mxu0 0.0
        %3540 = vmatpush1.msra.mxu0 0.0
        %3541 = vmatprep.subr.mxu0 0.0
        %3542 = vmatpush1.msra.mxu0 0.0
        %3543 = vmatprep.subr.mxu0 0.0
        %3544 = vmatpush1.msra.mxu0 0.0
        %3545 = vmatprep.subr.mxu0 0.0
        %3546 = vmatpush1.msra.mxu0 0.0
        %3547 = vmatprep.subr.mxu0 0.0
        %3548 = vmatpush1.msra.mxu0 0.0
        %3549 = vmatprep.subr.mxu0 0.0
        %3550 = vmatpush1.msra.mxu0 0.0
        %3551 = vmatprep.subr.mxu0 0.0
        %3552 = vmatpush1.msra.mxu0 0.0
        %3553 = vmatprep.subr.mxu0 0.0
        %3554 = vmatpush1.msra.mxu0 0.0
        %3555 = vmatprep.subr.mxu0 0.0
        %3556 = vmatpush1.msra.mxu0 0.0
        %3557 = vmatprep.subr.mxu0 0.0
        %3558 = vmatpush1.msra.mxu0 0.0
        %3559 = vmatprep.subr.mxu0 0.0
        %3560 = vmatpush1.msra.mxu0 0.0
        %3561 = vmatprep.subr.mxu0 0.0
        %3562 = vmatpush1.msra.mxu0 0.0
        %3563 = vmatprep.subr.mxu0 0.0
        %3564 = vmatpush1.msra.mxu0 0.0
        %3565 = vmatprep.subr.mxu0 0.0
        %3566 = vmatpush1.msra.mxu0 0.0
        %3567 = vmatprep.subr.mxu0 0.0
        %3568 = vmatpush1.msra.mxu0 0.0
        %3569 = vmatprep.subr.mxu0 0.0
        %3570 = vmatpush1.msra.mxu0 0.0
        %3571 = vmatprep.subr.mxu0 0.0
        %3572 = vmatpush1.msra.mxu0 0.0
        %3573 = vmatprep.subr.mxu0 0.0
        %3574 = vmatpush1.msra.mxu0 0.0
        %3575 = vmatprep.subr.mxu0 0.0
        %3576 = vmatpush1.msra.mxu0 0.0
        %3577 = vmatprep.subr.mxu0 0.0
        %3578 = vmatpush1.msra.mxu0 0.0
        %3579 = vmatprep.mubr.f32.mxu0 0.0
        %3580 = vmatmul.mubr.f32.gmra.mrb[0].mxu0 %v3237
        %v3581 = vpop.f32.mrb[0].mxu0
        %v3582 = vadd.f32 0.0, %v3581
        %v3583 = vpop.f32.mrb[0].mxu0
        %v3584 = vadd.f32 0.0, %v3583
        %3585 = vmatprep.mubr.f32.mxu0 0.0
        %3586 = vmatmul.mubr.f32.gmra.mrb[0].mxu0 %v3240
        %v3587 = vpop.f32.mrb[0].mxu0
        %v3588 = vadd.f32 0.0, %v3587
        %v3589 = vpop.f32.mrb[0].mxu0
        %v3590 = vadd.f32 0.0, %v3589
        %3591 = vmatprep.mubr.f32.mxu0 0.0
        %3592 = vmatmul.mubr.f32.gmra.mrb[0].mxu0 %v3243
        %v3593 = vpop.f32.mrb[0].mxu0
        %v3594 = vadd.f32 0.0, %v3593
        %v3595 = vpop.f32.mrb[0].mxu0
        %v3596 = vadd.f32 0.0, %v3595
        %3597 = vmatprep.mubr.f32.mxu0 0.0
        %3598 = vmatmul.mubr.f32.gmra.mrb[0].mxu0 %v3246
        %v3599 = vpop.f32.mrb[0].mxu0
        %v3600 = vadd.f32 0.0, %v3599
        %v3601 = vpop.f32.mrb[0].mxu0
        %v3602 = vadd.f32 0.0, %v3601
        %3603 = vdwg.mxu0
        %v3605 = vsel %vm1101, %v3227, 0
        %v3608 = vsel %vm1101, %v3228, 0
        %v3611 = vsel %vm1101, %v3229, 0
        %v3614 = vsel %vm1101, %v3230, 0
        %3616 = vmatprep.subr.mxu0 %v3195
        %3617 = vmatpush1.msra.mxu0 %v3194
        %3618 = vmatprep.subr.mxu0 %v3203
        %3619 = vmatpush1.msra.mxu0 %v3202
        %3620 = vmatprep.subr.mxu0 %v3211
        %3621 = vmatpush1.msra.mxu0 %v3210
        %3622 = vmatprep.subr.mxu0 %v3219
        %3623 = vmatpush1.msra.mxu0 %v3218
        %3624 = vmatprep.subr.mxu0 0.0
        %3625 = vmatpush1.msra.mxu0 0.0
        %3626 = vmatprep.subr.mxu0 0.0
        %3627 = vmatpush1.msra.mxu0 0.0
        %3628 = vmatprep.subr.mxu0 0.0
        %3629 = vmatpush1.msra.mxu0 0.0
        %3630 = vmatprep.subr.mxu0 0.0
        %3631 = vmatpush1.msra.mxu0 0.0
        %3632 = vmatprep.subr.mxu0 0.0
        %3633 = vmatpush1.msra.mxu0 0.0
        %3634 = vmatprep.subr.mxu0 0.0
        %3635 = vmatpush1.msra.mxu0 0.0
        %3636 = vmatprep.subr.mxu0 0.0
        %3637 = vmatpush1.msra.mxu0 0.0
        %3638 = vmatprep.subr.mxu0 0.0
        %3639 = vmatpush1.msra.mxu0 0.0
        %3640 = vmatprep.subr.mxu0 0.0
        %3641 = vmatpush1.msra.mxu0 0.0
        %3642 = vmatprep.subr.mxu0 0.0
        %3643 = vmatpush1.msra.mxu0 0.0
        %3644 = vmatprep.subr.mxu0 0.0
        %3645 = vmatpush1.msra.mxu0 0.0
        %3646 = vmatprep.subr.mxu0 0.0
        %3647 = vmatpush1.msra.mxu0 0.0
        %3648 = vmatprep.subr.mxu0 0.0
        %3649 = vmatpush1.msra.mxu0 0.0
        %3650 = vmatprep.subr.mxu0 0.0
        %3651 = vmatpush1.msra.mxu0 0.0
        %3652 = vmatprep.subr.mxu0 0.0
        %3653 = vmatpush1.msra.mxu0 0.0
        %3654 = vmatprep.subr.mxu0 0.0
        %3655 = vmatpush1.msra.mxu0 0.0
        %3656 = vmatprep.subr.mxu0 0.0
        %3657 = vmatpush1.msra.mxu0 0.0
        %3658 = vmatprep.subr.mxu0 0.0
        %3659 = vmatpush1.msra.mxu0 0.0
        %3660 = vmatprep.subr.mxu0 0.0
        %3661 = vmatpush1.msra.mxu0 0.0
        %3662 = vmatprep.subr.mxu0 0.0
        %3663 = vmatpush1.msra.mxu0 0.0
        %3664 = vmatprep.subr.mxu0 0.0
        %3665 = vmatpush1.msra.mxu0 0.0
        %3666 = vmatprep.subr.mxu0 0.0
        %3667 = vmatpush1.msra.mxu0 0.0
        %3668 = vmatprep.subr.mxu0 0.0
        %3669 = vmatpush1.msra.mxu0 0.0
        %3670 = vmatprep.subr.mxu0 0.0
        %3671 = vmatpush1.msra.mxu0 0.0
        %3672 = vmatprep.subr.mxu0 0.0
        %3673 = vmatpush1.msra.mxu0 0.0
        %3674 = vmatprep.subr.mxu0 0.0
        %3675 = vmatpush1.msra.mxu0 0.0
        %3676 = vmatprep.subr.mxu0 0.0
        %3677 = vmatpush1.msra.mxu0 0.0
        %3678 = vmatprep.subr.mxu0 0.0
        %3679 = vmatpush1.msra.mxu0 0.0
        %3680 = vmatprep.mubr.f32.mxu0 0.0
        %3681 = vmatmul.mubr.f32.gmra.mrb[0].mxu0 %v3605
        %v3682 = vpop.f32.mrb[0].mxu0
        %v3683 = vadd.f32 %v3315, %v3682
        %v3684 = vpop.f32.mrb[0].mxu0
        %v3685 = vadd.f32 %v3317, %v3684
        %3686 = vmatprep.mubr.f32.mxu0 0.0
        %3687 = vmatmul.mubr.f32.gmra.mrb[0].mxu0 %v3608
        %v3688 = vpop.f32.mrb[0].mxu0
        %v3689 = vadd.f32 %v3321, %v3688
        %v3690 = vpop.f32.mrb[0].mxu0
        %v3691 = vadd.f32 %v3323, %v3690
        %3692 = vmatprep.mubr.f32.mxu0 0.0
        %3693 = vmatmul.mubr.f32.gmra.mrb[0].mxu0 %v3611
        %v3694 = vpop.f32.mrb[0].mxu0
        %v3695 = vadd.f32 %v3327, %v3694
        %v3696 = vpop.f32.mrb[0].mxu0
        %v3697 = vadd.f32 %v3329, %v3696
        %3698 = vmatprep.mubr.f32.mxu0 0.0
        %3699 = vmatmul.mubr.f32.gmra.mrb[0].mxu0 %v3614
        %v3700 = vpop.f32.mrb[0].mxu0
        %v3701 = vadd.f32 %v3333, %v3700
        %v3702 = vpop.f32.mrb[0].mxu0
        %v3703 = vadd.f32 %v3335, %v3702
        %3704 = vdwg.mxu0
        %3705 = vmatprep.subr.mxu0 %v3197
        %3706 = vmatpush1.msra.mxu0 %v3196
        %3707 = vmatprep.subr.mxu0 %v3205
        %3708 = vmatpush1.msra.mxu0 %v3204
        %3709 = vmatprep.subr.mxu0 %v3213
        %3710 = vmatpush1.msra.mxu0 %v3212
        %3711 = vmatprep.subr.mxu0 %v3221
        %3712 = vmatpush1.msra.mxu0 %v3220
        %3713 = vmatprep.subr.mxu0 0.0
        %3714 = vmatpush1.msra.mxu0 0.0
        %3715 = vmatprep.subr.mxu0 0.0
        %3716 = vmatpush1.msra.mxu0 0.0
        %3717 = vmatprep.subr.mxu0 0.0
        %3718 = vmatpush1.msra.mxu0 0.0
        %3719 = vmatprep.subr.mxu0 0.0
        %3720 = vmatpush1.msra.mxu0 0.0
        %3721 = vmatprep.subr.mxu0 0.0
        %3722 = vmatpush1.msra.mxu0 0.0
        %3723 = vmatprep.subr.mxu0 0.0
        %3724 = vmatpush1.msra.mxu0 0.0
        %3725 = vmatprep.subr.mxu0 0.0
        %3726 = vmatpush1.msra.mxu0 0.0
        %3727 = vmatprep.subr.mxu0 0.0
        %3728 = vmatpush1.msra.mxu0 0.0
        %3729 = vmatprep.subr.mxu0 0.0
        %3730 = vmatpush1.msra.mxu0 0.0
        %3731 = vmatprep.subr.mxu0 0.0
        %3732 = vmatpush1.msra.mxu0 0.0
        %3733 = vmatprep.subr.mxu0 0.0
        %3734 = vmatpush1.msra.mxu0 0.0
        %3735 = vmatprep.subr.mxu0 0.0
        %3736 = vmatpush1.msra.mxu0 0.0
        %3737 = vmatprep.subr.mxu0 0.0
        %3738 = vmatpush1.msra.mxu0 0.0
        %3739 = vmatprep.subr.mxu0 0.0
        %3740 = vmatpush1.msra.mxu0 0.0
        %3741 = vmatprep.subr.mxu0 0.0
        %3742 = vmatpush1.msra.mxu0 0.0
        %3743 = vmatprep.subr.mxu0 0.0
        %3744 = vmatpush1.msra.mxu0 0.0
        %3745 = vmatprep.subr.mxu0 0.0
        %3746 = vmatpush1.msra.mxu0 0.0
        %3747 = vmatprep.subr.mxu0 0.0
        %3748 = vmatpush1.msra.mxu0 0.0
        %3749 = vmatprep.subr.mxu0 0.0
        %3750 = vmatpush1.msra.mxu0 0.0
        %3751 = vmatprep.subr.mxu0 0.0
        %3752 = vmatpush1.msra.mxu0 0.0
        %3753 = vmatprep.subr.mxu0 0.0
        %3754 = vmatpush1.msra.mxu0 0.0
        %3755 = vmatprep.subr.mxu0 0.0
        %3756 = vmatpush1.msra.mxu0 0.0
        %3757 = vmatprep.subr.mxu0 0.0
        %3758 = vmatpush1.msra.mxu0 0.0
        %3759 = vmatprep.subr.mxu0 0.0
        %3760 = vmatpush1.msra.mxu0 0.0
        %3761 = vmatprep.subr.mxu0 0.0
        %3762 = vmatpush1.msra.mxu0 0.0
        %3763 = vmatprep.subr.mxu0 0.0
        %3764 = vmatpush1.msra.mxu0 0.0
        %3765 = vmatprep.subr.mxu0 0.0
        %3766 = vmatpush1.msra.mxu0 0.0
        %3767 = vmatprep.subr.mxu0 0.0
        %3768 = vmatpush1.msra.mxu0 0.0
        %3769 = vmatprep.mubr.f32.mxu0 0.0
        %3770 = vmatmul.mubr.f32.gmra.mrb[0].mxu0 %v3605
        %v3771 = vpop.f32.mrb[0].mxu0
        %v3772 = vadd.f32 %v3404, %v3771
        %v3773 = vpop.f32.mrb[0].mxu0
        %v3774 = vadd.f32 %v3406, %v3773
        %3775 = vmatprep.mubr.f32.mxu0 0.0
        %3776 = vmatmul.mubr.f32.gmra.mrb[0].mxu0 %v3608
        %v3777 = vpop.f32.mrb[0].mxu0
        %v3778 = vadd.f32 %v3410, %v3777
        %v3779 = vpop.f32.mrb[0].mxu0
        %v3780 = vadd.f32 %v3412, %v3779
        %3781 = vmatprep.mubr.f32.mxu0 0.0
        %3782 = vmatmul.mubr.f32.gmra.mrb[0].mxu0 %v3611
        %v3783 = vpop.f32.mrb[0].mxu0
        %v3784 = vadd.f32 %v3416, %v3783
        %v3785 = vpop.f32.mrb[0].mxu0
        %v3786 = vadd.f32 %v3418, %v3785
        %3787 = vmatprep.mubr.f32.mxu0 0.0
        %3788 = vmatmul.mubr.f32.gmra.mrb[0].mxu0 %v3614
        %v3789 = vpop.f32.mrb[0].mxu0
        %v3790 = vadd.f32 %v3422, %v3789
        %v3791 = vpop.f32.mrb[0].mxu0
        %v3792 = vadd.f32 %v3424, %v3791
        %3793 = vdwg.mxu0
        %3794 = vmatprep.subr.mxu0 %v3199
        %3795 = vmatpush1.msra.mxu0 %v3198
        %3796 = vmatprep.subr.mxu0 %v3207
        %3797 = vmatpush1.msra.mxu0 %v3206
        %3798 = vmatprep.subr.mxu0 %v3215
        %3799 = vmatpush1.msra.mxu0 %v3214
        %3800 = vmatprep.subr.mxu0 %v3223
        %3801 = vmatpush1.msra.mxu0 %v3222
        %3802 = vmatprep.subr.mxu0 0.0
        %3803 = vmatpush1.msra.mxu0 0.0
        %3804 = vmatprep.subr.mxu0 0.0
        %3805 = vmatpush1.msra.mxu0 0.0
        %3806 = vmatprep.subr.mxu0 0.0
        %3807 = vmatpush1.msra.mxu0 0.0
        %3808 = vmatprep.subr.mxu0 0.0
        %3809 = vmatpush1.msra.mxu0 0.0
        %3810 = vmatprep.subr.mxu0 0.0
        %3811 = vmatpush1.msra.mxu0 0.0
        %3812 = vmatprep.subr.mxu0 0.0
        %3813 = vmatpush1.msra.mxu0 0.0
        %3814 = vmatprep.subr.mxu0 0.0
        %3815 = vmatpush1.msra.mxu0 0.0
        %3816 = vmatprep.subr.mxu0 0.0
        %3817 = vmatpush1.msra.mxu0 0.0
        %3818 = vmatprep.subr.mxu0 0.0
        %3819 = vmatpush1.msra.mxu0 0.0
        %3820 = vmatprep.subr.mxu0 0.0
        %3821 = vmatpush1.msra.mxu0 0.0
        %3822 = vmatprep.subr.mxu0 0.0
        %3823 = vmatpush1.msra.mxu0 0.0
        %3824 = vmatprep.subr.mxu0 0.0
        %3825 = vmatpush1.msra.mxu0 0.0
        %3826 = vmatprep.subr.mxu0 0.0
        %3827 = vmatpush1.msra.mxu0 0.0
        %3828 = vmatprep.subr.mxu0 0.0
        %3829 = vmatpush1.msra.mxu0 0.0
        %3830 = vmatprep.subr.mxu0 0.0
        %3831 = vmatpush1.msra.mxu0 0.0
        %3832 = vmatprep.subr.mxu0 0.0
        %3833 = vmatpush1.msra.mxu0 0.0
        %3834 = vmatprep.subr.mxu0 0.0
        %3835 = vmatpush1.msra.mxu0 0.0
        %3836 = vmatprep.subr.mxu0 0.0
        %3837 = vmatpush1.msra.mxu0 0.0
        %3838 = vmatprep.subr.mxu0 0.0
        %3839 = vmatpush1.msra.mxu0 0.0
        %3840 = vmatprep.subr.mxu0 0.0
        %3841 = vmatpush1.msra.mxu0 0.0
        %3842 = vmatprep.subr.mxu0 0.0
        %3843 = vmatpush1.msra.mxu0 0.0
        %3844 = vmatprep.subr.mxu0 0.0
        %3845 = vmatpush1.msra.mxu0 0.0
        %3846 = vmatprep.subr.mxu0 0.0
        %3847 = vmatpush1.msra.mxu0 0.0
        %3848 = vmatprep.subr.mxu0 0.0
        %3849 = vmatpush1.msra.mxu0 0.0
        %3850 = vmatprep.subr.mxu0 0.0
        %3851 = vmatpush1.msra.mxu0 0.0
        %3852 = vmatprep.subr.mxu0 0.0
        %3853 = vmatpush1.msra.mxu0 0.0
        %3854 = vmatprep.subr.mxu0 0.0
        %3855 = vmatpush1.msra.mxu0 0.0
        %3856 = vmatprep.subr.mxu0 0.0
        %3857 = vmatpush1.msra.mxu0 0.0
        %3858 = vmatprep.mubr.f32.mxu0 0.0
        %3859 = vmatmul.mubr.f32.gmra.mrb[0].mxu0 %v3605
        %v3860 = vpop.f32.mrb[0].mxu0
        %v3861 = vadd.f32 %v3493, %v3860
        %v3862 = vpop.f32.mrb[0].mxu0
        %v3863 = vadd.f32 %v3495, %v3862
        %3864 = vmatprep.mubr.f32.mxu0 0.0
        %3865 = vmatmul.mubr.f32.gmra.mrb[0].mxu0 %v3608
        %v3866 = vpop.f32.mrb[0].mxu0
        %v3867 = vadd.f32 %v3499, %v3866
        %v3868 = vpop.f32.mrb[0].mxu0
        %v3869 = vadd.f32 %v3501, %v3868
        %3870 = vmatprep.mubr.f32.mxu0 0.0
        %3871 = vmatmul.mubr.f32.gmra.mrb[0].mxu0 %v3611
        %v3872 = vpop.f32.mrb[0].mxu0
        %v3873 = vadd.f32 %v3505, %v3872
        %v3874 = vpop.f32.mrb[0].mxu0
        %v3875 = vadd.f32 %v3507, %v3874
        %3876 = vmatprep.mubr.f32.mxu0 0.0
        %3877 = vmatmul.mubr.f32.gmra.mrb[0].mxu0 %v3614
        %v3878 = vpop.f32.mrb[0].mxu0
        %v3879 = vadd.f32 %v3511, %v3878
        %v3880 = vpop.f32.mrb[0].mxu0
        %v3881 = vadd.f32 %v3513, %v3880
        %3882 = vdwg.mxu0
        %3883 = vmatprep.subr.mxu0 %v3201
        %3884 = vmatpush1.msra.mxu0 %v3200
        %3885 = vmatprep.subr.mxu0 %v3209
        %3886 = vmatpush1.msra.mxu0 %v3208
        %3887 = vmatprep.subr.mxu0 %v3217
        %3888 = vmatpush1.msra.mxu0 %v3216
        %3889 = vmatprep.subr.mxu0 %v3225
        %3890 = vmatpush1.msra.mxu0 %v3224
        %3891 = vmatprep.subr.mxu0 0.0
        %3892 = vmatpush1.msra.mxu0 0.0
        %3893 = vmatprep.subr.mxu0 0.0
        %3894 = vmatpush1.msra.mxu0 0.0
        %3895 = vmatprep.subr.mxu0 0.0
        %3896 = vmatpush1.msra.mxu0 0.0
        %3897 = vmatprep.subr.mxu0 0.0
        %3898 = vmatpush1.msra.mxu0 0.0
        %3899 = vmatprep.subr.mxu0 0.0
        %3900 = vmatpush1.msra.mxu0 0.0
        %3901 = vmatprep.subr.mxu0 0.0
        %3902 = vmatpush1.msra.mxu0 0.0
        %3903 = vmatprep.subr.mxu0 0.0
        %3904 = vmatpush1.msra.mxu0 0.0
        %3905 = vmatprep.subr.mxu0 0.0
        %3906 = vmatpush1.msra.mxu0 0.0
        %3907 = vmatprep.subr.mxu0 0.0
        %3908 = vmatpush1.msra.mxu0 0.0
        %3909 = vmatprep.subr.mxu0 0.0
        %3910 = vmatpush1.msra.mxu0 0.0
        %3911 = vmatprep.subr.mxu0 0.0
        %3912 = vmatpush1.msra.mxu0 0.0
        %3913 = vmatprep.subr.mxu0 0.0
        %3914 = vmatpush1.msra.mxu0 0.0
        %3915 = vmatprep.subr.mxu0 0.0
        %3916 = vmatpush1.msra.mxu0 0.0
        %3917 = vmatprep.subr.mxu0 0.0
        %3918 = vmatpush1.msra.mxu0 0.0
        %3919 = vmatprep.subr.mxu0 0.0
        %3920 = vmatpush1.msra.mxu0 0.0
        %3921 = vmatprep.subr.mxu0 0.0
        %3922 = vmatpush1.msra.mxu0 0.0
        %3923 = vmatprep.subr.mxu0 0.0
        %3924 = vmatpush1.msra.mxu0 0.0
        %3925 = vmatprep.subr.mxu0 0.0
        %3926 = vmatpush1.msra.mxu0 0.0
        %3927 = vmatprep.subr.mxu0 0.0
        %3928 = vmatpush1.msra.mxu0 0.0
        %3929 = vmatprep.subr.mxu0 0.0
        %3930 = vmatpush1.msra.mxu0 0.0
        %3931 = vmatprep.subr.mxu0 0.0
        %3932 = vmatpush1.msra.mxu0 0.0
        %3933 = vmatprep.subr.mxu0 0.0
        %3934 = vmatpush1.msra.mxu0 0.0
        %3935 = vmatprep.subr.mxu0 0.0
        %3936 = vmatpush1.msra.mxu0 0.0
        %3937 = vmatprep.subr.mxu0 0.0
        %3938 = vmatpush1.msra.mxu0 0.0
        %3939 = vmatprep.subr.mxu0 0.0
        %3940 = vmatpush1.msra.mxu0 0.0
        %3941 = vmatprep.subr.mxu0 0.0
        %3942 = vmatpush1.msra.mxu0 0.0
        %3943 = vmatprep.subr.mxu0 0.0
        %3944 = vmatpush1.msra.mxu0 0.0
        %3945 = vmatprep.subr.mxu0 0.0
        %3946 = vmatpush1.msra.mxu0 0.0
        %3947 = vmatprep.mubr.f32.mxu0 0.0
        %3948 = vmatmul.mubr.f32.gmra.mrb[0].mxu0 %v3605
        %v3949 = vpop.f32.mrb[0].mxu0
        %v3950 = vadd.f32 %v3582, %v3949
        %v3951 = vpop.f32.mrb[0].mxu0
        %v3952 = vadd.f32 %v3584, %v3951
        %3953 = vmatprep.mubr.f32.mxu0 0.0
        %3954 = vmatmul.mubr.f32.gmra.mrb[0].mxu0 %v3608
        %v3955 = vpop.f32.mrb[0].mxu0
        %v3956 = vadd.f32 %v3588, %v3955
        %v3957 = vpop.f32.mrb[0].mxu0
        %v3958 = vadd.f32 %v3590, %v3957
        %3959 = vmatprep.mubr.f32.mxu0 0.0
        %3960 = vmatmul.mubr.f32.gmra.mrb[0].mxu0 %v3611
        %v3961 = vpop.f32.mrb[0].mxu0
        %v3962 = vadd.f32 %v3594, %v3961
        %v3963 = vpop.f32.mrb[0].mxu0
        %v3964 = vadd.f32 %v3596, %v3963
        %3965 = vmatprep.mubr.f32.mxu0 0.0
        %3966 = vmatmul.mubr.f32.gmra.mrb[0].mxu0 %v3614
        %v3967 = vpop.f32.mrb[0].mxu0
        %v3968 = vadd.f32 %v3600, %v3967
        %v3969 = vpop.f32.mrb[0].mxu0
        %v3970 = vadd.f32 %v3602, %v3969
        %3971 = vdwg.mxu0
        %3973 = vset.pattern.permute.xlu0 0
        %3974 = vperm.xlu0 %3973, %v355
        %v3975 = vpop.permute.xlu0 %3974
        %3978 = vset.pattern.permute.xlu0 0
        %3979 = vperm.xlu0 %3978, %v356
        %v3980 = vpop.permute.xlu0 %3979
        %3983 = vset.pattern.permute.xlu0 0
        %3984 = vperm.xlu0 %3983, %v357
        %v3985 = vpop.permute.xlu0 %3984
        %3988 = vset.pattern.permute.xlu0 0
        %3989 = vperm.xlu0 %3988, %v358
        %v3990 = vpop.permute.xlu0 %3989
        %v3992 = vadd.f32 %v3683, %v3975
        %v3993 = vadd.f32 %v3685, %v3975
        %v3994 = vadd.f32 %v3772, %v3975
        %v3995 = vadd.f32 %v3774, %v3975
        %v3996 = vadd.f32 %v3861, %v3975
        %v3997 = vadd.f32 %v3863, %v3975
        %v3998 = vadd.f32 %v3950, %v3975
        %v3999 = vadd.f32 %v3952, %v3975
        %v4000 = vadd.f32 %v3689, %v3980
        %v4001 = vadd.f32 %v3691, %v3980
        %v4002 = vadd.f32 %v3778, %v3980
        %v4003 = vadd.f32 %v3780, %v3980
        %v4004 = vadd.f32 %v3867, %v3980
        %v4005 = vadd.f32 %v3869, %v3980
        %v4006 = vadd.f32 %v3956, %v3980
        %v4007 = vadd.f32 %v3958, %v3980
        %v4008 = vadd.f32 %v3695, %v3985
        %v4009 = vadd.f32 %v3697, %v3985
        %v4010 = vadd.f32 %v3784, %v3985
        %v4011 = vadd.f32 %v3786, %v3985
        %v4012 = vadd.f32 %v3873, %v3985
        %v4013 = vadd.f32 %v3875, %v3985
        %v4014 = vadd.f32 %v3962, %v3985
        %v4015 = vadd.f32 %v3964, %v3985
        %v4016 = vadd.f32 %v3701, %v3990
        %v4017 = vadd.f32 %v3703, %v3990
        %v4018 = vadd.f32 %v3790, %v3990
        %v4019 = vadd.f32 %v3792, %v3990
        %v4020 = vadd.f32 %v3879, %v3990
        %v4021 = vadd.f32 %v3881, %v3990
        %v4022 = vadd.f32 %v3968, %v3990
        %v4023 = vadd.f32 %v3970, %v3990
        %v4024 = vmul.f32 %v3992, 100.0
        %v4025 = vmul.f32 %v3993, 100.0
        %v4026 = vmul.f32 %v3994, 100.0
        %v4027 = vmul.f32 %v3995, 100.0
        %v4028 = vmul.f32 %v3996, 100.0
        %v4029 = vmul.f32 %v3997, 100.0
        %v4030 = vmul.f32 %v3998, 100.0
        %v4031 = vmul.f32 %v3999, 100.0
        %v4032 = vmul.f32 %v4000, 100.0
        %v4033 = vmul.f32 %v4001, 100.0
        %v4034 = vmul.f32 %v4002, 100.0
        %v4035 = vmul.f32 %v4003, 100.0
        %v4036 = vmul.f32 %v4004, 100.0
        %v4037 = vmul.f32 %v4005, 100.0
        %v4038 = vmul.f32 %v4006, 100.0
        %v4039 = vmul.f32 %v4007, 100.0
        %v4040 = vmul.f32 %v4008, 100.0
        %v4041 = vmul.f32 %v4009, 100.0
        %v4042 = vmul.f32 %v4010, 100.0
        %v4043 = vmul.f32 %v4011, 100.0
        %v4044 = vmul.f32 %v4012, 100.0
        %v4045 = vmul.f32 %v4013, 100.0
        %v4046 = vmul.f32 %v4014, 100.0
        %v4047 = vmul.f32 %v4015, 100.0
        %v4048 = vmul.f32 %v4016, 100.0
        %v4049 = vmul.f32 %v4017, 100.0
        %v4050 = vmul.f32 %v4018, 100.0
        %v4051 = vmul.f32 %v4019, 100.0
        %v4052 = vmul.f32 %v4020, 100.0
        %v4053 = vmul.f32 %v4021, 100.0
        %v4054 = vmul.f32 %v4022, 100.0
        %v4055 = vmul.f32 %v4023, 100.0
        %vm4056 = vcmp.gt.f32.partialorder %v4024, 20.0
        %vm4057 = vcmp.gt.f32.partialorder %v4025, 20.0
        %vm4058 = vcmp.gt.f32.partialorder %v4026, 20.0
        %vm4059 = vcmp.gt.f32.partialorder %v4027, 20.0
        %vm4060 = vcmp.gt.f32.partialorder %v4028, 20.0
        %vm4061 = vcmp.gt.f32.partialorder %v4029, 20.0
        %vm4062 = vcmp.gt.f32.partialorder %v4030, 20.0
        %vm4063 = vcmp.gt.f32.partialorder %v4031, 20.0
        %vm4064 = vcmp.gt.f32.partialorder %v4032, 20.0
        %vm4065 = vcmp.gt.f32.partialorder %v4033, 20.0
        %vm4066 = vcmp.gt.f32.partialorder %v4034, 20.0
        %vm4067 = vcmp.gt.f32.partialorder %v4035, 20.0
        %vm4068 = vcmp.gt.f32.partialorder %v4036, 20.0
        %vm4069 = vcmp.gt.f32.partialorder %v4037, 20.0
        %vm4070 = vcmp.gt.f32.partialorder %v4038, 20.0
        %vm4071 = vcmp.gt.f32.partialorder %v4039, 20.0
        %vm4072 = vcmp.gt.f32.partialorder %v4040, 20.0
        %vm4073 = vcmp.gt.f32.partialorder %v4041, 20.0
        %vm4074 = vcmp.gt.f32.partialorder %v4042, 20.0
        %vm4075 = vcmp.gt.f32.partialorder %v4043, 20.0
        %vm4076 = vcmp.gt.f32.partialorder %v4044, 20.0
        %vm4077 = vcmp.gt.f32.partialorder %v4045, 20.0
        %vm4078 = vcmp.gt.f32.partialorder %v4046, 20.0
        %vm4079 = vcmp.gt.f32.partialorder %v4047, 20.0
        %vm4080 = vcmp.gt.f32.partialorder %v4048, 20.0
        %vm4081 = vcmp.gt.f32.partialorder %v4049, 20.0
        %vm4082 = vcmp.gt.f32.partialorder %v4050, 20.0
        %vm4083 = vcmp.gt.f32.partialorder %v4051, 20.0
        %vm4084 = vcmp.gt.f32.partialorder %v4052, 20.0
        %vm4085 = vcmp.gt.f32.partialorder %v4053, 20.0
        %vm4086 = vcmp.gt.f32.partialorder %v4054, 20.0
        %vm4087 = vcmp.gt.f32.partialorder %v4055, 20.0
        %v4088 = vmin.f32 %v4024, 20.0
        %v4089 = vmin.f32 %v4025, 20.0
        %v4090 = vmin.f32 %v4026, 20.0
        %v4091 = vmin.f32 %v4027, 20.0
        %v4092 = vmin.f32 %v4028, 20.0
        %v4093 = vmin.f32 %v4029, 20.0
        %v4094 = vmin.f32 %v4030, 20.0
        %v4095 = vmin.f32 %v4031, 20.0
        %v4096 = vmin.f32 %v4032, 20.0
        %v4097 = vmin.f32 %v4033, 20.0
        %v4098 = vmin.f32 %v4034, 20.0
        %v4099 = vmin.f32 %v4035, 20.0
        %v4100 = vmin.f32 %v4036, 20.0
        %v4101 = vmin.f32 %v4037, 20.0
        %v4102 = vmin.f32 %v4038, 20.0
        %v4103 = vmin.f32 %v4039, 20.0
        %v4104 = vmin.f32 %v4040, 20.0
        %v4105 = vmin.f32 %v4041, 20.0
        %v4106 = vmin.f32 %v4042, 20.0
        %v4107 = vmin.f32 %v4043, 20.0
        %v4108 = vmin.f32 %v4044, 20.0
        %v4109 = vmin.f32 %v4045, 20.0
        %v4110 = vmin.f32 %v4046, 20.0
        %v4111 = vmin.f32 %v4047, 20.0
        %v4112 = vmin.f32 %v4048, 20.0
        %v4113 = vmin.f32 %v4049, 20.0
        %v4114 = vmin.f32 %v4050, 20.0
        %v4115 = vmin.f32 %v4051, 20.0
        %v4116 = vmin.f32 %v4052, 20.0
        %v4117 = vmin.f32 %v4053, 20.0
        %v4118 = vmin.f32 %v4054, 20.0
        %v4119 = vmin.f32 %v4055, 20.0
        %v4120 = vmul.f32 %v4088, 1.442695
        %v4121 = vpow.pop %v4120
        %v4122 = vmul.f32 %v4089, 1.442695
        %v4123 = vpow.pop %v4122
        %v4124 = vmul.f32 %v4090, 1.442695
        %v4125 = vpow.pop %v4124
        %v4126 = vmul.f32 %v4091, 1.442695
        %v4127 = vpow.pop %v4126
        %v4128 = vmul.f32 %v4092, 1.442695
        %v4129 = vpow.pop %v4128
        %v4130 = vmul.f32 %v4093, 1.442695
        %v4131 = vpow.pop %v4130
        %v4132 = vmul.f32 %v4094, 1.442695
        %v4133 = vpow.pop %v4132
        %v4134 = vmul.f32 %v4095, 1.442695
        %v4135 = vpow.pop %v4134
        %v4136 = vmul.f32 %v4096, 1.442695
        %v4137 = vpow.pop %v4136
        %v4138 = vmul.f32 %v4097, 1.442695
        %v4139 = vpow.pop %v4138
        %v4140 = vmul.f32 %v4098, 1.442695
        %v4141 = vpow.pop %v4140
        %v4142 = vmul.f32 %v4099, 1.442695
        %v4143 = vpow.pop %v4142
        %v4144 = vmul.f32 %v4100, 1.442695
        %v4145 = vpow.pop %v4144
        %v4146 = vmul.f32 %v4101, 1.442695
        %v4147 = vpow.pop %v4146
        %v4148 = vmul.f32 %v4102, 1.442695
        %v4149 = vpow.pop %v4148
        %v4150 = vmul.f32 %v4103, 1.442695
        %v4151 = vpow.pop %v4150
        %v4152 = vmul.f32 %v4104, 1.442695
        %v4153 = vpow.pop %v4152
        %v4154 = vmul.f32 %v4105, 1.442695
        %v4155 = vpow.pop %v4154
        %v4156 = vmul.f32 %v4106, 1.442695
        %v4157 = vpow.pop %v4156
        %v4158 = vmul.f32 %v4107, 1.442695
        %v4159 = vpow.pop %v4158
        %v4160 = vmul.f32 %v4108, 1.442695
        %v4161 = vpow.pop %v4160
        %v4162 = vmul.f32 %v4109, 1.442695
        %v4163 = vpow.pop %v4162
        %v4164 = vmul.f32 %v4110, 1.442695
        %v4165 = vpow.pop %v4164
        %v4166 = vmul.f32 %v4111, 1.442695
        %v4167 = vpow.pop %v4166
        %v4168 = vmul.f32 %v4112, 1.442695
        %v4169 = vpow.pop %v4168
        %v4170 = vmul.f32 %v4113, 1.442695
        %v4171 = vpow.pop %v4170
        %v4172 = vmul.f32 %v4114, 1.442695
        %v4173 = vpow.pop %v4172
        %v4174 = vmul.f32 %v4115, 1.442695
        %v4175 = vpow.pop %v4174
        %v4176 = vmul.f32 %v4116, 1.442695
        %v4177 = vpow.pop %v4176
        %v4178 = vmul.f32 %v4117, 1.442695
        %v4179 = vpow.pop %v4178
        %v4180 = vmul.f32 %v4118, 1.442695
        %v4181 = vpow.pop %v4180
        %v4182 = vmul.f32 %v4119, 1.442695
        %v4183 = vpow.pop %v4182
        %v4184 = vadd.f32 %v4121, 1.0
        %v4185 = vadd.f32 %v4123, 1.0
        %v4186 = vadd.f32 %v4125, 1.0
        %v4187 = vadd.f32 %v4127, 1.0
        %v4188 = vadd.f32 %v4129, 1.0
        %v4189 = vadd.f32 %v4131, 1.0
        %v4190 = vadd.f32 %v4133, 1.0
        %v4191 = vadd.f32 %v4135, 1.0
        %v4192 = vadd.f32 %v4137, 1.0
        %v4193 = vadd.f32 %v4139, 1.0
        %v4194 = vadd.f32 %v4141, 1.0
        %v4195 = vadd.f32 %v4143, 1.0
        %v4196 = vadd.f32 %v4145, 1.0
        %v4197 = vadd.f32 %v4147, 1.0
        %v4198 = vadd.f32 %v4149, 1.0
        %v4199 = vadd.f32 %v4151, 1.0
        %v4200 = vadd.f32 %v4153, 1.0
        %v4201 = vadd.f32 %v4155, 1.0
        %v4202 = vadd.f32 %v4157, 1.0
        %v4203 = vadd.f32 %v4159, 1.0
        %v4204 = vadd.f32 %v4161, 1.0
        %v4205 = vadd.f32 %v4163, 1.0
        %v4206 = vadd.f32 %v4165, 1.0
        %v4207 = vadd.f32 %v4167, 1.0
        %v4208 = vadd.f32 %v4169, 1.0
        %v4209 = vadd.f32 %v4171, 1.0
        %v4210 = vadd.f32 %v4173, 1.0
        %v4211 = vadd.f32 %v4175, 1.0
        %v4212 = vadd.f32 %v4177, 1.0
        %v4213 = vadd.f32 %v4179, 1.0
        %v4214 = vadd.f32 %v4181, 1.0
        %v4215 = vadd.f32 %v4183, 1.0
        %v4216 = vlog2.pop %v4184
        %v4217 = vmul.f32 %v4216, 0.6931472
        %v4218 = vlog2.pop %v4185
        %v4219 = vmul.f32 %v4218, 0.6931472
        %v4220 = vlog2.pop %v4186
        %v4221 = vmul.f32 %v4220, 0.6931472
        %v4222 = vlog2.pop %v4187
        %v4223 = vmul.f32 %v4222, 0.6931472
        %v4224 = vlog2.pop %v4188
        %v4225 = vmul.f32 %v4224, 0.6931472
        %v4226 = vlog2.pop %v4189
        %v4227 = vmul.f32 %v4226, 0.6931472
        %v4228 = vlog2.pop %v4190
        %v4229 = vmul.f32 %v4228, 0.6931472
        %v4230 = vlog2.pop %v4191
        %v4231 = vmul.f32 %v4230, 0.6931472
        %v4232 = vlog2.pop %v4192
        %v4233 = vmul.f32 %v4232, 0.6931472
        %v4234 = vlog2.pop %v4193
        %v4235 = vmul.f32 %v4234, 0.6931472
        %v4236 = vlog2.pop %v4194
        %v4237 = vmul.f32 %v4236, 0.6931472
        %v4238 = vlog2.pop %v4195
        %v4239 = vmul.f32 %v4238, 0.6931472
        %v4240 = vlog2.pop %v4196
        %v4241 = vmul.f32 %v4240, 0.6931472
        %v4242 = vlog2.pop %v4197
        %v4243 = vmul.f32 %v4242, 0.6931472
        %v4244 = vlog2.pop %v4198
        %v4245 = vmul.f32 %v4244, 0.6931472
        %v4246 = vlog2.pop %v4199
        %v4247 = vmul.f32 %v4246, 0.6931472
        %v4248 = vlog2.pop %v4200
        %v4249 = vmul.f32 %v4248, 0.6931472
        %v4250 = vlog2.pop %v4201
        %v4251 = vmul.f32 %v4250, 0.6931472
        %v4252 = vlog2.pop %v4202
        %v4253 = vmul.f32 %v4252, 0.6931472
        %v4254 = vlog2.pop %v4203
        %v4255 = vmul.f32 %v4254, 0.6931472
        %v4256 = vlog2.pop %v4204
        %v4257 = vmul.f32 %v4256, 0.6931472
        %v4258 = vlog2.pop %v4205
        %v4259 = vmul.f32 %v4258, 0.6931472
        %v4260 = vlog2.pop %v4206
        %v4261 = vmul.f32 %v4260, 0.6931472
        %v4262 = vlog2.pop %v4207
        %v4263 = vmul.f32 %v4262, 0.6931472
        %v4264 = vlog2.pop %v4208
        %v4265 = vmul.f32 %v4264, 0.6931472
        %v4266 = vlog2.pop %v4209
        %v4267 = vmul.f32 %v4266, 0.6931472
        %v4268 = vlog2.pop %v4210
        %v4269 = vmul.f32 %v4268, 0.6931472
        %v4270 = vlog2.pop %v4211
        %v4271 = vmul.f32 %v4270, 0.6931472
        %v4272 = vlog2.pop %v4212
        %v4273 = vmul.f32 %v4272, 0.6931472
        %v4274 = vlog2.pop %v4213
        %v4275 = vmul.f32 %v4274, 0.6931472
        %v4276 = vlog2.pop %v4214
        %v4277 = vmul.f32 %v4276, 0.6931472
        %v4278 = vlog2.pop %v4215
        %v4279 = vmul.f32 %v4278, 0.6931472
        %v4280 = vmul.f32 %v4217, %v1008
        %v4281 = vmul.f32 %v4219, %v1008
        %v4282 = vmul.f32 %v4221, %v1008
        %v4283 = vmul.f32 %v4223, %v1008
        %v4284 = vmul.f32 %v4225, %v1008
        %v4285 = vmul.f32 %v4227, %v1008
        %v4286 = vmul.f32 %v4229, %v1008
        %v4287 = vmul.f32 %v4231, %v1008
        %v4288 = vmul.f32 %v4233, %v1008
        %v4289 = vmul.f32 %v4235, %v1008
        %v4290 = vmul.f32 %v4237, %v1008
        %v4291 = vmul.f32 %v4239, %v1008
        %v4292 = vmul.f32 %v4241, %v1008
        %v4293 = vmul.f32 %v4243, %v1008
        %v4294 = vmul.f32 %v4245, %v1008
        %v4295 = vmul.f32 %v4247, %v1008
        %v4296 = vmul.f32 %v4249, %v1008
        %v4297 = vmul.f32 %v4251, %v1008
        %v4298 = vmul.f32 %v4253, %v1008
        %v4299 = vmul.f32 %v4255, %v1008
        %v4300 = vmul.f32 %v4257, %v1008
        %v4301 = vmul.f32 %v4259, %v1008
        %v4302 = vmul.f32 %v4261, %v1008
        %v4303 = vmul.f32 %v4263, %v1008
        %v4304 = vmul.f32 %v4265, %v1008
        %v4305 = vmul.f32 %v4267, %v1008
        %v4306 = vmul.f32 %v4269, %v1008
        %v4307 = vmul.f32 %v4271, %v1008
        %v4308 = vmul.f32 %v4273, %v1008
        %v4309 = vmul.f32 %v4275, %v1008
        %v4310 = vmul.f32 %v4277, %v1008
        %v4311 = vmul.f32 %v4279, %v1008
        %v4312 = vsel %vm4056, %v3992, %v4280
        %v4313 = vsel %vm4057, %v3993, %v4281
        %v4314 = vsel %vm4058, %v3994, %v4282
        %v4315 = vsel %vm4059, %v3995, %v4283
        %v4316 = vsel %vm4060, %v3996, %v4284
        %v4317 = vsel %vm4061, %v3997, %v4285
        %v4318 = vsel %vm4062, %v3998, %v4286
        %v4319 = vsel %vm4063, %v3999, %v4287
        %v4320 = vsel %vm4064, %v4000, %v4288
        %v4321 = vsel %vm4065, %v4001, %v4289
        %v4322 = vsel %vm4066, %v4002, %v4290
        %v4323 = vsel %vm4067, %v4003, %v4291
        %v4324 = vsel %vm4068, %v4004, %v4292
        %v4325 = vsel %vm4069, %v4005, %v4293
        %v4326 = vsel %vm4070, %v4006, %v4294
        %v4327 = vsel %vm4071, %v4007, %v4295
        %v4328 = vsel %vm4072, %v4008, %v4296
        %v4329 = vsel %vm4073, %v4009, %v4297
        %v4330 = vsel %vm4074, %v4010, %v4298
        %v4331 = vsel %vm4075, %v4011, %v4299
        %v4332 = vsel %vm4076, %v4012, %v4300
        %v4333 = vsel %vm4077, %v4013, %v4301
        %v4334 = vsel %vm4078, %v4014, %v4302
        %v4335 = vsel %vm4079, %v4015, %v4303
        %v4336 = vsel %vm4080, %v4016, %v4304
        %v4337 = vsel %vm4081, %v4017, %v4305
        %v4338 = vsel %vm4082, %v4018, %v4306
        %v4339 = vsel %vm4083, %v4019, %v4307
        %v4340 = vsel %vm4084, %v4020, %v4308
        %v4341 = vsel %vm4085, %v4021, %v4309
        %v4342 = vsel %vm4086, %v4022, %v4310
        %v4343 = vsel %vm4087, %v4023, %v4311
        %s4344 = scalar_lea.vmem [#allocation2], 128
        %v4345 = vld [vmem:[%s4344] sm:$0xff]
        %v4346 = vld [vmem:[%s4344 + $0x8] sm:$0xff]
        %v4347 = vld [vmem:[%s4344 + $0x10] sm:$0xff]
        %v4348 = vld [vmem:[%s4344 + $0x18] sm:$0xff]
        %s4349 = scalar_lea.vmem %s4, 128
        %v4350 = vld [vmem:[%s4349] sm:$0xff]
        %v4351 = vld [vmem:[%s4349 + $0x8] sm:$0xff]
        %v4352 = vld [vmem:[%s4349 + $0x10] sm:$0xff]
        %v4353 = vld [vmem:[%s4349 + $0x18] sm:$0xff]
        %4355 = vset.pattern.permute.xlu0 0
        %4356 = vperm.xlu0 %4355, %v4350
        %v4357 = vpop.permute.xlu0 %4356
        %4360 = vset.pattern.permute.xlu0 0
        %4361 = vperm.xlu0 %4360, %v4351
        %v4362 = vpop.permute.xlu0 %4361
        %4365 = vset.pattern.permute.xlu0 0
        %4366 = vperm.xlu0 %4365, %v4352
        %v4367 = vpop.permute.xlu0 %4366
        %4370 = vset.pattern.permute.xlu0 0
        %4371 = vperm.xlu0 %4370, %v4353
        %v4372 = vpop.permute.xlu0 %4371
        %v4375 = vsel %vm1101, %v4345, 0
        %v4378 = vsel %vm1101, %v4346, 0
        %v4381 = vsel %vm1101, %v4347, 0
        %v4384 = vsel %vm1101, %v4348, 0
        %4386 = vmatprep.subr.mxu0 %v4313
        %4387 = vmatpush1.msra.mxu0 %v4312
        %4388 = vmatprep.subr.mxu0 %v4321
        %4389 = vmatpush1.msra.mxu0 %v4320
        %4390 = vmatprep.subr.mxu0 %v4329
        %4391 = vmatpush1.msra.mxu0 %v4328
        %4392 = vmatprep.subr.mxu0 %v4337
        %4393 = vmatpush1.msra.mxu0 %v4336
        %4394 = vmatprep.subr.mxu0 0.0
        %4395 = vmatpush1.msra.mxu0 0.0
        %4396 = vmatprep.subr.mxu0 0.0
        %4397 = vmatpush1.msra.mxu0 0.0
        %4398 = vmatprep.subr.mxu0 0.0
        %4399 = vmatpush1.msra.mxu0 0.0
        %4400 = vmatprep.subr.mxu0 0.0
        %4401 = vmatpush1.msra.mxu0 0.0
        %4402 = vmatprep.subr.mxu0 0.0
        %4403 = vmatpush1.msra.mxu0 0.0
        %4404 = vmatprep.subr.mxu0 0.0
        %4405 = vmatpush1.msra.mxu0 0.0
        %4406 = vmatprep.subr.mxu0 0.0
        %4407 = vmatpush1.msra.mxu0 0.0
        %4408 = vmatprep.subr.mxu0 0.0
        %4409 = vmatpush1.msra.mxu0 0.0
        %4410 = vmatprep.subr.mxu0 0.0
        %4411 = vmatpush1.msra.mxu0 0.0
        %4412 = vmatprep.subr.mxu0 0.0
        %4413 = vmatpush1.msra.mxu0 0.0
        %4414 = vmatprep.subr.mxu0 0.0
        %4415 = vmatpush1.msra.mxu0 0.0
        %4416 = vmatprep.subr.mxu0 0.0
        %4417 = vmatpush1.msra.mxu0 0.0
        %4418 = vmatprep.subr.mxu0 0.0
        %4419 = vmatpush1.msra.mxu0 0.0
        %4420 = vmatprep.subr.mxu0 0.0
        %4421 = vmatpush1.msra.mxu0 0.0
        %4422 = vmatprep.subr.mxu0 0.0
        %4423 = vmatpush1.msra.mxu0 0.0
        %4424 = vmatprep.subr.mxu0 0.0
        %4425 = vmatpush1.msra.mxu0 0.0
        %4426 = vmatprep.subr.mxu0 0.0
        %4427 = vmatpush1.msra.mxu0 0.0
        %4428 = vmatprep.subr.mxu0 0.0
        %4429 = vmatpush1.msra.mxu0 0.0
        %4430 = vmatprep.subr.mxu0 0.0
        %4431 = vmatpush1.msra.mxu0 0.0
        %4432 = vmatprep.subr.mxu0 0.0
        %4433 = vmatpush1.msra.mxu0 0.0
        %4434 = vmatprep.subr.mxu0 0.0
        %4435 = vmatpush1.msra.mxu0 0.0
        %4436 = vmatprep.subr.mxu0 0.0
        %4437 = vmatpush1.msra.mxu0 0.0
        %4438 = vmatprep.subr.mxu0 0.0
        %4439 = vmatpush1.msra.mxu0 0.0
        %4440 = vmatprep.subr.mxu0 0.0
        %4441 = vmatpush1.msra.mxu0 0.0
        %4442 = vmatprep.subr.mxu0 0.0
        %4443 = vmatpush1.msra.mxu0 0.0
        %4444 = vmatprep.subr.mxu0 0.0
        %4445 = vmatpush1.msra.mxu0 0.0
        %4446 = vmatprep.subr.mxu0 0.0
        %4447 = vmatpush1.msra.mxu0 0.0
        %4448 = vmatprep.subr.mxu0 0.0
        %4449 = vmatpush1.msra.mxu0 0.0
        %4450 = vmatprep.mubr.f32.mxu0 0.0
        %4451 = vmatmul.mubr.f32.gmra.mrb[0].mxu0 %v4375
        %v4452 = vpop.f32.mrb[0].mxu0
        %v4453 = vadd.f32 %v4357, %v4452
        %v4454 = vpop.f32.mrb[0].mxu0
        %v4455 = vadd.f32 %v4357, %v4454
        %4456 = vmatprep.mubr.f32.mxu0 0.0
        %4457 = vmatmul.mubr.f32.gmra.mrb[0].mxu0 %v4378
        %v4458 = vpop.f32.mrb[0].mxu0
        %v4459 = vadd.f32 %v4362, %v4458
        %v4460 = vpop.f32.mrb[0].mxu0
        %v4461 = vadd.f32 %v4362, %v4460
        %4462 = vmatprep.mubr.f32.mxu0 0.0
        %4463 = vmatmul.mubr.f32.gmra.mrb[0].mxu0 %v4381
        %v4464 = vpop.f32.mrb[0].mxu0
        %v4465 = vadd.f32 %v4367, %v4464
        %v4466 = vpop.f32.mrb[0].mxu0
        %v4467 = vadd.f32 %v4367, %v4466
        %4468 = vmatprep.mubr.f32.mxu0 0.0
        %4469 = vmatmul.mubr.f32.gmra.mrb[0].mxu0 %v4384
        %v4470 = vpop.f32.mrb[0].mxu0
        %v4471 = vadd.f32 %v4372, %v4470
        %v4472 = vpop.f32.mrb[0].mxu0
        %v4473 = vadd.f32 %v4372, %v4472
        %4474 = vdwg.mxu0
        %4475 = vmatprep.subr.mxu0 %v4315
        %4476 = vmatpush1.msra.mxu0 %v4314
        %4477 = vmatprep.subr.mxu0 %v4323
        %4478 = vmatpush1.msra.mxu0 %v4322
        %4479 = vmatprep.subr.mxu0 %v4331
        %4480 = vmatpush1.msra.mxu0 %v4330
        %4481 = vmatprep.subr.mxu0 %v4339
        %4482 = vmatpush1.msra.mxu0 %v4338
        %4483 = vmatprep.subr.mxu0 0.0
        %4484 = vmatpush1.msra.mxu0 0.0
        %4485 = vmatprep.subr.mxu0 0.0
        %4486 = vmatpush1.msra.mxu0 0.0
        %4487 = vmatprep.subr.mxu0 0.0
        %4488 = vmatpush1.msra.mxu0 0.0
        %4489 = vmatprep.subr.mxu0 0.0
        %4490 = vmatpush1.msra.mxu0 0.0
        %4491 = vmatprep.subr.mxu0 0.0
        %4492 = vmatpush1.msra.mxu0 0.0
        %4493 = vmatprep.subr.mxu0 0.0
        %4494 = vmatpush1.msra.mxu0 0.0
        %4495 = vmatprep.subr.mxu0 0.0
        %4496 = vmatpush1.msra.mxu0 0.0
        %4497 = vmatprep.subr.mxu0 0.0
        %4498 = vmatpush1.msra.mxu0 0.0
        %4499 = vmatprep.subr.mxu0 0.0
        %4500 = vmatpush1.msra.mxu0 0.0
        %4501 = vmatprep.subr.mxu0 0.0
        %4502 = vmatpush1.msra.mxu0 0.0
        %4503 = vmatprep.subr.mxu0 0.0
        %4504 = vmatpush1.msra.mxu0 0.0
        %4505 = vmatprep.subr.mxu0 0.0
        %4506 = vmatpush1.msra.mxu0 0.0
        %4507 = vmatprep.subr.mxu0 0.0
        %4508 = vmatpush1.msra.mxu0 0.0
        %4509 = vmatprep.subr.mxu0 0.0
        %4510 = vmatpush1.msra.mxu0 0.0
        %4511 = vmatprep.subr.mxu0 0.0
        %4512 = vmatpush1.msra.mxu0 0.0
        %4513 = vmatprep.subr.mxu0 0.0
        %4514 = vmatpush1.msra.mxu0 0.0
        %4515 = vmatprep.subr.mxu0 0.0
        %4516 = vmatpush1.msra.mxu0 0.0
        %4517 = vmatprep.subr.mxu0 0.0
        %4518 = vmatpush1.msra.mxu0 0.0
        %4519 = vmatprep.subr.mxu0 0.0
        %4520 = vmatpush1.msra.mxu0 0.0
        %4521 = vmatprep.subr.mxu0 0.0
        %4522 = vmatpush1.msra.mxu0 0.0
        %4523 = vmatprep.subr.mxu0 0.0
        %4524 = vmatpush1.msra.mxu0 0.0
        %4525 = vmatprep.subr.mxu0 0.0
        %4526 = vmatpush1.msra.mxu0 0.0
        %4527 = vmatprep.subr.mxu0 0.0
        %4528 = vmatpush1.msra.mxu0 0.0
        %4529 = vmatprep.subr.mxu0 0.0
        %4530 = vmatpush1.msra.mxu0 0.0
        %4531 = vmatprep.subr.mxu0 0.0
        %4532 = vmatpush1.msra.mxu0 0.0
        %4533 = vmatprep.subr.mxu0 0.0
        %4534 = vmatpush1.msra.mxu0 0.0
        %4535 = vmatprep.subr.mxu0 0.0
        %4536 = vmatpush1.msra.mxu0 0.0
        %4537 = vmatprep.subr.mxu0 0.0
        %4538 = vmatpush1.msra.mxu0 0.0
        %4539 = vmatprep.mubr.f32.mxu0 0.0
        %4540 = vmatmul.mubr.f32.gmra.mrb[0].mxu0 %v4375
        %v4541 = vpop.f32.mrb[0].mxu0
        %v4542 = vadd.f32 %v4357, %v4541
        %v4543 = vpop.f32.mrb[0].mxu0
        %v4544 = vadd.f32 %v4357, %v4543
        %4545 = vmatprep.mubr.f32.mxu0 0.0
        %4546 = vmatmul.mubr.f32.gmra.mrb[0].mxu0 %v4378
        %v4547 = vpop.f32.mrb[0].mxu0
        %v4548 = vadd.f32 %v4362, %v4547
        %v4549 = vpop.f32.mrb[0].mxu0
        %v4550 = vadd.f32 %v4362, %v4549
        %4551 = vmatprep.mubr.f32.mxu0 0.0
        %4552 = vmatmul.mubr.f32.gmra.mrb[0].mxu0 %v4381
        %v4553 = vpop.f32.mrb[0].mxu0
        %v4554 = vadd.f32 %v4367, %v4553
        %v4555 = vpop.f32.mrb[0].mxu0
        %v4556 = vadd.f32 %v4367, %v4555
        %4557 = vmatprep.mubr.f32.mxu0 0.0
        %4558 = vmatmul.mubr.f32.gmra.mrb[0].mxu0 %v4384
        %v4559 = vpop.f32.mrb[0].mxu0
        %v4560 = vadd.f32 %v4372, %v4559
        %v4561 = vpop.f32.mrb[0].mxu0
        %v4562 = vadd.f32 %v4372, %v4561
        %4563 = vdwg.mxu0
        %4564 = vmatprep.subr.mxu0 %v4317
        %4565 = vmatpush1.msra.mxu0 %v4316
        %4566 = vmatprep.subr.mxu0 %v4325
        %4567 = vmatpush1.msra.mxu0 %v4324
        %4568 = vmatprep.subr.mxu0 %v4333
        %4569 = vmatpush1.msra.mxu0 %v4332
        %4570 = vmatprep.subr.mxu0 %v4341
        %4571 = vmatpush1.msra.mxu0 %v4340
        %4572 = vmatprep.subr.mxu0 0.0
        %4573 = vmatpush1.msra.mxu0 0.0
        %4574 = vmatprep.subr.mxu0 0.0
        %4575 = vmatpush1.msra.mxu0 0.0
        %4576 = vmatprep.subr.mxu0 0.0
        %4577 = vmatpush1.msra.mxu0 0.0
        %4578 = vmatprep.subr.mxu0 0.0
        %4579 = vmatpush1.msra.mxu0 0.0
        %4580 = vmatprep.subr.mxu0 0.0
        %4581 = vmatpush1.msra.mxu0 0.0
        %4582 = vmatprep.subr.mxu0 0.0
        %4583 = vmatpush1.msra.mxu0 0.0
        %4584 = vmatprep.subr.mxu0 0.0
        %4585 = vmatpush1.msra.mxu0 0.0
        %4586 = vmatprep.subr.mxu0 0.0
        %4587 = vmatpush1.msra.mxu0 0.0
        %4588 = vmatprep.subr.mxu0 0.0
        %4589 = vmatpush1.msra.mxu0 0.0
        %4590 = vmatprep.subr.mxu0 0.0
        %4591 = vmatpush1.msra.mxu0 0.0
        %4592 = vmatprep.subr.mxu0 0.0
        %4593 = vmatpush1.msra.mxu0 0.0
        %4594 = vmatprep.subr.mxu0 0.0
        %4595 = vmatpush1.msra.mxu0 0.0
        %4596 = vmatprep.subr.mxu0 0.0
        %4597 = vmatpush1.msra.mxu0 0.0
        %4598 = vmatprep.subr.mxu0 0.0
        %4599 = vmatpush1.msra.mxu0 0.0
        %4600 = vmatprep.subr.mxu0 0.0
        %4601 = vmatpush1.msra.mxu0 0.0
        %4602 = vmatprep.subr.mxu0 0.0
        %4603 = vmatpush1.msra.mxu0 0.0
        %4604 = vmatprep.subr.mxu0 0.0
        %4605 = vmatpush1.msra.mxu0 0.0
        %4606 = vmatprep.subr.mxu0 0.0
        %4607 = vmatpush1.msra.mxu0 0.0
        %4608 = vmatprep.subr.mxu0 0.0
        %4609 = vmatpush1.msra.mxu0 0.0
        %4610 = vmatprep.subr.mxu0 0.0
        %4611 = vmatpush1.msra.mxu0 0.0
        %4612 = vmatprep.subr.mxu0 0.0
        %4613 = vmatpush1.msra.mxu0 0.0
        %4614 = vmatprep.subr.mxu0 0.0
        %4615 = vmatpush1.msra.mxu0 0.0
        %4616 = vmatprep.subr.mxu0 0.0
        %4617 = vmatpush1.msra.mxu0 0.0
        %4618 = vmatprep.subr.mxu0 0.0
        %4619 = vmatpush1.msra.mxu0 0.0
        %4620 = vmatprep.subr.mxu0 0.0
        %4621 = vmatpush1.msra.mxu0 0.0
        %4622 = vmatprep.subr.mxu0 0.0
        %4623 = vmatpush1.msra.mxu0 0.0
        %4624 = vmatprep.subr.mxu0 0.0
        %4625 = vmatpush1.msra.mxu0 0.0
        %4626 = vmatprep.subr.mxu0 0.0
        %4627 = vmatpush1.msra.mxu0 0.0
        %4628 = vmatprep.mubr.f32.mxu0 0.0
        %4629 = vmatmul.mubr.f32.gmra.mrb[0].mxu0 %v4375
        %v4630 = vpop.f32.mrb[0].mxu0
        %v4631 = vadd.f32 %v4357, %v4630
        %v4632 = vpop.f32.mrb[0].mxu0
        %v4633 = vadd.f32 %v4357, %v4632
        %4634 = vmatprep.mubr.f32.mxu0 0.0
        %4635 = vmatmul.mubr.f32.gmra.mrb[0].mxu0 %v4378
        %v4636 = vpop.f32.mrb[0].mxu0
        %v4637 = vadd.f32 %v4362, %v4636
        %v4638 = vpop.f32.mrb[0].mxu0
        %v4639 = vadd.f32 %v4362, %v4638
        %4640 = vmatprep.mubr.f32.mxu0 0.0
        %4641 = vmatmul.mubr.f32.gmra.mrb[0].mxu0 %v4381
        %v4642 = vpop.f32.mrb[0].mxu0
        %v4643 = vadd.f32 %v4367, %v4642
        %v4644 = vpop.f32.mrb[0].mxu0
        %v4645 = vadd.f32 %v4367, %v4644
        %4646 = vmatprep.mubr.f32.mxu0 0.0
        %4647 = vmatmul.mubr.f32.gmra.mrb[0].mxu0 %v4384
        %v4648 = vpop.f32.mrb[0].mxu0
        %v4649 = vadd.f32 %v4372, %v4648
        %v4650 = vpop.f32.mrb[0].mxu0
        %v4651 = vadd.f32 %v4372, %v4650
        %4652 = vdwg.mxu0
        %4653 = vmatprep.subr.mxu0 %v4319
        %4654 = vmatpush1.msra.mxu0 %v4318
        %4655 = vmatprep.subr.mxu0 %v4327
        %4656 = vmatpush1.msra.mxu0 %v4326
        %4657 = vmatprep.subr.mxu0 %v4335
        %4658 = vmatpush1.msra.mxu0 %v4334
        %4659 = vmatprep.subr.mxu0 %v4343
        %4660 = vmatpush1.msra.mxu0 %v4342
        %4661 = vmatprep.subr.mxu0 0.0
        %4662 = vmatpush1.msra.mxu0 0.0
        %4663 = vmatprep.subr.mxu0 0.0
        %4664 = vmatpush1.msra.mxu0 0.0
        %4665 = vmatprep.subr.mxu0 0.0
        %4666 = vmatpush1.msra.mxu0 0.0
        %4667 = vmatprep.subr.mxu0 0.0
        %4668 = vmatpush1.msra.mxu0 0.0
        %4669 = vmatprep.subr.mxu0 0.0
        %4670 = vmatpush1.msra.mxu0 0.0
        %4671 = vmatprep.subr.mxu0 0.0
        %4672 = vmatpush1.msra.mxu0 0.0
        %4673 = vmatprep.subr.mxu0 0.0
        %4674 = vmatpush1.msra.mxu0 0.0
        %4675 = vmatprep.subr.mxu0 0.0
        %4676 = vmatpush1.msra.mxu0 0.0
        %4677 = vmatprep.subr.mxu0 0.0
        %4678 = vmatpush1.msra.mxu0 0.0
        %4679 = vmatprep.subr.mxu0 0.0
        %4680 = vmatpush1.msra.mxu0 0.0
        %4681 = vmatprep.subr.mxu0 0.0
        %4682 = vmatpush1.msra.mxu0 0.0
        %4683 = vmatprep.subr.mxu0 0.0
        %4684 = vmatpush1.msra.mxu0 0.0
        %4685 = vmatprep.subr.mxu0 0.0
        %4686 = vmatpush1.msra.mxu0 0.0
        %4687 = vmatprep.subr.mxu0 0.0
        %4688 = vmatpush1.msra.mxu0 0.0
        %4689 = vmatprep.subr.mxu0 0.0
        %4690 = vmatpush1.msra.mxu0 0.0
        %4691 = vmatprep.subr.mxu0 0.0
        %4692 = vmatpush1.msra.mxu0 0.0
        %4693 = vmatprep.subr.mxu0 0.0
        %4694 = vmatpush1.msra.mxu0 0.0
        %4695 = vmatprep.subr.mxu0 0.0
        %4696 = vmatpush1.msra.mxu0 0.0
        %4697 = vmatprep.subr.mxu0 0.0
        %4698 = vmatpush1.msra.mxu0 0.0
        %4699 = vmatprep.subr.mxu0 0.0
        %4700 = vmatpush1.msra.mxu0 0.0
        %4701 = vmatprep.subr.mxu0 0.0
        %4702 = vmatpush1.msra.mxu0 0.0
        %4703 = vmatprep.subr.mxu0 0.0
        %4704 = vmatpush1.msra.mxu0 0.0
        %4705 = vmatprep.subr.mxu0 0.0
        %4706 = vmatpush1.msra.mxu0 0.0
        %4707 = vmatprep.subr.mxu0 0.0
        %4708 = vmatpush1.msra.mxu0 0.0
        %4709 = vmatprep.subr.mxu0 0.0
        %4710 = vmatpush1.msra.mxu0 0.0
        %4711 = vmatprep.subr.mxu0 0.0
        %4712 = vmatpush1.msra.mxu0 0.0
        %4713 = vmatprep.subr.mxu0 0.0
        %4714 = vmatpush1.msra.mxu0 0.0
        %4715 = vmatprep.subr.mxu0 0.0
        %4716 = vmatpush1.msra.mxu0 0.0
        %4717 = vmatprep.mubr.f32.mxu0 0.0
        %4718 = vmatmul.mubr.f32.gmra.mrb[0].mxu0 %v4375
        %v4719 = vpop.f32.mrb[0].mxu0
        %v4720 = vadd.f32 %v4357, %v4719
        %v4721 = vpop.f32.mrb[0].mxu0
        %v4722 = vadd.f32 %v4357, %v4721
        %4723 = vmatprep.mubr.f32.mxu0 0.0
        %4724 = vmatmul.mubr.f32.gmra.mrb[0].mxu0 %v4378
        %v4725 = vpop.f32.mrb[0].mxu0
        %v4726 = vadd.f32 %v4362, %v4725
        %v4727 = vpop.f32.mrb[0].mxu0
        %v4728 = vadd.f32 %v4362, %v4727
        %4729 = vmatprep.mubr.f32.mxu0 0.0
        %4730 = vmatmul.mubr.f32.gmra.mrb[0].mxu0 %v4381
        %v4731 = vpop.f32.mrb[0].mxu0
        %v4732 = vadd.f32 %v4367, %v4731
        %v4733 = vpop.f32.mrb[0].mxu0
        %v4734 = vadd.f32 %v4367, %v4733
        %4735 = vmatprep.mubr.f32.mxu0 0.0
        %4736 = vmatmul.mubr.f32.gmra.mrb[0].mxu0 %v4384
        %v4737 = vpop.f32.mrb[0].mxu0
        %v4738 = vadd.f32 %v4372, %v4737
        %v4739 = vpop.f32.mrb[0].mxu0
        %v4740 = vadd.f32 %v4372, %v4739
        %4741 = vdwg.mxu0
        %v4742 = vmul.f32 %v4453, 100.0
        %v4743 = vmul.f32 %v4455, 100.0
        %v4744 = vmul.f32 %v4542, 100.0
        %v4745 = vmul.f32 %v4544, 100.0
        %v4746 = vmul.f32 %v4631, 100.0
        %v4747 = vmul.f32 %v4633, 100.0
        %v4748 = vmul.f32 %v4720, 100.0
        %v4749 = vmul.f32 %v4722, 100.0
        %v4750 = vmul.f32 %v4459, 100.0
        %v4751 = vmul.f32 %v4461, 100.0
        %v4752 = vmul.f32 %v4548, 100.0
        %v4753 = vmul.f32 %v4550, 100.0
        %v4754 = vmul.f32 %v4637, 100.0
        %v4755 = vmul.f32 %v4639, 100.0
        %v4756 = vmul.f32 %v4726, 100.0
        %v4757 = vmul.f32 %v4728, 100.0
        %v4758 = vmul.f32 %v4465, 100.0
        %v4759 = vmul.f32 %v4467, 100.0
        %v4760 = vmul.f32 %v4554, 100.0
        %v4761 = vmul.f32 %v4556, 100.0
        %v4762 = vmul.f32 %v4643, 100.0
        %v4763 = vmul.f32 %v4645, 100.0
        %v4764 = vmul.f32 %v4732, 100.0
        %v4765 = vmul.f32 %v4734, 100.0
        %v4766 = vmul.f32 %v4471, 100.0
        %v4767 = vmul.f32 %v4473, 100.0
        %v4768 = vmul.f32 %v4560, 100.0
        %v4769 = vmul.f32 %v4562, 100.0
        %v4770 = vmul.f32 %v4649, 100.0
        %v4771 = vmul.f32 %v4651, 100.0
        %v4772 = vmul.f32 %v4738, 100.0
        %v4773 = vmul.f32 %v4740, 100.0
        %vm4774 = vcmp.gt.f32.partialorder %v4742, 20.0
        %vm4775 = vcmp.gt.f32.partialorder %v4743, 20.0
        %vm4776 = vcmp.gt.f32.partialorder %v4744, 20.0
        %vm4777 = vcmp.gt.f32.partialorder %v4745, 20.0
        %vm4778 = vcmp.gt.f32.partialorder %v4746, 20.0
        %vm4779 = vcmp.gt.f32.partialorder %v4747, 20.0
        %vm4780 = vcmp.gt.f32.partialorder %v4748, 20.0
        %vm4781 = vcmp.gt.f32.partialorder %v4749, 20.0
        %vm4782 = vcmp.gt.f32.partialorder %v4750, 20.0
        %vm4783 = vcmp.gt.f32.partialorder %v4751, 20.0
        %vm4784 = vcmp.gt.f32.partialorder %v4752, 20.0
        %vm4785 = vcmp.gt.f32.partialorder %v4753, 20.0
        %vm4786 = vcmp.gt.f32.partialorder %v4754, 20.0
        %vm4787 = vcmp.gt.f32.partialorder %v4755, 20.0
        %vm4788 = vcmp.gt.f32.partialorder %v4756, 20.0
        %vm4789 = vcmp.gt.f32.partialorder %v4757, 20.0
        %vm4790 = vcmp.gt.f32.partialorder %v4758, 20.0
        %vm4791 = vcmp.gt.f32.partialorder %v4759, 20.0
        %vm4792 = vcmp.gt.f32.partialorder %v4760, 20.0
        %vm4793 = vcmp.gt.f32.partialorder %v4761, 20.0
        %vm4794 = vcmp.gt.f32.partialorder %v4762, 20.0
        %vm4795 = vcmp.gt.f32.partialorder %v4763, 20.0
        %vm4796 = vcmp.gt.f32.partialorder %v4764, 20.0
        %vm4797 = vcmp.gt.f32.partialorder %v4765, 20.0
        %vm4798 = vcmp.gt.f32.partialorder %v4766, 20.0
        %vm4799 = vcmp.gt.f32.partialorder %v4767, 20.0
        %vm4800 = vcmp.gt.f32.partialorder %v4768, 20.0
        %vm4801 = vcmp.gt.f32.partialorder %v4769, 20.0
        %vm4802 = vcmp.gt.f32.partialorder %v4770, 20.0
        %vm4803 = vcmp.gt.f32.partialorder %v4771, 20.0
        %vm4804 = vcmp.gt.f32.partialorder %v4772, 20.0
        %vm4805 = vcmp.gt.f32.partialorder %v4773, 20.0
        %v4806 = vmin.f32 %v4742, 20.0
        %v4807 = vmin.f32 %v4743, 20.0
        %v4808 = vmin.f32 %v4744, 20.0
        %v4809 = vmin.f32 %v4745, 20.0
        %v4810 = vmin.f32 %v4746, 20.0
        %v4811 = vmin.f32 %v4747, 20.0
        %v4812 = vmin.f32 %v4748, 20.0
        %v4813 = vmin.f32 %v4749, 20.0
        %v4814 = vmin.f32 %v4750, 20.0
        %v4815 = vmin.f32 %v4751, 20.0
        %v4816 = vmin.f32 %v4752, 20.0
        %v4817 = vmin.f32 %v4753, 20.0
        %v4818 = vmin.f32 %v4754, 20.0
        %v4819 = vmin.f32 %v4755, 20.0
        %v4820 = vmin.f32 %v4756, 20.0
        %v4821 = vmin.f32 %v4757, 20.0
        %v4822 = vmin.f32 %v4758, 20.0
        %v4823 = vmin.f32 %v4759, 20.0
        %v4824 = vmin.f32 %v4760, 20.0
        %v4825 = vmin.f32 %v4761, 20.0
        %v4826 = vmin.f32 %v4762, 20.0
        %v4827 = vmin.f32 %v4763, 20.0
        %v4828 = vmin.f32 %v4764, 20.0
        %v4829 = vmin.f32 %v4765, 20.0
        %v4830 = vmin.f32 %v4766, 20.0
        %v4831 = vmin.f32 %v4767, 20.0
        %v4832 = vmin.f32 %v4768, 20.0
        %v4833 = vmin.f32 %v4769, 20.0
        %v4834 = vmin.f32 %v4770, 20.0
        %v4835 = vmin.f32 %v4771, 20.0
        %v4836 = vmin.f32 %v4772, 20.0
        %v4837 = vmin.f32 %v4773, 20.0
        %v4838 = vmul.f32 %v4806, 1.442695
        %v4839 = vpow.pop %v4838
        %v4840 = vmul.f32 %v4807, 1.442695
        %v4841 = vpow.pop %v4840
        %v4842 = vmul.f32 %v4808, 1.442695
        %v4843 = vpow.pop %v4842
        %v4844 = vmul.f32 %v4809, 1.442695
        %v4845 = vpow.pop %v4844
        %v4846 = vmul.f32 %v4810, 1.442695
        %v4847 = vpow.pop %v4846
        %v4848 = vmul.f32 %v4811, 1.442695
        %v4849 = vpow.pop %v4848
        %v4850 = vmul.f32 %v4812, 1.442695
        %v4851 = vpow.pop %v4850
        %v4852 = vmul.f32 %v4813, 1.442695
        %v4853 = vpow.pop %v4852
        %v4854 = vmul.f32 %v4814, 1.442695
        %v4855 = vpow.pop %v4854
        %v4856 = vmul.f32 %v4815, 1.442695
        %v4857 = vpow.pop %v4856
        %v4858 = vmul.f32 %v4816, 1.442695
        %v4859 = vpow.pop %v4858
        %v4860 = vmul.f32 %v4817, 1.442695
        %v4861 = vpow.pop %v4860
        %v4862 = vmul.f32 %v4818, 1.442695
        %v4863 = vpow.pop %v4862
        %v4864 = vmul.f32 %v4819, 1.442695
        %v4865 = vpow.pop %v4864
        %v4866 = vmul.f32 %v4820, 1.442695
        %v4867 = vpow.pop %v4866
        %v4868 = vmul.f32 %v4821, 1.442695
        %v4869 = vpow.pop %v4868
        %v4870 = vmul.f32 %v4822, 1.442695
        %v4871 = vpow.pop %v4870
        %v4872 = vmul.f32 %v4823, 1.442695
        %v4873 = vpow.pop %v4872
        %v4874 = vmul.f32 %v4824, 1.442695
        %v4875 = vpow.pop %v4874
        %v4876 = vmul.f32 %v4825, 1.442695
        %v4877 = vpow.pop %v4876
        %v4878 = vmul.f32 %v4826, 1.442695
        %v4879 = vpow.pop %v4878
        %v4880 = vmul.f32 %v4827, 1.442695
        %v4881 = vpow.pop %v4880
        %v4882 = vmul.f32 %v4828, 1.442695
        %v4883 = vpow.pop %v4882
        %v4884 = vmul.f32 %v4829, 1.442695
        %v4885 = vpow.pop %v4884
        %v4886 = vmul.f32 %v4830, 1.442695
        %v4887 = vpow.pop %v4886
        %v4888 = vmul.f32 %v4831, 1.442695
        %v4889 = vpow.pop %v4888
        %v4890 = vmul.f32 %v4832, 1.442695
        %v4891 = vpow.pop %v4890
        %v4892 = vmul.f32 %v4833, 1.442695
        %v4893 = vpow.pop %v4892
        %v4894 = vmul.f32 %v4834, 1.442695
        %v4895 = vpow.pop %v4894
        %v4896 = vmul.f32 %v4835, 1.442695
        %v4897 = vpow.pop %v4896
        %v4898 = vmul.f32 %v4836, 1.442695
        %v4899 = vpow.pop %v4898
        %v4900 = vmul.f32 %v4837, 1.442695
        %v4901 = vpow.pop %v4900
        %v4902 = vadd.f32 %v4839, 1.0
        %v4903 = vadd.f32 %v4841, 1.0
        %v4904 = vadd.f32 %v4843, 1.0
        %v4905 = vadd.f32 %v4845, 1.0
        %v4906 = vadd.f32 %v4847, 1.0
        %v4907 = vadd.f32 %v4849, 1.0
        %v4908 = vadd.f32 %v4851, 1.0
        %v4909 = vadd.f32 %v4853, 1.0
        %v4910 = vadd.f32 %v4855, 1.0
        %v4911 = vadd.f32 %v4857, 1.0
        %v4912 = vadd.f32 %v4859, 1.0
        %v4913 = vadd.f32 %v4861, 1.0
        %v4914 = vadd.f32 %v4863, 1.0
        %v4915 = vadd.f32 %v4865, 1.0
        %v4916 = vadd.f32 %v4867, 1.0
        %v4917 = vadd.f32 %v4869, 1.0
        %v4918 = vadd.f32 %v4871, 1.0
        %v4919 = vadd.f32 %v4873, 1.0
        %v4920 = vadd.f32 %v4875, 1.0
        %v4921 = vadd.f32 %v4877, 1.0
        %v4922 = vadd.f32 %v4879, 1.0
        %v4923 = vadd.f32 %v4881, 1.0
        %v4924 = vadd.f32 %v4883, 1.0
        %v4925 = vadd.f32 %v4885, 1.0
        %v4926 = vadd.f32 %v4887, 1.0
        %v4927 = vadd.f32 %v4889, 1.0
        %v4928 = vadd.f32 %v4891, 1.0
        %v4929 = vadd.f32 %v4893, 1.0
        %v4930 = vadd.f32 %v4895, 1.0
        %v4931 = vadd.f32 %v4897, 1.0
        %v4932 = vadd.f32 %v4899, 1.0
        %v4933 = vadd.f32 %v4901, 1.0
        %v4934 = vlog2.pop %v4902
        %v4935 = vmul.f32 %v4934, 0.6931472
        %v4936 = vlog2.pop %v4903
        %v4937 = vmul.f32 %v4936, 0.6931472
        %v4938 = vlog2.pop %v4904
        %v4939 = vmul.f32 %v4938, 0.6931472
        %v4940 = vlog2.pop %v4905
        %v4941 = vmul.f32 %v4940, 0.6931472
        %v4942 = vlog2.pop %v4906
        %v4943 = vmul.f32 %v4942, 0.6931472
        %v4944 = vlog2.pop %v4907
        %v4945 = vmul.f32 %v4944, 0.6931472
        %v4946 = vlog2.pop %v4908
        %v4947 = vmul.f32 %v4946, 0.6931472
        %v4948 = vlog2.pop %v4909
        %v4949 = vmul.f32 %v4948, 0.6931472
        %v4950 = vlog2.pop %v4910
        %v4951 = vmul.f32 %v4950, 0.6931472
        %v4952 = vlog2.pop %v4911
        %v4953 = vmul.f32 %v4952, 0.6931472
        %v4954 = vlog2.pop %v4912
        %v4955 = vmul.f32 %v4954, 0.6931472
        %v4956 = vlog2.pop %v4913
        %v4957 = vmul.f32 %v4956, 0.6931472
        %v4958 = vlog2.pop %v4914
        %v4959 = vmul.f32 %v4958, 0.6931472
        %v4960 = vlog2.pop %v4915
        %v4961 = vmul.f32 %v4960, 0.6931472
        %v4962 = vlog2.pop %v4916
        %v4963 = vmul.f32 %v4962, 0.6931472
        %v4964 = vlog2.pop %v4917
        %v4965 = vmul.f32 %v4964, 0.6931472
        %v4966 = vlog2.pop %v4918
        %v4967 = vmul.f32 %v4966, 0.6931472
        %v4968 = vlog2.pop %v4919
        %v4969 = vmul.f32 %v4968, 0.6931472
        %v4970 = vlog2.pop %v4920
        %v4971 = vmul.f32 %v4970, 0.6931472
        %v4972 = vlog2.pop %v4921
        %v4973 = vmul.f32 %v4972, 0.6931472
        %v4974 = vlog2.pop %v4922
        %v4975 = vmul.f32 %v4974, 0.6931472
        %v4976 = vlog2.pop %v4923
        %v4977 = vmul.f32 %v4976, 0.6931472
        %v4978 = vlog2.pop %v4924
        %v4979 = vmul.f32 %v4978, 0.6931472
        %v4980 = vlog2.pop %v4925
        %v4981 = vmul.f32 %v4980, 0.6931472
        %v4982 = vlog2.pop %v4926
        %v4983 = vmul.f32 %v4982, 0.6931472
        %v4984 = vlog2.pop %v4927
        %v4985 = vmul.f32 %v4984, 0.6931472
        %v4986 = vlog2.pop %v4928
        %v4987 = vmul.f32 %v4986, 0.6931472
        %v4988 = vlog2.pop %v4929
        %v4989 = vmul.f32 %v4988, 0.6931472
        %v4990 = vlog2.pop %v4930
        %v4991 = vmul.f32 %v4990, 0.6931472
        %v4992 = vlog2.pop %v4931
        %v4993 = vmul.f32 %v4992, 0.6931472
        %v4994 = vlog2.pop %v4932
        %v4995 = vmul.f32 %v4994, 0.6931472
        %v4996 = vlog2.pop %v4933
        %v4997 = vmul.f32 %v4996, 0.6931472
        %v4998 = vmul.f32 %v4935, %v1008
        %v4999 = vmul.f32 %v4937, %v1008
        %v5000 = vmul.f32 %v4939, %v1008
        %v5001 = vmul.f32 %v4941, %v1008
        %v5002 = vmul.f32 %v4943, %v1008
        %v5003 = vmul.f32 %v4945, %v1008
        %v5004 = vmul.f32 %v4947, %v1008
        %v5005 = vmul.f32 %v4949, %v1008
        %v5006 = vmul.f32 %v4951, %v1008
        %v5007 = vmul.f32 %v4953, %v1008
        %v5008 = vmul.f32 %v4955, %v1008
        %v5009 = vmul.f32 %v4957, %v1008
        %v5010 = vmul.f32 %v4959, %v1008
        %v5011 = vmul.f32 %v4961, %v1008
        %v5012 = vmul.f32 %v4963, %v1008
        %v5013 = vmul.f32 %v4965, %v1008
        %v5014 = vmul.f32 %v4967, %v1008
        %v5015 = vmul.f32 %v4969, %v1008
        %v5016 = vmul.f32 %v4971, %v1008
        %v5017 = vmul.f32 %v4973, %v1008
        %v5018 = vmul.f32 %v4975, %v1008
        %v5019 = vmul.f32 %v4977, %v1008
        %v5020 = vmul.f32 %v4979, %v1008
        %v5021 = vmul.f32 %v4981, %v1008
        %v5022 = vmul.f32 %v4983, %v1008
        %v5023 = vmul.f32 %v4985, %v1008
        %v5024 = vmul.f32 %v4987, %v1008
        %v5025 = vmul.f32 %v4989, %v1008
        %v5026 = vmul.f32 %v4991, %v1008
        %v5027 = vmul.f32 %v4993, %v1008
        %v5028 = vmul.f32 %v4995, %v1008
        %v5029 = vmul.f32 %v4997, %v1008
        %v5030 = vsel %vm4774, %v4453, %v4998
        %v5031 = vsel %vm4775, %v4455, %v4999
        %v5032 = vsel %vm4776, %v4542, %v5000
        %v5033 = vsel %vm4777, %v4544, %v5001
        %v5034 = vsel %vm4778, %v4631, %v5002
        %v5035 = vsel %vm4779, %v4633, %v5003
        %v5036 = vsel %vm4780, %v4720, %v5004
        %v5037 = vsel %vm4781, %v4722, %v5005
        %v5038 = vsel %vm4782, %v4459, %v5006
        %v5039 = vsel %vm4783, %v4461, %v5007
        %v5040 = vsel %vm4784, %v4548, %v5008
        %v5041 = vsel %vm4785, %v4550, %v5009
        %v5042 = vsel %vm4786, %v4637, %v5010
        %v5043 = vsel %vm4787, %v4639, %v5011
        %v5044 = vsel %vm4788, %v4726, %v5012
        %v5045 = vsel %vm4789, %v4728, %v5013
        %v5046 = vsel %vm4790, %v4465, %v5014
        %v5047 = vsel %vm4791, %v4467, %v5015
        %v5048 = vsel %vm4792, %v4554, %v5016
        %v5049 = vsel %vm4793, %v4556, %v5017
        %v5050 = vsel %vm4794, %v4643, %v5018
        %v5051 = vsel %vm4795, %v4645, %v5019
        %v5052 = vsel %vm4796, %v4732, %v5020
        %v5053 = vsel %vm4797, %v4734, %v5021
        %v5054 = vsel %vm4798, %v4471, %v5022
        %v5055 = vsel %vm4799, %v4473, %v5023
        %v5056 = vsel %vm4800, %v4560, %v5024
        %v5057 = vsel %vm4801, %v4562, %v5025
        %v5058 = vsel %vm4802, %v4649, %v5026
        %v5059 = vsel %vm4803, %v4651, %v5027
        %v5060 = vsel %vm4804, %v4738, %v5028
        %v5061 = vsel %vm4805, %v4740, %v5029
        %s5062 = scalar_lea.vmem [#allocation2], 160
        %v5063 = vld [vmem:[%s5062] sm:$0xff]
        %v5064 = vld [vmem:[%s5062 + $0x8] sm:$0xff]
        %v5065 = vld [vmem:[%s5062 + $0x10] sm:$0xff]
        %v5066 = vld [vmem:[%s5062 + $0x18] sm:$0xff]
        %s5067 = scalar_lea.vmem %s4, 160
        %v5068 = vld [vmem:[%s5067] sm:$0xff]
        %v5069 = vld [vmem:[%s5067 + $0x8] sm:$0xff]
        %v5070 = vld [vmem:[%s5067 + $0x10] sm:$0xff]
        %v5071 = vld [vmem:[%s5067 + $0x18] sm:$0xff]
        %5073 = vset.pattern.permute.xlu0 0
        %5074 = vperm.xlu0 %5073, %v5068
        %v5075 = vpop.permute.xlu0 %5074
        %5078 = vset.pattern.permute.xlu0 0
        %5079 = vperm.xlu0 %5078, %v5069
        %v5080 = vpop.permute.xlu0 %5079
        %5083 = vset.pattern.permute.xlu0 0
        %5084 = vperm.xlu0 %5083, %v5070
        %v5085 = vpop.permute.xlu0 %5084
        %5088 = vset.pattern.permute.xlu0 0
        %5089 = vperm.xlu0 %5088, %v5071
        %v5090 = vpop.permute.xlu0 %5089
        %v5093 = vsel %vm1101, %v5063, 0
        %v5096 = vsel %vm1101, %v5064, 0
        %v5099 = vsel %vm1101, %v5065, 0
        %v5102 = vsel %vm1101, %v5066, 0
        %5104 = vmatprep.subr.mxu0 %v5031
        %5105 = vmatpush1.msra.mxu0 %v5030
        %5106 = vmatprep.subr.mxu0 %v5039
        %5107 = vmatpush1.msra.mxu0 %v5038
        %5108 = vmatprep.subr.mxu0 %v5047
        %5109 = vmatpush1.msra.mxu0 %v5046
        %5110 = vmatprep.subr.mxu0 %v5055
        %5111 = vmatpush1.msra.mxu0 %v5054
        %5112 = vmatprep.subr.mxu0 0.0
        %5113 = vmatpush1.msra.mxu0 0.0
        %5114 = vmatprep.subr.mxu0 0.0
        %5115 = vmatpush1.msra.mxu0 0.0
        %5116 = vmatprep.subr.mxu0 0.0
        %5117 = vmatpush1.msra.mxu0 0.0
        %5118 = vmatprep.subr.mxu0 0.0
        %5119 = vmatpush1.msra.mxu0 0.0
        %5120 = vmatprep.subr.mxu0 0.0
        %5121 = vmatpush1.msra.mxu0 0.0
        %5122 = vmatprep.subr.mxu0 0.0
        %5123 = vmatpush1.msra.mxu0 0.0
        %5124 = vmatprep.subr.mxu0 0.0
        %5125 = vmatpush1.msra.mxu0 0.0
        %5126 = vmatprep.subr.mxu0 0.0
        %5127 = vmatpush1.msra.mxu0 0.0
        %5128 = vmatprep.subr.mxu0 0.0
        %5129 = vmatpush1.msra.mxu0 0.0
        %5130 = vmatprep.subr.mxu0 0.0
        %5131 = vmatpush1.msra.mxu0 0.0
        %5132 = vmatprep.subr.mxu0 0.0
        %5133 = vmatpush1.msra.mxu0 0.0
        %5134 = vmatprep.subr.mxu0 0.0
        %5135 = vmatpush1.msra.mxu0 0.0
        %5136 = vmatprep.subr.mxu0 0.0
        %5137 = vmatpush1.msra.mxu0 0.0
        %5138 = vmatprep.subr.mxu0 0.0
        %5139 = vmatpush1.msra.mxu0 0.0
        %5140 = vmatprep.subr.mxu0 0.0
        %5141 = vmatpush1.msra.mxu0 0.0
        %5142 = vmatprep.subr.mxu0 0.0
        %5143 = vmatpush1.msra.mxu0 0.0
        %5144 = vmatprep.subr.mxu0 0.0
        %5145 = vmatpush1.msra.mxu0 0.0
        %5146 = vmatprep.subr.mxu0 0.0
        %5147 = vmatpush1.msra.mxu0 0.0
        %5148 = vmatprep.subr.mxu0 0.0
        %5149 = vmatpush1.msra.mxu0 0.0
        %5150 = vmatprep.subr.mxu0 0.0
        %5151 = vmatpush1.msra.mxu0 0.0
        %5152 = vmatprep.subr.mxu0 0.0
        %5153 = vmatpush1.msra.mxu0 0.0
        %5154 = vmatprep.subr.mxu0 0.0
        %5155 = vmatpush1.msra.mxu0 0.0
        %5156 = vmatprep.subr.mxu0 0.0
        %5157 = vmatpush1.msra.mxu0 0.0
        %5158 = vmatprep.subr.mxu0 0.0
        %5159 = vmatpush1.msra.mxu0 0.0
        %5160 = vmatprep.subr.mxu0 0.0
        %5161 = vmatpush1.msra.mxu0 0.0
        %5162 = vmatprep.subr.mxu0 0.0
        %5163 = vmatpush1.msra.mxu0 0.0
        %5164 = vmatprep.subr.mxu0 0.0
        %5165 = vmatpush1.msra.mxu0 0.0
        %5166 = vmatprep.subr.mxu0 0.0
        %5167 = vmatpush1.msra.mxu0 0.0
        %5168 = vmatprep.mubr.f32.mxu0 0.0
        %5169 = vmatmul.mubr.f32.gmra.mrb[0].mxu0 %v5093
        %v5170 = vpop.f32.mrb[0].mxu0
        %v5171 = vadd.f32 %v5075, %v5170
        %v5172 = vpop.f32.mrb[0].mxu0
        %v5173 = vadd.f32 %v5075, %v5172
        %5174 = vmatprep.mubr.f32.mxu0 0.0
        %5175 = vmatmul.mubr.f32.gmra.mrb[0].mxu0 %v5096
        %v5176 = vpop.f32.mrb[0].mxu0
        %v5177 = vadd.f32 %v5080, %v5176
        %v5178 = vpop.f32.mrb[0].mxu0
        %v5179 = vadd.f32 %v5080, %v5178
        %5180 = vmatprep.mubr.f32.mxu0 0.0
        %5181 = vmatmul.mubr.f32.gmra.mrb[0].mxu0 %v5099
        %v5182 = vpop.f32.mrb[0].mxu0
        %v5183 = vadd.f32 %v5085, %v5182
        %v5184 = vpop.f32.mrb[0].mxu0
        %v5185 = vadd.f32 %v5085, %v5184
        %5186 = vmatprep.mubr.f32.mxu0 0.0
        %5187 = vmatmul.mubr.f32.gmra.mrb[0].mxu0 %v5102
        %v5188 = vpop.f32.mrb[0].mxu0
        %v5189 = vadd.f32 %v5090, %v5188
        %v5190 = vpop.f32.mrb[0].mxu0
        %v5191 = vadd.f32 %v5090, %v5190
        %5192 = vdwg.mxu0
        %5193 = vmatprep.subr.mxu0 %v5033
        %5194 = vmatpush1.msra.mxu0 %v5032
        %5195 = vmatprep.subr.mxu0 %v5041
        %5196 = vmatpush1.msra.mxu0 %v5040
        %5197 = vmatprep.subr.mxu0 %v5049
        %5198 = vmatpush1.msra.mxu0 %v5048
        %5199 = vmatprep.subr.mxu0 %v5057
        %5200 = vmatpush1.msra.mxu0 %v5056
        %5201 = vmatprep.subr.mxu0 0.0
        %5202 = vmatpush1.msra.mxu0 0.0
        %5203 = vmatprep.subr.mxu0 0.0
        %5204 = vmatpush1.msra.mxu0 0.0
        %5205 = vmatprep.subr.mxu0 0.0
        %5206 = vmatpush1.msra.mxu0 0.0
        %5207 = vmatprep.subr.mxu0 0.0
        %5208 = vmatpush1.msra.mxu0 0.0
        %5209 = vmatprep.subr.mxu0 0.0
        %5210 = vmatpush1.msra.mxu0 0.0
        %5211 = vmatprep.subr.mxu0 0.0
        %5212 = vmatpush1.msra.mxu0 0.0
        %5213 = vmatprep.subr.mxu0 0.0
        %5214 = vmatpush1.msra.mxu0 0.0
        %5215 = vmatprep.subr.mxu0 0.0
        %5216 = vmatpush1.msra.mxu0 0.0
        %5217 = vmatprep.subr.mxu0 0.0
        %5218 = vmatpush1.msra.mxu0 0.0
        %5219 = vmatprep.subr.mxu0 0.0
        %5220 = vmatpush1.msra.mxu0 0.0
        %5221 = vmatprep.subr.mxu0 0.0
        %5222 = vmatpush1.msra.mxu0 0.0
        %5223 = vmatprep.subr.mxu0 0.0
        %5224 = vmatpush1.msra.mxu0 0.0
        %5225 = vmatprep.subr.mxu0 0.0
        %5226 = vmatpush1.msra.mxu0 0.0
        %5227 = vmatprep.subr.mxu0 0.0
        %5228 = vmatpush1.msra.mxu0 0.0
        %5229 = vmatprep.subr.mxu0 0.0
        %5230 = vmatpush1.msra.mxu0 0.0
        %5231 = vmatprep.subr.mxu0 0.0
        %5232 = vmatpush1.msra.mxu0 0.0
        %5233 = vmatprep.subr.mxu0 0.0
        %5234 = vmatpush1.msra.mxu0 0.0
        %5235 = vmatprep.subr.mxu0 0.0
        %5236 = vmatpush1.msra.mxu0 0.0
        %5237 = vmatprep.subr.mxu0 0.0
        %5238 = vmatpush1.msra.mxu0 0.0
        %5239 = vmatprep.subr.mxu0 0.0
        %5240 = vmatpush1.msra.mxu0 0.0
        %5241 = vmatprep.subr.mxu0 0.0
        %5242 = vmatpush1.msra.mxu0 0.0
        %5243 = vmatprep.subr.mxu0 0.0
        %5244 = vmatpush1.msra.mxu0 0.0
        %5245 = vmatprep.subr.mxu0 0.0
        %5246 = vmatpush1.msra.mxu0 0.0
        %5247 = vmatprep.subr.mxu0 0.0
        %5248 = vmatpush1.msra.mxu0 0.0
        %5249 = vmatprep.subr.mxu0 0.0
        %5250 = vmatpush1.msra.mxu0 0.0
        %5251 = vmatprep.subr.mxu0 0.0
        %5252 = vmatpush1.msra.mxu0 0.0
        %5253 = vmatprep.subr.mxu0 0.0
        %5254 = vmatpush1.msra.mxu0 0.0
        %5255 = vmatprep.subr.mxu0 0.0
        %5256 = vmatpush1.msra.mxu0 0.0
        %5257 = vmatprep.mubr.f32.mxu0 0.0
        %5258 = vmatmul.mubr.f32.gmra.mrb[0].mxu0 %v5093
        %v5259 = vpop.f32.mrb[0].mxu0
        %v5260 = vadd.f32 %v5075, %v5259
        %v5261 = vpop.f32.mrb[0].mxu0
        %v5262 = vadd.f32 %v5075, %v5261
        %5263 = vmatprep.mubr.f32.mxu0 0.0
        %5264 = vmatmul.mubr.f32.gmra.mrb[0].mxu0 %v5096
        %v5265 = vpop.f32.mrb[0].mxu0
        %v5266 = vadd.f32 %v5080, %v5265
        %v5267 = vpop.f32.mrb[0].mxu0
        %v5268 = vadd.f32 %v5080, %v5267
        %5269 = vmatprep.mubr.f32.mxu0 0.0
        %5270 = vmatmul.mubr.f32.gmra.mrb[0].mxu0 %v5099
        %v5271 = vpop.f32.mrb[0].mxu0
        %v5272 = vadd.f32 %v5085, %v5271
        %v5273 = vpop.f32.mrb[0].mxu0
        %v5274 = vadd.f32 %v5085, %v5273
        %5275 = vmatprep.mubr.f32.mxu0 0.0
        %5276 = vmatmul.mubr.f32.gmra.mrb[0].mxu0 %v5102
        %v5277 = vpop.f32.mrb[0].mxu0
        %v5278 = vadd.f32 %v5090, %v5277
        %v5279 = vpop.f32.mrb[0].mxu0
        %v5280 = vadd.f32 %v5090, %v5279
        %5281 = vdwg.mxu0
        %5282 = vmatprep.subr.mxu0 %v5035
        %5283 = vmatpush1.msra.mxu0 %v5034
        %5284 = vmatprep.subr.mxu0 %v5043
        %5285 = vmatpush1.msra.mxu0 %v5042
        %5286 = vmatprep.subr.mxu0 %v5051
        %5287 = vmatpush1.msra.mxu0 %v5050
        %5288 = vmatprep.subr.mxu0 %v5059
        %5289 = vmatpush1.msra.mxu0 %v5058
        %5290 = vmatprep.subr.mxu0 0.0
        %5291 = vmatpush1.msra.mxu0 0.0
        %5292 = vmatprep.subr.mxu0 0.0
        %5293 = vmatpush1.msra.mxu0 0.0
        %5294 = vmatprep.subr.mxu0 0.0
        %5295 = vmatpush1.msra.mxu0 0.0
        %5296 = vmatprep.subr.mxu0 0.0
        %5297 = vmatpush1.msra.mxu0 0.0
        %5298 = vmatprep.subr.mxu0 0.0
        %5299 = vmatpush1.msra.mxu0 0.0
        %5300 = vmatprep.subr.mxu0 0.0
        %5301 = vmatpush1.msra.mxu0 0.0
        %5302 = vmatprep.subr.mxu0 0.0
        %5303 = vmatpush1.msra.mxu0 0.0
        %5304 = vmatprep.subr.mxu0 0.0
        %5305 = vmatpush1.msra.mxu0 0.0
        %5306 = vmatprep.subr.mxu0 0.0
        %5307 = vmatpush1.msra.mxu0 0.0
        %5308 = vmatprep.subr.mxu0 0.0
        %5309 = vmatpush1.msra.mxu0 0.0
        %5310 = vmatprep.subr.mxu0 0.0
        %5311 = vmatpush1.msra.mxu0 0.0
        %5312 = vmatprep.subr.mxu0 0.0
        %5313 = vmatpush1.msra.mxu0 0.0
        %5314 = vmatprep.subr.mxu0 0.0
        %5315 = vmatpush1.msra.mxu0 0.0
        %5316 = vmatprep.subr.mxu0 0.0
        %5317 = vmatpush1.msra.mxu0 0.0
        %5318 = vmatprep.subr.mxu0 0.0
        %5319 = vmatpush1.msra.mxu0 0.0
        %5320 = vmatprep.subr.mxu0 0.0
        %5321 = vmatpush1.msra.mxu0 0.0
        %5322 = vmatprep.subr.mxu0 0.0
        %5323 = vmatpush1.msra.mxu0 0.0
        %5324 = vmatprep.subr.mxu0 0.0
        %5325 = vmatpush1.msra.mxu0 0.0
        %5326 = vmatprep.subr.mxu0 0.0
        %5327 = vmatpush1.msra.mxu0 0.0
        %5328 = vmatprep.subr.mxu0 0.0
        %5329 = vmatpush1.msra.mxu0 0.0
        %5330 = vmatprep.subr.mxu0 0.0
        %5331 = vmatpush1.msra.mxu0 0.0
        %5332 = vmatprep.subr.mxu0 0.0
        %5333 = vmatpush1.msra.mxu0 0.0
        %5334 = vmatprep.subr.mxu0 0.0
        %5335 = vmatpush1.msra.mxu0 0.0
        %5336 = vmatprep.subr.mxu0 0.0
        %5337 = vmatpush1.msra.mxu0 0.0
        %5338 = vmatprep.subr.mxu0 0.0
        %5339 = vmatpush1.msra.mxu0 0.0
        %5340 = vmatprep.subr.mxu0 0.0
        %5341 = vmatpush1.msra.mxu0 0.0
        %5342 = vmatprep.subr.mxu0 0.0
        %5343 = vmatpush1.msra.mxu0 0.0
        %5344 = vmatprep.subr.mxu0 0.0
        %5345 = vmatpush1.msra.mxu0 0.0
        %5346 = vmatprep.mubr.f32.mxu0 0.0
        %5347 = vmatmul.mubr.f32.gmra.mrb[0].mxu0 %v5093
        %v5348 = vpop.f32.mrb[0].mxu0
        %v5349 = vadd.f32 %v5075, %v5348
        %v5350 = vpop.f32.mrb[0].mxu0
        %v5351 = vadd.f32 %v5075, %v5350
        %5352 = vmatprep.mubr.f32.mxu0 0.0
        %5353 = vmatmul.mubr.f32.gmra.mrb[0].mxu0 %v5096
        %v5354 = vpop.f32.mrb[0].mxu0
        %v5355 = vadd.f32 %v5080, %v5354
        %v5356 = vpop.f32.mrb[0].mxu0
        %v5357 = vadd.f32 %v5080, %v5356
        %5358 = vmatprep.mubr.f32.mxu0 0.0
        %5359 = vmatmul.mubr.f32.gmra.mrb[0].mxu0 %v5099
        %v5360 = vpop.f32.mrb[0].mxu0
        %v5361 = vadd.f32 %v5085, %v5360
        %v5362 = vpop.f32.mrb[0].mxu0
        %v5363 = vadd.f32 %v5085, %v5362
        %5364 = vmatprep.mubr.f32.mxu0 0.0
        %5365 = vmatmul.mubr.f32.gmra.mrb[0].mxu0 %v5102
        %v5366 = vpop.f32.mrb[0].mxu0
        %v5367 = vadd.f32 %v5090, %v5366
        %v5368 = vpop.f32.mrb[0].mxu0
        %v5369 = vadd.f32 %v5090, %v5368
        %5370 = vdwg.mxu0
        %5371 = vmatprep.subr.mxu0 %v5037
        %5372 = vmatpush1.msra.mxu0 %v5036
        %5373 = vmatprep.subr.mxu0 %v5045
        %5374 = vmatpush1.msra.mxu0 %v5044
        %5375 = vmatprep.subr.mxu0 %v5053
        %5376 = vmatpush1.msra.mxu0 %v5052
        %5377 = vmatprep.subr.mxu0 %v5061
        %5378 = vmatpush1.msra.mxu0 %v5060
        %5379 = vmatprep.subr.mxu0 0.0
        %5380 = vmatpush1.msra.mxu0 0.0
        %5381 = vmatprep.subr.mxu0 0.0
        %5382 = vmatpush1.msra.mxu0 0.0
        %5383 = vmatprep.subr.mxu0 0.0
        %5384 = vmatpush1.msra.mxu0 0.0
        %5385 = vmatprep.subr.mxu0 0.0
        %5386 = vmatpush1.msra.mxu0 0.0
        %5387 = vmatprep.subr.mxu0 0.0
        %5388 = vmatpush1.msra.mxu0 0.0
        %5389 = vmatprep.subr.mxu0 0.0
        %5390 = vmatpush1.msra.mxu0 0.0
        %5391 = vmatprep.subr.mxu0 0.0
        %5392 = vmatpush1.msra.mxu0 0.0
        %5393 = vmatprep.subr.mxu0 0.0
        %5394 = vmatpush1.msra.mxu0 0.0
        %5395 = vmatprep.subr.mxu0 0.0
        %5396 = vmatpush1.msra.mxu0 0.0
        %5397 = vmatprep.subr.mxu0 0.0
        %5398 = vmatpush1.msra.mxu0 0.0
        %5399 = vmatprep.subr.mxu0 0.0
        %5400 = vmatpush1.msra.mxu0 0.0
        %5401 = vmatprep.subr.mxu0 0.0
        %5402 = vmatpush1.msra.mxu0 0.0
        %5403 = vmatprep.subr.mxu0 0.0
        %5404 = vmatpush1.msra.mxu0 0.0
        %5405 = vmatprep.subr.mxu0 0.0
        %5406 = vmatpush1.msra.mxu0 0.0
        %5407 = vmatprep.subr.mxu0 0.0
        %5408 = vmatpush1.msra.mxu0 0.0
        %5409 = vmatprep.subr.mxu0 0.0
        %5410 = vmatpush1.msra.mxu0 0.0
        %5411 = vmatprep.subr.mxu0 0.0
        %5412 = vmatpush1.msra.mxu0 0.0
        %5413 = vmatprep.subr.mxu0 0.0
        %5414 = vmatpush1.msra.mxu0 0.0
        %5415 = vmatprep.subr.mxu0 0.0
        %5416 = vmatpush1.msra.mxu0 0.0
        %5417 = vmatprep.subr.mxu0 0.0
        %5418 = vmatpush1.msra.mxu0 0.0
        %5419 = vmatprep.subr.mxu0 0.0
        %5420 = vmatpush1.msra.mxu0 0.0
        %5421 = vmatprep.subr.mxu0 0.0
        %5422 = vmatpush1.msra.mxu0 0.0
        %5423 = vmatprep.subr.mxu0 0.0
        %5424 = vmatpush1.msra.mxu0 0.0
        %5425 = vmatprep.subr.mxu0 0.0
        %5426 = vmatpush1.msra.mxu0 0.0
        %5427 = vmatprep.subr.mxu0 0.0
        %5428 = vmatpush1.msra.mxu0 0.0
        %5429 = vmatprep.subr.mxu0 0.0
        %5430 = vmatpush1.msra.mxu0 0.0
        %5431 = vmatprep.subr.mxu0 0.0
        %5432 = vmatpush1.msra.mxu0 0.0
        %5433 = vmatprep.subr.mxu0 0.0
        %5434 = vmatpush1.msra.mxu0 0.0
        %5435 = vmatprep.mubr.f32.mxu0 0.0
        %5436 = vmatmul.mubr.f32.gmra.mrb[0].mxu0 %v5093
        %v5437 = vpop.f32.mrb[0].mxu0
        %v5438 = vadd.f32 %v5075, %v5437
        %v5439 = vpop.f32.mrb[0].mxu0
        %v5440 = vadd.f32 %v5075, %v5439
        %5441 = vmatprep.mubr.f32.mxu0 0.0
        %5442 = vmatmul.mubr.f32.gmra.mrb[0].mxu0 %v5096
        %v5443 = vpop.f32.mrb[0].mxu0
        %v5444 = vadd.f32 %v5080, %v5443
        %v5445 = vpop.f32.mrb[0].mxu0
        %v5446 = vadd.f32 %v5080, %v5445
        %5447 = vmatprep.mubr.f32.mxu0 0.0
        %5448 = vmatmul.mubr.f32.gmra.mrb[0].mxu0 %v5099
        %v5449 = vpop.f32.mrb[0].mxu0
        %v5450 = vadd.f32 %v5085, %v5449
        %v5451 = vpop.f32.mrb[0].mxu0
        %v5452 = vadd.f32 %v5085, %v5451
        %5453 = vmatprep.mubr.f32.mxu0 0.0
        %5454 = vmatmul.mubr.f32.gmra.mrb[0].mxu0 %v5102
        %v5455 = vpop.f32.mrb[0].mxu0
        %v5456 = vadd.f32 %v5090, %v5455
        %v5457 = vpop.f32.mrb[0].mxu0
        %v5458 = vadd.f32 %v5090, %v5457
        %5459 = vdwg.mxu0
        %v5460 = vmul.f32 %v5171, 100.0
        %v5461 = vmul.f32 %v5173, 100.0
        %v5462 = vmul.f32 %v5260, 100.0
        %v5463 = vmul.f32 %v5262, 100.0
        %v5464 = vmul.f32 %v5349, 100.0
        %v5465 = vmul.f32 %v5351, 100.0
        %v5466 = vmul.f32 %v5438, 100.0
        %v5467 = vmul.f32 %v5440, 100.0
        %v5468 = vmul.f32 %v5177, 100.0
        %v5469 = vmul.f32 %v5179, 100.0
        %v5470 = vmul.f32 %v5266, 100.0
        %v5471 = vmul.f32 %v5268, 100.0
        %v5472 = vmul.f32 %v5355, 100.0
        %v5473 = vmul.f32 %v5357, 100.0
        %v5474 = vmul.f32 %v5444, 100.0
        %v5475 = vmul.f32 %v5446, 100.0
        %v5476 = vmul.f32 %v5183, 100.0
        %v5477 = vmul.f32 %v5185, 100.0
        %v5478 = vmul.f32 %v5272, 100.0
        %v5479 = vmul.f32 %v5274, 100.0
        %v5480 = vmul.f32 %v5361, 100.0
        %v5481 = vmul.f32 %v5363, 100.0
        %v5482 = vmul.f32 %v5450, 100.0
        %v5483 = vmul.f32 %v5452, 100.0
        %v5484 = vmul.f32 %v5189, 100.0
        %v5485 = vmul.f32 %v5191, 100.0
        %v5486 = vmul.f32 %v5278, 100.0
        %v5487 = vmul.f32 %v5280, 100.0
        %v5488 = vmul.f32 %v5367, 100.0
        %v5489 = vmul.f32 %v5369, 100.0
        %v5490 = vmul.f32 %v5456, 100.0
        %v5491 = vmul.f32 %v5458, 100.0
        %vm5492 = vcmp.gt.f32.partialorder %v5460, 20.0
        %vm5493 = vcmp.gt.f32.partialorder %v5461, 20.0
        %vm5494 = vcmp.gt.f32.partialorder %v5462, 20.0
        %vm5495 = vcmp.gt.f32.partialorder %v5463, 20.0
        %vm5496 = vcmp.gt.f32.partialorder %v5464, 20.0
        %vm5497 = vcmp.gt.f32.partialorder %v5465, 20.0
        %vm5498 = vcmp.gt.f32.partialorder %v5466, 20.0
        %vm5499 = vcmp.gt.f32.partialorder %v5467, 20.0
        %vm5500 = vcmp.gt.f32.partialorder %v5468, 20.0
        %vm5501 = vcmp.gt.f32.partialorder %v5469, 20.0
        %vm5502 = vcmp.gt.f32.partialorder %v5470, 20.0
        %vm5503 = vcmp.gt.f32.partialorder %v5471, 20.0
        %vm5504 = vcmp.gt.f32.partialorder %v5472, 20.0
        %vm5505 = vcmp.gt.f32.partialorder %v5473, 20.0
        %vm5506 = vcmp.gt.f32.partialorder %v5474, 20.0
        %vm5507 = vcmp.gt.f32.partialorder %v5475, 20.0
        %vm5508 = vcmp.gt.f32.partialorder %v5476, 20.0
        %vm5509 = vcmp.gt.f32.partialorder %v5477, 20.0
        %vm5510 = vcmp.gt.f32.partialorder %v5478, 20.0
        %vm5511 = vcmp.gt.f32.partialorder %v5479, 20.0
        %vm5512 = vcmp.gt.f32.partialorder %v5480, 20.0
        %vm5513 = vcmp.gt.f32.partialorder %v5481, 20.0
        %vm5514 = vcmp.gt.f32.partialorder %v5482, 20.0
        %vm5515 = vcmp.gt.f32.partialorder %v5483, 20.0
        %vm5516 = vcmp.gt.f32.partialorder %v5484, 20.0
        %vm5517 = vcmp.gt.f32.partialorder %v5485, 20.0
        %vm5518 = vcmp.gt.f32.partialorder %v5486, 20.0
        %vm5519 = vcmp.gt.f32.partialorder %v5487, 20.0
        %vm5520 = vcmp.gt.f32.partialorder %v5488, 20.0
        %vm5521 = vcmp.gt.f32.partialorder %v5489, 20.0
        %vm5522 = vcmp.gt.f32.partialorder %v5490, 20.0
        %vm5523 = vcmp.gt.f32.partialorder %v5491, 20.0
        %v5524 = vmin.f32 %v5460, 20.0
        %v5525 = vmin.f32 %v5461, 20.0
        %v5526 = vmin.f32 %v5462, 20.0
        %v5527 = vmin.f32 %v5463, 20.0
        %v5528 = vmin.f32 %v5464, 20.0
        %v5529 = vmin.f32 %v5465, 20.0
        %v5530 = vmin.f32 %v5466, 20.0
        %v5531 = vmin.f32 %v5467, 20.0
        %v5532 = vmin.f32 %v5468, 20.0
        %v5533 = vmin.f32 %v5469, 20.0
        %v5534 = vmin.f32 %v5470, 20.0
        %v5535 = vmin.f32 %v5471, 20.0
        %v5536 = vmin.f32 %v5472, 20.0
        %v5537 = vmin.f32 %v5473, 20.0
        %v5538 = vmin.f32 %v5474, 20.0
        %v5539 = vmin.f32 %v5475, 20.0
        %v5540 = vmin.f32 %v5476, 20.0
        %v5541 = vmin.f32 %v5477, 20.0
        %v5542 = vmin.f32 %v5478, 20.0
        %v5543 = vmin.f32 %v5479, 20.0
        %v5544 = vmin.f32 %v5480, 20.0
        %v5545 = vmin.f32 %v5481, 20.0
        %v5546 = vmin.f32 %v5482, 20.0
        %v5547 = vmin.f32 %v5483, 20.0
        %v5548 = vmin.f32 %v5484, 20.0
        %v5549 = vmin.f32 %v5485, 20.0
        %v5550 = vmin.f32 %v5486, 20.0
        %v5551 = vmin.f32 %v5487, 20.0
        %v5552 = vmin.f32 %v5488, 20.0
        %v5553 = vmin.f32 %v5489, 20.0
        %v5554 = vmin.f32 %v5490, 20.0
        %v5555 = vmin.f32 %v5491, 20.0
        %v5556 = vmul.f32 %v5524, 1.442695
        %v5557 = vpow.pop %v5556
        %v5558 = vmul.f32 %v5525, 1.442695
        %v5559 = vpow.pop %v5558
        %v5560 = vmul.f32 %v5526, 1.442695
        %v5561 = vpow.pop %v5560
        %v5562 = vmul.f32 %v5527, 1.442695
        %v5563 = vpow.pop %v5562
        %v5564 = vmul.f32 %v5528, 1.442695
        %v5565 = vpow.pop %v5564
        %v5566 = vmul.f32 %v5529, 1.442695
        %v5567 = vpow.pop %v5566
        %v5568 = vmul.f32 %v5530, 1.442695
        %v5569 = vpow.pop %v5568
        %v5570 = vmul.f32 %v5531, 1.442695
        %v5571 = vpow.pop %v5570
        %v5572 = vmul.f32 %v5532, 1.442695
        %v5573 = vpow.pop %v5572
        %v5574 = vmul.f32 %v5533, 1.442695
        %v5575 = vpow.pop %v5574
        %v5576 = vmul.f32 %v5534, 1.442695
        %v5577 = vpow.pop %v5576
        %v5578 = vmul.f32 %v5535, 1.442695
        %v5579 = vpow.pop %v5578
        %v5580 = vmul.f32 %v5536, 1.442695
        %v5581 = vpow.pop %v5580
        %v5582 = vmul.f32 %v5537, 1.442695
        %v5583 = vpow.pop %v5582
        %v5584 = vmul.f32 %v5538, 1.442695
        %v5585 = vpow.pop %v5584
        %v5586 = vmul.f32 %v5539, 1.442695
        %v5587 = vpow.pop %v5586
        %v5588 = vmul.f32 %v5540, 1.442695
        %v5589 = vpow.pop %v5588
        %v5590 = vmul.f32 %v5541, 1.442695
        %v5591 = vpow.pop %v5590
        %v5592 = vmul.f32 %v5542, 1.442695
        %v5593 = vpow.pop %v5592
        %v5594 = vmul.f32 %v5543, 1.442695
        %v5595 = vpow.pop %v5594
        %v5596 = vmul.f32 %v5544, 1.442695
        %v5597 = vpow.pop %v5596
        %v5598 = vmul.f32 %v5545, 1.442695
        %v5599 = vpow.pop %v5598
        %v5600 = vmul.f32 %v5546, 1.442695
        %v5601 = vpow.pop %v5600
        %v5602 = vmul.f32 %v5547, 1.442695
        %v5603 = vpow.pop %v5602
        %v5604 = vmul.f32 %v5548, 1.442695
        %v5605 = vpow.pop %v5604
        %v5606 = vmul.f32 %v5549, 1.442695
        %v5607 = vpow.pop %v5606
        %v5608 = vmul.f32 %v5550, 1.442695
        %v5609 = vpow.pop %v5608
        %v5610 = vmul.f32 %v5551, 1.442695
        %v5611 = vpow.pop %v5610
        %v5612 = vmul.f32 %v5552, 1.442695
        %v5613 = vpow.pop %v5612
        %v5614 = vmul.f32 %v5553, 1.442695
        %v5615 = vpow.pop %v5614
        %v5616 = vmul.f32 %v5554, 1.442695
        %v5617 = vpow.pop %v5616
        %v5618 = vmul.f32 %v5555, 1.442695
        %v5619 = vpow.pop %v5618
        %v5620 = vadd.f32 %v5557, 1.0
        %v5621 = vadd.f32 %v5559, 1.0
        %v5622 = vadd.f32 %v5561, 1.0
        %v5623 = vadd.f32 %v5563, 1.0
        %v5624 = vadd.f32 %v5565, 1.0
        %v5625 = vadd.f32 %v5567, 1.0
        %v5626 = vadd.f32 %v5569, 1.0
        %v5627 = vadd.f32 %v5571, 1.0
        %v5628 = vadd.f32 %v5573, 1.0
        %v5629 = vadd.f32 %v5575, 1.0
        %v5630 = vadd.f32 %v5577, 1.0
        %v5631 = vadd.f32 %v5579, 1.0
        %v5632 = vadd.f32 %v5581, 1.0
        %v5633 = vadd.f32 %v5583, 1.0
        %v5634 = vadd.f32 %v5585, 1.0
        %v5635 = vadd.f32 %v5587, 1.0
        %v5636 = vadd.f32 %v5589, 1.0
        %v5637 = vadd.f32 %v5591, 1.0
        %v5638 = vadd.f32 %v5593, 1.0
        %v5639 = vadd.f32 %v5595, 1.0
        %v5640 = vadd.f32 %v5597, 1.0
        %v5641 = vadd.f32 %v5599, 1.0
        %v5642 = vadd.f32 %v5601, 1.0
        %v5643 = vadd.f32 %v5603, 1.0
        %v5644 = vadd.f32 %v5605, 1.0
        %v5645 = vadd.f32 %v5607, 1.0
        %v5646 = vadd.f32 %v5609, 1.0
        %v5647 = vadd.f32 %v5611, 1.0
        %v5648 = vadd.f32 %v5613, 1.0
        %v5649 = vadd.f32 %v5615, 1.0
        %v5650 = vadd.f32 %v5617, 1.0
        %v5651 = vadd.f32 %v5619, 1.0
        %v5652 = vlog2.pop %v5620
        %v5653 = vmul.f32 %v5652, 0.6931472
        %v5654 = vlog2.pop %v5621
        %v5655 = vmul.f32 %v5654, 0.6931472
        %v5656 = vlog2.pop %v5622
        %v5657 = vmul.f32 %v5656, 0.6931472
        %v5658 = vlog2.pop %v5623
        %v5659 = vmul.f32 %v5658, 0.6931472
        %v5660 = vlog2.pop %v5624
        %v5661 = vmul.f32 %v5660, 0.6931472
        %v5662 = vlog2.pop %v5625
        %v5663 = vmul.f32 %v5662, 0.6931472
        %v5664 = vlog2.pop %v5626
        %v5665 = vmul.f32 %v5664, 0.6931472
        %v5666 = vlog2.pop %v5627
        %v5667 = vmul.f32 %v5666, 0.6931472
        %v5668 = vlog2.pop %v5628
        %v5669 = vmul.f32 %v5668, 0.6931472
        %v5670 = vlog2.pop %v5629
        %v5671 = vmul.f32 %v5670, 0.6931472
        %v5672 = vlog2.pop %v5630
        %v5673 = vmul.f32 %v5672, 0.6931472
        %v5674 = vlog2.pop %v5631
        %v5675 = vmul.f32 %v5674, 0.6931472
        %v5676 = vlog2.pop %v5632
        %v5677 = vmul.f32 %v5676, 0.6931472
        %v5678 = vlog2.pop %v5633
        %v5679 = vmul.f32 %v5678, 0.6931472
        %v5680 = vlog2.pop %v5634
        %v5681 = vmul.f32 %v5680, 0.6931472
        %v5682 = vlog2.pop %v5635
        %v5683 = vmul.f32 %v5682, 0.6931472
        %v5684 = vlog2.pop %v5636
        %v5685 = vmul.f32 %v5684, 0.6931472
        %v5686 = vlog2.pop %v5637
        %v5687 = vmul.f32 %v5686, 0.6931472
        %v5688 = vlog2.pop %v5638
        %v5689 = vmul.f32 %v5688, 0.6931472
        %v5690 = vlog2.pop %v5639
        %v5691 = vmul.f32 %v5690, 0.6931472
        %v5692 = vlog2.pop %v5640
        %v5693 = vmul.f32 %v5692, 0.6931472
        %v5694 = vlog2.pop %v5641
        %v5695 = vmul.f32 %v5694, 0.6931472
        %v5696 = vlog2.pop %v5642
        %v5697 = vmul.f32 %v5696, 0.6931472
        %v5698 = vlog2.pop %v5643
        %v5699 = vmul.f32 %v5698, 0.6931472
        %v5700 = vlog2.pop %v5644
        %v5701 = vmul.f32 %v5700, 0.6931472
        %v5702 = vlog2.pop %v5645
        %v5703 = vmul.f32 %v5702, 0.6931472
        %v5704 = vlog2.pop %v5646
        %v5705 = vmul.f32 %v5704, 0.6931472
        %v5706 = vlog2.pop %v5647
        %v5707 = vmul.f32 %v5706, 0.6931472
        %v5708 = vlog2.pop %v5648
        %v5709 = vmul.f32 %v5708, 0.6931472
        %v5710 = vlog2.pop %v5649
        %v5711 = vmul.f32 %v5710, 0.6931472
        %v5712 = vlog2.pop %v5650
        %v5713 = vmul.f32 %v5712, 0.6931472
        %v5714 = vlog2.pop %v5651
        %v5715 = vmul.f32 %v5714, 0.6931472
        %v5716 = vmul.f32 %v5653, %v1008
        %v5717 = vmul.f32 %v5655, %v1008
        %v5718 = vmul.f32 %v5657, %v1008
        %v5719 = vmul.f32 %v5659, %v1008
        %v5720 = vmul.f32 %v5661, %v1008
        %v5721 = vmul.f32 %v5663, %v1008
        %v5722 = vmul.f32 %v5665, %v1008
        %v5723 = vmul.f32 %v5667, %v1008
        %v5724 = vmul.f32 %v5669, %v1008
        %v5725 = vmul.f32 %v5671, %v1008
        %v5726 = vmul.f32 %v5673, %v1008
        %v5727 = vmul.f32 %v5675, %v1008
        %v5728 = vmul.f32 %v5677, %v1008
        %v5729 = vmul.f32 %v5679, %v1008
        %v5730 = vmul.f32 %v5681, %v1008
        %v5731 = vmul.f32 %v5683, %v1008
        %v5732 = vmul.f32 %v5685, %v1008
        %v5733 = vmul.f32 %v5687, %v1008
        %v5734 = vmul.f32 %v5689, %v1008
        %v5735 = vmul.f32 %v5691, %v1008
        %v5736 = vmul.f32 %v5693, %v1008
        %v5737 = vmul.f32 %v5695, %v1008
        %v5738 = vmul.f32 %v5697, %v1008
        %v5739 = vmul.f32 %v5699, %v1008
        %v5740 = vmul.f32 %v5701, %v1008
        %v5741 = vmul.f32 %v5703, %v1008
        %v5742 = vmul.f32 %v5705, %v1008
        %v5743 = vmul.f32 %v5707, %v1008
        %v5744 = vmul.f32 %v5709, %v1008
        %v5745 = vmul.f32 %v5711, %v1008
        %v5746 = vmul.f32 %v5713, %v1008
        %v5747 = vmul.f32 %v5715, %v1008
        %v5748 = vsel %vm5492, %v5171, %v5716
        %v5749 = vsel %vm5493, %v5173, %v5717
        %v5750 = vsel %vm5494, %v5260, %v5718
        %v5751 = vsel %vm5495, %v5262, %v5719
        %v5752 = vsel %vm5496, %v5349, %v5720
        %v5753 = vsel %vm5497, %v5351, %v5721
        %v5754 = vsel %vm5498, %v5438, %v5722
        %v5755 = vsel %vm5499, %v5440, %v5723
        %v5756 = vsel %vm5500, %v5177, %v5724
        %v5757 = vsel %vm5501, %v5179, %v5725
        %v5758 = vsel %vm5502, %v5266, %v5726
        %v5759 = vsel %vm5503, %v5268, %v5727
        %v5760 = vsel %vm5504, %v5355, %v5728
        %v5761 = vsel %vm5505, %v5357, %v5729
        %v5762 = vsel %vm5506, %v5444, %v5730
        %v5763 = vsel %vm5507, %v5446, %v5731
        %v5764 = vsel %vm5508, %v5183, %v5732
        %v5765 = vsel %vm5509, %v5185, %v5733
        %v5766 = vsel %vm5510, %v5272, %v5734
        %v5767 = vsel %vm5511, %v5274, %v5735
        %v5768 = vsel %vm5512, %v5361, %v5736
        %v5769 = vsel %vm5513, %v5363, %v5737
        %v5770 = vsel %vm5514, %v5450, %v5738
        %v5771 = vsel %vm5515, %v5452, %v5739
        %v5772 = vsel %vm5516, %v5189, %v5740
        %v5773 = vsel %vm5517, %v5191, %v5741
        %v5774 = vsel %vm5518, %v5278, %v5742
        %v5775 = vsel %vm5519, %v5280, %v5743
        %v5776 = vsel %vm5520, %v5367, %v5744
        %v5777 = vsel %vm5521, %v5369, %v5745
        %v5778 = vsel %vm5522, %v5456, %v5746
        %v5779 = vsel %vm5523, %v5458, %v5747
        %s5780 = scalar_lea.vmem [#allocation2], 192
        %v5781 = vld [vmem:[%s5780] sm:$0xff]
        %v5782 = vld [vmem:[%s5780 + $0x8] sm:$0xff]
        %v5783 = vld [vmem:[%s5780 + $0x10] sm:$0xff]
        %v5784 = vld [vmem:[%s5780 + $0x18] sm:$0xff]
        %s5785 = scalar_lea.vmem %s4, 192
        %v5786 = vld [vmem:[%s5785] sm:$0xff]
        %v5787 = vld [vmem:[%s5785 + $0x8] sm:$0xff]
        %v5788 = vld [vmem:[%s5785 + $0x10] sm:$0xff]
        %v5789 = vld [vmem:[%s5785 + $0x18] sm:$0xff]
        %5791 = vset.pattern.permute.xlu0 0
        %5792 = vperm.xlu0 %5791, %v5786
        %v5793 = vpop.permute.xlu0 %5792
        %5796 = vset.pattern.permute.xlu0 0
        %5797 = vperm.xlu0 %5796, %v5787
        %v5798 = vpop.permute.xlu0 %5797
        %5801 = vset.pattern.permute.xlu0 0
        %5802 = vperm.xlu0 %5801, %v5788
        %v5803 = vpop.permute.xlu0 %5802
        %5806 = vset.pattern.permute.xlu0 0
        %5807 = vperm.xlu0 %5806, %v5789
        %v5808 = vpop.permute.xlu0 %5807
        %v5811 = vsel %vm1101, %v5781, 0
        %v5814 = vsel %vm1101, %v5782, 0
        %v5817 = vsel %vm1101, %v5783, 0
        %v5820 = vsel %vm1101, %v5784, 0
        %5822 = vmatprep.subr.mxu0 %v5749
        %5823 = vmatpush1.msra.mxu0 %v5748
        %5824 = vmatprep.subr.mxu0 %v5757
        %5825 = vmatpush1.msra.mxu0 %v5756
        %5826 = vmatprep.subr.mxu0 %v5765
        %5827 = vmatpush1.msra.mxu0 %v5764
        %5828 = vmatprep.subr.mxu0 %v5773
        %5829 = vmatpush1.msra.mxu0 %v5772
        %5830 = vmatprep.subr.mxu0 0.0
        %5831 = vmatpush1.msra.mxu0 0.0
        %5832 = vmatprep.subr.mxu0 0.0
        %5833 = vmatpush1.msra.mxu0 0.0
        %5834 = vmatprep.subr.mxu0 0.0
        %5835 = vmatpush1.msra.mxu0 0.0
        %5836 = vmatprep.subr.mxu0 0.0
        %5837 = vmatpush1.msra.mxu0 0.0
        %5838 = vmatprep.subr.mxu0 0.0
        %5839 = vmatpush1.msra.mxu0 0.0
        %5840 = vmatprep.subr.mxu0 0.0
        %5841 = vmatpush1.msra.mxu0 0.0
        %5842 = vmatprep.subr.mxu0 0.0
        %5843 = vmatpush1.msra.mxu0 0.0
        %5844 = vmatprep.subr.mxu0 0.0
        %5845 = vmatpush1.msra.mxu0 0.0
        %5846 = vmatprep.subr.mxu0 0.0
        %5847 = vmatpush1.msra.mxu0 0.0
        %5848 = vmatprep.subr.mxu0 0.0
        %5849 = vmatpush1.msra.mxu0 0.0
        %5850 = vmatprep.subr.mxu0 0.0
        %5851 = vmatpush1.msra.mxu0 0.0
        %5852 = vmatprep.subr.mxu0 0.0
        %5853 = vmatpush1.msra.mxu0 0.0
        %5854 = vmatprep.subr.mxu0 0.0
        %5855 = vmatpush1.msra.mxu0 0.0
        %5856 = vmatprep.subr.mxu0 0.0
        %5857 = vmatpush1.msra.mxu0 0.0
        %5858 = vmatprep.subr.mxu0 0.0
        %5859 = vmatpush1.msra.mxu0 0.0
        %5860 = vmatprep.subr.mxu0 0.0
        %5861 = vmatpush1.msra.mxu0 0.0
        %5862 = vmatprep.subr.mxu0 0.0
        %5863 = vmatpush1.msra.mxu0 0.0
        %5864 = vmatprep.subr.mxu0 0.0
        %5865 = vmatpush1.msra.mxu0 0.0
        %5866 = vmatprep.subr.mxu0 0.0
        %5867 = vmatpush1.msra.mxu0 0.0
        %5868 = vmatprep.subr.mxu0 0.0
        %5869 = vmatpush1.msra.mxu0 0.0
        %5870 = vmatprep.subr.mxu0 0.0
        %5871 = vmatpush1.msra.mxu0 0.0
        %5872 = vmatprep.subr.mxu0 0.0
        %5873 = vmatpush1.msra.mxu0 0.0
        %5874 = vmatprep.subr.mxu0 0.0
        %5875 = vmatpush1.msra.mxu0 0.0
        %5876 = vmatprep.subr.mxu0 0.0
        %5877 = vmatpush1.msra.mxu0 0.0
        %5878 = vmatprep.subr.mxu0 0.0
        %5879 = vmatpush1.msra.mxu0 0.0
        %5880 = vmatprep.subr.mxu0 0.0
        %5881 = vmatpush1.msra.mxu0 0.0
        %5882 = vmatprep.subr.mxu0 0.0
        %5883 = vmatpush1.msra.mxu0 0.0
        %5884 = vmatprep.subr.mxu0 0.0
        %5885 = vmatpush1.msra.mxu0 0.0
        %5886 = vmatprep.mubr.f32.mxu0 0.0
        %5887 = vmatmul.mubr.f32.gmra.mrb[0].mxu0 %v5811
        %v5888 = vpop.f32.mrb[0].mxu0
        %v5889 = vadd.f32 %v5793, %v5888
        %v5890 = vpop.f32.mrb[0].mxu0
        %v5891 = vadd.f32 %v5793, %v5890
        %5892 = vmatprep.mubr.f32.mxu0 0.0
        %5893 = vmatmul.mubr.f32.gmra.mrb[0].mxu0 %v5814
        %v5894 = vpop.f32.mrb[0].mxu0
        %v5895 = vadd.f32 %v5798, %v5894
        %v5896 = vpop.f32.mrb[0].mxu0
        %v5897 = vadd.f32 %v5798, %v5896
        %5898 = vmatprep.mubr.f32.mxu0 0.0
        %5899 = vmatmul.mubr.f32.gmra.mrb[0].mxu0 %v5817
        %v5900 = vpop.f32.mrb[0].mxu0
        %v5901 = vadd.f32 %v5803, %v5900
        %v5902 = vpop.f32.mrb[0].mxu0
        %v5903 = vadd.f32 %v5803, %v5902
        %5904 = vmatprep.mubr.f32.mxu0 0.0
        %5905 = vmatmul.mubr.f32.gmra.mrb[0].mxu0 %v5820
        %v5906 = vpop.f32.mrb[0].mxu0
        %v5907 = vadd.f32 %v5808, %v5906
        %v5908 = vpop.f32.mrb[0].mxu0
        %v5909 = vadd.f32 %v5808, %v5908
        %5910 = vdwg.mxu0
        %5911 = vmatprep.subr.mxu0 %v5751
        %5912 = vmatpush1.msra.mxu0 %v5750
        %5913 = vmatprep.subr.mxu0 %v5759
        %5914 = vmatpush1.msra.mxu0 %v5758
        %5915 = vmatprep.subr.mxu0 %v5767
        %5916 = vmatpush1.msra.mxu0 %v5766
        %5917 = vmatprep.subr.mxu0 %v5775
        %5918 = vmatpush1.msra.mxu0 %v5774
        %5919 = vmatprep.subr.mxu0 0.0
        %5920 = vmatpush1.msra.mxu0 0.0
        %5921 = vmatprep.subr.mxu0 0.0
        %5922 = vmatpush1.msra.mxu0 0.0
        %5923 = vmatprep.subr.mxu0 0.0
        %5924 = vmatpush1.msra.mxu0 0.0
        %5925 = vmatprep.subr.mxu0 0.0
        %5926 = vmatpush1.msra.mxu0 0.0
        %5927 = vmatprep.subr.mxu0 0.0
        %5928 = vmatpush1.msra.mxu0 0.0
        %5929 = vmatprep.subr.mxu0 0.0
        %5930 = vmatpush1.msra.mxu0 0.0
        %5931 = vmatprep.subr.mxu0 0.0
        %5932 = vmatpush1.msra.mxu0 0.0
        %5933 = vmatprep.subr.mxu0 0.0
        %5934 = vmatpush1.msra.mxu0 0.0
        %5935 = vmatprep.subr.mxu0 0.0
        %5936 = vmatpush1.msra.mxu0 0.0
        %5937 = vmatprep.subr.mxu0 0.0
        %5938 = vmatpush1.msra.mxu0 0.0
        %5939 = vmatprep.subr.mxu0 0.0
        %5940 = vmatpush1.msra.mxu0 0.0
        %5941 = vmatprep.subr.mxu0 0.0
        %5942 = vmatpush1.msra.mxu0 0.0
        %5943 = vmatprep.subr.mxu0 0.0
        %5944 = vmatpush1.msra.mxu0 0.0
        %5945 = vmatprep.subr.mxu0 0.0
        %5946 = vmatpush1.msra.mxu0 0.0
        %5947 = vmatprep.subr.mxu0 0.0
        %5948 = vmatpush1.msra.mxu0 0.0
        %5949 = vmatprep.subr.mxu0 0.0
        %5950 = vmatpush1.msra.mxu0 0.0
        %5951 = vmatprep.subr.mxu0 0.0
        %5952 = vmatpush1.msra.mxu0 0.0
        %5953 = vmatprep.subr.mxu0 0.0
        %5954 = vmatpush1.msra.mxu0 0.0
        %5955 = vmatprep.subr.mxu0 0.0
        %5956 = vmatpush1.msra.mxu0 0.0
        %5957 = vmatprep.subr.mxu0 0.0
        %5958 = vmatpush1.msra.mxu0 0.0
        %5959 = vmatprep.subr.mxu0 0.0
        %5960 = vmatpush1.msra.mxu0 0.0
        %5961 = vmatprep.subr.mxu0 0.0
        %5962 = vmatpush1.msra.mxu0 0.0
        %5963 = vmatprep.subr.mxu0 0.0
        %5964 = vmatpush1.msra.mxu0 0.0
        %5965 = vmatprep.subr.mxu0 0.0
        %5966 = vmatpush1.msra.mxu0 0.0
        %5967 = vmatprep.subr.mxu0 0.0
        %5968 = vmatpush1.msra.mxu0 0.0
        %5969 = vmatprep.subr.mxu0 0.0
        %5970 = vmatpush1.msra.mxu0 0.0
        %5971 = vmatprep.subr.mxu0 0.0
        %5972 = vmatpush1.msra.mxu0 0.0
        %5973 = vmatprep.subr.mxu0 0.0
        %5974 = vmatpush1.msra.mxu0 0.0
        %5975 = vmatprep.mubr.f32.mxu0 0.0
        %5976 = vmatmul.mubr.f32.gmra.mrb[0].mxu0 %v5811
        %v5977 = vpop.f32.mrb[0].mxu0
        %v5978 = vadd.f32 %v5793, %v5977
        %v5979 = vpop.f32.mrb[0].mxu0
        %v5980 = vadd.f32 %v5793, %v5979
        %5981 = vmatprep.mubr.f32.mxu0 0.0
        %5982 = vmatmul.mubr.f32.gmra.mrb[0].mxu0 %v5814
        %v5983 = vpop.f32.mrb[0].mxu0
        %v5984 = vadd.f32 %v5798, %v5983
        %v5985 = vpop.f32.mrb[0].mxu0
        %v5986 = vadd.f32 %v5798, %v5985
        %5987 = vmatprep.mubr.f32.mxu0 0.0
        %5988 = vmatmul.mubr.f32.gmra.mrb[0].mxu0 %v5817
        %v5989 = vpop.f32.mrb[0].mxu0
        %v5990 = vadd.f32 %v5803, %v5989
        %v5991 = vpop.f32.mrb[0].mxu0
        %v5992 = vadd.f32 %v5803, %v5991
        %5993 = vmatprep.mubr.f32.mxu0 0.0
        %5994 = vmatmul.mubr.f32.gmra.mrb[0].mxu0 %v5820
        %v5995 = vpop.f32.mrb[0].mxu0
        %v5996 = vadd.f32 %v5808, %v5995
        %v5997 = vpop.f32.mrb[0].mxu0
        %v5998 = vadd.f32 %v5808, %v5997
        %5999 = vdwg.mxu0
        %6000 = vmatprep.subr.mxu0 %v5753
        %6001 = vmatpush1.msra.mxu0 %v5752
        %6002 = vmatprep.subr.mxu0 %v5761
        %6003 = vmatpush1.msra.mxu0 %v5760
        %6004 = vmatprep.subr.mxu0 %v5769
        %6005 = vmatpush1.msra.mxu0 %v5768
        %6006 = vmatprep.subr.mxu0 %v5777
        %6007 = vmatpush1.msra.mxu0 %v5776
        %6008 = vmatprep.subr.mxu0 0.0
        %6009 = vmatpush1.msra.mxu0 0.0
        %6010 = vmatprep.subr.mxu0 0.0
        %6011 = vmatpush1.msra.mxu0 0.0
        %6012 = vmatprep.subr.mxu0 0.0
        %6013 = vmatpush1.msra.mxu0 0.0
        %6014 = vmatprep.subr.mxu0 0.0
        %6015 = vmatpush1.msra.mxu0 0.0
        %6016 = vmatprep.subr.mxu0 0.0
        %6017 = vmatpush1.msra.mxu0 0.0
        %6018 = vmatprep.subr.mxu0 0.0
        %6019 = vmatpush1.msra.mxu0 0.0
        %6020 = vmatprep.subr.mxu0 0.0
        %6021 = vmatpush1.msra.mxu0 0.0
        %6022 = vmatprep.subr.mxu0 0.0
        %6023 = vmatpush1.msra.mxu0 0.0
        %6024 = vmatprep.subr.mxu0 0.0
        %6025 = vmatpush1.msra.mxu0 0.0
        %6026 = vmatprep.subr.mxu0 0.0
        %6027 = vmatpush1.msra.mxu0 0.0
        %6028 = vmatprep.subr.mxu0 0.0
        %6029 = vmatpush1.msra.mxu0 0.0
        %6030 = vmatprep.subr.mxu0 0.0
        %6031 = vmatpush1.msra.mxu0 0.0
        %6032 = vmatprep.subr.mxu0 0.0
        %6033 = vmatpush1.msra.mxu0 0.0
        %6034 = vmatprep.subr.mxu0 0.0
        %6035 = vmatpush1.msra.mxu0 0.0
        %6036 = vmatprep.subr.mxu0 0.0
        %6037 = vmatpush1.msra.mxu0 0.0
        %6038 = vmatprep.subr.mxu0 0.0
        %6039 = vmatpush1.msra.mxu0 0.0
        %6040 = vmatprep.subr.mxu0 0.0
        %6041 = vmatpush1.msra.mxu0 0.0
        %6042 = vmatprep.subr.mxu0 0.0
        %6043 = vmatpush1.msra.mxu0 0.0
        %6044 = vmatprep.subr.mxu0 0.0
        %6045 = vmatpush1.msra.mxu0 0.0
        %6046 = vmatprep.subr.mxu0 0.0
        %6047 = vmatpush1.msra.mxu0 0.0
        %6048 = vmatprep.subr.mxu0 0.0
        %6049 = vmatpush1.msra.mxu0 0.0
        %6050 = vmatprep.subr.mxu0 0.0
        %6051 = vmatpush1.msra.mxu0 0.0
        %6052 = vmatprep.subr.mxu0 0.0
        %6053 = vmatpush1.msra.mxu0 0.0
        %6054 = vmatprep.subr.mxu0 0.0
        %6055 = vmatpush1.msra.mxu0 0.0
        %6056 = vmatprep.subr.mxu0 0.0
        %6057 = vmatpush1.msra.mxu0 0.0
        %6058 = vmatprep.subr.mxu0 0.0
        %6059 = vmatpush1.msra.mxu0 0.0
        %6060 = vmatprep.subr.mxu0 0.0
        %6061 = vmatpush1.msra.mxu0 0.0
        %6062 = vmatprep.subr.mxu0 0.0
        %6063 = vmatpush1.msra.mxu0 0.0
        %6064 = vmatprep.mubr.f32.mxu0 0.0
        %6065 = vmatmul.mubr.f32.gmra.mrb[0].mxu0 %v5811
        %v6066 = vpop.f32.mrb[0].mxu0
        %v6067 = vadd.f32 %v5793, %v6066
        %v6068 = vpop.f32.mrb[0].mxu0
        %v6069 = vadd.f32 %v5793, %v6068
        %6070 = vmatprep.mubr.f32.mxu0 0.0
        %6071 = vmatmul.mubr.f32.gmra.mrb[0].mxu0 %v5814
        %v6072 = vpop.f32.mrb[0].mxu0
        %v6073 = vadd.f32 %v5798, %v6072
        %v6074 = vpop.f32.mrb[0].mxu0
        %v6075 = vadd.f32 %v5798, %v6074
        %6076 = vmatprep.mubr.f32.mxu0 0.0
        %6077 = vmatmul.mubr.f32.gmra.mrb[0].mxu0 %v5817
        %v6078 = vpop.f32.mrb[0].mxu0
        %v6079 = vadd.f32 %v5803, %v6078
        %v6080 = vpop.f32.mrb[0].mxu0
        %v6081 = vadd.f32 %v5803, %v6080
        %6082 = vmatprep.mubr.f32.mxu0 0.0
        %6083 = vmatmul.mubr.f32.gmra.mrb[0].mxu0 %v5820
        %v6084 = vpop.f32.mrb[0].mxu0
        %v6085 = vadd.f32 %v5808, %v6084
        %v6086 = vpop.f32.mrb[0].mxu0
        %v6087 = vadd.f32 %v5808, %v6086
        %6088 = vdwg.mxu0
        %6089 = vmatprep.subr.mxu0 %v5755
        %6090 = vmatpush1.msra.mxu0 %v5754
        %6091 = vmatprep.subr.mxu0 %v5763
        %6092 = vmatpush1.msra.mxu0 %v5762
        %6093 = vmatprep.subr.mxu0 %v5771
        %6094 = vmatpush1.msra.mxu0 %v5770
        %6095 = vmatprep.subr.mxu0 %v5779
        %6096 = vmatpush1.msra.mxu0 %v5778
        %6097 = vmatprep.subr.mxu0 0.0
        %6098 = vmatpush1.msra.mxu0 0.0
        %6099 = vmatprep.subr.mxu0 0.0
        %6100 = vmatpush1.msra.mxu0 0.0
        %6101 = vmatprep.subr.mxu0 0.0
        %6102 = vmatpush1.msra.mxu0 0.0
        %6103 = vmatprep.subr.mxu0 0.0
        %6104 = vmatpush1.msra.mxu0 0.0
        %6105 = vmatprep.subr.mxu0 0.0
        %6106 = vmatpush1.msra.mxu0 0.0
        %6107 = vmatprep.subr.mxu0 0.0
        %6108 = vmatpush1.msra.mxu0 0.0
        %6109 = vmatprep.subr.mxu0 0.0
        %6110 = vmatpush1.msra.mxu0 0.0
        %6111 = vmatprep.subr.mxu0 0.0
        %6112 = vmatpush1.msra.mxu0 0.0
        %6113 = vmatprep.subr.mxu0 0.0
        %6114 = vmatpush1.msra.mxu0 0.0
        %6115 = vmatprep.subr.mxu0 0.0
        %6116 = vmatpush1.msra.mxu0 0.0
        %6117 = vmatprep.subr.mxu0 0.0
        %6118 = vmatpush1.msra.mxu0 0.0
        %6119 = vmatprep.subr.mxu0 0.0
        %6120 = vmatpush1.msra.mxu0 0.0
        %6121 = vmatprep.subr.mxu0 0.0
        %6122 = vmatpush1.msra.mxu0 0.0
        %6123 = vmatprep.subr.mxu0 0.0
        %6124 = vmatpush1.msra.mxu0 0.0
        %6125 = vmatprep.subr.mxu0 0.0
        %6126 = vmatpush1.msra.mxu0 0.0
        %6127 = vmatprep.subr.mxu0 0.0
        %6128 = vmatpush1.msra.mxu0 0.0
        %6129 = vmatprep.subr.mxu0 0.0
        %6130 = vmatpush1.msra.mxu0 0.0
        %6131 = vmatprep.subr.mxu0 0.0
        %6132 = vmatpush1.msra.mxu0 0.0
        %6133 = vmatprep.subr.mxu0 0.0
        %6134 = vmatpush1.msra.mxu0 0.0
        %6135 = vmatprep.subr.mxu0 0.0
        %6136 = vmatpush1.msra.mxu0 0.0
        %6137 = vmatprep.subr.mxu0 0.0
        %6138 = vmatpush1.msra.mxu0 0.0
        %6139 = vmatprep.subr.mxu0 0.0
        %6140 = vmatpush1.msra.mxu0 0.0
        %6141 = vmatprep.subr.mxu0 0.0
        %6142 = vmatpush1.msra.mxu0 0.0
        %6143 = vmatprep.subr.mxu0 0.0
        %6144 = vmatpush1.msra.mxu0 0.0
        %6145 = vmatprep.subr.mxu0 0.0
        %6146 = vmatpush1.msra.mxu0 0.0
        %6147 = vmatprep.subr.mxu0 0.0
        %6148 = vmatpush1.msra.mxu0 0.0
        %6149 = vmatprep.subr.mxu0 0.0
        %6150 = vmatpush1.msra.mxu0 0.0
        %6151 = vmatprep.subr.mxu0 0.0
        %6152 = vmatpush1.msra.mxu0 0.0
        %6153 = vmatprep.mubr.f32.mxu0 0.0
        %6154 = vmatmul.mubr.f32.gmra.mrb[0].mxu0 %v5811
        %v6155 = vpop.f32.mrb[0].mxu0
        %v6156 = vadd.f32 %v5793, %v6155
        %v6157 = vpop.f32.mrb[0].mxu0
        %v6158 = vadd.f32 %v5793, %v6157
        %6159 = vmatprep.mubr.f32.mxu0 0.0
        %6160 = vmatmul.mubr.f32.gmra.mrb[0].mxu0 %v5814
        %v6161 = vpop.f32.mrb[0].mxu0
        %v6162 = vadd.f32 %v5798, %v6161
        %v6163 = vpop.f32.mrb[0].mxu0
        %v6164 = vadd.f32 %v5798, %v6163
        %6165 = vmatprep.mubr.f32.mxu0 0.0
        %6166 = vmatmul.mubr.f32.gmra.mrb[0].mxu0 %v5817
        %v6167 = vpop.f32.mrb[0].mxu0
        %v6168 = vadd.f32 %v5803, %v6167
        %v6169 = vpop.f32.mrb[0].mxu0
        %v6170 = vadd.f32 %v5803, %v6169
        %6171 = vmatprep.mubr.f32.mxu0 0.0
        %6172 = vmatmul.mubr.f32.gmra.mrb[0].mxu0 %v5820
        %v6173 = vpop.f32.mrb[0].mxu0
        %v6174 = vadd.f32 %v5808, %v6173
        %v6175 = vpop.f32.mrb[0].mxu0
        %v6176 = vadd.f32 %v5808, %v6175
        %6177 = vdwg.mxu0
        %v6178 = vmul.f32 %v5889, 100.0
        %v6179 = vmul.f32 %v5891, 100.0
        %v6180 = vmul.f32 %v5978, 100.0
        %v6181 = vmul.f32 %v5980, 100.0
        %v6182 = vmul.f32 %v6067, 100.0
        %v6183 = vmul.f32 %v6069, 100.0
        %v6184 = vmul.f32 %v6156, 100.0
        %v6185 = vmul.f32 %v6158, 100.0
        %v6186 = vmul.f32 %v5895, 100.0
        %v6187 = vmul.f32 %v5897, 100.0
        %v6188 = vmul.f32 %v5984, 100.0
        %v6189 = vmul.f32 %v5986, 100.0
        %v6190 = vmul.f32 %v6073, 100.0
        %v6191 = vmul.f32 %v6075, 100.0
        %v6192 = vmul.f32 %v6162, 100.0
        %v6193 = vmul.f32 %v6164, 100.0
        %v6194 = vmul.f32 %v5901, 100.0
        %v6195 = vmul.f32 %v5903, 100.0
        %v6196 = vmul.f32 %v5990, 100.0
        %v6197 = vmul.f32 %v5992, 100.0
        %v6198 = vmul.f32 %v6079, 100.0
        %v6199 = vmul.f32 %v6081, 100.0
        %v6200 = vmul.f32 %v6168, 100.0
        %v6201 = vmul.f32 %v6170, 100.0
        %v6202 = vmul.f32 %v5907, 100.0
        %v6203 = vmul.f32 %v5909, 100.0
        %v6204 = vmul.f32 %v5996, 100.0
        %v6205 = vmul.f32 %v5998, 100.0
        %v6206 = vmul.f32 %v6085, 100.0
        %v6207 = vmul.f32 %v6087, 100.0
        %v6208 = vmul.f32 %v6174, 100.0
        %v6209 = vmul.f32 %v6176, 100.0
        %vm6210 = vcmp.gt.f32.partialorder %v6178, 20.0
        %vm6211 = vcmp.gt.f32.partialorder %v6179, 20.0
        %vm6212 = vcmp.gt.f32.partialorder %v6180, 20.0
        %vm6213 = vcmp.gt.f32.partialorder %v6181, 20.0
        %vm6214 = vcmp.gt.f32.partialorder %v6182, 20.0
        %vm6215 = vcmp.gt.f32.partialorder %v6183, 20.0
        %vm6216 = vcmp.gt.f32.partialorder %v6184, 20.0
        %vm6217 = vcmp.gt.f32.partialorder %v6185, 20.0
        %vm6218 = vcmp.gt.f32.partialorder %v6186, 20.0
        %vm6219 = vcmp.gt.f32.partialorder %v6187, 20.0
        %vm6220 = vcmp.gt.f32.partialorder %v6188, 20.0
        %vm6221 = vcmp.gt.f32.partialorder %v6189, 20.0
        %vm6222 = vcmp.gt.f32.partialorder %v6190, 20.0
        %vm6223 = vcmp.gt.f32.partialorder %v6191, 20.0
        %vm6224 = vcmp.gt.f32.partialorder %v6192, 20.0
        %vm6225 = vcmp.gt.f32.partialorder %v6193, 20.0
        %vm6226 = vcmp.gt.f32.partialorder %v6194, 20.0
        %vm6227 = vcmp.gt.f32.partialorder %v6195, 20.0
        %vm6228 = vcmp.gt.f32.partialorder %v6196, 20.0
        %vm6229 = vcmp.gt.f32.partialorder %v6197, 20.0
        %vm6230 = vcmp.gt.f32.partialorder %v6198, 20.0
        %vm6231 = vcmp.gt.f32.partialorder %v6199, 20.0
        %vm6232 = vcmp.gt.f32.partialorder %v6200, 20.0
        %vm6233 = vcmp.gt.f32.partialorder %v6201, 20.0
        %vm6234 = vcmp.gt.f32.partialorder %v6202, 20.0
        %vm6235 = vcmp.gt.f32.partialorder %v6203, 20.0
        %vm6236 = vcmp.gt.f32.partialorder %v6204, 20.0
        %vm6237 = vcmp.gt.f32.partialorder %v6205, 20.0
        %vm6238 = vcmp.gt.f32.partialorder %v6206, 20.0
        %vm6239 = vcmp.gt.f32.partialorder %v6207, 20.0
        %vm6240 = vcmp.gt.f32.partialorder %v6208, 20.0
        %vm6241 = vcmp.gt.f32.partialorder %v6209, 20.0
        %v6242 = vmin.f32 %v6178, 20.0
        %v6243 = vmin.f32 %v6179, 20.0
        %v6244 = vmin.f32 %v6180, 20.0
        %v6245 = vmin.f32 %v6181, 20.0
        %v6246 = vmin.f32 %v6182, 20.0
        %v6247 = vmin.f32 %v6183, 20.0
        %v6248 = vmin.f32 %v6184, 20.0
        %v6249 = vmin.f32 %v6185, 20.0
        %v6250 = vmin.f32 %v6186, 20.0
        %v6251 = vmin.f32 %v6187, 20.0
        %v6252 = vmin.f32 %v6188, 20.0
        %v6253 = vmin.f32 %v6189, 20.0
        %v6254 = vmin.f32 %v6190, 20.0
        %v6255 = vmin.f32 %v6191, 20.0
        %v6256 = vmin.f32 %v6192, 20.0
        %v6257 = vmin.f32 %v6193, 20.0
        %v6258 = vmin.f32 %v6194, 20.0
        %v6259 = vmin.f32 %v6195, 20.0
        %v6260 = vmin.f32 %v6196, 20.0
        %v6261 = vmin.f32 %v6197, 20.0
        %v6262 = vmin.f32 %v6198, 20.0
        %v6263 = vmin.f32 %v6199, 20.0
        %v6264 = vmin.f32 %v6200, 20.0
        %v6265 = vmin.f32 %v6201, 20.0
        %v6266 = vmin.f32 %v6202, 20.0
        %v6267 = vmin.f32 %v6203, 20.0
        %v6268 = vmin.f32 %v6204, 20.0
        %v6269 = vmin.f32 %v6205, 20.0
        %v6270 = vmin.f32 %v6206, 20.0
        %v6271 = vmin.f32 %v6207, 20.0
        %v6272 = vmin.f32 %v6208, 20.0
        %v6273 = vmin.f32 %v6209, 20.0
        %v6274 = vmul.f32 %v6242, 1.442695
        %v6275 = vpow.pop %v6274
        %v6276 = vmul.f32 %v6243, 1.442695
        %v6277 = vpow.pop %v6276
        %v6278 = vmul.f32 %v6244, 1.442695
        %v6279 = vpow.pop %v6278
        %v6280 = vmul.f32 %v6245, 1.442695
        %v6281 = vpow.pop %v6280
        %v6282 = vmul.f32 %v6246, 1.442695
        %v6283 = vpow.pop %v6282
        %v6284 = vmul.f32 %v6247, 1.442695
        %v6285 = vpow.pop %v6284
        %v6286 = vmul.f32 %v6248, 1.442695
        %v6287 = vpow.pop %v6286
        %v6288 = vmul.f32 %v6249, 1.442695
        %v6289 = vpow.pop %v6288
        %v6290 = vmul.f32 %v6250, 1.442695
        %v6291 = vpow.pop %v6290
        %v6292 = vmul.f32 %v6251, 1.442695
        %v6293 = vpow.pop %v6292
        %v6294 = vmul.f32 %v6252, 1.442695
        %v6295 = vpow.pop %v6294
        %v6296 = vmul.f32 %v6253, 1.442695
        %v6297 = vpow.pop %v6296
        %v6298 = vmul.f32 %v6254, 1.442695
        %v6299 = vpow.pop %v6298
        %v6300 = vmul.f32 %v6255, 1.442695
        %v6301 = vpow.pop %v6300
        %v6302 = vmul.f32 %v6256, 1.442695
        %v6303 = vpow.pop %v6302
        %v6304 = vmul.f32 %v6257, 1.442695
        %v6305 = vpow.pop %v6304
        %v6306 = vmul.f32 %v6258, 1.442695
        %v6307 = vpow.pop %v6306
        %v6308 = vmul.f32 %v6259, 1.442695
        %v6309 = vpow.pop %v6308
        %v6310 = vmul.f32 %v6260, 1.442695
        %v6311 = vpow.pop %v6310
        %v6312 = vmul.f32 %v6261, 1.442695
        %v6313 = vpow.pop %v6312
        %v6314 = vmul.f32 %v6262, 1.442695
        %v6315 = vpow.pop %v6314
        %v6316 = vmul.f32 %v6263, 1.442695
        %v6317 = vpow.pop %v6316
        %v6318 = vmul.f32 %v6264, 1.442695
        %v6319 = vpow.pop %v6318
        %v6320 = vmul.f32 %v6265, 1.442695
        %v6321 = vpow.pop %v6320
        %v6322 = vmul.f32 %v6266, 1.442695
        %v6323 = vpow.pop %v6322
        %v6324 = vmul.f32 %v6267, 1.442695
        %v6325 = vpow.pop %v6324
        %v6326 = vmul.f32 %v6268, 1.442695
        %v6327 = vpow.pop %v6326
        %v6328 = vmul.f32 %v6269, 1.442695
        %v6329 = vpow.pop %v6328
        %v6330 = vmul.f32 %v6270, 1.442695
        %v6331 = vpow.pop %v6330
        %v6332 = vmul.f32 %v6271, 1.442695
        %v6333 = vpow.pop %v6332
        %v6334 = vmul.f32 %v6272, 1.442695
        %v6335 = vpow.pop %v6334
        %v6336 = vmul.f32 %v6273, 1.442695
        %v6337 = vpow.pop %v6336
        %v6338 = vadd.f32 %v6275, 1.0
        %v6339 = vadd.f32 %v6277, 1.0
        %v6340 = vadd.f32 %v6279, 1.0
        %v6341 = vadd.f32 %v6281, 1.0
        %v6342 = vadd.f32 %v6283, 1.0
        %v6343 = vadd.f32 %v6285, 1.0
        %v6344 = vadd.f32 %v6287, 1.0
        %v6345 = vadd.f32 %v6289, 1.0
        %v6346 = vadd.f32 %v6291, 1.0
        %v6347 = vadd.f32 %v6293, 1.0
        %v6348 = vadd.f32 %v6295, 1.0
        %v6349 = vadd.f32 %v6297, 1.0
        %v6350 = vadd.f32 %v6299, 1.0
        %v6351 = vadd.f32 %v6301, 1.0
        %v6352 = vadd.f32 %v6303, 1.0
        %v6353 = vadd.f32 %v6305, 1.0
        %v6354 = vadd.f32 %v6307, 1.0
        %v6355 = vadd.f32 %v6309, 1.0
        %v6356 = vadd.f32 %v6311, 1.0
        %v6357 = vadd.f32 %v6313, 1.0
        %v6358 = vadd.f32 %v6315, 1.0
        %v6359 = vadd.f32 %v6317, 1.0
        %v6360 = vadd.f32 %v6319, 1.0
        %v6361 = vadd.f32 %v6321, 1.0
        %v6362 = vadd.f32 %v6323, 1.0
        %v6363 = vadd.f32 %v6325, 1.0
        %v6364 = vadd.f32 %v6327, 1.0
        %v6365 = vadd.f32 %v6329, 1.0
        %v6366 = vadd.f32 %v6331, 1.0
        %v6367 = vadd.f32 %v6333, 1.0
        %v6368 = vadd.f32 %v6335, 1.0
        %v6369 = vadd.f32 %v6337, 1.0
        %v6370 = vlog2.pop %v6338
        %v6371 = vmul.f32 %v6370, 0.6931472
        %v6372 = vlog2.pop %v6339
        %v6373 = vmul.f32 %v6372, 0.6931472
        %v6374 = vlog2.pop %v6340
        %v6375 = vmul.f32 %v6374, 0.6931472
        %v6376 = vlog2.pop %v6341
        %v6377 = vmul.f32 %v6376, 0.6931472
        %v6378 = vlog2.pop %v6342
        %v6379 = vmul.f32 %v6378, 0.6931472
        %v6380 = vlog2.pop %v6343
        %v6381 = vmul.f32 %v6380, 0.6931472
        %v6382 = vlog2.pop %v6344
        %v6383 = vmul.f32 %v6382, 0.6931472
        %v6384 = vlog2.pop %v6345
        %v6385 = vmul.f32 %v6384, 0.6931472
        %v6386 = vlog2.pop %v6346
        %v6387 = vmul.f32 %v6386, 0.6931472
        %v6388 = vlog2.pop %v6347
        %v6389 = vmul.f32 %v6388, 0.6931472
        %v6390 = vlog2.pop %v6348
        %v6391 = vmul.f32 %v6390, 0.6931472
        %v6392 = vlog2.pop %v6349
        %v6393 = vmul.f32 %v6392, 0.6931472
        %v6394 = vlog2.pop %v6350
        %v6395 = vmul.f32 %v6394, 0.6931472
        %v6396 = vlog2.pop %v6351
        %v6397 = vmul.f32 %v6396, 0.6931472
        %v6398 = vlog2.pop %v6352
        %v6399 = vmul.f32 %v6398, 0.6931472
        %v6400 = vlog2.pop %v6353
        %v6401 = vmul.f32 %v6400, 0.6931472
        %v6402 = vlog2.pop %v6354
        %v6403 = vmul.f32 %v6402, 0.6931472
        %v6404 = vlog2.pop %v6355
        %v6405 = vmul.f32 %v6404, 0.6931472
        %v6406 = vlog2.pop %v6356
        %v6407 = vmul.f32 %v6406, 0.6931472
        %v6408 = vlog2.pop %v6357
        %v6409 = vmul.f32 %v6408, 0.6931472
        %v6410 = vlog2.pop %v6358
        %v6411 = vmul.f32 %v6410, 0.6931472
        %v6412 = vlog2.pop %v6359
        %v6413 = vmul.f32 %v6412, 0.6931472
        %v6414 = vlog2.pop %v6360
        %v6415 = vmul.f32 %v6414, 0.6931472
        %v6416 = vlog2.pop %v6361
        %v6417 = vmul.f32 %v6416, 0.6931472
        %v6418 = vlog2.pop %v6362
        %v6419 = vmul.f32 %v6418, 0.6931472
        %v6420 = vlog2.pop %v6363
        %v6421 = vmul.f32 %v6420, 0.6931472
        %v6422 = vlog2.pop %v6364
        %v6423 = vmul.f32 %v6422, 0.6931472
        %v6424 = vlog2.pop %v6365
        %v6425 = vmul.f32 %v6424, 0.6931472
        %v6426 = vlog2.pop %v6366
        %v6427 = vmul.f32 %v6426, 0.6931472
        %v6428 = vlog2.pop %v6367
        %v6429 = vmul.f32 %v6428, 0.6931472
        %v6430 = vlog2.pop %v6368
        %v6431 = vmul.f32 %v6430, 0.6931472
        %v6432 = vlog2.pop %v6369
        %v6433 = vmul.f32 %v6432, 0.6931472
        %v6434 = vmul.f32 %v6371, %v1008
        %v6435 = vmul.f32 %v6373, %v1008
        %v6436 = vmul.f32 %v6375, %v1008
        %v6437 = vmul.f32 %v6377, %v1008
        %v6438 = vmul.f32 %v6379, %v1008
        %v6439 = vmul.f32 %v6381, %v1008
        %v6440 = vmul.f32 %v6383, %v1008
        %v6441 = vmul.f32 %v6385, %v1008
        %v6442 = vmul.f32 %v6387, %v1008
        %v6443 = vmul.f32 %v6389, %v1008
        %v6444 = vmul.f32 %v6391, %v1008
        %v6445 = vmul.f32 %v6393, %v1008
        %v6446 = vmul.f32 %v6395, %v1008
        %v6447 = vmul.f32 %v6397, %v1008
        %v6448 = vmul.f32 %v6399, %v1008
        %v6449 = vmul.f32 %v6401, %v1008
        %v6450 = vmul.f32 %v6403, %v1008
        %v6451 = vmul.f32 %v6405, %v1008
        %v6452 = vmul.f32 %v6407, %v1008
        %v6453 = vmul.f32 %v6409, %v1008
        %v6454 = vmul.f32 %v6411, %v1008
        %v6455 = vmul.f32 %v6413, %v1008
        %v6456 = vmul.f32 %v6415, %v1008
        %v6457 = vmul.f32 %v6417, %v1008
        %v6458 = vmul.f32 %v6419, %v1008
        %v6459 = vmul.f32 %v6421, %v1008
        %v6460 = vmul.f32 %v6423, %v1008
        %v6461 = vmul.f32 %v6425, %v1008
        %v6462 = vmul.f32 %v6427, %v1008
        %v6463 = vmul.f32 %v6429, %v1008
        %v6464 = vmul.f32 %v6431, %v1008
        %v6465 = vmul.f32 %v6433, %v1008
        %v6466 = vsel %vm6210, %v5889, %v6434
        %v6467 = vsel %vm6211, %v5891, %v6435
        %v6468 = vsel %vm6212, %v5978, %v6436
        %v6469 = vsel %vm6213, %v5980, %v6437
        %v6470 = vsel %vm6214, %v6067, %v6438
        %v6471 = vsel %vm6215, %v6069, %v6439
        %v6472 = vsel %vm6216, %v6156, %v6440
        %v6473 = vsel %vm6217, %v6158, %v6441
        %v6474 = vsel %vm6218, %v5895, %v6442
        %v6475 = vsel %vm6219, %v5897, %v6443
        %v6476 = vsel %vm6220, %v5984, %v6444
        %v6477 = vsel %vm6221, %v5986, %v6445
        %v6478 = vsel %vm6222, %v6073, %v6446
        %v6479 = vsel %vm6223, %v6075, %v6447
        %v6480 = vsel %vm6224, %v6162, %v6448
        %v6481 = vsel %vm6225, %v6164, %v6449
        %v6482 = vsel %vm6226, %v5901, %v6450
        %v6483 = vsel %vm6227, %v5903, %v6451
        %v6484 = vsel %vm6228, %v5990, %v6452
        %v6485 = vsel %vm6229, %v5992, %v6453
        %v6486 = vsel %vm6230, %v6079, %v6454
        %v6487 = vsel %vm6231, %v6081, %v6455
        %v6488 = vsel %vm6232, %v6168, %v6456
        %v6489 = vsel %vm6233, %v6170, %v6457
        %v6490 = vsel %vm6234, %v5907, %v6458
        %v6491 = vsel %vm6235, %v5909, %v6459
        %v6492 = vsel %vm6236, %v5996, %v6460
        %v6493 = vsel %vm6237, %v5998, %v6461
        %v6494 = vsel %vm6238, %v6085, %v6462
        %v6495 = vsel %vm6239, %v6087, %v6463
        %v6496 = vsel %vm6240, %v6174, %v6464
        %v6497 = vsel %vm6241, %v6176, %v6465
        %v6498 = vld [vmem:[%s5] sm:$0xff]
        %v6499 = vld [vmem:[%s6] sm:$0xff]
        %6501 = vset.pattern.permute.xlu0 0
        %6502 = vperm.xlu0 %6501, %v6499
        %v6503 = vpop.permute.xlu0 %6502
        %v6506 = vsel %vm1101, %v6498, 0
        %6508 = vmatprep.subr.mxu0 %v6467
        %6509 = vmatpush1.msra.mxu0 %v6466
        %6510 = vmatprep.subr.mxu0 %v6475
        %6511 = vmatpush1.msra.mxu0 %v6474
        %6512 = vmatprep.subr.mxu0 %v6483
        %6513 = vmatpush1.msra.mxu0 %v6482
        %6514 = vmatprep.subr.mxu0 %v6491
        %6515 = vmatpush1.msra.mxu0 %v6490
        %6516 = vmatprep.subr.mxu0 0.0
        %6517 = vmatpush1.msra.mxu0 0.0
        %6518 = vmatprep.subr.mxu0 0.0
        %6519 = vmatpush1.msra.mxu0 0.0
        %6520 = vmatprep.subr.mxu0 0.0
        %6521 = vmatpush1.msra.mxu0 0.0
        %6522 = vmatprep.subr.mxu0 0.0
        %6523 = vmatpush1.msra.mxu0 0.0
        %6524 = vmatprep.subr.mxu0 0.0
        %6525 = vmatpush1.msra.mxu0 0.0
        %6526 = vmatprep.subr.mxu0 0.0
        %6527 = vmatpush1.msra.mxu0 0.0
        %6528 = vmatprep.subr.mxu0 0.0
        %6529 = vmatpush1.msra.mxu0 0.0
        %6530 = vmatprep.subr.mxu0 0.0
        %6531 = vmatpush1.msra.mxu0 0.0
        %6532 = vmatprep.subr.mxu0 0.0
        %6533 = vmatpush1.msra.mxu0 0.0
        %6534 = vmatprep.subr.mxu0 0.0
        %6535 = vmatpush1.msra.mxu0 0.0
        %6536 = vmatprep.subr.mxu0 0.0
        %6537 = vmatpush1.msra.mxu0 0.0
        %6538 = vmatprep.subr.mxu0 0.0
        %6539 = vmatpush1.msra.mxu0 0.0
        %6540 = vmatprep.subr.mxu0 0.0
        %6541 = vmatpush1.msra.mxu0 0.0
        %6542 = vmatprep.subr.mxu0 0.0
        %6543 = vmatpush1.msra.mxu0 0.0
        %6544 = vmatprep.subr.mxu0 0.0
        %6545 = vmatpush1.msra.mxu0 0.0
        %6546 = vmatprep.subr.mxu0 0.0
        %6547 = vmatpush1.msra.mxu0 0.0
        %6548 = vmatprep.subr.mxu0 0.0
        %6549 = vmatpush1.msra.mxu0 0.0
        %6550 = vmatprep.subr.mxu0 0.0
        %6551 = vmatpush1.msra.mxu0 0.0
        %6552 = vmatprep.subr.mxu0 0.0
        %6553 = vmatpush1.msra.mxu0 0.0
        %6554 = vmatprep.subr.mxu0 0.0
        %6555 = vmatpush1.msra.mxu0 0.0
        %6556 = vmatprep.subr.mxu0 0.0
        %6557 = vmatpush1.msra.mxu0 0.0
        %6558 = vmatprep.subr.mxu0 0.0
        %6559 = vmatpush1.msra.mxu0 0.0
        %6560 = vmatprep.subr.mxu0 0.0
        %6561 = vmatpush1.msra.mxu0 0.0
        %6562 = vmatprep.subr.mxu0 0.0
        %6563 = vmatpush1.msra.mxu0 0.0
        %6564 = vmatprep.subr.mxu0 0.0
        %6565 = vmatpush1.msra.mxu0 0.0
        %6566 = vmatprep.subr.mxu0 0.0
        %6567 = vmatpush1.msra.mxu0 0.0
        %6568 = vmatprep.subr.mxu0 0.0
        %6569 = vmatpush1.msra.mxu0 0.0
        %6570 = vmatprep.subr.mxu0 0.0
        %6571 = vmatpush1.msra.mxu0 0.0
        %6572 = vmatprep.mubr.f32.mxu0 0.0
        %6573 = vmatmul.mubr.f32.gmra.mrb[0].mxu0 %v6506
        %v6574 = vpop.f32.mrb[0].mxu0
        %v6575 = vadd.f32 %v6503, %v6574
        %v6576 = vpop.f32.mrb[0].mxu0
        %v6577 = vadd.f32 %v6503, %v6576
        %6578 = vdwg.mxu0
        %6579 = vmatprep.subr.mxu0 %v6469
        %6580 = vmatpush1.msra.mxu0 %v6468
        %6581 = vmatprep.subr.mxu0 %v6477
        %6582 = vmatpush1.msra.mxu0 %v6476
        %6583 = vmatprep.subr.mxu0 %v6485
        %6584 = vmatpush1.msra.mxu0 %v6484
        %6585 = vmatprep.subr.mxu0 %v6493
        %6586 = vmatpush1.msra.mxu0 %v6492
        %6587 = vmatprep.subr.mxu0 0.0
        %6588 = vmatpush1.msra.mxu0 0.0
        %6589 = vmatprep.subr.mxu0 0.0
        %6590 = vmatpush1.msra.mxu0 0.0
        %6591 = vmatprep.subr.mxu0 0.0
        %6592 = vmatpush1.msra.mxu0 0.0
        %6593 = vmatprep.subr.mxu0 0.0
        %6594 = vmatpush1.msra.mxu0 0.0
        %6595 = vmatprep.subr.mxu0 0.0
        %6596 = vmatpush1.msra.mxu0 0.0
        %6597 = vmatprep.subr.mxu0 0.0
        %6598 = vmatpush1.msra.mxu0 0.0
        %6599 = vmatprep.subr.mxu0 0.0
        %6600 = vmatpush1.msra.mxu0 0.0
        %6601 = vmatprep.subr.mxu0 0.0
        %6602 = vmatpush1.msra.mxu0 0.0
        %6603 = vmatprep.subr.mxu0 0.0
        %6604 = vmatpush1.msra.mxu0 0.0
        %6605 = vmatprep.subr.mxu0 0.0
        %6606 = vmatpush1.msra.mxu0 0.0
        %6607 = vmatprep.subr.mxu0 0.0
        %6608 = vmatpush1.msra.mxu0 0.0
        %6609 = vmatprep.subr.mxu0 0.0
        %6610 = vmatpush1.msra.mxu0 0.0
        %6611 = vmatprep.subr.mxu0 0.0
        %6612 = vmatpush1.msra.mxu0 0.0
        %6613 = vmatprep.subr.mxu0 0.0
        %6614 = vmatpush1.msra.mxu0 0.0
        %6615 = vmatprep.subr.mxu0 0.0
        %6616 = vmatpush1.msra.mxu0 0.0
        %6617 = vmatprep.subr.mxu0 0.0
        %6618 = vmatpush1.msra.mxu0 0.0
        %6619 = vmatprep.subr.mxu0 0.0
        %6620 = vmatpush1.msra.mxu0 0.0
        %6621 = vmatprep.subr.mxu0 0.0
        %6622 = vmatpush1.msra.mxu0 0.0
        %6623 = vmatprep.subr.mxu0 0.0
        %6624 = vmatpush1.msra.mxu0 0.0
        %6625 = vmatprep.subr.mxu0 0.0
        %6626 = vmatpush1.msra.mxu0 0.0
        %6627 = vmatprep.subr.mxu0 0.0
        %6628 = vmatpush1.msra.mxu0 0.0
        %6629 = vmatprep.subr.mxu0 0.0
        %6630 = vmatpush1.msra.mxu0 0.0
        %6631 = vmatprep.subr.mxu0 0.0
        %6632 = vmatpush1.msra.mxu0 0.0
        %6633 = vmatprep.subr.mxu0 0.0
        %6634 = vmatpush1.msra.mxu0 0.0
        %6635 = vmatprep.subr.mxu0 0.0
        %6636 = vmatpush1.msra.mxu0 0.0
        %6637 = vmatprep.subr.mxu0 0.0
        %6638 = vmatpush1.msra.mxu0 0.0
        %6639 = vmatprep.subr.mxu0 0.0
        %6640 = vmatpush1.msra.mxu0 0.0
        %6641 = vmatprep.subr.mxu0 0.0
        %6642 = vmatpush1.msra.mxu0 0.0
        %6643 = vmatprep.mubr.f32.mxu0 0.0
        %6644 = vmatmul.mubr.f32.gmra.mrb[0].mxu0 %v6506
        %v6645 = vpop.f32.mrb[0].mxu0
        %v6646 = vadd.f32 %v6503, %v6645
        %v6647 = vpop.f32.mrb[0].mxu0
        %v6648 = vadd.f32 %v6503, %v6647
        %6649 = vdwg.mxu0
        %6650 = vmatprep.subr.mxu0 %v6471
        %6651 = vmatpush1.msra.mxu0 %v6470
        %6652 = vmatprep.subr.mxu0 %v6479
        %6653 = vmatpush1.msra.mxu0 %v6478
        %6654 = vmatprep.subr.mxu0 %v6487
        %6655 = vmatpush1.msra.mxu0 %v6486
        %6656 = vmatprep.subr.mxu0 %v6495
        %6657 = vmatpush1.msra.mxu0 %v6494
        %6658 = vmatprep.subr.mxu0 0.0
        %6659 = vmatpush1.msra.mxu0 0.0
        %6660 = vmatprep.subr.mxu0 0.0
        %6661 = vmatpush1.msra.mxu0 0.0
        %6662 = vmatprep.subr.mxu0 0.0
        %6663 = vmatpush1.msra.mxu0 0.0
        %6664 = vmatprep.subr.mxu0 0.0
        %6665 = vmatpush1.msra.mxu0 0.0
        %6666 = vmatprep.subr.mxu0 0.0
        %6667 = vmatpush1.msra.mxu0 0.0
        %6668 = vmatprep.subr.mxu0 0.0
        %6669 = vmatpush1.msra.mxu0 0.0
        %6670 = vmatprep.subr.mxu0 0.0
        %6671 = vmatpush1.msra.mxu0 0.0
        %6672 = vmatprep.subr.mxu0 0.0
        %6673 = vmatpush1.msra.mxu0 0.0
        %6674 = vmatprep.subr.mxu0 0.0
        %6675 = vmatpush1.msra.mxu0 0.0
        %6676 = vmatprep.subr.mxu0 0.0
        %6677 = vmatpush1.msra.mxu0 0.0
        %6678 = vmatprep.subr.mxu0 0.0
        %6679 = vmatpush1.msra.mxu0 0.0
        %6680 = vmatprep.subr.mxu0 0.0
        %6681 = vmatpush1.msra.mxu0 0.0
        %6682 = vmatprep.subr.mxu0 0.0
        %6683 = vmatpush1.msra.mxu0 0.0
        %6684 = vmatprep.subr.mxu0 0.0
        %6685 = vmatpush1.msra.mxu0 0.0
        %6686 = vmatprep.subr.mxu0 0.0
        %6687 = vmatpush1.msra.mxu0 0.0
        %6688 = vmatprep.subr.mxu0 0.0
        %6689 = vmatpush1.msra.mxu0 0.0
        %6690 = vmatprep.subr.mxu0 0.0
        %6691 = vmatpush1.msra.mxu0 0.0
        %6692 = vmatprep.subr.mxu0 0.0
        %6693 = vmatpush1.msra.mxu0 0.0
        %6694 = vmatprep.subr.mxu0 0.0
        %6695 = vmatpush1.msra.mxu0 0.0
        %6696 = vmatprep.subr.mxu0 0.0
        %6697 = vmatpush1.msra.mxu0 0.0
        %6698 = vmatprep.subr.mxu0 0.0
        %6699 = vmatpush1.msra.mxu0 0.0
        %6700 = vmatprep.subr.mxu0 0.0
        %6701 = vmatpush1.msra.mxu0 0.0
        %6702 = vmatprep.subr.mxu0 0.0
        %6703 = vmatpush1.msra.mxu0 0.0
        %6704 = vmatprep.subr.mxu0 0.0
        %6705 = vmatpush1.msra.mxu0 0.0
        %6706 = vmatprep.subr.mxu0 0.0
        %6707 = vmatpush1.msra.mxu0 0.0
        %6708 = vmatprep.subr.mxu0 0.0
        %6709 = vmatpush1.msra.mxu0 0.0
        %6710 = vmatprep.subr.mxu0 0.0
        %6711 = vmatpush1.msra.mxu0 0.0
        %6712 = vmatprep.subr.mxu0 0.0
        %6713 = vmatpush1.msra.mxu0 0.0
        %6714 = vmatprep.mubr.f32.mxu0 0.0
        %6715 = vmatmul.mubr.f32.gmra.mrb[0].mxu0 %v6506
        %v6716 = vpop.f32.mrb[0].mxu0
        %v6717 = vadd.f32 %v6503, %v6716
        %v6718 = vpop.f32.mrb[0].mxu0
        %v6719 = vadd.f32 %v6503, %v6718
        %6720 = vdwg.mxu0
        %6721 = vmatprep.subr.mxu0 %v6473
        %6722 = vmatpush1.msra.mxu0 %v6472
        %6723 = vmatprep.subr.mxu0 %v6481
        %6724 = vmatpush1.msra.mxu0 %v6480
        %6725 = vmatprep.subr.mxu0 %v6489
        %6726 = vmatpush1.msra.mxu0 %v6488
        %6727 = vmatprep.subr.mxu0 %v6497
        %6728 = vmatpush1.msra.mxu0 %v6496
        %6729 = vmatprep.subr.mxu0 0.0
        %6730 = vmatpush1.msra.mxu0 0.0
        %6731 = vmatprep.subr.mxu0 0.0
        %6732 = vmatpush1.msra.mxu0 0.0
        %6733 = vmatprep.subr.mxu0 0.0
        %6734 = vmatpush1.msra.mxu0 0.0
        %6735 = vmatprep.subr.mxu0 0.0
        %6736 = vmatpush1.msra.mxu0 0.0
        %6737 = vmatprep.subr.mxu0 0.0
        %6738 = vmatpush1.msra.mxu0 0.0
        %6739 = vmatprep.subr.mxu0 0.0
        %6740 = vmatpush1.msra.mxu0 0.0
        %6741 = vmatprep.subr.mxu0 0.0
        %6742 = vmatpush1.msra.mxu0 0.0
        %6743 = vmatprep.subr.mxu0 0.0
        %6744 = vmatpush1.msra.mxu0 0.0
        %6745 = vmatprep.subr.mxu0 0.0
        %6746 = vmatpush1.msra.mxu0 0.0
        %6747 = vmatprep.subr.mxu0 0.0
        %6748 = vmatpush1.msra.mxu0 0.0
        %6749 = vmatprep.subr.mxu0 0.0
        %6750 = vmatpush1.msra.mxu0 0.0
        %6751 = vmatprep.subr.mxu0 0.0
        %6752 = vmatpush1.msra.mxu0 0.0
        %6753 = vmatprep.subr.mxu0 0.0
        %6754 = vmatpush1.msra.mxu0 0.0
        %6755 = vmatprep.subr.mxu0 0.0
        %6756 = vmatpush1.msra.mxu0 0.0
        %6757 = vmatprep.subr.mxu0 0.0
        %6758 = vmatpush1.msra.mxu0 0.0
        %6759 = vmatprep.subr.mxu0 0.0
        %6760 = vmatpush1.msra.mxu0 0.0
        %6761 = vmatprep.subr.mxu0 0.0
        %6762 = vmatpush1.msra.mxu0 0.0
        %6763 = vmatprep.subr.mxu0 0.0
        %6764 = vmatpush1.msra.mxu0 0.0
        %6765 = vmatprep.subr.mxu0 0.0
        %6766 = vmatpush1.msra.mxu0 0.0
        %6767 = vmatprep.subr.mxu0 0.0
        %6768 = vmatpush1.msra.mxu0 0.0
        %6769 = vmatprep.subr.mxu0 0.0
        %6770 = vmatpush1.msra.mxu0 0.0
        %6771 = vmatprep.subr.mxu0 0.0
        %6772 = vmatpush1.msra.mxu0 0.0
        %6773 = vmatprep.subr.mxu0 0.0
        %6774 = vmatpush1.msra.mxu0 0.0
        %6775 = vmatprep.subr.mxu0 0.0
        %6776 = vmatpush1.msra.mxu0 0.0
        %6777 = vmatprep.subr.mxu0 0.0
        %6778 = vmatpush1.msra.mxu0 0.0
        %6779 = vmatprep.subr.mxu0 0.0
        %6780 = vmatpush1.msra.mxu0 0.0
        %6781 = vmatprep.subr.mxu0 0.0
        %6782 = vmatpush1.msra.mxu0 0.0
        %6783 = vmatprep.subr.mxu0 0.0
        %6784 = vmatpush1.msra.mxu0 0.0
        %6785 = vmatprep.mubr.f32.mxu0 0.0
        %6786 = vmatmul.mubr.f32.gmra.mrb[0].mxu0 %v6506
        %v6787 = vpop.f32.mrb[0].mxu0
        %v6788 = vadd.f32 %v6503, %v6787
        %v6789 = vpop.f32.mrb[0].mxu0
        %v6790 = vadd.f32 %v6503, %v6789
        %6791 = vdwg.mxu0
        %6792 = vst [vmem:[%s326] sm:$0xff] %v6575
        %6793 = vst [vmem:[%s326 + $0x8] sm:$0xff] %v6577
        %6794 = vst [vmem:[%s326 + $0x10] sm:$0xff] %v6646
        %6795 = vst [vmem:[%s326 + $0x18] sm:$0xff] %v6648
        %6796 = vst [vmem:[%s326 + $0x20] sm:$0xff] %v6717
        %6797 = vst [vmem:[%s326 + $0x28] sm:$0xff] %v6719
        %6798 = vst [vmem:[%s326 + $0x30] sm:$0xff] %v6788
        %6799 = vst [vmem:[%s326 + $0x38] sm:$0xff] %v6790
        %s6800 = sand.u32 %s203, 1
        %s6801 = scalar_lea.sflag [#allocation4], %s6800
        %s6802 = sand.u32 %s203, 1
        %s6803 = smul.addr %s6802, 64
        %s6804 = scalar_lea.vmem [#allocation5], %s6803
        // Predicated region
        $region53: #{tpu_custom_call.1} parent=47 // pred_check
          %p6805 = pneg %p213
        $region54: #{tpu_custom_call.1} parent=47 // pred_check_branch
          %6807 = sbr.rel (%p6805) target = $region56
        $region55: #{tpu_custom_call.1} parent=47 // pred_region
          %s6808 = smul.u32 8, %s27
          %s6810 = ssub.s32 1024, 1024
          %6811 = vsyncadd %s6801, %s6810
          %s6812 = smul.addr %s26, 16
          %s6813 = sadd.s32 %s6808, %s6812
          %s6814 = smul.addr %s6813, 128
          %s6815 = scalar_lea.hbm %s7, %s6814
          %s6817 = sshll.u32 %s6804, 4
          %s6818 = int_to_ptr.vmem [resolvable:$true] %s6817
          %6820 = dma.vmem_to_hbm [thread:$0]  %s6818, 1024, %s6815, %s6801
        $region56: #{tpu_custom_call.1} parent=47 // pred_fallthru
          _
      $region48: #{tpu_custom_call.1} parent=5 // pred_fallthru
        _
      %p6821 = scmp.le.s32.totalorder 2, %s17
      // Predicated region
      $region57: #{tpu_custom_call.1} parent=5 // pred_check
        %p6822 = pneg %p6821
      $region58: #{tpu_custom_call.1} parent=5 // pred_check_branch
        %6824 = sbr.rel (%p6822) target = $region60
      $region59: #{tpu_custom_call.1} parent=5 // pred_region
        %s6825 = ssub.s32 %s17, 2
        // Predicated region
        $region61: #{tpu_custom_call.1} parent=59 // pred_check
          %p6826 = pneg %p219
        $region62: #{tpu_custom_call.1} parent=59 // pred_check_branch
          %6828 = sbr.rel (%p6826) target = $region64
        $region63: #{tpu_custom_call.1} parent=59 // pred_region
          %s6829 = sand.u32 %s204, 1
          %s6830 = scalar_lea.sflag [#allocation4], %s6829
          %s6831 = sand.u32 %s204, 1
          %s6832 = smul.addr %s6831, 64
          %s6833 = scalar_lea.vmem [#allocation5], %s6832
          %6834 = dma.done %s6830, 1024
        $region64: #{tpu_custom_call.1} parent=59 // pred_fallthru
          _
      $region60: #{tpu_custom_call.1} parent=5 // pred_fallthru
        _
    $region6: #{tpu_custom_call.1} parent=1 // loop_footer
      %s21 = sadd.s32 1, %s17
    $region7: #{tpu_custom_call.1} parent=1 // loop_footer_branch
      %16 = sbr.rel target = $region3
    $region8: #{tpu_custom_call.1} parent=1 // loop_exit
      _
    %6835 = vsyncpa [#allocation3], 1
    %s6836 = scalar_lea.sflag [#allocation3], 1
    %6837 = vsyncpa %s6836, 1
    %6838 = vsyncpa [#allocation4], 1
    %s6839 = scalar_lea.sflag [#allocation4], 1
    %6840 = vsyncpa %s6839, 1

</llo_original>
